<compile_context>
chip_gen: v7x
topology: tpu7x:2x2x1
jax: 0.10.0
libtpu: 0.0.40
codegen_flags: <defaults>
</compile_context>

<pallas_src>
import functools

import jax
import jax.numpy as jnp
from jax.experimental import pallas as pl
from jax.experimental.pallas import tpu as pltpu


def _block3d_kernel(*args, n_convs, c_in, c_out, c_pad, D, H, W):
    # args = (x_ref, mask_ref, w0, b0, w1, b1, ..., o_ref, xext_ref, col_ref)
    x_ref = args[0]
    mask_ref = args[1]                       # (27, DHW) boundary masks
    wb_refs = args[2:2 + 2 * n_convs]
    o_ref = args[2 + 2 * n_convs]
    xext_ref, col_ref = args[3 + 2 * n_convs:]

    dhw = D * H * W
    s_off = H * W + W + 1                    # max |tap offset| on the flat axis

    # Zero the extended activation slab (margins + spare channel rows), then
    # drop this batch element's activation into the centre.  21 KB -> trivial.
    xext_ref[...] = jnp.zeros_like(xext_ref)
    xext_ref[0:c_in, s_off:s_off + dhw] = x_ref[...].astype(jnp.float32)

    for i in range(n_convs):
        w_ref = wb_refs[2 * i]               # (c_out, 27 * c_pad)
        b_ref = wb_refs[2 * i + 1]           # (c_out, 1)

        # Shift+mask im2col: row block `tap` = lane-shifted activation slab,
        # boundary taps zeroed by the precomputed mask (handles padding=1).
        tap = 0
        for kd in range(3):
            for kh in range(3):
                for kw in range(3):
                    off = (kd - 1) * H * W + (kh - 1) * W + (kw - 1)
                    src = xext_ref[:, s_off + off:s_off + off + dhw]
                    if kd == 1 and kh == 1 and kw == 1:
                        # Centre tap: mask is all ones, skip the multiply.
                        col_ref[tap * c_pad:(tap + 1) * c_pad, :] = src
                    else:
                        col_ref[tap * c_pad:(tap + 1) * c_pad, :] = (
                            src * mask_ref[tap:tap + 1, :])
                    tap += 1

        # One lane-dense MXU matmul per conv: (c_out, 27*c_pad) @ (27*c_pad, DHW)
        acc = jax.lax.dot_general(
            w_ref[...], col_ref[...],
            (((1,), (0,)), ((), ())),
            preferred_element_type=jnp.float32)
        acc = acc + b_ref[...]                # bias broadcast over voxels

        if i < n_convs - 1:
            # ReLU, then write back into the centre of the slab for the next
            # conv.  Margins stay zero; spare channel rows are neutralised by
            # the zero-padded weight rows of the next conv.
            xext_ref[0:c_out, s_off:s_off + dhw] = jnp.maximum(acc, 0.0)
        else:
            o_ref[...] = acc.astype(o_ref.dtype)   # lane-dense (c_out, DHW)


def block3d_forward(x_ncdhw, params_torch):
    """Full Block3d forward.

    x_ncdhw: (N, Cin, D, H, W)
    params_torch: list of (w (Cout, Cin_i, 3, 3, 3), b (Cout,)) in PyTorch layout.
    """
    N, c_in, D, H, W = x_ncdhw.shape
    c_out = params_torch[0][0].shape[0]
    n_convs = len(params_torch)
    dhw = D * H * W
    c_max = max(c_in, c_out)
    c_pad = ((c_max + 7) // 8) * 8           # sublane-aligned channel rows
    s_off = H * W + W + 1

    # Hoisted: 27 boundary masks (padding=1 handling), one per conv tap.
    od = jnp.arange(D)[:, None, None]
    oh = jnp.arange(H)[None, :, None]
    ow = jnp.arange(W)[None, None, :]
    masks = []
    for kd in range(3):
        for kh in range(3):
            for kw in range(3):
                idd = od + (kd - 1)
                ihh = oh + (kh - 1)
                iww = ow + (kw - 1)
                m = ((idd >= 0) & (idd < D) & (ihh >= 0) & (ihh < H)
                     & (iww >= 0) & (iww < W))
                masks.append(m.reshape(dhw))
    mask = jnp.stack(masks).astype(jnp.float32)        # (27, DHW)

    # Hoisted weight prep: OIDHW -> (Cout, 3,3,3, Cin_i) -> zero-pad channels
    # to c_pad -> flatten to (Cout, 27*c_pad) matmul layout (row = tap*c_pad+c).
    flat_params = []
    for (w, b) in params_torch:
        cin_i = w.shape[1]
        wk = jnp.transpose(w, (0, 2, 3, 4, 1))
        wk = jnp.pad(wk, ((0, 0), (0, 0), (0, 0), (0, 0), (0, c_pad - cin_i)))
        wk = wk.reshape(c_out, 27 * c_pad).astype(jnp.float32)
        bk = b.reshape(c_out, 1).astype(jnp.float32)
        flat_params.append((wk, bk))

    x2d = x_ncdhw.reshape(N, c_in, dhw)      # contiguous reshape (free)

    kernel = functools.partial(
        _block3d_kernel, n_convs=n_convs, c_in=c_in, c_out=c_out,
        c_pad=c_pad, D=D, H=H, W=W)

    in_specs = [pl.BlockSpec((None, c_in, dhw), lambda n: (n, 0, 0)),
                pl.BlockSpec((27, dhw), lambda n: (0, 0))]
    operands = [x2d, mask]
    for (wk, bk) in flat_params:
        in_specs.append(pl.BlockSpec((c_out, 27 * c_pad), lambda n: (0, 0)))
        in_specs.append(pl.BlockSpec((c_out, 1), lambda n: (0, 0)))
        operands.extend([wk, bk])

    out2d = pl.pallas_call(
        kernel,
        out_shape=jax.ShapeDtypeStruct((N, c_out, dhw), x_ncdhw.dtype),
        grid_spec=pltpu.PrefetchScalarGridSpec(
            num_scalar_prefetch=0,
            grid=(N,),
            in_specs=in_specs,
            out_specs=pl.BlockSpec((None, c_out, dhw), lambda n: (n, 0, 0)),
            scratch_shapes=[
                pltpu.VMEM((c_pad, dhw + 2 * s_off), jnp.float32),  # flat acts
                pltpu.VMEM((27 * c_pad, dhw), jnp.float32),         # im2col
            ]),
        compiler_params=pltpu.CompilerParams(
            dimension_semantics=("parallel",)),
    )(*operands)

    return out2d.reshape(N, c_out, D, H, W)  # contiguous reshape (free)


def _reference_block3d(x_ncdhw, params_torch):
    """Pure-JAX reference (PyTorch NCDHW / OIDHW convention)."""
    x = x_ncdhw
    n = len(params_torch)
    for i, (w, b) in enumerate(params_torch):
        x = jax.lax.conv_general_dilated(
            x, w, window_strides=(1, 1, 1),
            padding=((1, 1), (1, 1), (1, 1)),
            dimension_numbers=('NCDHW', 'OIDHW', 'NCDHW'))
        x = x + b.reshape(1, -1, 1, 1, 1)
        if i < n - 1:
            x = jnp.maximum(x, 0.0)
    return x


if __name__ == "__main__":
    # Small shapes consistent with the module: N=2, Cin=4, Cout=8, D=H=W=8.
    N, Cin, Cout = 2, 4, 8
    D = H = W = 8
    complexity = 2  # -> 3 convs with ReLU between them

    key = jax.random.PRNGKey(0)
    keys = jax.random.split(key, 1 + 2 * (complexity + 1))
    x = jax.random.normal(keys[0], (N, Cin, D, H, W), jnp.float32)

    # PyTorch Conv3d parameter shapes: (Cout, Cin_i, 3, 3, 3), (Cout,)
    params_torch = []
    c_prev = Cin
    for i in range(complexity + 1):
        kw_, kb_ = keys[1 + 2 * i], keys[2 + 2 * i]
        w = jax.random.normal(kw_, (Cout, c_prev, 3, 3, 3), jnp.float32) * 0.1
        b = jax.random.normal(kb_, (Cout,), jnp.float32) * 0.1
        params_torch.append((w, b))
        c_prev = Cout

    out = block3d_forward(x, params_torch)
    out = jax.block_until_ready(out)

    ref = _reference_block3d(x, params_torch)
    assert out.shape == ref.shape == (N, Cout, D, H, W)
    assert bool(jnp.allclose(out, ref, atol=1e-4, rtol=1e-4)), "mismatch vs reference"

    # TODO(synk): checkpoint_sequential (checkpointing=True) only changes
    # training-time memory behavior; forward semantics are unchanged.
    print("KERNEL_OK")
</pallas_src>

<mosaic_0001>
module attributes {stable_mosaic.version = 11 : i64} {
  func.func @_block3d_kernel(%arg0: i32, %arg1: memref<1x4x512xf32, #tpu.memory_space<vmem>>, %arg2: memref<27x512xf32, #tpu.memory_space<vmem>>, %arg3: memref<8x216xf32, #tpu.memory_space<vmem>>, %arg4: memref<8x1xf32, #tpu.memory_space<vmem>>, %arg5: memref<8x216xf32, #tpu.memory_space<vmem>>, %arg6: memref<8x1xf32, #tpu.memory_space<vmem>>, %arg7: memref<8x216xf32, #tpu.memory_space<vmem>>, %arg8: memref<8x1xf32, #tpu.memory_space<vmem>>, %arg9: memref<1x8x512xf32, #tpu.memory_space<vmem>>, %arg10: memref<8x658xf32, #tpu.memory_space<vmem>>, %arg11: memref<216x512xf32, #tpu.memory_space<vmem>>) attributes {dimension_semantics = [#tpu.dimension_semantics<parallel>], iteration_bounds = array<i64: 2>, scalar_prefetch = 0 : i64, scratch_operands = 2 : i64, tpu.core_type = #tpu.core_type<tc>, window_params = [{transform_indices = @transform_0, window_bounds = array<i64: 1, 4, 512>}, {pipeline_mode = #tpu.pipeline_mode<synchronous>, transform_indices = @transform_1, window_bounds = array<i64: 27, 512>}, {pipeline_mode = #tpu.pipeline_mode<synchronous>, transform_indices = @transform_2, window_bounds = array<i64: 8, 216>}, {pipeline_mode = #tpu.pipeline_mode<synchronous>, transform_indices = @transform_3, window_bounds = array<i64: 8, 1>}, {pipeline_mode = #tpu.pipeline_mode<synchronous>, transform_indices = @transform_4, window_bounds = array<i64: 8, 216>}, {pipeline_mode = #tpu.pipeline_mode<synchronous>, transform_indices = @transform_5, window_bounds = array<i64: 8, 1>}, {pipeline_mode = #tpu.pipeline_mode<synchronous>, transform_indices = @transform_6, window_bounds = array<i64: 8, 216>}, {pipeline_mode = #tpu.pipeline_mode<synchronous>, transform_indices = @transform_7, window_bounds = array<i64: 8, 1>}, {transform_indices = @transform_8, window_bounds = array<i64: 1, 8, 512>}]} {
    %cst = arith.constant 0.000000e+00 : f32
    %0 = vector.broadcast %cst : f32 to vector<8x658xf32>
    %c0 = arith.constant 0 : index
    %c0_0 = arith.constant 0 : index
    %1 = vector.load %arg10[%c0, %c0_0] : memref<8x658xf32, #tpu.memory_space<vmem>>, vector<8x658xf32>
    tpu.vector_store %arg10[%c0, %c0_0], %0 {strides = array<i32>} : memref<8x658xf32, #tpu.memory_space<vmem>>, vector<8x658xf32>,
    %c0_1 = arith.constant 0 : index
    %c0_2 = arith.constant 0 : index
    %c0_3 = arith.constant 0 : index
    %2 = vector.load %arg1[%c0_1, %c0_2, %c0_3] : memref<1x4x512xf32, #tpu.memory_space<vmem>>, vector<1x4x512xf32>
    %3 = vector.shape_cast %2 : vector<1x4x512xf32> to vector<4x512xf32>
    %c0_4 = arith.constant 0 : index
    %c73 = arith.constant 73 : index
    %4 = vector.load %arg10[%c0_4, %c73] : memref<8x658xf32, #tpu.memory_space<vmem>>, vector<4x512xf32>
    tpu.vector_store %arg10[%c0_4, %c73], %3 {strides = array<i32>} : memref<8x658xf32, #tpu.memory_space<vmem>>, vector<4x512xf32>,
    %c0_5 = arith.constant 0 : index
    %c0_6 = arith.constant 0 : index
    %5 = vector.load %arg10[%c0_5, %c0_6] : memref<8x658xf32, #tpu.memory_space<vmem>>, vector<8x512xf32>
    %c0_7 = arith.constant 0 : index
    %c0_8 = arith.constant 0 : index
    %6 = vector.load %arg2[%c0_7, %c0_8] : memref<27x512xf32, #tpu.memory_space<vmem>>, vector<1x512xf32>
    %7 = vector.broadcast %6 : vector<1x512xf32> to vector<8x512xf32>
    %8 = arith.mulf %5, %7 : vector<8x512xf32>
    %c0_9 = arith.constant 0 : index
    %c0_10 = arith.constant 0 : index
    %9 = vector.load %arg11[%c0_9, %c0_10] : memref<216x512xf32, #tpu.memory_space<vmem>>, vector<8x512xf32>
    tpu.vector_store %arg11[%c0_9, %c0_10], %8 {strides = array<i32>} : memref<216x512xf32, #tpu.memory_space<vmem>>, vector<8x512xf32>,
    %c0_11 = arith.constant 0 : index
    %c1 = arith.constant 1 : index
    %10 = vector.load %arg10[%c0_11, %c1] : memref<8x658xf32, #tpu.memory_space<vmem>>, vector<8x512xf32>
    %c1_12 = arith.constant 1 : index
    %c0_13 = arith.constant 0 : index
    %11 = vector.load %arg2[%c1_12, %c0_13] : memref<27x512xf32, #tpu.memory_space<vmem>>, vector<1x512xf32>
    %12 = vector.broadcast %11 : vector<1x512xf32> to vector<8x512xf32>
    %13 = arith.mulf %10, %12 : vector<8x512xf32>
    %c8 = arith.constant 8 : index
    %c0_14 = arith.constant 0 : index
    %14 = vector.load %arg11[%c8, %c0_14] : memref<216x512xf32, #tpu.memory_space<vmem>>, vector<8x512xf32>
    tpu.vector_store %arg11[%c8, %c0_14], %13 {strides = array<i32>} : memref<216x512xf32, #tpu.memory_space<vmem>>, vector<8x512xf32>,
    %c0_15 = arith.constant 0 : index
    %c2 = arith.constant 2 : index
    %15 = vector.load %arg10[%c0_15, %c2] : memref<8x658xf32, #tpu.memory_space<vmem>>, vector<8x512xf32>
    %c2_16 = arith.constant 2 : index
    %c0_17 = arith.constant 0 : index
    %16 = vector.load %arg2[%c2_16, %c0_17] : memref<27x512xf32, #tpu.memory_space<vmem>>, vector<1x512xf32>
    %17 = vector.broadcast %16 : vector<1x512xf32> to vector<8x512xf32>
    %18 = arith.mulf %15, %17 : vector<8x512xf32>
    %c16 = arith.constant 16 : index
    %c0_18 = arith.constant 0 : index
    %19 = vector.load %arg11[%c16, %c0_18] : memref<216x512xf32, #tpu.memory_space<vmem>>, vector<8x512xf32>
    tpu.vector_store %arg11[%c16, %c0_18], %18 {strides = array<i32>} : memref<216x512xf32, #tpu.memory_space<vmem>>, vector<8x512xf32>,
    %c0_19 = arith.constant 0 : index
    %c8_20 = arith.constant 8 : index
    %20 = vector.load %arg10[%c0_19, %c8_20] : memref<8x658xf32, #tpu.memory_space<vmem>>, vector<8x512xf32>
    %c3 = arith.constant 3 : index
    %c0_21 = arith.constant 0 : index
    %21 = vector.load %arg2[%c3, %c0_21] : memref<27x512xf32, #tpu.memory_space<vmem>>, vector<1x512xf32>
    %22 = vector.broadcast %21 : vector<1x512xf32> to vector<8x512xf32>
    %23 = arith.mulf %20, %22 : vector<8x512xf32>
    %c24 = arith.constant 24 : index
    %c0_22 = arith.constant 0 : index
    %24 = vector.load %arg11[%c24, %c0_22] : memref<216x512xf32, #tpu.memory_space<vmem>>, vector<8x512xf32>
    tpu.vector_store %arg11[%c24, %c0_22], %23 {strides = array<i32>} : memref<216x512xf32, #tpu.memory_space<vmem>>, vector<8x512xf32>,
    %c0_23 = arith.constant 0 : index
    %c9 = arith.constant 9 : index
    %25 = vector.load %arg10[%c0_23, %c9] : memref<8x658xf32, #tpu.memory_space<vmem>>, vector<8x512xf32>
    %c4 = arith.constant 4 : index
    %c0_24 = arith.constant 0 : index
    %26 = vector.load %arg2[%c4, %c0_24] : memref<27x512xf32, #tpu.memory_space<vmem>>, vector<1x512xf32>
    %27 = vector.broadcast %26 : vector<1x512xf32> to vector<8x512xf32>
    %28 = arith.mulf %25, %27 : vector<8x512xf32>
    %c32 = arith.constant 32 : index
    %c0_25 = arith.constant 0 : index
    %29 = vector.load %arg11[%c32, %c0_25] : memref<216x512xf32, #tpu.memory_space<vmem>>, vector<8x512xf32>
    tpu.vector_store %arg11[%c32, %c0_25], %28 {strides = array<i32>} : memref<216x512xf32, #tpu.memory_space<vmem>>, vector<8x512xf32>,
    %c0_26 = arith.constant 0 : index
    %c10 = arith.constant 10 : index
    %30 = vector.load %arg10[%c0_26, %c10] : memref<8x658xf32, #tpu.memory_space<vmem>>, vector<8x512xf32>
    %c5 = arith.constant 5 : index
    %c0_27 = arith.constant 0 : index
    %31 = vector.load %arg2[%c5, %c0_27] : memref<27x512xf32, #tpu.memory_space<vmem>>, vector<1x512xf32>
    %32 = vector.broadcast %31 : vector<1x512xf32> to vector<8x512xf32>
    %33 = arith.mulf %30, %32 : vector<8x512xf32>
    %c40 = arith.constant 40 : index
    %c0_28 = arith.constant 0 : index
    %34 = vector.load %arg11[%c40, %c0_28] : memref<216x512xf32, #tpu.memory_space<vmem>>, vector<8x512xf32>
    tpu.vector_store %arg11[%c40, %c0_28], %33 {strides = array<i32>} : memref<216x512xf32, #tpu.memory_space<vmem>>, vector<8x512xf32>,
    %c0_29 = arith.constant 0 : index
    %c16_30 = arith.constant 16 : index
    %35 = vector.load %arg10[%c0_29, %c16_30] : memref<8x658xf32, #tpu.memory_space<vmem>>, vector<8x512xf32>
    %c6 = arith.constant 6 : index
    %c0_31 = arith.constant 0 : index
    %36 = vector.load %arg2[%c6, %c0_31] : memref<27x512xf32, #tpu.memory_space<vmem>>, vector<1x512xf32>
    %37 = vector.broadcast %36 : vector<1x512xf32> to vector<8x512xf32>
    %38 = arith.mulf %35, %37 : vector<8x512xf32>
    %c48 = arith.constant 48 : index
    %c0_32 = arith.constant 0 : index
    %39 = vector.load %arg11[%c48, %c0_32] : memref<216x512xf32, #tpu.memory_space<vmem>>, vector<8x512xf32>
    tpu.vector_store %arg11[%c48, %c0_32], %38 {strides = array<i32>} : memref<216x512xf32, #tpu.memory_space<vmem>>, vector<8x512xf32>,
    %c0_33 = arith.constant 0 : index
    %c17 = arith.constant 17 : index
    %40 = vector.load %arg10[%c0_33, %c17] : memref<8x658xf32, #tpu.memory_space<vmem>>, vector<8x512xf32>
    %c7 = arith.constant 7 : index
    %c0_34 = arith.constant 0 : index
    %41 = vector.load %arg2[%c7, %c0_34] : memref<27x512xf32, #tpu.memory_space<vmem>>, vector<1x512xf32>
    %42 = vector.broadcast %41 : vector<1x512xf32> to vector<8x512xf32>
    %43 = arith.mulf %40, %42 : vector<8x512xf32>
    %c56 = arith.constant 56 : index
    %c0_35 = arith.constant 0 : index
    %44 = vector.load %arg11[%c56, %c0_35] : memref<216x512xf32, #tpu.memory_space<vmem>>, vector<8x512xf32>
    tpu.vector_store %arg11[%c56, %c0_35], %43 {strides = array<i32>} : memref<216x512xf32, #tpu.memory_space<vmem>>, vector<8x512xf32>,
    %c0_36 = arith.constant 0 : index
    %c18 = arith.constant 18 : index
    %45 = vector.load %arg10[%c0_36, %c18] : memref<8x658xf32, #tpu.memory_space<vmem>>, vector<8x512xf32>
    %c8_37 = arith.constant 8 : index
    %c0_38 = arith.constant 0 : index
    %46 = vector.load %arg2[%c8_37, %c0_38] : memref<27x512xf32, #tpu.memory_space<vmem>>, vector<1x512xf32>
    %47 = vector.broadcast %46 : vector<1x512xf32> to vector<8x512xf32>
    %48 = arith.mulf %45, %47 : vector<8x512xf32>
    %c64 = arith.constant 64 : index
    %c0_39 = arith.constant 0 : index
    %49 = vector.load %arg11[%c64, %c0_39] : memref<216x512xf32, #tpu.memory_space<vmem>>, vector<8x512xf32>
    tpu.vector_store %arg11[%c64, %c0_39], %48 {strides = array<i32>} : memref<216x512xf32, #tpu.memory_space<vmem>>, vector<8x512xf32>,
    %c0_40 = arith.constant 0 : index
    %c64_41 = arith.constant 64 : index
    %50 = vector.load %arg10[%c0_40, %c64_41] : memref<8x658xf32, #tpu.memory_space<vmem>>, vector<8x512xf32>
    %c9_42 = arith.constant 9 : index
    %c0_43 = arith.constant 0 : index
    %51 = vector.load %arg2[%c9_42, %c0_43] : memref<27x512xf32, #tpu.memory_space<vmem>>, vector<1x512xf32>
    %52 = vector.broadcast %51 : vector<1x512xf32> to vector<8x512xf32>
    %53 = arith.mulf %50, %52 : vector<8x512xf32>
    %c72 = arith.constant 72 : index
    %c0_44 = arith.constant 0 : index
    %54 = vector.load %arg11[%c72, %c0_44] : memref<216x512xf32, #tpu.memory_space<vmem>>, vector<8x512xf32>
    tpu.vector_store %arg11[%c72, %c0_44], %53 {strides = array<i32>} : memref<216x512xf32, #tpu.memory_space<vmem>>, vector<8x512xf32>,
    %c0_45 = arith.constant 0 : index
    %c65 = arith.constant 65 : index
    %55 = vector.load %arg10[%c0_45, %c65] : memref<8x658xf32, #tpu.memory_space<vmem>>, vector<8x512xf32>
    %c10_46 = arith.constant 10 : index
    %c0_47 = arith.constant 0 : index
    %56 = vector.load %arg2[%c10_46, %c0_47] : memref<27x512xf32, #tpu.memory_space<vmem>>, vector<1x512xf32>
    %57 = vector.broadcast %56 : vector<1x512xf32> to vector<8x512xf32>
    %58 = arith.mulf %55, %57 : vector<8x512xf32>
    %c80 = arith.constant 80 : index
    %c0_48 = arith.constant 0 : index
    %59 = vector.load %arg11[%c80, %c0_48] : memref<216x512xf32, #tpu.memory_space<vmem>>, vector<8x512xf32>
    tpu.vector_store %arg11[%c80, %c0_48], %58 {strides = array<i32>} : memref<216x512xf32, #tpu.memory_space<vmem>>, vector<8x512xf32>,
    %c0_49 = arith.constant 0 : index
    %c66 = arith.constant 66 : index
    %60 = vector.load %arg10[%c0_49, %c66] : memref<8x658xf32, #tpu.memory_space<vmem>>, vector<8x512xf32>
    %c11 = arith.constant 11 : index
    %c0_50 = arith.constant 0 : index
    %61 = vector.load %arg2[%c11, %c0_50] : memref<27x512xf32, #tpu.memory_space<vmem>>, vector<1x512xf32>
    %62 = vector.broadcast %61 : vector<1x512xf32> to vector<8x512xf32>
    %63 = arith.mulf %60, %62 : vector<8x512xf32>
    %c88 = arith.constant 88 : index
    %c0_51 = arith.constant 0 : index
    %64 = vector.load %arg11[%c88, %c0_51] : memref<216x512xf32, #tpu.memory_space<vmem>>, vector<8x512xf32>
    tpu.vector_store %arg11[%c88, %c0_51], %63 {strides = array<i32>} : memref<216x512xf32, #tpu.memory_space<vmem>>, vector<8x512xf32>,
    %c0_52 = arith.constant 0 : index
    %c72_53 = arith.constant 72 : index
    %65 = vector.load %arg10[%c0_52, %c72_53] : memref<8x658xf32, #tpu.memory_space<vmem>>, vector<8x512xf32>
    %c12 = arith.constant 12 : index
    %c0_54 = arith.constant 0 : index
    %66 = vector.load %arg2[%c12, %c0_54] : memref<27x512xf32, #tpu.memory_space<vmem>>, vector<1x512xf32>
    %67 = vector.broadcast %66 : vector<1x512xf32> to vector<8x512xf32>
    %68 = arith.mulf %65, %67 : vector<8x512xf32>
    %c96 = arith.constant 96 : index
    %c0_55 = arith.constant 0 : index
    %69 = vector.load %arg11[%c96, %c0_55] : memref<216x512xf32, #tpu.memory_space<vmem>>, vector<8x512xf32>
    tpu.vector_store %arg11[%c96, %c0_55], %68 {strides = array<i32>} : memref<216x512xf32, #tpu.memory_space<vmem>>, vector<8x512xf32>,
    %c0_56 = arith.constant 0 : index
    %c73_57 = arith.constant 73 : index
    %70 = vector.load %arg10[%c0_56, %c73_57] : memref<8x658xf32, #tpu.memory_space<vmem>>, vector<8x512xf32>
    %c104 = arith.constant 104 : index
    %c0_58 = arith.constant 0 : index
    %71 = vector.load %arg11[%c104, %c0_58] : memref<216x512xf32, #tpu.memory_space<vmem>>, vector<8x512xf32>
    tpu.vector_store %arg11[%c104, %c0_58], %70 {strides = array<i32>} : memref<216x512xf32, #tpu.memory_space<vmem>>, vector<8x512xf32>,
    %c0_59 = arith.constant 0 : index
    %c74 = arith.constant 74 : index
    %72 = vector.load %arg10[%c0_59, %c74] : memref<8x658xf32, #tpu.memory_space<vmem>>, vector<8x512xf32>
    %c14 = arith.constant 14 : index
    %c0_60 = arith.constant 0 : index
    %73 = vector.load %arg2[%c14, %c0_60] : memref<27x512xf32, #tpu.memory_space<vmem>>, vector<1x512xf32>
    %74 = vector.broadcast %73 : vector<1x512xf32> to vector<8x512xf32>
    %75 = arith.mulf %72, %74 : vector<8x512xf32>
    %c112 = arith.constant 112 : index
    %c0_61 = arith.constant 0 : index
    %76 = vector.load %arg11[%c112, %c0_61] : memref<216x512xf32, #tpu.memory_space<vmem>>, vector<8x512xf32>
    tpu.vector_store %arg11[%c112, %c0_61], %75 {strides = array<i32>} : memref<216x512xf32, #tpu.memory_space<vmem>>, vector<8x512xf32>,
    %c0_62 = arith.constant 0 : index
    %c80_63 = arith.constant 80 : index
    %77 = vector.load %arg10[%c0_62, %c80_63] : memref<8x658xf32, #tpu.memory_space<vmem>>, vector<8x512xf32>
    %c15 = arith.constant 15 : index
    %c0_64 = arith.constant 0 : index
    %78 = vector.load %arg2[%c15, %c0_64] : memref<27x512xf32, #tpu.memory_space<vmem>>, vector<1x512xf32>
    %79 = vector.broadcast %78 : vector<1x512xf32> to vector<8x512xf32>
    %80 = arith.mulf %77, %79 : vector<8x512xf32>
    %c120 = arith.constant 120 : index
    %c0_65 = arith.constant 0 : index
    %81 = vector.load %arg11[%c120, %c0_65] : memref<216x512xf32, #tpu.memory_space<vmem>>, vector<8x512xf32>
    tpu.vector_store %arg11[%c120, %c0_65], %80 {strides = array<i32>} : memref<216x512xf32, #tpu.memory_space<vmem>>, vector<8x512xf32>,
    %c0_66 = arith.constant 0 : index
    %c81 = arith.constant 81 : index
    %82 = vector.load %arg10[%c0_66, %c81] : memref<8x658xf32, #tpu.memory_space<vmem>>, vector<8x512xf32>
    %c16_67 = arith.constant 16 : index
    %c0_68 = arith.constant 0 : index
    %83 = vector.load %arg2[%c16_67, %c0_68] : memref<27x512xf32, #tpu.memory_space<vmem>>, vector<1x512xf32>
    %84 = vector.broadcast %83 : vector<1x512xf32> to vector<8x512xf32>
    %85 = arith.mulf %82, %84 : vector<8x512xf32>
    %c128 = arith.constant 128 : index
    %c0_69 = arith.constant 0 : index
    %86 = vector.load %arg11[%c128, %c0_69] : memref<216x512xf32, #tpu.memory_space<vmem>>, vector<8x512xf32>
    tpu.vector_store %arg11[%c128, %c0_69], %85 {strides = array<i32>} : memref<216x512xf32, #tpu.memory_space<vmem>>, vector<8x512xf32>,
    %c0_70 = arith.constant 0 : index
    %c82 = arith.constant 82 : index
    %87 = vector.load %arg10[%c0_70, %c82] : memref<8x658xf32, #tpu.memory_space<vmem>>, vector<8x512xf32>
    %c17_71 = arith.constant 17 : index
    %c0_72 = arith.constant 0 : index
    %88 = vector.load %arg2[%c17_71, %c0_72] : memref<27x512xf32, #tpu.memory_space<vmem>>, vector<1x512xf32>
    %89 = vector.broadcast %88 : vector<1x512xf32> to vector<8x512xf32>
    %90 = arith.mulf %87, %89 : vector<8x512xf32>
    %c136 = arith.constant 136 : index
    %c0_73 = arith.constant 0 : index
    %91 = vector.load %arg11[%c136, %c0_73] : memref<216x512xf32, #tpu.memory_space<vmem>>, vector<8x512xf32>
    tpu.vector_store %arg11[%c136, %c0_73], %90 {strides = array<i32>} : memref<216x512xf32, #tpu.memory_space<vmem>>, vector<8x512xf32>,
    %c0_74 = arith.constant 0 : index
    %c128_75 = arith.constant 128 : index
    %92 = vector.load %arg10[%c0_74, %c128_75] : memref<8x658xf32, #tpu.memory_space<vmem>>, vector<8x512xf32>
    %c18_76 = arith.constant 18 : index
    %c0_77 = arith.constant 0 : index
    %93 = vector.load %arg2[%c18_76, %c0_77] : memref<27x512xf32, #tpu.memory_space<vmem>>, vector<1x512xf32>
    %94 = vector.broadcast %93 : vector<1x512xf32> to vector<8x512xf32>
    %95 = arith.mulf %92, %94 : vector<8x512xf32>
    %c144 = arith.constant 144 : index
    %c0_78 = arith.constant 0 : index
    %96 = vector.load %arg11[%c144, %c0_78] : memref<216x512xf32, #tpu.memory_space<vmem>>, vector<8x512xf32>
    tpu.vector_store %arg11[%c144, %c0_78], %95 {strides = array<i32>} : memref<216x512xf32, #tpu.memory_space<vmem>>, vector<8x512xf32>,
    %c0_79 = arith.constant 0 : index
    %c129 = arith.constant 129 : index
    %97 = vector.load %arg10[%c0_79, %c129] : memref<8x658xf32, #tpu.memory_space<vmem>>, vector<8x512xf32>
    %c19 = arith.constant 19 : index
    %c0_80 = arith.constant 0 : index
    %98 = vector.load %arg2[%c19, %c0_80] : memref<27x512xf32, #tpu.memory_space<vmem>>, vector<1x512xf32>
    %99 = vector.broadcast %98 : vector<1x512xf32> to vector<8x512xf32>
    %100 = arith.mulf %97, %99 : vector<8x512xf32>
    %c152 = arith.constant 152 : index
    %c0_81 = arith.constant 0 : index
    %101 = vector.load %arg11[%c152, %c0_81] : memref<216x512xf32, #tpu.memory_space<vmem>>, vector<8x512xf32>
    tpu.vector_store %arg11[%c152, %c0_81], %100 {strides = array<i32>} : memref<216x512xf32, #tpu.memory_space<vmem>>, vector<8x512xf32>,
    %c0_82 = arith.constant 0 : index
    %c130 = arith.constant 130 : index
    %102 = vector.load %arg10[%c0_82, %c130] : memref<8x658xf32, #tpu.memory_space<vmem>>, vector<8x512xf32>
    %c20 = arith.constant 20 : index
    %c0_83 = arith.constant 0 : index
    %103 = vector.load %arg2[%c20, %c0_83] : memref<27x512xf32, #tpu.memory_space<vmem>>, vector<1x512xf32>
    %104 = vector.broadcast %103 : vector<1x512xf32> to vector<8x512xf32>
    %105 = arith.mulf %102, %104 : vector<8x512xf32>
    %c160 = arith.constant 160 : index
    %c0_84 = arith.constant 0 : index
    %106 = vector.load %arg11[%c160, %c0_84] : memref<216x512xf32, #tpu.memory_space<vmem>>, vector<8x512xf32>
    tpu.vector_store %arg11[%c160, %c0_84], %105 {strides = array<i32>} : memref<216x512xf32, #tpu.memory_space<vmem>>, vector<8x512xf32>,
    %c0_85 = arith.constant 0 : index
    %c136_86 = arith.constant 136 : index
    %107 = vector.load %arg10[%c0_85, %c136_86] : memref<8x658xf32, #tpu.memory_space<vmem>>, vector<8x512xf32>
    %c21 = arith.constant 21 : index
    %c0_87 = arith.constant 0 : index
    %108 = vector.load %arg2[%c21, %c0_87] : memref<27x512xf32, #tpu.memory_space<vmem>>, vector<1x512xf32>
    %109 = vector.broadcast %108 : vector<1x512xf32> to vector<8x512xf32>
    %110 = arith.mulf %107, %109 : vector<8x512xf32>
    %c168 = arith.constant 168 : index
    %c0_88 = arith.constant 0 : index
    %111 = vector.load %arg11[%c168, %c0_88] : memref<216x512xf32, #tpu.memory_space<vmem>>, vector<8x512xf32>
    tpu.vector_store %arg11[%c168, %c0_88], %110 {strides = array<i32>} : memref<216x512xf32, #tpu.memory_space<vmem>>, vector<8x512xf32>,
    %c0_89 = arith.constant 0 : index
    %c137 = arith.constant 137 : index
    %112 = vector.load %arg10[%c0_89, %c137] : memref<8x658xf32, #tpu.memory_space<vmem>>, vector<8x512xf32>
    %c22 = arith.constant 22 : index
    %c0_90 = arith.constant 0 : index
    %113 = vector.load %arg2[%c22, %c0_90] : memref<27x512xf32, #tpu.memory_space<vmem>>, vector<1x512xf32>
    %114 = vector.broadcast %113 : vector<1x512xf32> to vector<8x512xf32>
    %115 = arith.mulf %112, %114 : vector<8x512xf32>
    %c176 = arith.constant 176 : index
    %c0_91 = arith.constant 0 : index
    %116 = vector.load %arg11[%c176, %c0_91] : memref<216x512xf32, #tpu.memory_space<vmem>>, vector<8x512xf32>
    tpu.vector_store %arg11[%c176, %c0_91], %115 {strides = array<i32>} : memref<216x512xf32, #tpu.memory_space<vmem>>, vector<8x512xf32>,
    %c0_92 = arith.constant 0 : index
    %c138 = arith.constant 138 : index
    %117 = vector.load %arg10[%c0_92, %c138] : memref<8x658xf32, #tpu.memory_space<vmem>>, vector<8x512xf32>
    %c23 = arith.constant 23 : index
    %c0_93 = arith.constant 0 : index
    %118 = vector.load %arg2[%c23, %c0_93] : memref<27x512xf32, #tpu.memory_space<vmem>>, vector<1x512xf32>
    %119 = vector.broadcast %118 : vector<1x512xf32> to vector<8x512xf32>
    %120 = arith.mulf %117, %119 : vector<8x512xf32>
    %c184 = arith.constant 184 : index
    %c0_94 = arith.constant 0 : index
    %121 = vector.load %arg11[%c184, %c0_94] : memref<216x512xf32, #tpu.memory_space<vmem>>, vector<8x512xf32>
    tpu.vector_store %arg11[%c184, %c0_94], %120 {strides = array<i32>} : memref<216x512xf32, #tpu.memory_space<vmem>>, vector<8x512xf32>,
    %c0_95 = arith.constant 0 : index
    %c144_96 = arith.constant 144 : index
    %122 = vector.load %arg10[%c0_95, %c144_96] : memref<8x658xf32, #tpu.memory_space<vmem>>, vector<8x512xf32>
    %c24_97 = arith.constant 24 : index
    %c0_98 = arith.constant 0 : index
    %123 = vector.load %arg2[%c24_97, %c0_98] : memref<27x512xf32, #tpu.memory_space<vmem>>, vector<1x512xf32>
    %124 = vector.broadcast %123 : vector<1x512xf32> to vector<8x512xf32>
    %125 = arith.mulf %122, %124 : vector<8x512xf32>
    %c192 = arith.constant 192 : index
    %c0_99 = arith.constant 0 : index
    %126 = vector.load %arg11[%c192, %c0_99] : memref<216x512xf32, #tpu.memory_space<vmem>>, vector<8x512xf32>
    tpu.vector_store %arg11[%c192, %c0_99], %125 {strides = array<i32>} : memref<216x512xf32, #tpu.memory_space<vmem>>, vector<8x512xf32>,
    %c0_100 = arith.constant 0 : index
    %c145 = arith.constant 145 : index
    %127 = vector.load %arg10[%c0_100, %c145] : memref<8x658xf32, #tpu.memory_space<vmem>>, vector<8x512xf32>
    %c25 = arith.constant 25 : index
    %c0_101 = arith.constant 0 : index
    %128 = vector.load %arg2[%c25, %c0_101] : memref<27x512xf32, #tpu.memory_space<vmem>>, vector<1x512xf32>
    %129 = vector.broadcast %128 : vector<1x512xf32> to vector<8x512xf32>
    %130 = arith.mulf %127, %129 : vector<8x512xf32>
    %c200 = arith.constant 200 : index
    %c0_102 = arith.constant 0 : index
    %131 = vector.load %arg11[%c200, %c0_102] : memref<216x512xf32, #tpu.memory_space<vmem>>, vector<8x512xf32>
    tpu.vector_store %arg11[%c200, %c0_102], %130 {strides = array<i32>} : memref<216x512xf32, #tpu.memory_space<vmem>>, vector<8x512xf32>,
    %c0_103 = arith.constant 0 : index
    %c146 = arith.constant 146 : index
    %132 = vector.load %arg10[%c0_103, %c146] : memref<8x658xf32, #tpu.memory_space<vmem>>, vector<8x512xf32>
    %c26 = arith.constant 26 : index
    %c0_104 = arith.constant 0 : index
    %133 = vector.load %arg2[%c26, %c0_104] : memref<27x512xf32, #tpu.memory_space<vmem>>, vector<1x512xf32>
    %134 = vector.broadcast %133 : vector<1x512xf32> to vector<8x512xf32>
    %135 = arith.mulf %132, %134 : vector<8x512xf32>
    %c208 = arith.constant 208 : index
    %c0_105 = arith.constant 0 : index
    %136 = vector.load %arg11[%c208, %c0_105] : memref<216x512xf32, #tpu.memory_space<vmem>>, vector<8x512xf32>
    tpu.vector_store %arg11[%c208, %c0_105], %135 {strides = array<i32>} : memref<216x512xf32, #tpu.memory_space<vmem>>, vector<8x512xf32>,
    %c0_106 = arith.constant 0 : index
    %c0_107 = arith.constant 0 : index
    %137 = vector.load %arg3[%c0_106, %c0_107] : memref<8x216xf32, #tpu.memory_space<vmem>>, vector<8x216xf32>
    %c0_108 = arith.constant 0 : index
    %c0_109 = arith.constant 0 : index
    %138 = vector.load %arg11[%c0_108, %c0_109] : memref<216x512xf32, #tpu.memory_space<vmem>>, vector<216x512xf32>
    %cst_110 = arith.constant dense<0.000000e+00> : vector<8x512xf32>
    %139 = tpu.matmul %137, %138, %cst_110 {dimension_numbers = #tpu.dot_dimension_numbers<[1], [0], [0], [1], [0, 0, 1, 1], [], []>} : vector<8x216xf32>, vector<216x512xf32>, vector<8x512xf32> -> vector<8x512xf32>
    %c0_111 = arith.constant 0 : index
    %c0_112 = arith.constant 0 : index
    %140 = vector.load %arg4[%c0_111, %c0_112] : memref<8x1xf32, #tpu.memory_space<vmem>>, vector<8x1xf32>
    %141 = vector.broadcast %140 : vector<8x1xf32> to vector<8x512xf32>
    %142 = arith.addf %139, %141 : vector<8x512xf32>
    %cst_113 = arith.constant 0.000000e+00 : f32
    %143 = vector.broadcast %cst_113 : f32 to vector<8x512xf32>
    %144 = arith.maximumf %142, %143 : vector<8x512xf32>
    %c0_114 = arith.constant 0 : index
    %c73_115 = arith.constant 73 : index
    %145 = vector.load %arg10[%c0_114, %c73_115] : memref<8x658xf32, #tpu.memory_space<vmem>>, vector<8x512xf32>
    tpu.vector_store %arg10[%c0_114, %c73_115], %144 {strides = array<i32>} : memref<8x658xf32, #tpu.memory_space<vmem>>, vector<8x512xf32>,
    %c0_116 = arith.constant 0 : index
    %c0_117 = arith.constant 0 : index
    %146 = vector.load %arg10[%c0_116, %c0_117] : memref<8x658xf32, #tpu.memory_space<vmem>>, vector<8x512xf32>
    %c0_118 = arith.constant 0 : index
    %c0_119 = arith.constant 0 : index
    %147 = vector.load %arg2[%c0_118, %c0_119] : memref<27x512xf32, #tpu.memory_space<vmem>>, vector<1x512xf32>
    %148 = vector.broadcast %147 : vector<1x512xf32> to vector<8x512xf32>
    %149 = arith.mulf %146, %148 : vector<8x512xf32>
    %c0_120 = arith.constant 0 : index
    %c0_121 = arith.constant 0 : index
    %150 = vector.load %arg11[%c0_120, %c0_121] : memref<216x512xf32, #tpu.memory_space<vmem>>, vector<8x512xf32>
    tpu.vector_store %arg11[%c0_120, %c0_121], %149 {strides = array<i32>} : memref<216x512xf32, #tpu.memory_space<vmem>>, vector<8x512xf32>,
    %c0_122 = arith.constant 0 : index
    %c1_123 = arith.constant 1 : index
    %151 = vector.load %arg10[%c0_122, %c1_123] : memref<8x658xf32, #tpu.memory_space<vmem>>, vector<8x512xf32>
    %c1_124 = arith.constant 1 : index
    %c0_125 = arith.constant 0 : index
    %152 = vector.load %arg2[%c1_124, %c0_125] : memref<27x512xf32, #tpu.memory_space<vmem>>, vector<1x512xf32>
    %153 = vector.broadcast %152 : vector<1x512xf32> to vector<8x512xf32>
    %154 = arith.mulf %151, %153 : vector<8x512xf32>
    %c8_126 = arith.constant 8 : index
    %c0_127 = arith.constant 0 : index
    %155 = vector.load %arg11[%c8_126, %c0_127] : memref<216x512xf32, #tpu.memory_space<vmem>>, vector<8x512xf32>
    tpu.vector_store %arg11[%c8_126, %c0_127], %154 {strides = array<i32>} : memref<216x512xf32, #tpu.memory_space<vmem>>, vector<8x512xf32>,
    %c0_128 = arith.constant 0 : index
    %c2_129 = arith.constant 2 : index
    %156 = vector.load %arg10[%c0_128, %c2_129] : memref<8x658xf32, #tpu.memory_space<vmem>>, vector<8x512xf32>
    %c2_130 = arith.constant 2 : index
    %c0_131 = arith.constant 0 : index
    %157 = vector.load %arg2[%c2_130, %c0_131] : memref<27x512xf32, #tpu.memory_space<vmem>>, vector<1x512xf32>
    %158 = vector.broadcast %157 : vector<1x512xf32> to vector<8x512xf32>
    %159 = arith.mulf %156, %158 : vector<8x512xf32>
    %c16_132 = arith.constant 16 : index
    %c0_133 = arith.constant 0 : index
    %160 = vector.load %arg11[%c16_132, %c0_133] : memref<216x512xf32, #tpu.memory_space<vmem>>, vector<8x512xf32>
    tpu.vector_store %arg11[%c16_132, %c0_133], %159 {strides = array<i32>} : memref<216x512xf32, #tpu.memory_space<vmem>>, vector<8x512xf32>,
    %c0_134 = arith.constant 0 : index
    %c8_135 = arith.constant 8 : index
    %161 = vector.load %arg10[%c0_134, %c8_135] : memref<8x658xf32, #tpu.memory_space<vmem>>, vector<8x512xf32>
    %c3_136 = arith.constant 3 : index
    %c0_137 = arith.constant 0 : index
    %162 = vector.load %arg2[%c3_136, %c0_137] : memref<27x512xf32, #tpu.memory_space<vmem>>, vector<1x512xf32>
    %163 = vector.broadcast %162 : vector<1x512xf32> to vector<8x512xf32>
    %164 = arith.mulf %161, %163 : vector<8x512xf32>
    %c24_138 = arith.constant 24 : index
    %c0_139 = arith.constant 0 : index
    %165 = vector.load %arg11[%c24_138, %c0_139] : memref<216x512xf32, #tpu.memory_space<vmem>>, vector<8x512xf32>
    tpu.vector_store %arg11[%c24_138, %c0_139], %164 {strides = array<i32>} : memref<216x512xf32, #tpu.memory_space<vmem>>, vector<8x512xf32>,
    %c0_140 = arith.constant 0 : index
    %c9_141 = arith.constant 9 : index
    %166 = vector.load %arg10[%c0_140, %c9_141] : memref<8x658xf32, #tpu.memory_space<vmem>>, vector<8x512xf32>
    %c4_142 = arith.constant 4 : index
    %c0_143 = arith.constant 0 : index
    %167 = vector.load %arg2[%c4_142, %c0_143] : memref<27x512xf32, #tpu.memory_space<vmem>>, vector<1x512xf32>
    %168 = vector.broadcast %167 : vector<1x512xf32> to vector<8x512xf32>
    %169 = arith.mulf %166, %168 : vector<8x512xf32>
    %c32_144 = arith.constant 32 : index
    %c0_145 = arith.constant 0 : index
    %170 = vector.load %arg11[%c32_144, %c0_145] : memref<216x512xf32, #tpu.memory_space<vmem>>, vector<8x512xf32>
    tpu.vector_store %arg11[%c32_144, %c0_145], %169 {strides = array<i32>} : memref<216x512xf32, #tpu.memory_space<vmem>>, vector<8x512xf32>,
    %c0_146 = arith.constant 0 : index
    %c10_147 = arith.constant 10 : index
    %171 = vector.load %arg10[%c0_146, %c10_147] : memref<8x658xf32, #tpu.memory_space<vmem>>, vector<8x512xf32>
    %c5_148 = arith.constant 5 : index
    %c0_149 = arith.constant 0 : index
    %172 = vector.load %arg2[%c5_148, %c0_149] : memref<27x512xf32, #tpu.memory_space<vmem>>, vector<1x512xf32>
    %173 = vector.broadcast %172 : vector<1x512xf32> to vector<8x512xf32>
    %174 = arith.mulf %171, %173 : vector<8x512xf32>
    %c40_150 = arith.constant 40 : index
    %c0_151 = arith.constant 0 : index
    %175 = vector.load %arg11[%c40_150, %c0_151] : memref<216x512xf32, #tpu.memory_space<vmem>>, vector<8x512xf32>
    tpu.vector_store %arg11[%c40_150, %c0_151], %174 {strides = array<i32>} : memref<216x512xf32, #tpu.memory_space<vmem>>, vector<8x512xf32>,
    %c0_152 = arith.constant 0 : index
    %c16_153 = arith.constant 16 : index
    %176 = vector.load %arg10[%c0_152, %c16_153] : memref<8x658xf32, #tpu.memory_space<vmem>>, vector<8x512xf32>
    %c6_154 = arith.constant 6 : index
    %c0_155 = arith.constant 0 : index
    %177 = vector.load %arg2[%c6_154, %c0_155] : memref<27x512xf32, #tpu.memory_space<vmem>>, vector<1x512xf32>
    %178 = vector.broadcast %177 : vector<1x512xf32> to vector<8x512xf32>
    %179 = arith.mulf %176, %178 : vector<8x512xf32>
    %c48_156 = arith.constant 48 : index
    %c0_157 = arith.constant 0 : index
    %180 = vector.load %arg11[%c48_156, %c0_157] : memref<216x512xf32, #tpu.memory_space<vmem>>, vector<8x512xf32>
    tpu.vector_store %arg11[%c48_156, %c0_157], %179 {strides = array<i32>} : memref<216x512xf32, #tpu.memory_space<vmem>>, vector<8x512xf32>,
    %c0_158 = arith.constant 0 : index
    %c17_159 = arith.constant 17 : index
    %181 = vector.load %arg10[%c0_158, %c17_159] : memref<8x658xf32, #tpu.memory_space<vmem>>, vector<8x512xf32>
    %c7_160 = arith.constant 7 : index
    %c0_161 = arith.constant 0 : index
    %182 = vector.load %arg2[%c7_160, %c0_161] : memref<27x512xf32, #tpu.memory_space<vmem>>, vector<1x512xf32>
    %183 = vector.broadcast %182 : vector<1x512xf32> to vector<8x512xf32>
    %184 = arith.mulf %181, %183 : vector<8x512xf32>
    %c56_162 = arith.constant 56 : index
    %c0_163 = arith.constant 0 : index
    %185 = vector.load %arg11[%c56_162, %c0_163] : memref<216x512xf32, #tpu.memory_space<vmem>>, vector<8x512xf32>
    tpu.vector_store %arg11[%c56_162, %c0_163], %184 {strides = array<i32>} : memref<216x512xf32, #tpu.memory_space<vmem>>, vector<8x512xf32>,
    %c0_164 = arith.constant 0 : index
    %c18_165 = arith.constant 18 : index
    %186 = vector.load %arg10[%c0_164, %c18_165] : memref<8x658xf32, #tpu.memory_space<vmem>>, vector<8x512xf32>
    %c8_166 = arith.constant 8 : index
    %c0_167 = arith.constant 0 : index
    %187 = vector.load %arg2[%c8_166, %c0_167] : memref<27x512xf32, #tpu.memory_space<vmem>>, vector<1x512xf32>
    %188 = vector.broadcast %187 : vector<1x512xf32> to vector<8x512xf32>
    %189 = arith.mulf %186, %188 : vector<8x512xf32>
    %c64_168 = arith.constant 64 : index
    %c0_169 = arith.constant 0 : index
    %190 = vector.load %arg11[%c64_168, %c0_169] : memref<216x512xf32, #tpu.memory_space<vmem>>, vector<8x512xf32>
    tpu.vector_store %arg11[%c64_168, %c0_169], %189 {strides = array<i32>} : memref<216x512xf32, #tpu.memory_space<vmem>>, vector<8x512xf32>,
    %c0_170 = arith.constant 0 : index
    %c64_171 = arith.constant 64 : index
    %191 = vector.load %arg10[%c0_170, %c64_171] : memref<8x658xf32, #tpu.memory_space<vmem>>, vector<8x512xf32>
    %c9_172 = arith.constant 9 : index
    %c0_173 = arith.constant 0 : index
    %192 = vector.load %arg2[%c9_172, %c0_173] : memref<27x512xf32, #tpu.memory_space<vmem>>, vector<1x512xf32>
    %193 = vector.broadcast %192 : vector<1x512xf32> to vector<8x512xf32>
    %194 = arith.mulf %191, %193 : vector<8x512xf32>
    %c72_174 = arith.constant 72 : index
    %c0_175 = arith.constant 0 : index
    %195 = vector.load %arg11[%c72_174, %c0_175] : memref<216x512xf32, #tpu.memory_space<vmem>>, vector<8x512xf32>
    tpu.vector_store %arg11[%c72_174, %c0_175], %194 {strides = array<i32>} : memref<216x512xf32, #tpu.memory_space<vmem>>, vector<8x512xf32>,
    %c0_176 = arith.constant 0 : index
    %c65_177 = arith.constant 65 : index
    %196 = vector.load %arg10[%c0_176, %c65_177] : memref<8x658xf32, #tpu.memory_space<vmem>>, vector<8x512xf32>
    %c10_178 = arith.constant 10 : index
    %c0_179 = arith.constant 0 : index
    %197 = vector.load %arg2[%c10_178, %c0_179] : memref<27x512xf32, #tpu.memory_space<vmem>>, vector<1x512xf32>
    %198 = vector.broadcast %197 : vector<1x512xf32> to vector<8x512xf32>
    %199 = arith.mulf %196, %198 : vector<8x512xf32>
    %c80_180 = arith.constant 80 : index
    %c0_181 = arith.constant 0 : index
    %200 = vector.load %arg11[%c80_180, %c0_181] : memref<216x512xf32, #tpu.memory_space<vmem>>, vector<8x512xf32>
    tpu.vector_store %arg11[%c80_180, %c0_181], %199 {strides = array<i32>} : memref<216x512xf32, #tpu.memory_space<vmem>>, vector<8x512xf32>,
    %c0_182 = arith.constant 0 : index
    %c66_183 = arith.constant 66 : index
    %201 = vector.load %arg10[%c0_182, %c66_183] : memref<8x658xf32, #tpu.memory_space<vmem>>, vector<8x512xf32>
    %c11_184 = arith.constant 11 : index
    %c0_185 = arith.constant 0 : index
    %202 = vector.load %arg2[%c11_184, %c0_185] : memref<27x512xf32, #tpu.memory_space<vmem>>, vector<1x512xf32>
    %203 = vector.broadcast %202 : vector<1x512xf32> to vector<8x512xf32>
    %204 = arith.mulf %201, %203 : vector<8x512xf32>
    %c88_186 = arith.constant 88 : index
    %c0_187 = arith.constant 0 : index
    %205 = vector.load %arg11[%c88_186, %c0_187] : memref<216x512xf32, #tpu.memory_space<vmem>>, vector<8x512xf32>
    tpu.vector_store %arg11[%c88_186, %c0_187], %204 {strides = array<i32>} : memref<216x512xf32, #tpu.memory_space<vmem>>, vector<8x512xf32>,
    %c0_188 = arith.constant 0 : index
    %c72_189 = arith.constant 72 : index
    %206 = vector.load %arg10[%c0_188, %c72_189] : memref<8x658xf32, #tpu.memory_space<vmem>>, vector<8x512xf32>
    %c12_190 = arith.constant 12 : index
    %c0_191 = arith.constant 0 : index
    %207 = vector.load %arg2[%c12_190, %c0_191] : memref<27x512xf32, #tpu.memory_space<vmem>>, vector<1x512xf32>
    %208 = vector.broadcast %207 : vector<1x512xf32> to vector<8x512xf32>
    %209 = arith.mulf %206, %208 : vector<8x512xf32>
    %c96_192 = arith.constant 96 : index
    %c0_193 = arith.constant 0 : index
    %210 = vector.load %arg11[%c96_192, %c0_193] : memref<216x512xf32, #tpu.memory_space<vmem>>, vector<8x512xf32>
    tpu.vector_store %arg11[%c96_192, %c0_193], %209 {strides = array<i32>} : memref<216x512xf32, #tpu.memory_space<vmem>>, vector<8x512xf32>,
    %c0_194 = arith.constant 0 : index
    %c73_195 = arith.constant 73 : index
    %211 = vector.load %arg10[%c0_194, %c73_195] : memref<8x658xf32, #tpu.memory_space<vmem>>, vector<8x512xf32>
    %c104_196 = arith.constant 104 : index
    %c0_197 = arith.constant 0 : index
    %212 = vector.load %arg11[%c104_196, %c0_197] : memref<216x512xf32, #tpu.memory_space<vmem>>, vector<8x512xf32>
    tpu.vector_store %arg11[%c104_196, %c0_197], %211 {strides = array<i32>} : memref<216x512xf32, #tpu.memory_space<vmem>>, vector<8x512xf32>,
    %c0_198 = arith.constant 0 : index
    %c74_199 = arith.constant 74 : index
    %213 = vector.load %arg10[%c0_198, %c74_199] : memref<8x658xf32, #tpu.memory_space<vmem>>, vector<8x512xf32>
    %c14_200 = arith.constant 14 : index
    %c0_201 = arith.constant 0 : index
    %214 = vector.load %arg2[%c14_200, %c0_201] : memref<27x512xf32, #tpu.memory_space<vmem>>, vector<1x512xf32>
    %215 = vector.broadcast %214 : vector<1x512xf32> to vector<8x512xf32>
    %216 = arith.mulf %213, %215 : vector<8x512xf32>
    %c112_202 = arith.constant 112 : index
    %c0_203 = arith.constant 0 : index
    %217 = vector.load %arg11[%c112_202, %c0_203] : memref<216x512xf32, #tpu.memory_space<vmem>>, vector<8x512xf32>
    tpu.vector_store %arg11[%c112_202, %c0_203], %216 {strides = array<i32>} : memref<216x512xf32, #tpu.memory_space<vmem>>, vector<8x512xf32>,
    %c0_204 = arith.constant 0 : index
    %c80_205 = arith.constant 80 : index
    %218 = vector.load %arg10[%c0_204, %c80_205] : memref<8x658xf32, #tpu.memory_space<vmem>>, vector<8x512xf32>
    %c15_206 = arith.constant 15 : index
    %c0_207 = arith.constant 0 : index
    %219 = vector.load %arg2[%c15_206, %c0_207] : memref<27x512xf32, #tpu.memory_space<vmem>>, vector<1x512xf32>
    %220 = vector.broadcast %219 : vector<1x512xf32> to vector<8x512xf32>
    %221 = arith.mulf %218, %220 : vector<8x512xf32>
    %c120_208 = arith.constant 120 : index
    %c0_209 = arith.constant 0 : index
    %222 = vector.load %arg11[%c120_208, %c0_209] : memref<216x512xf32, #tpu.memory_space<vmem>>, vector<8x512xf32>
    tpu.vector_store %arg11[%c120_208, %c0_209], %221 {strides = array<i32>} : memref<216x512xf32, #tpu.memory_space<vmem>>, vector<8x512xf32>,
    %c0_210 = arith.constant 0 : index
    %c81_211 = arith.constant 81 : index
    %223 = vector.load %arg10[%c0_210, %c81_211] : memref<8x658xf32, #tpu.memory_space<vmem>>, vector<8x512xf32>
    %c16_212 = arith.constant 16 : index
    %c0_213 = arith.constant 0 : index
    %224 = vector.load %arg2[%c16_212, %c0_213] : memref<27x512xf32, #tpu.memory_space<vmem>>, vector<1x512xf32>
    %225 = vector.broadcast %224 : vector<1x512xf32> to vector<8x512xf32>
    %226 = arith.mulf %223, %225 : vector<8x512xf32>
    %c128_214 = arith.constant 128 : index
    %c0_215 = arith.constant 0 : index
    %227 = vector.load %arg11[%c128_214, %c0_215] : memref<216x512xf32, #tpu.memory_space<vmem>>, vector<8x512xf32>
    tpu.vector_store %arg11[%c128_214, %c0_215], %226 {strides = array<i32>} : memref<216x512xf32, #tpu.memory_space<vmem>>, vector<8x512xf32>,
    %c0_216 = arith.constant 0 : index
    %c82_217 = arith.constant 82 : index
    %228 = vector.load %arg10[%c0_216, %c82_217] : memref<8x658xf32, #tpu.memory_space<vmem>>, vector<8x512xf32>
    %c17_218 = arith.constant 17 : index
    %c0_219 = arith.constant 0 : index
    %229 = vector.load %arg2[%c17_218, %c0_219] : memref<27x512xf32, #tpu.memory_space<vmem>>, vector<1x512xf32>
    %230 = vector.broadcast %229 : vector<1x512xf32> to vector<8x512xf32>
    %231 = arith.mulf %228, %230 : vector<8x512xf32>
    %c136_220 = arith.constant 136 : index
    %c0_221 = arith.constant 0 : index
    %232 = vector.load %arg11[%c136_220, %c0_221] : memref<216x512xf32, #tpu.memory_space<vmem>>, vector<8x512xf32>
    tpu.vector_store %arg11[%c136_220, %c0_221], %231 {strides = array<i32>} : memref<216x512xf32, #tpu.memory_space<vmem>>, vector<8x512xf32>,
    %c0_222 = arith.constant 0 : index
    %c128_223 = arith.constant 128 : index
    %233 = vector.load %arg10[%c0_222, %c128_223] : memref<8x658xf32, #tpu.memory_space<vmem>>, vector<8x512xf32>
    %c18_224 = arith.constant 18 : index
    %c0_225 = arith.constant 0 : index
    %234 = vector.load %arg2[%c18_224, %c0_225] : memref<27x512xf32, #tpu.memory_space<vmem>>, vector<1x512xf32>
    %235 = vector.broadcast %234 : vector<1x512xf32> to vector<8x512xf32>
    %236 = arith.mulf %233, %235 : vector<8x512xf32>
    %c144_226 = arith.constant 144 : index
    %c0_227 = arith.constant 0 : index
    %237 = vector.load %arg11[%c144_226, %c0_227] : memref<216x512xf32, #tpu.memory_space<vmem>>, vector<8x512xf32>
    tpu.vector_store %arg11[%c144_226, %c0_227], %236 {strides = array<i32>} : memref<216x512xf32, #tpu.memory_space<vmem>>, vector<8x512xf32>,
    %c0_228 = arith.constant 0 : index
    %c129_229 = arith.constant 129 : index
    %238 = vector.load %arg10[%c0_228, %c129_229] : memref<8x658xf32, #tpu.memory_space<vmem>>, vector<8x512xf32>
    %c19_230 = arith.constant 19 : index
    %c0_231 = arith.constant 0 : index
    %239 = vector.load %arg2[%c19_230, %c0_231] : memref<27x512xf32, #tpu.memory_space<vmem>>, vector<1x512xf32>
    %240 = vector.broadcast %239 : vector<1x512xf32> to vector<8x512xf32>
    %241 = arith.mulf %238, %240 : vector<8x512xf32>
    %c152_232 = arith.constant 152 : index
    %c0_233 = arith.constant 0 : index
    %242 = vector.load %arg11[%c152_232, %c0_233] : memref<216x512xf32, #tpu.memory_space<vmem>>, vector<8x512xf32>
    tpu.vector_store %arg11[%c152_232, %c0_233], %241 {strides = array<i32>} : memref<216x512xf32, #tpu.memory_space<vmem>>, vector<8x512xf32>,
    %c0_234 = arith.constant 0 : index
    %c130_235 = arith.constant 130 : index
    %243 = vector.load %arg10[%c0_234, %c130_235] : memref<8x658xf32, #tpu.memory_space<vmem>>, vector<8x512xf32>
    %c20_236 = arith.constant 20 : index
    %c0_237 = arith.constant 0 : index
    %244 = vector.load %arg2[%c20_236, %c0_237] : memref<27x512xf32, #tpu.memory_space<vmem>>, vector<1x512xf32>
    %245 = vector.broadcast %244 : vector<1x512xf32> to vector<8x512xf32>
    %246 = arith.mulf %243, %245 : vector<8x512xf32>
    %c160_238 = arith.constant 160 : index
    %c0_239 = arith.constant 0 : index
    %247 = vector.load %arg11[%c160_238, %c0_239] : memref<216x512xf32, #tpu.memory_space<vmem>>, vector<8x512xf32>
    tpu.vector_store %arg11[%c160_238, %c0_239], %246 {strides = array<i32>} : memref<216x512xf32, #tpu.memory_space<vmem>>, vector<8x512xf32>,
    %c0_240 = arith.constant 0 : index
    %c136_241 = arith.constant 136 : index
    %248 = vector.load %arg10[%c0_240, %c136_241] : memref<8x658xf32, #tpu.memory_space<vmem>>, vector<8x512xf32>
    %c21_242 = arith.constant 21 : index
    %c0_243 = arith.constant 0 : index
    %249 = vector.load %arg2[%c21_242, %c0_243] : memref<27x512xf32, #tpu.memory_space<vmem>>, vector<1x512xf32>
    %250 = vector.broadcast %249 : vector<1x512xf32> to vector<8x512xf32>
    %251 = arith.mulf %248, %250 : vector<8x512xf32>
    %c168_244 = arith.constant 168 : index
    %c0_245 = arith.constant 0 : index
    %252 = vector.load %arg11[%c168_244, %c0_245] : memref<216x512xf32, #tpu.memory_space<vmem>>, vector<8x512xf32>
    tpu.vector_store %arg11[%c168_244, %c0_245], %251 {strides = array<i32>} : memref<216x512xf32, #tpu.memory_space<vmem>>, vector<8x512xf32>,
    %c0_246 = arith.constant 0 : index
    %c137_247 = arith.constant 137 : index
    %253 = vector.load %arg10[%c0_246, %c137_247] : memref<8x658xf32, #tpu.memory_space<vmem>>, vector<8x512xf32>
    %c22_248 = arith.constant 22 : index
    %c0_249 = arith.constant 0 : index
    %254 = vector.load %arg2[%c22_248, %c0_249] : memref<27x512xf32, #tpu.memory_space<vmem>>, vector<1x512xf32>
    %255 = vector.broadcast %254 : vector<1x512xf32> to vector<8x512xf32>
    %256 = arith.mulf %253, %255 : vector<8x512xf32>
    %c176_250 = arith.constant 176 : index
    %c0_251 = arith.constant 0 : index
    %257 = vector.load %arg11[%c176_250, %c0_251] : memref<216x512xf32, #tpu.memory_space<vmem>>, vector<8x512xf32>
    tpu.vector_store %arg11[%c176_250, %c0_251], %256 {strides = array<i32>} : memref<216x512xf32, #tpu.memory_space<vmem>>, vector<8x512xf32>,
    %c0_252 = arith.constant 0 : index
    %c138_253 = arith.constant 138 : index
    %258 = vector.load %arg10[%c0_252, %c138_253] : memref<8x658xf32, #tpu.memory_space<vmem>>, vector<8x512xf32>
    %c23_254 = arith.constant 23 : index
    %c0_255 = arith.constant 0 : index
    %259 = vector.load %arg2[%c23_254, %c0_255] : memref<27x512xf32, #tpu.memory_space<vmem>>, vector<1x512xf32>
    %260 = vector.broadcast %259 : vector<1x512xf32> to vector<8x512xf32>
    %261 = arith.mulf %258, %260 : vector<8x512xf32>
    %c184_256 = arith.constant 184 : index
    %c0_257 = arith.constant 0 : index
    %262 = vector.load %arg11[%c184_256, %c0_257] : memref<216x512xf32, #tpu.memory_space<vmem>>, vector<8x512xf32>
    tpu.vector_store %arg11[%c184_256, %c0_257], %261 {strides = array<i32>} : memref<216x512xf32, #tpu.memory_space<vmem>>, vector<8x512xf32>,
    %c0_258 = arith.constant 0 : index
    %c144_259 = arith.constant 144 : index
    %263 = vector.load %arg10[%c0_258, %c144_259] : memref<8x658xf32, #tpu.memory_space<vmem>>, vector<8x512xf32>
    %c24_260 = arith.constant 24 : index
    %c0_261 = arith.constant 0 : index
    %264 = vector.load %arg2[%c24_260, %c0_261] : memref<27x512xf32, #tpu.memory_space<vmem>>, vector<1x512xf32>
    %265 = vector.broadcast %264 : vector<1x512xf32> to vector<8x512xf32>
    %266 = arith.mulf %263, %265 : vector<8x512xf32>
    %c192_262 = arith.constant 192 : index
    %c0_263 = arith.constant 0 : index
    %267 = vector.load %arg11[%c192_262, %c0_263] : memref<216x512xf32, #tpu.memory_space<vmem>>, vector<8x512xf32>
    tpu.vector_store %arg11[%c192_262, %c0_263], %266 {strides = array<i32>} : memref<216x512xf32, #tpu.memory_space<vmem>>, vector<8x512xf32>,
    %c0_264 = arith.constant 0 : index
    %c145_265 = arith.constant 145 : index
    %268 = vector.load %arg10[%c0_264, %c145_265] : memref<8x658xf32, #tpu.memory_space<vmem>>, vector<8x512xf32>
    %c25_266 = arith.constant 25 : index
    %c0_267 = arith.constant 0 : index
    %269 = vector.load %arg2[%c25_266, %c0_267] : memref<27x512xf32, #tpu.memory_space<vmem>>, vector<1x512xf32>
    %270 = vector.broadcast %269 : vector<1x512xf32> to vector<8x512xf32>
    %271 = arith.mulf %268, %270 : vector<8x512xf32>
    %c200_268 = arith.constant 200 : index
    %c0_269 = arith.constant 0 : index
    %272 = vector.load %arg11[%c200_268, %c0_269] : memref<216x512xf32, #tpu.memory_space<vmem>>, vector<8x512xf32>
    tpu.vector_store %arg11[%c200_268, %c0_269], %271 {strides = array<i32>} : memref<216x512xf32, #tpu.memory_space<vmem>>, vector<8x512xf32>,
    %c0_270 = arith.constant 0 : index
    %c146_271 = arith.constant 146 : index
    %273 = vector.load %arg10[%c0_270, %c146_271] : memref<8x658xf32, #tpu.memory_space<vmem>>, vector<8x512xf32>
    %c26_272 = arith.constant 26 : index
    %c0_273 = arith.constant 0 : index
    %274 = vector.load %arg2[%c26_272, %c0_273] : memref<27x512xf32, #tpu.memory_space<vmem>>, vector<1x512xf32>
    %275 = vector.broadcast %274 : vector<1x512xf32> to vector<8x512xf32>
    %276 = arith.mulf %273, %275 : vector<8x512xf32>
    %c208_274 = arith.constant 208 : index
    %c0_275 = arith.constant 0 : index
    %277 = vector.load %arg11[%c208_274, %c0_275] : memref<216x512xf32, #tpu.memory_space<vmem>>, vector<8x512xf32>
    tpu.vector_store %arg11[%c208_274, %c0_275], %276 {strides = array<i32>} : memref<216x512xf32, #tpu.memory_space<vmem>>, vector<8x512xf32>,
    %c0_276 = arith.constant 0 : index
    %c0_277 = arith.constant 0 : index
    %278 = vector.load %arg5[%c0_276, %c0_277] : memref<8x216xf32, #tpu.memory_space<vmem>>, vector<8x216xf32>
    %c0_278 = arith.constant 0 : index
    %c0_279 = arith.constant 0 : index
    %279 = vector.load %arg11[%c0_278, %c0_279] : memref<216x512xf32, #tpu.memory_space<vmem>>, vector<216x512xf32>
    %cst_280 = arith.constant dense<0.000000e+00> : vector<8x512xf32>
    %280 = tpu.matmul %278, %279, %cst_280 {dimension_numbers = #tpu.dot_dimension_numbers<[1], [0], [0], [1], [0, 0, 1, 1], [], []>} : vector<8x216xf32>, vector<216x512xf32>, vector<8x512xf32> -> vector<8x512xf32>
    %c0_281 = arith.constant 0 : index
    %c0_282 = arith.constant 0 : index
    %281 = vector.load %arg6[%c0_281, %c0_282] : memref<8x1xf32, #tpu.memory_space<vmem>>, vector<8x1xf32>
    %282 = vector.broadcast %281 : vector<8x1xf32> to vector<8x512xf32>
    %283 = arith.addf %280, %282 : vector<8x512xf32>
    %cst_283 = arith.constant 0.000000e+00 : f32
    %284 = vector.broadcast %cst_283 : f32 to vector<8x512xf32>
    %285 = arith.maximumf %283, %284 : vector<8x512xf32>
    %c0_284 = arith.constant 0 : index
    %c73_285 = arith.constant 73 : index
    %286 = vector.load %arg10[%c0_284, %c73_285] : memref<8x658xf32, #tpu.memory_space<vmem>>, vector<8x512xf32>
    tpu.vector_store %arg10[%c0_284, %c73_285], %285 {strides = array<i32>} : memref<8x658xf32, #tpu.memory_space<vmem>>, vector<8x512xf32>,
    %c0_286 = arith.constant 0 : index
    %c0_287 = arith.constant 0 : index
    %287 = vector.load %arg10[%c0_286, %c0_287] : memref<8x658xf32, #tpu.memory_space<vmem>>, vector<8x512xf32>
    %c0_288 = arith.constant 0 : index
    %c0_289 = arith.constant 0 : index
    %288 = vector.load %arg2[%c0_288, %c0_289] : memref<27x512xf32, #tpu.memory_space<vmem>>, vector<1x512xf32>
    %289 = vector.broadcast %288 : vector<1x512xf32> to vector<8x512xf32>
    %290 = arith.mulf %287, %289 : vector<8x512xf32>
    %c0_290 = arith.constant 0 : index
    %c0_291 = arith.constant 0 : index
    %291 = vector.load %arg11[%c0_290, %c0_291] : memref<216x512xf32, #tpu.memory_space<vmem>>, vector<8x512xf32>
    tpu.vector_store %arg11[%c0_290, %c0_291], %290 {strides = array<i32>} : memref<216x512xf32, #tpu.memory_space<vmem>>, vector<8x512xf32>,
    %c0_292 = arith.constant 0 : index
    %c1_293 = arith.constant 1 : index
    %292 = vector.load %arg10[%c0_292, %c1_293] : memref<8x658xf32, #tpu.memory_space<vmem>>, vector<8x512xf32>
    %c1_294 = arith.constant 1 : index
    %c0_295 = arith.constant 0 : index
    %293 = vector.load %arg2[%c1_294, %c0_295] : memref<27x512xf32, #tpu.memory_space<vmem>>, vector<1x512xf32>
    %294 = vector.broadcast %293 : vector<1x512xf32> to vector<8x512xf32>
    %295 = arith.mulf %292, %294 : vector<8x512xf32>
    %c8_296 = arith.constant 8 : index
    %c0_297 = arith.constant 0 : index
    %296 = vector.load %arg11[%c8_296, %c0_297] : memref<216x512xf32, #tpu.memory_space<vmem>>, vector<8x512xf32>
    tpu.vector_store %arg11[%c8_296, %c0_297], %295 {strides = array<i32>} : memref<216x512xf32, #tpu.memory_space<vmem>>, vector<8x512xf32>,
    %c0_298 = arith.constant 0 : index
    %c2_299 = arith.constant 2 : index
    %297 = vector.load %arg10[%c0_298, %c2_299] : memref<8x658xf32, #tpu.memory_space<vmem>>, vector<8x512xf32>
    %c2_300 = arith.constant 2 : index
    %c0_301 = arith.constant 0 : index
    %298 = vector.load %arg2[%c2_300, %c0_301] : memref<27x512xf32, #tpu.memory_space<vmem>>, vector<1x512xf32>
    %299 = vector.broadcast %298 : vector<1x512xf32> to vector<8x512xf32>
    %300 = arith.mulf %297, %299 : vector<8x512xf32>
    %c16_302 = arith.constant 16 : index
    %c0_303 = arith.constant 0 : index
    %301 = vector.load %arg11[%c16_302, %c0_303] : memref<216x512xf32, #tpu.memory_space<vmem>>, vector<8x512xf32>
    tpu.vector_store %arg11[%c16_302, %c0_303], %300 {strides = array<i32>} : memref<216x512xf32, #tpu.memory_space<vmem>>, vector<8x512xf32>,
    %c0_304 = arith.constant 0 : index
    %c8_305 = arith.constant 8 : index
    %302 = vector.load %arg10[%c0_304, %c8_305] : memref<8x658xf32, #tpu.memory_space<vmem>>, vector<8x512xf32>
    %c3_306 = arith.constant 3 : index
    %c0_307 = arith.constant 0 : index
    %303 = vector.load %arg2[%c3_306, %c0_307] : memref<27x512xf32, #tpu.memory_space<vmem>>, vector<1x512xf32>
    %304 = vector.broadcast %303 : vector<1x512xf32> to vector<8x512xf32>
    %305 = arith.mulf %302, %304 : vector<8x512xf32>
    %c24_308 = arith.constant 24 : index
    %c0_309 = arith.constant 0 : index
    %306 = vector.load %arg11[%c24_308, %c0_309] : memref<216x512xf32, #tpu.memory_space<vmem>>, vector<8x512xf32>
    tpu.vector_store %arg11[%c24_308, %c0_309], %305 {strides = array<i32>} : memref<216x512xf32, #tpu.memory_space<vmem>>, vector<8x512xf32>,
    %c0_310 = arith.constant 0 : index
    %c9_311 = arith.constant 9 : index
    %307 = vector.load %arg10[%c0_310, %c9_311] : memref<8x658xf32, #tpu.memory_space<vmem>>, vector<8x512xf32>
    %c4_312 = arith.constant 4 : index
    %c0_313 = arith.constant 0 : index
    %308 = vector.load %arg2[%c4_312, %c0_313] : memref<27x512xf32, #tpu.memory_space<vmem>>, vector<1x512xf32>
    %309 = vector.broadcast %308 : vector<1x512xf32> to vector<8x512xf32>
    %310 = arith.mulf %307, %309 : vector<8x512xf32>
    %c32_314 = arith.constant 32 : index
    %c0_315 = arith.constant 0 : index
    %311 = vector.load %arg11[%c32_314, %c0_315] : memref<216x512xf32, #tpu.memory_space<vmem>>, vector<8x512xf32>
    tpu.vector_store %arg11[%c32_314, %c0_315], %310 {strides = array<i32>} : memref<216x512xf32, #tpu.memory_space<vmem>>, vector<8x512xf32>,
    %c0_316 = arith.constant 0 : index
    %c10_317 = arith.constant 10 : index
    %312 = vector.load %arg10[%c0_316, %c10_317] : memref<8x658xf32, #tpu.memory_space<vmem>>, vector<8x512xf32>
    %c5_318 = arith.constant 5 : index
    %c0_319 = arith.constant 0 : index
    %313 = vector.load %arg2[%c5_318, %c0_319] : memref<27x512xf32, #tpu.memory_space<vmem>>, vector<1x512xf32>
    %314 = vector.broadcast %313 : vector<1x512xf32> to vector<8x512xf32>
    %315 = arith.mulf %312, %314 : vector<8x512xf32>
    %c40_320 = arith.constant 40 : index
    %c0_321 = arith.constant 0 : index
    %316 = vector.load %arg11[%c40_320, %c0_321] : memref<216x512xf32, #tpu.memory_space<vmem>>, vector<8x512xf32>
    tpu.vector_store %arg11[%c40_320, %c0_321], %315 {strides = array<i32>} : memref<216x512xf32, #tpu.memory_space<vmem>>, vector<8x512xf32>,
    %c0_322 = arith.constant 0 : index
    %c16_323 = arith.constant 16 : index
    %317 = vector.load %arg10[%c0_322, %c16_323] : memref<8x658xf32, #tpu.memory_space<vmem>>, vector<8x512xf32>
    %c6_324 = arith.constant 6 : index
    %c0_325 = arith.constant 0 : index
    %318 = vector.load %arg2[%c6_324, %c0_325] : memref<27x512xf32, #tpu.memory_space<vmem>>, vector<1x512xf32>
    %319 = vector.broadcast %318 : vector<1x512xf32> to vector<8x512xf32>
    %320 = arith.mulf %317, %319 : vector<8x512xf32>
    %c48_326 = arith.constant 48 : index
    %c0_327 = arith.constant 0 : index
    %321 = vector.load %arg11[%c48_326, %c0_327] : memref<216x512xf32, #tpu.memory_space<vmem>>, vector<8x512xf32>
    tpu.vector_store %arg11[%c48_326, %c0_327], %320 {strides = array<i32>} : memref<216x512xf32, #tpu.memory_space<vmem>>, vector<8x512xf32>,
    %c0_328 = arith.constant 0 : index
    %c17_329 = arith.constant 17 : index
    %322 = vector.load %arg10[%c0_328, %c17_329] : memref<8x658xf32, #tpu.memory_space<vmem>>, vector<8x512xf32>
    %c7_330 = arith.constant 7 : index
    %c0_331 = arith.constant 0 : index
    %323 = vector.load %arg2[%c7_330, %c0_331] : memref<27x512xf32, #tpu.memory_space<vmem>>, vector<1x512xf32>
    %324 = vector.broadcast %323 : vector<1x512xf32> to vector<8x512xf32>
    %325 = arith.mulf %322, %324 : vector<8x512xf32>
    %c56_332 = arith.constant 56 : index
    %c0_333 = arith.constant 0 : index
    %326 = vector.load %arg11[%c56_332, %c0_333] : memref<216x512xf32, #tpu.memory_space<vmem>>, vector<8x512xf32>
    tpu.vector_store %arg11[%c56_332, %c0_333], %325 {strides = array<i32>} : memref<216x512xf32, #tpu.memory_space<vmem>>, vector<8x512xf32>,
    %c0_334 = arith.constant 0 : index
    %c18_335 = arith.constant 18 : index
    %327 = vector.load %arg10[%c0_334, %c18_335] : memref<8x658xf32, #tpu.memory_space<vmem>>, vector<8x512xf32>
    %c8_336 = arith.constant 8 : index
    %c0_337 = arith.constant 0 : index
    %328 = vector.load %arg2[%c8_336, %c0_337] : memref<27x512xf32, #tpu.memory_space<vmem>>, vector<1x512xf32>
    %329 = vector.broadcast %328 : vector<1x512xf32> to vector<8x512xf32>
    %330 = arith.mulf %327, %329 : vector<8x512xf32>
    %c64_338 = arith.constant 64 : index
    %c0_339 = arith.constant 0 : index
    %331 = vector.load %arg11[%c64_338, %c0_339] : memref<216x512xf32, #tpu.memory_space<vmem>>, vector<8x512xf32>
    tpu.vector_store %arg11[%c64_338, %c0_339], %330 {strides = array<i32>} : memref<216x512xf32, #tpu.memory_space<vmem>>, vector<8x512xf32>,
    %c0_340 = arith.constant 0 : index
    %c64_341 = arith.constant 64 : index
    %332 = vector.load %arg10[%c0_340, %c64_341] : memref<8x658xf32, #tpu.memory_space<vmem>>, vector<8x512xf32>
    %c9_342 = arith.constant 9 : index
    %c0_343 = arith.constant 0 : index
    %333 = vector.load %arg2[%c9_342, %c0_343] : memref<27x512xf32, #tpu.memory_space<vmem>>, vector<1x512xf32>
    %334 = vector.broadcast %333 : vector<1x512xf32> to vector<8x512xf32>
    %335 = arith.mulf %332, %334 : vector<8x512xf32>
    %c72_344 = arith.constant 72 : index
    %c0_345 = arith.constant 0 : index
    %336 = vector.load %arg11[%c72_344, %c0_345] : memref<216x512xf32, #tpu.memory_space<vmem>>, vector<8x512xf32>
    tpu.vector_store %arg11[%c72_344, %c0_345], %335 {strides = array<i32>} : memref<216x512xf32, #tpu.memory_space<vmem>>, vector<8x512xf32>,
    %c0_346 = arith.constant 0 : index
    %c65_347 = arith.constant 65 : index
    %337 = vector.load %arg10[%c0_346, %c65_347] : memref<8x658xf32, #tpu.memory_space<vmem>>, vector<8x512xf32>
    %c10_348 = arith.constant 10 : index
    %c0_349 = arith.constant 0 : index
    %338 = vector.load %arg2[%c10_348, %c0_349] : memref<27x512xf32, #tpu.memory_space<vmem>>, vector<1x512xf32>
    %339 = vector.broadcast %338 : vector<1x512xf32> to vector<8x512xf32>
    %340 = arith.mulf %337, %339 : vector<8x512xf32>
    %c80_350 = arith.constant 80 : index
    %c0_351 = arith.constant 0 : index
    %341 = vector.load %arg11[%c80_350, %c0_351] : memref<216x512xf32, #tpu.memory_space<vmem>>, vector<8x512xf32>
    tpu.vector_store %arg11[%c80_350, %c0_351], %340 {strides = array<i32>} : memref<216x512xf32, #tpu.memory_space<vmem>>, vector<8x512xf32>,
    %c0_352 = arith.constant 0 : index
    %c66_353 = arith.constant 66 : index
    %342 = vector.load %arg10[%c0_352, %c66_353] : memref<8x658xf32, #tpu.memory_space<vmem>>, vector<8x512xf32>
    %c11_354 = arith.constant 11 : index
    %c0_355 = arith.constant 0 : index
    %343 = vector.load %arg2[%c11_354, %c0_355] : memref<27x512xf32, #tpu.memory_space<vmem>>, vector<1x512xf32>
    %344 = vector.broadcast %343 : vector<1x512xf32> to vector<8x512xf32>
    %345 = arith.mulf %342, %344 : vector<8x512xf32>
    %c88_356 = arith.constant 88 : index
    %c0_357 = arith.constant 0 : index
    %346 = vector.load %arg11[%c88_356, %c0_357] : memref<216x512xf32, #tpu.memory_space<vmem>>, vector<8x512xf32>
    tpu.vector_store %arg11[%c88_356, %c0_357], %345 {strides = array<i32>} : memref<216x512xf32, #tpu.memory_space<vmem>>, vector<8x512xf32>,
    %c0_358 = arith.constant 0 : index
    %c72_359 = arith.constant 72 : index
    %347 = vector.load %arg10[%c0_358, %c72_359] : memref<8x658xf32, #tpu.memory_space<vmem>>, vector<8x512xf32>
    %c12_360 = arith.constant 12 : index
    %c0_361 = arith.constant 0 : index
    %348 = vector.load %arg2[%c12_360, %c0_361] : memref<27x512xf32, #tpu.memory_space<vmem>>, vector<1x512xf32>
    %349 = vector.broadcast %348 : vector<1x512xf32> to vector<8x512xf32>
    %350 = arith.mulf %347, %349 : vector<8x512xf32>
    %c96_362 = arith.constant 96 : index
    %c0_363 = arith.constant 0 : index
    %351 = vector.load %arg11[%c96_362, %c0_363] : memref<216x512xf32, #tpu.memory_space<vmem>>, vector<8x512xf32>
    tpu.vector_store %arg11[%c96_362, %c0_363], %350 {strides = array<i32>} : memref<216x512xf32, #tpu.memory_space<vmem>>, vector<8x512xf32>,
    %c0_364 = arith.constant 0 : index
    %c73_365 = arith.constant 73 : index
    %352 = vector.load %arg10[%c0_364, %c73_365] : memref<8x658xf32, #tpu.memory_space<vmem>>, vector<8x512xf32>
    %c104_366 = arith.constant 104 : index
    %c0_367 = arith.constant 0 : index
    %353 = vector.load %arg11[%c104_366, %c0_367] : memref<216x512xf32, #tpu.memory_space<vmem>>, vector<8x512xf32>
    tpu.vector_store %arg11[%c104_366, %c0_367], %352 {strides = array<i32>} : memref<216x512xf32, #tpu.memory_space<vmem>>, vector<8x512xf32>,
    %c0_368 = arith.constant 0 : index
    %c74_369 = arith.constant 74 : index
    %354 = vector.load %arg10[%c0_368, %c74_369] : memref<8x658xf32, #tpu.memory_space<vmem>>, vector<8x512xf32>
    %c14_370 = arith.constant 14 : index
    %c0_371 = arith.constant 0 : index
    %355 = vector.load %arg2[%c14_370, %c0_371] : memref<27x512xf32, #tpu.memory_space<vmem>>, vector<1x512xf32>
    %356 = vector.broadcast %355 : vector<1x512xf32> to vector<8x512xf32>
    %357 = arith.mulf %354, %356 : vector<8x512xf32>
    %c112_372 = arith.constant 112 : index
    %c0_373 = arith.constant 0 : index
    %358 = vector.load %arg11[%c112_372, %c0_373] : memref<216x512xf32, #tpu.memory_space<vmem>>, vector<8x512xf32>
    tpu.vector_store %arg11[%c112_372, %c0_373], %357 {strides = array<i32>} : memref<216x512xf32, #tpu.memory_space<vmem>>, vector<8x512xf32>,
    %c0_374 = arith.constant 0 : index
    %c80_375 = arith.constant 80 : index
    %359 = vector.load %arg10[%c0_374, %c80_375] : memref<8x658xf32, #tpu.memory_space<vmem>>, vector<8x512xf32>
    %c15_376 = arith.constant 15 : index
    %c0_377 = arith.constant 0 : index
    %360 = vector.load %arg2[%c15_376, %c0_377] : memref<27x512xf32, #tpu.memory_space<vmem>>, vector<1x512xf32>
    %361 = vector.broadcast %360 : vector<1x512xf32> to vector<8x512xf32>
    %362 = arith.mulf %359, %361 : vector<8x512xf32>
    %c120_378 = arith.constant 120 : index
    %c0_379 = arith.constant 0 : index
    %363 = vector.load %arg11[%c120_378, %c0_379] : memref<216x512xf32, #tpu.memory_space<vmem>>, vector<8x512xf32>
    tpu.vector_store %arg11[%c120_378, %c0_379], %362 {strides = array<i32>} : memref<216x512xf32, #tpu.memory_space<vmem>>, vector<8x512xf32>,
    %c0_380 = arith.constant 0 : index
    %c81_381 = arith.constant 81 : index
    %364 = vector.load %arg10[%c0_380, %c81_381] : memref<8x658xf32, #tpu.memory_space<vmem>>, vector<8x512xf32>
    %c16_382 = arith.constant 16 : index
    %c0_383 = arith.constant 0 : index
    %365 = vector.load %arg2[%c16_382, %c0_383] : memref<27x512xf32, #tpu.memory_space<vmem>>, vector<1x512xf32>
    %366 = vector.broadcast %365 : vector<1x512xf32> to vector<8x512xf32>
    %367 = arith.mulf %364, %366 : vector<8x512xf32>
    %c128_384 = arith.constant 128 : index
    %c0_385 = arith.constant 0 : index
    %368 = vector.load %arg11[%c128_384, %c0_385] : memref<216x512xf32, #tpu.memory_space<vmem>>, vector<8x512xf32>
    tpu.vector_store %arg11[%c128_384, %c0_385], %367 {strides = array<i32>} : memref<216x512xf32, #tpu.memory_space<vmem>>, vector<8x512xf32>,
    %c0_386 = arith.constant 0 : index
    %c82_387 = arith.constant 82 : index
    %369 = vector.load %arg10[%c0_386, %c82_387] : memref<8x658xf32, #tpu.memory_space<vmem>>, vector<8x512xf32>
    %c17_388 = arith.constant 17 : index
    %c0_389 = arith.constant 0 : index
    %370 = vector.load %arg2[%c17_388, %c0_389] : memref<27x512xf32, #tpu.memory_space<vmem>>, vector<1x512xf32>
    %371 = vector.broadcast %370 : vector<1x512xf32> to vector<8x512xf32>
    %372 = arith.mulf %369, %371 : vector<8x512xf32>
    %c136_390 = arith.constant 136 : index
    %c0_391 = arith.constant 0 : index
    %373 = vector.load %arg11[%c136_390, %c0_391] : memref<216x512xf32, #tpu.memory_space<vmem>>, vector<8x512xf32>
    tpu.vector_store %arg11[%c136_390, %c0_391], %372 {strides = array<i32>} : memref<216x512xf32, #tpu.memory_space<vmem>>, vector<8x512xf32>,
    %c0_392 = arith.constant 0 : index
    %c128_393 = arith.constant 128 : index
    %374 = vector.load %arg10[%c0_392, %c128_393] : memref<8x658xf32, #tpu.memory_space<vmem>>, vector<8x512xf32>
    %c18_394 = arith.constant 18 : index
    %c0_395 = arith.constant 0 : index
    %375 = vector.load %arg2[%c18_394, %c0_395] : memref<27x512xf32, #tpu.memory_space<vmem>>, vector<1x512xf32>
    %376 = vector.broadcast %375 : vector<1x512xf32> to vector<8x512xf32>
    %377 = arith.mulf %374, %376 : vector<8x512xf32>
    %c144_396 = arith.constant 144 : index
    %c0_397 = arith.constant 0 : index
    %378 = vector.load %arg11[%c144_396, %c0_397] : memref<216x512xf32, #tpu.memory_space<vmem>>, vector<8x512xf32>
    tpu.vector_store %arg11[%c144_396, %c0_397], %377 {strides = array<i32>} : memref<216x512xf32, #tpu.memory_space<vmem>>, vector<8x512xf32>,
    %c0_398 = arith.constant 0 : index
    %c129_399 = arith.constant 129 : index
    %379 = vector.load %arg10[%c0_398, %c129_399] : memref<8x658xf32, #tpu.memory_space<vmem>>, vector<8x512xf32>
    %c19_400 = arith.constant 19 : index
    %c0_401 = arith.constant 0 : index
    %380 = vector.load %arg2[%c19_400, %c0_401] : memref<27x512xf32, #tpu.memory_space<vmem>>, vector<1x512xf32>
    %381 = vector.broadcast %380 : vector<1x512xf32> to vector<8x512xf32>
    %382 = arith.mulf %379, %381 : vector<8x512xf32>
    %c152_402 = arith.constant 152 : index
    %c0_403 = arith.constant 0 : index
    %383 = vector.load %arg11[%c152_402, %c0_403] : memref<216x512xf32, #tpu.memory_space<vmem>>, vector<8x512xf32>
    tpu.vector_store %arg11[%c152_402, %c0_403], %382 {strides = array<i32>} : memref<216x512xf32, #tpu.memory_space<vmem>>, vector<8x512xf32>,
    %c0_404 = arith.constant 0 : index
    %c130_405 = arith.constant 130 : index
    %384 = vector.load %arg10[%c0_404, %c130_405] : memref<8x658xf32, #tpu.memory_space<vmem>>, vector<8x512xf32>
    %c20_406 = arith.constant 20 : index
    %c0_407 = arith.constant 0 : index
    %385 = vector.load %arg2[%c20_406, %c0_407] : memref<27x512xf32, #tpu.memory_space<vmem>>, vector<1x512xf32>
    %386 = vector.broadcast %385 : vector<1x512xf32> to vector<8x512xf32>
    %387 = arith.mulf %384, %386 : vector<8x512xf32>
    %c160_408 = arith.constant 160 : index
    %c0_409 = arith.constant 0 : index
    %388 = vector.load %arg11[%c160_408, %c0_409] : memref<216x512xf32, #tpu.memory_space<vmem>>, vector<8x512xf32>
    tpu.vector_store %arg11[%c160_408, %c0_409], %387 {strides = array<i32>} : memref<216x512xf32, #tpu.memory_space<vmem>>, vector<8x512xf32>,
    %c0_410 = arith.constant 0 : index
    %c136_411 = arith.constant 136 : index
    %389 = vector.load %arg10[%c0_410, %c136_411] : memref<8x658xf32, #tpu.memory_space<vmem>>, vector<8x512xf32>
    %c21_412 = arith.constant 21 : index
    %c0_413 = arith.constant 0 : index
    %390 = vector.load %arg2[%c21_412, %c0_413] : memref<27x512xf32, #tpu.memory_space<vmem>>, vector<1x512xf32>
    %391 = vector.broadcast %390 : vector<1x512xf32> to vector<8x512xf32>
    %392 = arith.mulf %389, %391 : vector<8x512xf32>
    %c168_414 = arith.constant 168 : index
    %c0_415 = arith.constant 0 : index
    %393 = vector.load %arg11[%c168_414, %c0_415] : memref<216x512xf32, #tpu.memory_space<vmem>>, vector<8x512xf32>
    tpu.vector_store %arg11[%c168_414, %c0_415], %392 {strides = array<i32>} : memref<216x512xf32, #tpu.memory_space<vmem>>, vector<8x512xf32>,
    %c0_416 = arith.constant 0 : index
    %c137_417 = arith.constant 137 : index
    %394 = vector.load %arg10[%c0_416, %c137_417] : memref<8x658xf32, #tpu.memory_space<vmem>>, vector<8x512xf32>
    %c22_418 = arith.constant 22 : index
    %c0_419 = arith.constant 0 : index
    %395 = vector.load %arg2[%c22_418, %c0_419] : memref<27x512xf32, #tpu.memory_space<vmem>>, vector<1x512xf32>
    %396 = vector.broadcast %395 : vector<1x512xf32> to vector<8x512xf32>
    %397 = arith.mulf %394, %396 : vector<8x512xf32>
    %c176_420 = arith.constant 176 : index
    %c0_421 = arith.constant 0 : index
    %398 = vector.load %arg11[%c176_420, %c0_421] : memref<216x512xf32, #tpu.memory_space<vmem>>, vector<8x512xf32>
    tpu.vector_store %arg11[%c176_420, %c0_421], %397 {strides = array<i32>} : memref<216x512xf32, #tpu.memory_space<vmem>>, vector<8x512xf32>,
    %c0_422 = arith.constant 0 : index
    %c138_423 = arith.constant 138 : index
    %399 = vector.load %arg10[%c0_422, %c138_423] : memref<8x658xf32, #tpu.memory_space<vmem>>, vector<8x512xf32>
    %c23_424 = arith.constant 23 : index
    %c0_425 = arith.constant 0 : index
    %400 = vector.load %arg2[%c23_424, %c0_425] : memref<27x512xf32, #tpu.memory_space<vmem>>, vector<1x512xf32>
    %401 = vector.broadcast %400 : vector<1x512xf32> to vector<8x512xf32>
    %402 = arith.mulf %399, %401 : vector<8x512xf32>
    %c184_426 = arith.constant 184 : index
    %c0_427 = arith.constant 0 : index
    %403 = vector.load %arg11[%c184_426, %c0_427] : memref<216x512xf32, #tpu.memory_space<vmem>>, vector<8x512xf32>
    tpu.vector_store %arg11[%c184_426, %c0_427], %402 {strides = array<i32>} : memref<216x512xf32, #tpu.memory_space<vmem>>, vector<8x512xf32>,
    %c0_428 = arith.constant 0 : index
    %c144_429 = arith.constant 144 : index
    %404 = vector.load %arg10[%c0_428, %c144_429] : memref<8x658xf32, #tpu.memory_space<vmem>>, vector<8x512xf32>
    %c24_430 = arith.constant 24 : index
    %c0_431 = arith.constant 0 : index
    %405 = vector.load %arg2[%c24_430, %c0_431] : memref<27x512xf32, #tpu.memory_space<vmem>>, vector<1x512xf32>
    %406 = vector.broadcast %405 : vector<1x512xf32> to vector<8x512xf32>
    %407 = arith.mulf %404, %406 : vector<8x512xf32>
    %c192_432 = arith.constant 192 : index
    %c0_433 = arith.constant 0 : index
    %408 = vector.load %arg11[%c192_432, %c0_433] : memref<216x512xf32, #tpu.memory_space<vmem>>, vector<8x512xf32>
    tpu.vector_store %arg11[%c192_432, %c0_433], %407 {strides = array<i32>} : memref<216x512xf32, #tpu.memory_space<vmem>>, vector<8x512xf32>,
    %c0_434 = arith.constant 0 : index
    %c145_435 = arith.constant 145 : index
    %409 = vector.load %arg10[%c0_434, %c145_435] : memref<8x658xf32, #tpu.memory_space<vmem>>, vector<8x512xf32>
    %c25_436 = arith.constant 25 : index
    %c0_437 = arith.constant 0 : index
    %410 = vector.load %arg2[%c25_436, %c0_437] : memref<27x512xf32, #tpu.memory_space<vmem>>, vector<1x512xf32>
    %411 = vector.broadcast %410 : vector<1x512xf32> to vector<8x512xf32>
    %412 = arith.mulf %409, %411 : vector<8x512xf32>
    %c200_438 = arith.constant 200 : index
    %c0_439 = arith.constant 0 : index
    %413 = vector.load %arg11[%c200_438, %c0_439] : memref<216x512xf32, #tpu.memory_space<vmem>>, vector<8x512xf32>
    tpu.vector_store %arg11[%c200_438, %c0_439], %412 {strides = array<i32>} : memref<216x512xf32, #tpu.memory_space<vmem>>, vector<8x512xf32>,
    %c0_440 = arith.constant 0 : index
    %c146_441 = arith.constant 146 : index
    %414 = vector.load %arg10[%c0_440, %c146_441] : memref<8x658xf32, #tpu.memory_space<vmem>>, vector<8x512xf32>
    %c26_442 = arith.constant 26 : index
    %c0_443 = arith.constant 0 : index
    %415 = vector.load %arg2[%c26_442, %c0_443] : memref<27x512xf32, #tpu.memory_space<vmem>>, vector<1x512xf32>
    %416 = vector.broadcast %415 : vector<1x512xf32> to vector<8x512xf32>
    %417 = arith.mulf %414, %416 : vector<8x512xf32>
    %c208_444 = arith.constant 208 : index
    %c0_445 = arith.constant 0 : index
    %418 = vector.load %arg11[%c208_444, %c0_445] : memref<216x512xf32, #tpu.memory_space<vmem>>, vector<8x512xf32>
    tpu.vector_store %arg11[%c208_444, %c0_445], %417 {strides = array<i32>} : memref<216x512xf32, #tpu.memory_space<vmem>>, vector<8x512xf32>,
    %c0_446 = arith.constant 0 : index
    %c0_447 = arith.constant 0 : index
    %419 = vector.load %arg7[%c0_446, %c0_447] : memref<8x216xf32, #tpu.memory_space<vmem>>, vector<8x216xf32>
    %c0_448 = arith.constant 0 : index
    %c0_449 = arith.constant 0 : index
    %420 = vector.load %arg11[%c0_448, %c0_449] : memref<216x512xf32, #tpu.memory_space<vmem>>, vector<216x512xf32>
    %cst_450 = arith.constant dense<0.000000e+00> : vector<8x512xf32>
    %421 = tpu.matmul %419, %420, %cst_450 {dimension_numbers = #tpu.dot_dimension_numbers<[1], [0], [0], [1], [0, 0, 1, 1], [], []>} : vector<8x216xf32>, vector<216x512xf32>, vector<8x512xf32> -> vector<8x512xf32>
    %c0_451 = arith.constant 0 : index
    %c0_452 = arith.constant 0 : index
    %422 = vector.load %arg8[%c0_451, %c0_452] : memref<8x1xf32, #tpu.memory_space<vmem>>, vector<8x1xf32>
    %423 = vector.broadcast %422 : vector<8x1xf32> to vector<8x512xf32>
    %424 = arith.addf %421, %423 : vector<8x512xf32>
    %c0_453 = arith.constant 0 : index
    %c0_454 = arith.constant 0 : index
    %c0_455 = arith.constant 0 : index
    %425 = vector.load %arg9[%c0_453, %c0_454, %c0_455] : memref<1x8x512xf32, #tpu.memory_space<vmem>>, vector<1x8x512xf32>
    %426 = vector.shape_cast %425 : vector<1x8x512xf32> to vector<8x512xf32>
    %427 = vector.shape_cast %424 : vector<8x512xf32> to vector<1x8x512xf32>
    tpu.vector_store %arg9[%c0_453, %c0_454, %c0_455], %427 {strides = array<i32>} : memref<1x8x512xf32, #tpu.memory_space<vmem>>, vector<1x8x512xf32>,
    return
  }
  func.func @transform_0(%arg0: i32) -> (i32, i32, i32) {
    %c0_i32 = arith.constant 0 : i32
    %c0_i32_0 = arith.constant 0 : i32
    %c0_i32_1 = arith.constant 0 : i32
    return %arg0, %c0_i32, %c0_i32_0 : i32, i32, i32
  }
  func.func @transform_1(%arg0: i32) -> (i32, i32) {
    %c0_i32 = arith.constant 0 : i32
    %c0_i32_0 = arith.constant 0 : i32
    %c0_i32_1 = arith.constant 0 : i32
    return %c0_i32, %c0_i32_0 : i32, i32
  }
  func.func @transform_2(%arg0: i32) -> (i32, i32) {
    %c0_i32 = arith.constant 0 : i32
    %c0_i32_0 = arith.constant 0 : i32
    %c0_i32_1 = arith.constant 0 : i32
    return %c0_i32, %c0_i32_0 : i32, i32
  }
  func.func @transform_3(%arg0: i32) -> (i32, i32) {
    %c0_i32 = arith.constant 0 : i32
    %c0_i32_0 = arith.constant 0 : i32
    %c0_i32_1 = arith.constant 0 : i32
    return %c0_i32, %c0_i32_0 : i32, i32
  }
  func.func @transform_4(%arg0: i32) -> (i32, i32) {
    %c0_i32 = arith.constant 0 : i32
    %c0_i32_0 = arith.constant 0 : i32
    %c0_i32_1 = arith.constant 0 : i32
    return %c0_i32, %c0_i32_0 : i32, i32
  }
  func.func @transform_5(%arg0: i32) -> (i32, i32) {
    %c0_i32 = arith.constant 0 : i32
    %c0_i32_0 = arith.constant 0 : i32
    %c0_i32_1 = arith.constant 0 : i32
    return %c0_i32, %c0_i32_0 : i32, i32
  }
  func.func @transform_6(%arg0: i32) -> (i32, i32) {
    %c0_i32 = arith.constant 0 : i32
    %c0_i32_0 = arith.constant 0 : i32
    %c0_i32_1 = arith.constant 0 : i32
    return %c0_i32, %c0_i32_0 : i32, i32
  }
  func.func @transform_7(%arg0: i32) -> (i32, i32) {
    %c0_i32 = arith.constant 0 : i32
    %c0_i32_0 = arith.constant 0 : i32
    %c0_i32_1 = arith.constant 0 : i32
    return %c0_i32, %c0_i32_0 : i32, i32
  }
  func.func @transform_8(%arg0: i32) -> (i32, i32, i32) {
    %c0_i32 = arith.constant 0 : i32
    %c0_i32_0 = arith.constant 0 : i32
    %c0_i32_1 = arith.constant 0 : i32
    return %arg0, %c0_i32, %c0_i32_0 : i32, i32, i32
  }
}

</mosaic_0001>

<llo_original>
// kernel: tpu_custom_call.1
$region0: #{tpu_custom_call.1}
  #allocation0 [shape = 'u32[]', space=smem, size = 0x4, offset = 0x4, fixed_abs, tag = 'smem constant byte address 0x4 - core index']
  #allocation1 [shape = 'u32[144,128]{1,0:T(1,128)}', space=vmem, size = 0x12000, scoped, tag = 'internal scratch']
  #allocation2 [shape = 'f32[8,658]{1,0:T(8,128)}', space=vmem, size = 0x6000, scoped, tag = 'scratch operand']
  #allocation3 [shape = 'f32[216,512]{1,0:T(8,128)}', space=vmem, size = 0x6c000, scoped, tag = 'scratch operand']
  %s0 = inlined_call_operand.hbm [shape: f32[2,4,512], index: 0, kind: input, shape index: {}]
  %s1 = inlined_call_operand.hbm [shape: f32[27,512], index: 1, kind: input, shape index: {}]
  %s2 = inlined_call_operand.vmem [shape: f32[8,216], index: 2, kind: input, shape index: {}]
  %s3 = inlined_call_operand.vmem [shape: f32[8,1], index: 3, kind: input, shape index: {}]
  %s4 = inlined_call_operand.vmem [shape: f32[8,216], index: 4, kind: input, shape index: {}]
  %s5 = inlined_call_operand.vmem [shape: f32[8,1], index: 5, kind: input, shape index: {}]
  %s6 = inlined_call_operand.vmem [shape: f32[8,216], index: 6, kind: input, shape index: {}]
  %s7 = inlined_call_operand.vmem [shape: f32[8,1], index: 7, kind: input, shape index: {}]
  %s8 = inlined_call_operand.hbm [shape: f32[2,8,512], index: 8, kind: output, shape index: {}]
  %s9 = sld [smem:[#allocation0]]
  $region73: #{tpu_custom_call.1} parent=0
    _
  %s11 = ssub.s32 1, %s9
  %s12 = scalar_select 0, %s11, %s9
  $region1: #{tpu_custom_call.1} parent=0
    #allocation4 [shape = 'u8[16384]{0}', space=vmem, size = 0x4000, scoped, tag = 'input window, operand 0']
    #allocation5 [shape = 's32[2]{0}', space=sflag, size = 0x8, scoped, tag = 'scoped memory for tpu_custom_call.1']
    #allocation6 [shape = 's32[2]{0}', space=sflag, size = 0x8, scoped, tag = 'scoped memory for tpu_custom_call.1']
    #allocation7 [shape = 'u8[65536]{0}', space=vmem, size = 0x10000, scoped, tag = 'input window, operand 1, single buffered']
    #allocation8 [shape = 's32[1]{0}', space=sflag, size = 0x4, scoped, tag = 'scoped memory for tpu_custom_call.1']
    #allocation9 [shape = 'u8[32768]{0}', space=vmem, size = 0x8000, scoped, tag = 'output window, operand 0']
    %13 = vsyncpa [#allocation5], 0
    %s14 = scalar_lea.sflag [#allocation5], 1
    %15 = vsyncpa %s14, 0
    %16 = vsyncpa [#allocation8], 0
    %17 = vsyncpa [#allocation6], 0
    %s18 = scalar_lea.sflag [#allocation6], 1
    %19 = vsyncpa %s18, 0
    loop: start=0, step=1, limit=4
    $region2: #{tpu_custom_call.1} parent=1 // loop_pre_header
      _
    $region3: #{tpu_custom_call.1} parent=1 // loop_header
      %s21 = sphi 0, %s25
      %p22 = scmp.ge.s32.totalorder %s21, 4
      %s31 = sphi 0, %s33
      %s34 = sphi 0, %s31
      %s35 = sphi 0, %s34
      %s51 = sphi 0, %s35
      %s55 = sphi 0, %s55
      %s57 = sphi 0, %s55
      %s58 = sphi 0, %s57
      %s72 = sphi 0, %s58
      %s76 = sphi 0, %s76
      %s78 = sphi 0, %s76
      %s79 = sphi 0, %s78
      %s93 = sphi 0, %s79
      %s97 = sphi 0, %s97
      %s99 = sphi 0, %s97
      %s100 = sphi 0, %s99
      %s114 = sphi 0, %s100
      %s118 = sphi 0, %s118
      %s120 = sphi 0, %s118
      %s121 = sphi 0, %s120
      %s135 = sphi 0, %s121
      %s139 = sphi 0, %s139
      %s141 = sphi 0, %s139
      %s142 = sphi 0, %s141
      %s156 = sphi 0, %s142
      %s160 = sphi 0, %s160
      %s162 = sphi 0, %s160
      %s163 = sphi 0, %s162
      %s177 = sphi 0, %s163
      %s181 = sphi 0, %s181
      %s183 = sphi 0, %s181
      %s184 = sphi 0, %s183
      %s198 = sphi 0, %s184
      %s204 = sphi 0, %s206
      %s207 = sphi 0, %s204
      %s208 = sphi 0, %s207
      %s224 = sphi 0, %s208
    $region4: #{tpu_custom_call.1} parent=1 // loop_header_branch
      %24 = sbr.rel (%p22) target = $region8
    $region5: #{tpu_custom_call.1} parent=1 // loop_body
      %s26 = ssub.s32 %s21, 1
      %s27 = ssub.s32 %s21, 2
      %s28 = sadd.s32 %s21, 1
      %s29 = ssub.s32 %s21, %s28
      %p30 = scmp.eq.s32.totalorder %s29, 0
      %s32 = sadd.s32 %s31, 1
      %s33 = scalar_select %p30, %s31, %s32
      %p36 = pneg %p30
      %p37 = scmp.eq.s32.totalorder %s21, 1
      %p38 = por %p36, %p37
      %p39 = scmp.ne.s32.totalorder %s31, %s34
      %p40 = scmp.eq.s32.totalorder %s21, 0
      %p41 = por %p39, %p40
      %p42 = scmp.ne.s32.totalorder %s31, %s34
      %p43 = scmp.eq.s32.totalorder %s26, 1
      %p44 = por %p42, %p43
      %p45 = scmp.ne.s32.totalorder %s34, %s35
      %p46 = scmp.eq.s32.totalorder %s26, 0
      %p47 = por %p45, %p46
      %p48 = scmp.ne.s32.totalorder %s34, %s35
      %p49 = scmp.eq.s32.totalorder %s27, 1
      %p50 = por %p48, %p49
      %p52 = scmp.ne.s32.totalorder %s35, %s51
      %p53 = scmp.eq.s32.totalorder %s27, 0
      %p54 = por %p52, %p53
      %s56 = sadd.s32 %s55, 1
      %p59 = scmp.eq.s32.totalorder %s21, 1
      %p60 = scmp.ne.s32.totalorder %s55, %s57
      %p61 = scmp.eq.s32.totalorder %s21, 0
      %p62 = por %p60, %p61
      %p63 = scmp.ne.s32.totalorder %s55, %s57
      %p64 = scmp.eq.s32.totalorder %s26, 1
      %p65 = por %p63, %p64
      %p66 = scmp.ne.s32.totalorder %s57, %s58
      %p67 = scmp.eq.s32.totalorder %s26, 0
      %p68 = por %p66, %p67
      %p69 = scmp.ne.s32.totalorder %s57, %s58
      %p70 = scmp.eq.s32.totalorder %s27, 1
      %p71 = por %p69, %p70
      %p73 = scmp.ne.s32.totalorder %s58, %s72
      %p74 = scmp.eq.s32.totalorder %s27, 0
      %p75 = por %p73, %p74
      %s77 = sadd.s32 %s76, 1
      %p80 = scmp.eq.s32.totalorder %s21, 1
      %p81 = scmp.ne.s32.totalorder %s76, %s78
      %p82 = scmp.eq.s32.totalorder %s21, 0
      %p83 = por %p81, %p82
      %p84 = scmp.ne.s32.totalorder %s76, %s78
      %p85 = scmp.eq.s32.totalorder %s26, 1
      %p86 = por %p84, %p85
      %p87 = scmp.ne.s32.totalorder %s78, %s79
      %p88 = scmp.eq.s32.totalorder %s26, 0
      %p89 = por %p87, %p88
      %p90 = scmp.ne.s32.totalorder %s78, %s79
      %p91 = scmp.eq.s32.totalorder %s27, 1
      %p92 = por %p90, %p91
      %p94 = scmp.ne.s32.totalorder %s79, %s93
      %p95 = scmp.eq.s32.totalorder %s27, 0
      %p96 = por %p94, %p95
      %s98 = sadd.s32 %s97, 1
      %p101 = scmp.eq.s32.totalorder %s21, 1
      %p102 = scmp.ne.s32.totalorder %s97, %s99
      %p103 = scmp.eq.s32.totalorder %s21, 0
      %p104 = por %p102, %p103
      %p105 = scmp.ne.s32.totalorder %s97, %s99
      %p106 = scmp.eq.s32.totalorder %s26, 1
      %p107 = por %p105, %p106
      %p108 = scmp.ne.s32.totalorder %s99, %s100
      %p109 = scmp.eq.s32.totalorder %s26, 0
      %p110 = por %p108, %p109
      %p111 = scmp.ne.s32.totalorder %s99, %s100
      %p112 = scmp.eq.s32.totalorder %s27, 1
      %p113 = por %p111, %p112
      %p115 = scmp.ne.s32.totalorder %s100, %s114
      %p116 = scmp.eq.s32.totalorder %s27, 0
      %p117 = por %p115, %p116
      %s119 = sadd.s32 %s118, 1
      %p122 = scmp.eq.s32.totalorder %s21, 1
      %p123 = scmp.ne.s32.totalorder %s118, %s120
      %p124 = scmp.eq.s32.totalorder %s21, 0
      %p125 = por %p123, %p124
      %p126 = scmp.ne.s32.totalorder %s118, %s120
      %p127 = scmp.eq.s32.totalorder %s26, 1
      %p128 = por %p126, %p127
      %p129 = scmp.ne.s32.totalorder %s120, %s121
      %p130 = scmp.eq.s32.totalorder %s26, 0
      %p131 = por %p129, %p130
      %p132 = scmp.ne.s32.totalorder %s120, %s121
      %p133 = scmp.eq.s32.totalorder %s27, 1
      %p134 = por %p132, %p133
      %p136 = scmp.ne.s32.totalorder %s121, %s135
      %p137 = scmp.eq.s32.totalorder %s27, 0
      %p138 = por %p136, %p137
      %s140 = sadd.s32 %s139, 1
      %p143 = scmp.eq.s32.totalorder %s21, 1
      %p144 = scmp.ne.s32.totalorder %s139, %s141
      %p145 = scmp.eq.s32.totalorder %s21, 0
      %p146 = por %p144, %p145
      %p147 = scmp.ne.s32.totalorder %s139, %s141
      %p148 = scmp.eq.s32.totalorder %s26, 1
      %p149 = por %p147, %p148
      %p150 = scmp.ne.s32.totalorder %s141, %s142
      %p151 = scmp.eq.s32.totalorder %s26, 0
      %p152 = por %p150, %p151
      %p153 = scmp.ne.s32.totalorder %s141, %s142
      %p154 = scmp.eq.s32.totalorder %s27, 1
      %p155 = por %p153, %p154
      %p157 = scmp.ne.s32.totalorder %s142, %s156
      %p158 = scmp.eq.s32.totalorder %s27, 0
      %p159 = por %p157, %p158
      %s161 = sadd.s32 %s160, 1
      %p164 = scmp.eq.s32.totalorder %s21, 1
      %p165 = scmp.ne.s32.totalorder %s160, %s162
      %p166 = scmp.eq.s32.totalorder %s21, 0
      %p167 = por %p165, %p166
      %p168 = scmp.ne.s32.totalorder %s160, %s162
      %p169 = scmp.eq.s32.totalorder %s26, 1
      %p170 = por %p168, %p169
      %p171 = scmp.ne.s32.totalorder %s162, %s163
      %p172 = scmp.eq.s32.totalorder %s26, 0
      %p173 = por %p171, %p172
      %p174 = scmp.ne.s32.totalorder %s162, %s163
      %p175 = scmp.eq.s32.totalorder %s27, 1
      %p176 = por %p174, %p175
      %p178 = scmp.ne.s32.totalorder %s163, %s177
      %p179 = scmp.eq.s32.totalorder %s27, 0
      %p180 = por %p178, %p179
      %s182 = sadd.s32 %s181, 1
      %p185 = scmp.eq.s32.totalorder %s21, 1
      %p186 = scmp.ne.s32.totalorder %s181, %s183
      %p187 = scmp.eq.s32.totalorder %s21, 0
      %p188 = por %p186, %p187
      %p189 = scmp.ne.s32.totalorder %s181, %s183
      %p190 = scmp.eq.s32.totalorder %s26, 1
      %p191 = por %p189, %p190
      %p192 = scmp.ne.s32.totalorder %s183, %s184
      %p193 = scmp.eq.s32.totalorder %s26, 0
      %p194 = por %p192, %p193
      %p195 = scmp.ne.s32.totalorder %s183, %s184
      %p196 = scmp.eq.s32.totalorder %s27, 1
      %p197 = por %p195, %p196
      %p199 = scmp.ne.s32.totalorder %s184, %s198
      %p200 = scmp.eq.s32.totalorder %s27, 0
      %p201 = por %p199, %p200
      %s202 = ssub.s32 %s21, %s28
      %p203 = scmp.eq.s32.totalorder %s202, 0
      %s205 = sadd.s32 %s204, 1
      %s206 = scalar_select %p203, %s204, %s205
      %p209 = pneg %p203
      %p210 = scmp.eq.s32.totalorder %s21, 1
      %p211 = por %p209, %p210
      %p212 = scmp.ne.s32.totalorder %s204, %s207
      %p213 = scmp.eq.s32.totalorder %s21, 0
      %p214 = por %p212, %p213
      %p215 = scmp.ne.s32.totalorder %s204, %s207
      %p216 = scmp.eq.s32.totalorder %s26, 1
      %p217 = por %p215, %p216
      %p218 = scmp.ne.s32.totalorder %s207, %s208
      %p219 = scmp.eq.s32.totalorder %s26, 0
      %p220 = por %p218, %p219
      %p221 = scmp.ne.s32.totalorder %s207, %s208
      %p222 = scmp.eq.s32.totalorder %s27, 1
      %p223 = por %p221, %p222
      %p225 = scmp.ne.s32.totalorder %s208, %s224
      %p226 = scmp.eq.s32.totalorder %s27, 0
      %p227 = por %p225, %p226
      %p228 = scmp.le.s32.totalorder 1, %s21
      %p229 = scmp.lt.s32.totalorder %s21, 3
      %p230 = pnand %p228, %p229
      %p231 = pneg %p230
      // Predicated region
      $region9: #{tpu_custom_call.1} parent=5 // pred_check
        _
      $region10: #{tpu_custom_call.1} parent=5 // pred_check_branch
        %233 = sbr.rel (%p230) target = $region12
      $region11: #{tpu_custom_call.1} parent=5 // pred_region
        %s234 = ssub.s32 %s21, 1
        // Predicated region
        $region13: #{tpu_custom_call.1} parent=11 // pred_check
          %p235 = pneg %p68
        $region14: #{tpu_custom_call.1} parent=11 // pred_check_branch
          %237 = sbr.rel (%p235) target = $region16
        $region15: #{tpu_custom_call.1} parent=11 // pred_region
          %s239 = ssub.s32 2048, 2048
          %240 = vsyncadd [#allocation8], %s239
          %s241 = sshll.u32 [#allocation7], 4
          %s242 = int_to_ptr.vmem [resolvable:$true] %s241
          %247 = dma.hbm_to_vmem [thread:$0]  %s1, 2048, %s242, [#allocation8], 512, 512, 32
        $region16: #{tpu_custom_call.1} parent=11 // pred_fallthru
          _
        // Predicated region
        $region17: #{tpu_custom_call.1} parent=11 // pred_check
          %p248 = pneg %p89
        $region18: #{tpu_custom_call.1} parent=11 // pred_check_branch
          %250 = sbr.rel (%p248) target = $region20
        $region19: #{tpu_custom_call.1} parent=11 // pred_region
          _
        $region20: #{tpu_custom_call.1} parent=11 // pred_fallthru
          _
        // Predicated region
        $region21: #{tpu_custom_call.1} parent=11 // pred_check
          %p251 = pneg %p110
        $region22: #{tpu_custom_call.1} parent=11 // pred_check_branch
          %253 = sbr.rel (%p251) target = $region24
        $region23: #{tpu_custom_call.1} parent=11 // pred_region
          _
        $region24: #{tpu_custom_call.1} parent=11 // pred_fallthru
          _
        // Predicated region
        $region25: #{tpu_custom_call.1} parent=11 // pred_check
          %p254 = pneg %p131
        $region26: #{tpu_custom_call.1} parent=11 // pred_check_branch
          %256 = sbr.rel (%p254) target = $region28
        $region27: #{tpu_custom_call.1} parent=11 // pred_region
          _
        $region28: #{tpu_custom_call.1} parent=11 // pred_fallthru
          _
        // Predicated region
        $region29: #{tpu_custom_call.1} parent=11 // pred_check
          %p257 = pneg %p152
        $region30: #{tpu_custom_call.1} parent=11 // pred_check_branch
          %259 = sbr.rel (%p257) target = $region32
        $region31: #{tpu_custom_call.1} parent=11 // pred_region
          _
        $region32: #{tpu_custom_call.1} parent=11 // pred_fallthru
          _
        // Predicated region
        $region33: #{tpu_custom_call.1} parent=11 // pred_check
          %p260 = pneg %p173
        $region34: #{tpu_custom_call.1} parent=11 // pred_check_branch
          %262 = sbr.rel (%p260) target = $region36
        $region35: #{tpu_custom_call.1} parent=11 // pred_region
          _
        $region36: #{tpu_custom_call.1} parent=11 // pred_fallthru
          _
        // Predicated region
        $region37: #{tpu_custom_call.1} parent=11 // pred_check
          %p263 = pneg %p194
        $region38: #{tpu_custom_call.1} parent=11 // pred_check_branch
          %265 = sbr.rel (%p263) target = $region40
        $region39: #{tpu_custom_call.1} parent=11 // pred_region
          _
        $region40: #{tpu_custom_call.1} parent=11 // pred_fallthru
          _
      $region12: #{tpu_custom_call.1} parent=5 // pred_fallthru
        _
      %p266 = scmp.lt.s32.totalorder %s21, 2
      // Predicated region
      $region41: #{tpu_custom_call.1} parent=5 // pred_check
        %p267 = pneg %p266
      $region42: #{tpu_custom_call.1} parent=5 // pred_check_branch
        %269 = sbr.rel (%p267) target = $region44
      $region43: #{tpu_custom_call.1} parent=5 // pred_region
        // Predicated region
        $region45: #{tpu_custom_call.1} parent=43 // pred_check
          %p270 = pneg %p41
        $region46: #{tpu_custom_call.1} parent=43 // pred_check_branch
          %272 = sbr.rel (%p270) target = $region48
        $region47: #{tpu_custom_call.1} parent=43 // pred_region
          %s273 = sand.u32 %s31, 1
          %s274 = scalar_lea.sflag [#allocation5], %s273
          %s275 = sand.u32 %s31, 1
          %s276 = smul.addr %s275, 16
          %s277 = scalar_lea.vmem [#allocation4], %s276
          %s279 = ssub.s32 256, 256
          %280 = vsyncadd %s274, %s279
          %s281 = smul.addr %s21, 4
          %s282 = smul.addr %s281, 64
          %s283 = scalar_lea.hbm %s0, %s282
          %s285 = sshll.u32 %s277, 4
          %s286 = int_to_ptr.vmem [resolvable:$true] %s285
          %288 = dma.hbm_to_vmem [thread:$0]  %s283, 256, %s286, %s274
        $region48: #{tpu_custom_call.1} parent=43 // pred_fallthru
          _
      $region44: #{tpu_custom_call.1} parent=5 // pred_fallthru
        _
      %p289 = scmp.le.s32.totalorder 1, %s21
      %p290 = scmp.lt.s32.totalorder %s21, 3
      %p291 = pnand %p289, %p290
      %p292 = pneg %p291
      // Predicated region
      $region49: #{tpu_custom_call.1} parent=5 // pred_check
        _
      $region50: #{tpu_custom_call.1} parent=5 // pred_check_branch
        %294 = sbr.rel (%p291) target = $region52
      $region51: #{tpu_custom_call.1} parent=5 // pred_region
        %s295 = ssub.s32 %s21, 1
        %s296 = sand.u32 %s34, 1
        %s297 = scalar_lea.sflag [#allocation5], %s296
        %s298 = sand.u32 %s34, 1
        %s299 = smul.addr %s298, 16
        %s300 = scalar_lea.vmem [#allocation4], %s299
        // Predicated region
        $region53: #{tpu_custom_call.1} parent=51 // pred_check
          %p301 = pneg %p47
        $region54: #{tpu_custom_call.1} parent=51 // pred_check_branch
          %303 = sbr.rel (%p301) target = $region56
        $region55: #{tpu_custom_call.1} parent=51 // pred_region
          %304 = dma.done %s297, 256
        $region56: #{tpu_custom_call.1} parent=51 // pred_fallthru
          _
        // Predicated region
        $region57: #{tpu_custom_call.1} parent=51 // pred_check
          %p305 = pneg %p68
        $region58: #{tpu_custom_call.1} parent=51 // pred_check_branch
          %307 = sbr.rel (%p305) target = $region60
        $region59: #{tpu_custom_call.1} parent=51 // pred_region
          %308 = dma.done [#allocation8], 2048
        $region60: #{tpu_custom_call.1} parent=51 // pred_fallthru
          _
        %s309 = sand.u32 %s34, 1
        %s310 = scalar_lea.sflag [#allocation5], %s309
        %s311 = sand.u32 %s34, 1
        %s312 = smul.addr %s311, 16
        %s313 = scalar_lea.vmem [#allocation4], %s312
        %p314 = pneg %p47
        %p315 = pneg %p44
        %p316 = pneg %p68
        %p317 = pneg %p65
        %p318 = pneg %p89
        %p319 = pneg %p86
        %p320 = pneg %p110
        %p321 = pneg %p107
        %p322 = pneg %p131
        %p323 = pneg %p128
        %p324 = pneg %p152
        %p325 = pneg %p149
        %p326 = pneg %p173
        %p327 = pneg %p170
        %p328 = pneg %p194
        %p329 = pneg %p191
        %p330 = pneg %p220
        %p331 = pneg %p217
        %s332 = sand.u32 %s207, 1
        %s333 = scalar_lea.sflag [#allocation6], %s332
        %s334 = sand.u32 %s207, 1
        %s335 = smul.addr %s334, 32
        %s336 = scalar_lea.vmem [#allocation9], %s335
        %337 = vst [vmem:[#allocation2] sm:$0xff] 0.0
        %338 = vst [vmem:[#allocation2 + $0x8] sm:$0xff] 0.0
        %339 = vst [vmem:[#allocation2 + $0x10] sm:$0xff] 0.0
        %340 = vst [vmem:[#allocation2 + $0x18] sm:$0xff] 0.0
        %341 = vst [vmem:[#allocation2 + $0x20] sm:$0xff] 0.0
        %vm342 = vcmask 146432
        %343 = vst.msk [vmem:[#allocation2 + $0x28] sm:$0xff] %vm342, 0.0
        %v344 = vld [vmem:[%s300] sm:$0xff]
        %v345 = vld [vmem:[%s300 + $0x8] sm:$0xff]
        %v348 = vcombine.high %v344, %v344
        %v349 = vcombine.high %v345, %v345
        %350 = vrot.lane.b32.xlu0 %v344, 73
        %v351 = vpop.permute.xlu0 %350
        %352 = vrot.lane.b32.xlu0 %v348, 73
        %v353 = vpop.permute.xlu0 %352
        %354 = vrot.lane.b32.xlu0 %v345, 73
        %v355 = vpop.permute.xlu0 %354
        %356 = vrot.lane.b32.xlu0 %v349, 73
        %v357 = vpop.permute.xlu0 %356
        %vm358 = vcmask 596992
        %v359 = vsel %vm358, %v351, %v353
        %v360 = vsel %vm358, %v353, %v355
        %v361 = vsel %vm358, %v355, %v357
        %vm367 = vcmask 1044040
        %368 = vst.msk [vmem:[#allocation2] sm:$0xf] %vm367, %v351
        %369 = vst [vmem:[#allocation2 + $0x8] sm:$0xf] %v359
        %370 = vst [vmem:[#allocation2 + $0x10] sm:$0xf] %v360
        %371 = vst [vmem:[#allocation2 + $0x18] sm:$0xf] %v361
        %vm372 = vcmask 592896
        %373 = vst.msk [vmem:[#allocation2 + $0x20] sm:$0xf] %vm372, %v357
        %v374 = vld [vmem:[#allocation2] sm:$0xff]
        %v375 = vld [vmem:[#allocation2 + $0x8] sm:$0xff]
        %v376 = vld [vmem:[#allocation2 + $0x10] sm:$0xff]
        %v377 = vld [vmem:[#allocation2 + $0x18] sm:$0xff]
        %v378 = vld [vmem:[#allocation7] ss:$8 sm:$0xf]
        %v380 = vlaneseq
        %v381 = vshrl.u32 %v380, 7
        %v382 = vsub.s32 0, %v381
        %v383 = vrot.slane %v378, %v382
        %v384 = vlaneseq
        %v385 = vshrl.u32 %v384, 7
        %v386 = vsub.s32 1, %v385
        %v387 = vrot.slane %v378, %v386
        %v388 = vlaneseq
        %v389 = vshrl.u32 %v388, 7
        %v390 = vsub.s32 2, %v389
        %v391 = vrot.slane %v378, %v390
        %v392 = vlaneseq
        %v393 = vshrl.u32 %v392, 7
        %v394 = vsub.s32 3, %v393
        %v395 = vrot.slane %v378, %v394
        %v400 = vmul.f32 %v374, %v383
        %v401 = vmul.f32 %v375, %v387
        %v402 = vmul.f32 %v376, %v391
        %v403 = vmul.f32 %v377, %v395
        %404 = vst [vmem:[#allocation3] sm:$0xff] %v400
        %405 = vst [vmem:[#allocation3 + $0x8] sm:$0xff] %v401
        %406 = vst [vmem:[#allocation3 + $0x10] sm:$0xff] %v402
        %407 = vst [vmem:[#allocation3 + $0x18] sm:$0xff] %v403
        %v408 = vld [vmem:[#allocation2] sm:$0xff]
        %v409 = vld [vmem:[#allocation2 + $0x8] sm:$0xff]
        %v410 = vld [vmem:[#allocation2 + $0x10] sm:$0xff]
        %v411 = vld [vmem:[#allocation2 + $0x18] sm:$0xff]
        %v412 = vld [vmem:[#allocation2 + $0x20] sm:$0xff]
        %s413 = scalar_lea.vmem [#allocation7], 1
        %v414 = vld [vmem:[%s413] ss:$8 sm:$0xf]
        %v416 = vlaneseq
        %v417 = vshrl.u32 %v416, 7
        %v418 = vsub.s32 0, %v417
        %v419 = vrot.slane %v414, %v418
        %v420 = vlaneseq
        %v421 = vshrl.u32 %v420, 7
        %v422 = vsub.s32 1, %v421
        %v423 = vrot.slane %v414, %v422
        %v424 = vlaneseq
        %v425 = vshrl.u32 %v424, 7
        %v426 = vsub.s32 2, %v425
        %v427 = vrot.slane %v414, %v426
        %v428 = vlaneseq
        %v429 = vshrl.u32 %v428, 7
        %v430 = vsub.s32 3, %v429
        %v431 = vrot.slane %v414, %v430
        %432 = vrot.lane.b32.xlu0 %v419, 1
        %v433 = vpop.permute.xlu0 %432
        %434 = vrot.lane.b32.xlu0 %v423, 1
        %v435 = vpop.permute.xlu0 %434
        %436 = vrot.lane.b32.xlu0 %v427, 1
        %v437 = vpop.permute.xlu0 %436
        %438 = vrot.lane.b32.xlu0 %v431, 1
        %v439 = vpop.permute.xlu0 %438
        %vm440 = vcmask 7168
        %v441 = vsel %vm440, %v433, %v435
        %v442 = vsel %vm440, %v435, %v437
        %v443 = vsel %vm440, %v437, %v439
        %v449 = vmul.f32 %v408, %v433
        %v450 = vmul.f32 %v409, %v441
        %v451 = vmul.f32 %v410, %v442
        %v452 = vmul.f32 %v411, %v443
        %v453 = vmul.f32 %v412, %v439
        %459 = vrot.lane.b32.xlu0 %v449, 127
        %v460 = vpop.permute.xlu0 %459
        %461 = vrot.lane.b32.xlu0 %v450, 127
        %v462 = vpop.permute.xlu0 %461
        %463 = vrot.lane.b32.xlu0 %v451, 127
        %v464 = vpop.permute.xlu0 %463
        %465 = vrot.lane.b32.xlu0 %v452, 127
        %v466 = vpop.permute.xlu0 %465
        %467 = vrot.lane.b32.xlu0 %v453, 127
        %v468 = vpop.permute.xlu0 %467
        %vm469 = vcmask 1039360
        %v470 = vsel %vm469, %v460, %v462
        %v471 = vsel %vm469, %v462, %v464
        %v472 = vsel %vm469, %v464, %v466
        %v473 = vsel %vm469, %v466, %v468
        %478 = vst [vmem:[#allocation3 + $0x20] sm:$0xff] %v470
        %479 = vst [vmem:[#allocation3 + $0x28] sm:$0xff] %v471
        %480 = vst [vmem:[#allocation3 + $0x30] sm:$0xff] %v472
        %481 = vst [vmem:[#allocation3 + $0x38] sm:$0xff] %v473
        %v482 = vld [vmem:[#allocation2] sm:$0xff]
        %v483 = vld [vmem:[#allocation2 + $0x8] sm:$0xff]
        %v484 = vld [vmem:[#allocation2 + $0x10] sm:$0xff]
        %v485 = vld [vmem:[#allocation2 + $0x18] sm:$0xff]
        %v486 = vld [vmem:[#allocation2 + $0x20] sm:$0xff]
        %s487 = scalar_lea.vmem [#allocation7], 2
        %v488 = vld [vmem:[%s487] ss:$8 sm:$0xf]
        %v490 = vlaneseq
        %v491 = vshrl.u32 %v490, 7
        %v492 = vsub.s32 0, %v491
        %v493 = vrot.slane %v488, %v492
        %v494 = vlaneseq
        %v495 = vshrl.u32 %v494, 7
        %v496 = vsub.s32 1, %v495
        %v497 = vrot.slane %v488, %v496
        %v498 = vlaneseq
        %v499 = vshrl.u32 %v498, 7
        %v500 = vsub.s32 2, %v499
        %v501 = vrot.slane %v488, %v500
        %v502 = vlaneseq
        %v503 = vshrl.u32 %v502, 7
        %v504 = vsub.s32 3, %v503
        %v505 = vrot.slane %v488, %v504
        %506 = vrot.lane.b32.xlu0 %v493, 2
        %v507 = vpop.permute.xlu0 %506
        %508 = vrot.lane.b32.xlu0 %v497, 2
        %v509 = vpop.permute.xlu0 %508
        %510 = vrot.lane.b32.xlu0 %v501, 2
        %v511 = vpop.permute.xlu0 %510
        %512 = vrot.lane.b32.xlu0 %v505, 2
        %v513 = vpop.permute.xlu0 %512
        %vm514 = vcmask 15360
        %v515 = vsel %vm514, %v507, %v509
        %v516 = vsel %vm514, %v509, %v511
        %v517 = vsel %vm514, %v511, %v513
        %v523 = vmul.f32 %v482, %v507
        %v524 = vmul.f32 %v483, %v515
        %v525 = vmul.f32 %v484, %v516
        %v526 = vmul.f32 %v485, %v517
        %v527 = vmul.f32 %v486, %v513
        %533 = vrot.lane.b32.xlu0 %v523, 126
        %v534 = vpop.permute.xlu0 %533
        %535 = vrot.lane.b32.xlu0 %v524, 126
        %v536 = vpop.permute.xlu0 %535
        %537 = vrot.lane.b32.xlu0 %v525, 126
        %v538 = vpop.permute.xlu0 %537
        %539 = vrot.lane.b32.xlu0 %v526, 126
        %v540 = vpop.permute.xlu0 %539
        %541 = vrot.lane.b32.xlu0 %v527, 126
        %v542 = vpop.permute.xlu0 %541
        %vm543 = vcmask 1031168
        %v544 = vsel %vm543, %v534, %v536
        %v545 = vsel %vm543, %v536, %v538
        %v546 = vsel %vm543, %v538, %v540
        %v547 = vsel %vm543, %v540, %v542
        %552 = vst [vmem:[#allocation3 + $0x40] sm:$0xff] %v544
        %553 = vst [vmem:[#allocation3 + $0x48] sm:$0xff] %v545
        %554 = vst [vmem:[#allocation3 + $0x50] sm:$0xff] %v546
        %555 = vst [vmem:[#allocation3 + $0x58] sm:$0xff] %v547
        %v556 = vld [vmem:[#allocation2] sm:$0xff]
        %v557 = vld [vmem:[#allocation2 + $0x8] sm:$0xff]
        %v558 = vld [vmem:[#allocation2 + $0x10] sm:$0xff]
        %v559 = vld [vmem:[#allocation2 + $0x18] sm:$0xff]
        %v560 = vld [vmem:[#allocation2 + $0x20] sm:$0xff]
        %s561 = scalar_lea.vmem [#allocation7], 3
        %v562 = vld [vmem:[%s561] ss:$8 sm:$0xf]
        %v564 = vlaneseq
        %v565 = vshrl.u32 %v564, 7
        %v566 = vsub.s32 0, %v565
        %v567 = vrot.slane %v562, %v566
        %v568 = vlaneseq
        %v569 = vshrl.u32 %v568, 7
        %v570 = vsub.s32 1, %v569
        %v571 = vrot.slane %v562, %v570
        %v572 = vlaneseq
        %v573 = vshrl.u32 %v572, 7
        %v574 = vsub.s32 2, %v573
        %v575 = vrot.slane %v562, %v574
        %v576 = vlaneseq
        %v577 = vshrl.u32 %v576, 7
        %v578 = vsub.s32 3, %v577
        %v579 = vrot.slane %v562, %v578
        %580 = vrot.lane.b32.xlu0 %v567, 8
        %v581 = vpop.permute.xlu0 %580
        %582 = vrot.lane.b32.xlu0 %v571, 8
        %v583 = vpop.permute.xlu0 %582
        %584 = vrot.lane.b32.xlu0 %v575, 8
        %v585 = vpop.permute.xlu0 %584
        %586 = vrot.lane.b32.xlu0 %v579, 8
        %v587 = vpop.permute.xlu0 %586
        %vm588 = vcmask 64512
        %v589 = vsel %vm588, %v581, %v583
        %v590 = vsel %vm588, %v583, %v585
        %v591 = vsel %vm588, %v585, %v587
        %v597 = vmul.f32 %v556, %v581
        %v598 = vmul.f32 %v557, %v589
        %v599 = vmul.f32 %v558, %v590
        %v600 = vmul.f32 %v559, %v591
        %v601 = vmul.f32 %v560, %v587
        %607 = vrot.lane.b32.xlu0 %v597, 120
        %v608 = vpop.permute.xlu0 %607
        %609 = vrot.lane.b32.xlu0 %v598, 120
        %v610 = vpop.permute.xlu0 %609
        %611 = vrot.lane.b32.xlu0 %v599, 120
        %v612 = vpop.permute.xlu0 %611
        %613 = vrot.lane.b32.xlu0 %v600, 120
        %v614 = vpop.permute.xlu0 %613
        %615 = vrot.lane.b32.xlu0 %v601, 120
        %v616 = vpop.permute.xlu0 %615
        %vm617 = vcmask 982016
        %v618 = vsel %vm617, %v608, %v610
        %v619 = vsel %vm617, %v610, %v612
        %v620 = vsel %vm617, %v612, %v614
        %v621 = vsel %vm617, %v614, %v616
        %626 = vst [vmem:[#allocation3 + $0x60] sm:$0xff] %v618
        %627 = vst [vmem:[#allocation3 + $0x68] sm:$0xff] %v619
        %628 = vst [vmem:[#allocation3 + $0x70] sm:$0xff] %v620
        %629 = vst [vmem:[#allocation3 + $0x78] sm:$0xff] %v621
        %v630 = vld [vmem:[#allocation2] sm:$0xff]
        %v631 = vld [vmem:[#allocation2 + $0x8] sm:$0xff]
        %v632 = vld [vmem:[#allocation2 + $0x10] sm:$0xff]
        %v633 = vld [vmem:[#allocation2 + $0x18] sm:$0xff]
        %v634 = vld [vmem:[#allocation2 + $0x20] sm:$0xff]
        %s635 = scalar_lea.vmem [#allocation7], 4
        %v636 = vld [vmem:[%s635] ss:$8 sm:$0xf]
        %v638 = vlaneseq
        %v639 = vshrl.u32 %v638, 7
        %v640 = vsub.s32 0, %v639
        %v641 = vrot.slane %v636, %v640
        %v642 = vlaneseq
        %v643 = vshrl.u32 %v642, 7
        %v644 = vsub.s32 1, %v643
        %v645 = vrot.slane %v636, %v644
        %v646 = vlaneseq
        %v647 = vshrl.u32 %v646, 7
        %v648 = vsub.s32 2, %v647
        %v649 = vrot.slane %v636, %v648
        %v650 = vlaneseq
        %v651 = vshrl.u32 %v650, 7
        %v652 = vsub.s32 3, %v651
        %v653 = vrot.slane %v636, %v652
        %654 = vrot.lane.b32.xlu0 %v641, 9
        %v655 = vpop.permute.xlu0 %654
        %656 = vrot.lane.b32.xlu0 %v645, 9
        %v657 = vpop.permute.xlu0 %656
        %658 = vrot.lane.b32.xlu0 %v649, 9
        %v659 = vpop.permute.xlu0 %658
        %660 = vrot.lane.b32.xlu0 %v653, 9
        %v661 = vpop.permute.xlu0 %660
        %vm662 = vcmask 72704
        %v663 = vsel %vm662, %v655, %v657
        %v664 = vsel %vm662, %v657, %v659
        %v665 = vsel %vm662, %v659, %v661
        %v671 = vmul.f32 %v630, %v655
        %v672 = vmul.f32 %v631, %v663
        %v673 = vmul.f32 %v632, %v664
        %v674 = vmul.f32 %v633, %v665
        %v675 = vmul.f32 %v634, %v661
        %681 = vrot.lane.b32.xlu0 %v671, 119
        %v682 = vpop.permute.xlu0 %681
        %683 = vrot.lane.b32.xlu0 %v672, 119
        %v684 = vpop.permute.xlu0 %683
        %685 = vrot.lane.b32.xlu0 %v673, 119
        %v686 = vpop.permute.xlu0 %685
        %687 = vrot.lane.b32.xlu0 %v674, 119
        %v688 = vpop.permute.xlu0 %687
        %689 = vrot.lane.b32.xlu0 %v675, 119
        %v690 = vpop.permute.xlu0 %689
        %vm691 = vcmask 973824
        %v692 = vsel %vm691, %v682, %v684
        %v693 = vsel %vm691, %v684, %v686
        %v694 = vsel %vm691, %v686, %v688
        %v695 = vsel %vm691, %v688, %v690
        %700 = vst [vmem:[#allocation3 + $0x80] sm:$0xff] %v692
        %701 = vst [vmem:[#allocation3 + $0x88] sm:$0xff] %v693
        %702 = vst [vmem:[#allocation3 + $0x90] sm:$0xff] %v694
        %703 = vst [vmem:[#allocation3 + $0x98] sm:$0xff] %v695
        %v704 = vld [vmem:[#allocation2] sm:$0xff]
        %v705 = vld [vmem:[#allocation2 + $0x8] sm:$0xff]
        %v706 = vld [vmem:[#allocation2 + $0x10] sm:$0xff]
        %v707 = vld [vmem:[#allocation2 + $0x18] sm:$0xff]
        %v708 = vld [vmem:[#allocation2 + $0x20] sm:$0xff]
        %s709 = scalar_lea.vmem [#allocation7], 5
        %v710 = vld [vmem:[%s709] ss:$8 sm:$0xf]
        %v712 = vlaneseq
        %v713 = vshrl.u32 %v712, 7
        %v714 = vsub.s32 0, %v713
        %v715 = vrot.slane %v710, %v714
        %v716 = vlaneseq
        %v717 = vshrl.u32 %v716, 7
        %v718 = vsub.s32 1, %v717
        %v719 = vrot.slane %v710, %v718
        %v720 = vlaneseq
        %v721 = vshrl.u32 %v720, 7
        %v722 = vsub.s32 2, %v721
        %v723 = vrot.slane %v710, %v722
        %v724 = vlaneseq
        %v725 = vshrl.u32 %v724, 7
        %v726 = vsub.s32 3, %v725
        %v727 = vrot.slane %v710, %v726
        %728 = vrot.lane.b32.xlu0 %v715, 10
        %v729 = vpop.permute.xlu0 %728
        %730 = vrot.lane.b32.xlu0 %v719, 10
        %v731 = vpop.permute.xlu0 %730
        %732 = vrot.lane.b32.xlu0 %v723, 10
        %v733 = vpop.permute.xlu0 %732
        %734 = vrot.lane.b32.xlu0 %v727, 10
        %v735 = vpop.permute.xlu0 %734
        %vm736 = vcmask 80896
        %v737 = vsel %vm736, %v729, %v731
        %v738 = vsel %vm736, %v731, %v733
        %v739 = vsel %vm736, %v733, %v735
        %v745 = vmul.f32 %v704, %v729
        %v746 = vmul.f32 %v705, %v737
        %v747 = vmul.f32 %v706, %v738
        %v748 = vmul.f32 %v707, %v739
        %v749 = vmul.f32 %v708, %v735
        %755 = vrot.lane.b32.xlu0 %v745, 118
        %v756 = vpop.permute.xlu0 %755
        %757 = vrot.lane.b32.xlu0 %v746, 118
        %v758 = vpop.permute.xlu0 %757
        %759 = vrot.lane.b32.xlu0 %v747, 118
        %v760 = vpop.permute.xlu0 %759
        %761 = vrot.lane.b32.xlu0 %v748, 118
        %v762 = vpop.permute.xlu0 %761
        %763 = vrot.lane.b32.xlu0 %v749, 118
        %v764 = vpop.permute.xlu0 %763
        %vm765 = vcmask 965632
        %v766 = vsel %vm765, %v756, %v758
        %v767 = vsel %vm765, %v758, %v760
        %v768 = vsel %vm765, %v760, %v762
        %v769 = vsel %vm765, %v762, %v764
        %774 = vst [vmem:[#allocation3 + $0xa0] sm:$0xff] %v766
        %775 = vst [vmem:[#allocation3 + $0xa8] sm:$0xff] %v767
        %776 = vst [vmem:[#allocation3 + $0xb0] sm:$0xff] %v768
        %777 = vst [vmem:[#allocation3 + $0xb8] sm:$0xff] %v769
        %v778 = vld [vmem:[#allocation2] sm:$0xff]
        %v779 = vld [vmem:[#allocation2 + $0x8] sm:$0xff]
        %v780 = vld [vmem:[#allocation2 + $0x10] sm:$0xff]
        %v781 = vld [vmem:[#allocation2 + $0x18] sm:$0xff]
        %v782 = vld [vmem:[#allocation2 + $0x20] sm:$0xff]
        %s783 = scalar_lea.vmem [#allocation7], 6
        %v784 = vld [vmem:[%s783] ss:$8 sm:$0xf]
        %v786 = vlaneseq
        %v787 = vshrl.u32 %v786, 7
        %v788 = vsub.s32 0, %v787
        %v789 = vrot.slane %v784, %v788
        %v790 = vlaneseq
        %v791 = vshrl.u32 %v790, 7
        %v792 = vsub.s32 1, %v791
        %v793 = vrot.slane %v784, %v792
        %v794 = vlaneseq
        %v795 = vshrl.u32 %v794, 7
        %v796 = vsub.s32 2, %v795
        %v797 = vrot.slane %v784, %v796
        %v798 = vlaneseq
        %v799 = vshrl.u32 %v798, 7
        %v800 = vsub.s32 3, %v799
        %v801 = vrot.slane %v784, %v800
        %802 = vrot.lane.b32.xlu0 %v789, 16
        %v803 = vpop.permute.xlu0 %802
        %804 = vrot.lane.b32.xlu0 %v793, 16
        %v805 = vpop.permute.xlu0 %804
        %806 = vrot.lane.b32.xlu0 %v797, 16
        %v807 = vpop.permute.xlu0 %806
        %808 = vrot.lane.b32.xlu0 %v801, 16
        %v809 = vpop.permute.xlu0 %808
        %vm810 = vcmask 130048
        %v811 = vsel %vm810, %v803, %v805
        %v812 = vsel %vm810, %v805, %v807
        %v813 = vsel %vm810, %v807, %v809
        %v819 = vmul.f32 %v778, %v803
        %v820 = vmul.f32 %v779, %v811
        %v821 = vmul.f32 %v780, %v812
        %v822 = vmul.f32 %v781, %v813
        %v823 = vmul.f32 %v782, %v809
        %829 = vrot.lane.b32.xlu0 %v819, 112
        %v830 = vpop.permute.xlu0 %829
        %831 = vrot.lane.b32.xlu0 %v820, 112
        %v832 = vpop.permute.xlu0 %831
        %833 = vrot.lane.b32.xlu0 %v821, 112
        %v834 = vpop.permute.xlu0 %833
        %835 = vrot.lane.b32.xlu0 %v822, 112
        %v836 = vpop.permute.xlu0 %835
        %837 = vrot.lane.b32.xlu0 %v823, 112
        %v838 = vpop.permute.xlu0 %837
        %vm839 = vcmask 916480
        %v840 = vsel %vm839, %v830, %v832
        %v841 = vsel %vm839, %v832, %v834
        %v842 = vsel %vm839, %v834, %v836
        %v843 = vsel %vm839, %v836, %v838
        %848 = vst [vmem:[#allocation3 + $0xc0] sm:$0xff] %v840
        %849 = vst [vmem:[#allocation3 + $0xc8] sm:$0xff] %v841
        %850 = vst [vmem:[#allocation3 + $0xd0] sm:$0xff] %v842
        %851 = vst [vmem:[#allocation3 + $0xd8] sm:$0xff] %v843
        %v852 = vld [vmem:[#allocation2] sm:$0xff]
        %v853 = vld [vmem:[#allocation2 + $0x8] sm:$0xff]
        %v854 = vld [vmem:[#allocation2 + $0x10] sm:$0xff]
        %v855 = vld [vmem:[#allocation2 + $0x18] sm:$0xff]
        %v856 = vld [vmem:[#allocation2 + $0x20] sm:$0xff]
        %s857 = scalar_lea.vmem [#allocation7], 7
        %v858 = vld [vmem:[%s857] ss:$8 sm:$0xf]
        %v860 = vlaneseq
        %v861 = vshrl.u32 %v860, 7
        %v862 = vsub.s32 0, %v861
        %v863 = vrot.slane %v858, %v862
        %v864 = vlaneseq
        %v865 = vshrl.u32 %v864, 7
        %v866 = vsub.s32 1, %v865
        %v867 = vrot.slane %v858, %v866
        %v868 = vlaneseq
        %v869 = vshrl.u32 %v868, 7
        %v870 = vsub.s32 2, %v869
        %v871 = vrot.slane %v858, %v870
        %v872 = vlaneseq
        %v873 = vshrl.u32 %v872, 7
        %v874 = vsub.s32 3, %v873
        %v875 = vrot.slane %v858, %v874
        %876 = vrot.lane.b32.xlu0 %v863, 17
        %v877 = vpop.permute.xlu0 %876
        %878 = vrot.lane.b32.xlu0 %v867, 17
        %v879 = vpop.permute.xlu0 %878
        %880 = vrot.lane.b32.xlu0 %v871, 17
        %v881 = vpop.permute.xlu0 %880
        %882 = vrot.lane.b32.xlu0 %v875, 17
        %v883 = vpop.permute.xlu0 %882
        %vm884 = vcmask 138240
        %v885 = vsel %vm884, %v877, %v879
        %v886 = vsel %vm884, %v879, %v881
        %v887 = vsel %vm884, %v881, %v883
        %v893 = vmul.f32 %v852, %v877
        %v894 = vmul.f32 %v853, %v885
        %v895 = vmul.f32 %v854, %v886
        %v896 = vmul.f32 %v855, %v887
        %v897 = vmul.f32 %v856, %v883
        %903 = vrot.lane.b32.xlu0 %v893, 111
        %v904 = vpop.permute.xlu0 %903
        %905 = vrot.lane.b32.xlu0 %v894, 111
        %v906 = vpop.permute.xlu0 %905
        %907 = vrot.lane.b32.xlu0 %v895, 111
        %v908 = vpop.permute.xlu0 %907
        %909 = vrot.lane.b32.xlu0 %v896, 111
        %v910 = vpop.permute.xlu0 %909
        %911 = vrot.lane.b32.xlu0 %v897, 111
        %v912 = vpop.permute.xlu0 %911
        %vm913 = vcmask 908288
        %v914 = vsel %vm913, %v904, %v906
        %v915 = vsel %vm913, %v906, %v908
        %v916 = vsel %vm913, %v908, %v910
        %v917 = vsel %vm913, %v910, %v912
        %922 = vst [vmem:[#allocation3 + $0xe0] sm:$0xff] %v914
        %923 = vst [vmem:[#allocation3 + $0xe8] sm:$0xff] %v915
        %924 = vst [vmem:[#allocation3 + $0xf0] sm:$0xff] %v916
        %925 = vst [vmem:[#allocation3 + $0xf8] sm:$0xff] %v917
        %v926 = vld [vmem:[#allocation2] sm:$0xff]
        %v927 = vld [vmem:[#allocation2 + $0x8] sm:$0xff]
        %v928 = vld [vmem:[#allocation2 + $0x10] sm:$0xff]
        %v929 = vld [vmem:[#allocation2 + $0x18] sm:$0xff]
        %v930 = vld [vmem:[#allocation2 + $0x20] sm:$0xff]
        %s931 = scalar_lea.vmem [#allocation7], 32
        %v932 = vld [vmem:[%s931] ss:$8 sm:$0xf]
        %v934 = vlaneseq
        %v935 = vshrl.u32 %v934, 7
        %v936 = vsub.s32 0, %v935
        %v937 = vrot.slane %v932, %v936
        %v938 = vlaneseq
        %v939 = vshrl.u32 %v938, 7
        %v940 = vsub.s32 1, %v939
        %v941 = vrot.slane %v932, %v940
        %v942 = vlaneseq
        %v943 = vshrl.u32 %v942, 7
        %v944 = vsub.s32 2, %v943
        %v945 = vrot.slane %v932, %v944
        %v946 = vlaneseq
        %v947 = vshrl.u32 %v946, 7
        %v948 = vsub.s32 3, %v947
        %v949 = vrot.slane %v932, %v948
        %950 = vrot.lane.b32.xlu0 %v937, 18
        %v951 = vpop.permute.xlu0 %950
        %952 = vrot.lane.b32.xlu0 %v941, 18
        %v953 = vpop.permute.xlu0 %952
        %954 = vrot.lane.b32.xlu0 %v945, 18
        %v955 = vpop.permute.xlu0 %954
        %956 = vrot.lane.b32.xlu0 %v949, 18
        %v957 = vpop.permute.xlu0 %956
        %v958 = vsel %vm342, %v951, %v953
        %v959 = vsel %vm342, %v953, %v955
        %v960 = vsel %vm342, %v955, %v957
        %v966 = vmul.f32 %v926, %v951
        %v967 = vmul.f32 %v927, %v958
        %v968 = vmul.f32 %v928, %v959
        %v969 = vmul.f32 %v929, %v960
        %v970 = vmul.f32 %v930, %v957
        %976 = vrot.lane.b32.xlu0 %v966, 110
        %v977 = vpop.permute.xlu0 %976
        %978 = vrot.lane.b32.xlu0 %v967, 110
        %v979 = vpop.permute.xlu0 %978
        %980 = vrot.lane.b32.xlu0 %v968, 110
        %v981 = vpop.permute.xlu0 %980
        %982 = vrot.lane.b32.xlu0 %v969, 110
        %v983 = vpop.permute.xlu0 %982
        %984 = vrot.lane.b32.xlu0 %v970, 110
        %v985 = vpop.permute.xlu0 %984
        %vm986 = vcmask 900096
        %v987 = vsel %vm986, %v977, %v979
        %v988 = vsel %vm986, %v979, %v981
        %v989 = vsel %vm986, %v981, %v983
        %v990 = vsel %vm986, %v983, %v985
        %995 = vst [vmem:[#allocation3 + $0x100] sm:$0xff] %v987
        %996 = vst [vmem:[#allocation3 + $0x108] sm:$0xff] %v988
        %997 = vst [vmem:[#allocation3 + $0x110] sm:$0xff] %v989
        %998 = vst [vmem:[#allocation3 + $0x118] sm:$0xff] %v990
        %v999 = vld [vmem:[#allocation2] sm:$0xff]
        %v1000 = vld [vmem:[#allocation2 + $0x8] sm:$0xff]
        %v1001 = vld [vmem:[#allocation2 + $0x10] sm:$0xff]
        %v1002 = vld [vmem:[#allocation2 + $0x18] sm:$0xff]
        %v1003 = vld [vmem:[#allocation2 + $0x20] sm:$0xff]
        %s1004 = scalar_lea.vmem [#allocation7], 33
        %v1005 = vld [vmem:[%s1004] ss:$8 sm:$0xf]
        %v1007 = vlaneseq
        %v1008 = vshrl.u32 %v1007, 7
        %v1009 = vsub.s32 0, %v1008
        %v1010 = vrot.slane %v1005, %v1009
        %v1011 = vlaneseq
        %v1012 = vshrl.u32 %v1011, 7
        %v1013 = vsub.s32 1, %v1012
        %v1014 = vrot.slane %v1005, %v1013
        %v1015 = vlaneseq
        %v1016 = vshrl.u32 %v1015, 7
        %v1017 = vsub.s32 2, %v1016
        %v1018 = vrot.slane %v1005, %v1017
        %v1019 = vlaneseq
        %v1020 = vshrl.u32 %v1019, 7
        %v1021 = vsub.s32 3, %v1020
        %v1022 = vrot.slane %v1005, %v1021
        %1023 = vrot.lane.b32.xlu0 %v1010, 64
        %v1024 = vpop.permute.xlu0 %1023
        %1025 = vrot.lane.b32.xlu0 %v1014, 64
        %v1026 = vpop.permute.xlu0 %1025
        %1027 = vrot.lane.b32.xlu0 %v1018, 64
        %v1028 = vpop.permute.xlu0 %1027
        %1029 = vrot.lane.b32.xlu0 %v1022, 64
        %v1030 = vpop.permute.xlu0 %1029
        %vm1031 = vcmask 523264
        %v1032 = vsel %vm1031, %v1024, %v1026
        %v1033 = vsel %vm1031, %v1026, %v1028
        %v1034 = vsel %vm1031, %v1028, %v1030
        %v1040 = vmul.f32 %v999, %v1024
        %v1041 = vmul.f32 %v1000, %v1032
        %v1042 = vmul.f32 %v1001, %v1033
        %v1043 = vmul.f32 %v1002, %v1034
        %v1044 = vmul.f32 %v1003, %v1030
        %1050 = vrot.lane.b32.xlu0 %v1040, 64
        %v1051 = vpop.permute.xlu0 %1050
        %1052 = vrot.lane.b32.xlu0 %v1041, 64
        %v1053 = vpop.permute.xlu0 %1052
        %1054 = vrot.lane.b32.xlu0 %v1042, 64
        %v1055 = vpop.permute.xlu0 %1054
        %1056 = vrot.lane.b32.xlu0 %v1043, 64
        %v1057 = vpop.permute.xlu0 %1056
        %1058 = vrot.lane.b32.xlu0 %v1044, 64
        %v1059 = vpop.permute.xlu0 %1058
        %v1060 = vsel %vm1031, %v1051, %v1053
        %v1061 = vsel %vm1031, %v1053, %v1055
        %v1062 = vsel %vm1031, %v1055, %v1057
        %v1063 = vsel %vm1031, %v1057, %v1059
        %1068 = vst [vmem:[#allocation3 + $0x120] sm:$0xff] %v1060
        %1069 = vst [vmem:[#allocation3 + $0x128] sm:$0xff] %v1061
        %1070 = vst [vmem:[#allocation3 + $0x130] sm:$0xff] %v1062
        %1071 = vst [vmem:[#allocation3 + $0x138] sm:$0xff] %v1063
        %v1072 = vld [vmem:[#allocation2] sm:$0xff]
        %v1073 = vld [vmem:[#allocation2 + $0x8] sm:$0xff]
        %v1074 = vld [vmem:[#allocation2 + $0x10] sm:$0xff]
        %v1075 = vld [vmem:[#allocation2 + $0x18] sm:$0xff]
        %v1076 = vld [vmem:[#allocation2 + $0x20] sm:$0xff]
        %s1077 = scalar_lea.vmem [#allocation7], 34
        %v1078 = vld [vmem:[%s1077] ss:$8 sm:$0xf]
        %v1080 = vlaneseq
        %v1081 = vshrl.u32 %v1080, 7
        %v1082 = vsub.s32 0, %v1081
        %v1083 = vrot.slane %v1078, %v1082
        %v1084 = vlaneseq
        %v1085 = vshrl.u32 %v1084, 7
        %v1086 = vsub.s32 1, %v1085
        %v1087 = vrot.slane %v1078, %v1086
        %v1088 = vlaneseq
        %v1089 = vshrl.u32 %v1088, 7
        %v1090 = vsub.s32 2, %v1089
        %v1091 = vrot.slane %v1078, %v1090
        %v1092 = vlaneseq
        %v1093 = vshrl.u32 %v1092, 7
        %v1094 = vsub.s32 3, %v1093
        %v1095 = vrot.slane %v1078, %v1094
        %1096 = vrot.lane.b32.xlu0 %v1083, 65
        %v1097 = vpop.permute.xlu0 %1096
        %1098 = vrot.lane.b32.xlu0 %v1087, 65
        %v1099 = vpop.permute.xlu0 %1098
        %1100 = vrot.lane.b32.xlu0 %v1091, 65
        %v1101 = vpop.permute.xlu0 %1100
        %1102 = vrot.lane.b32.xlu0 %v1095, 65
        %v1103 = vpop.permute.xlu0 %1102
        %vm1104 = vcmask 531456
        %v1105 = vsel %vm1104, %v1097, %v1099
        %v1106 = vsel %vm1104, %v1099, %v1101
        %v1107 = vsel %vm1104, %v1101, %v1103
        %v1113 = vmul.f32 %v1072, %v1097
        %v1114 = vmul.f32 %v1073, %v1105
        %v1115 = vmul.f32 %v1074, %v1106
        %v1116 = vmul.f32 %v1075, %v1107
        %v1117 = vmul.f32 %v1076, %v1103
        %1123 = vrot.lane.b32.xlu0 %v1113, 63
        %v1124 = vpop.permute.xlu0 %1123
        %1125 = vrot.lane.b32.xlu0 %v1114, 63
        %v1126 = vpop.permute.xlu0 %1125
        %1127 = vrot.lane.b32.xlu0 %v1115, 63
        %v1128 = vpop.permute.xlu0 %1127
        %1129 = vrot.lane.b32.xlu0 %v1116, 63
        %v1130 = vpop.permute.xlu0 %1129
        %1131 = vrot.lane.b32.xlu0 %v1117, 63
        %v1132 = vpop.permute.xlu0 %1131
        %vm1133 = vcmask 515072
        %v1134 = vsel %vm1133, %v1124, %v1126
        %v1135 = vsel %vm1133, %v1126, %v1128
        %v1136 = vsel %vm1133, %v1128, %v1130
        %v1137 = vsel %vm1133, %v1130, %v1132
        %1142 = vst [vmem:[#allocation3 + $0x140] sm:$0xff] %v1134
        %1143 = vst [vmem:[#allocation3 + $0x148] sm:$0xff] %v1135
        %1144 = vst [vmem:[#allocation3 + $0x150] sm:$0xff] %v1136
        %1145 = vst [vmem:[#allocation3 + $0x158] sm:$0xff] %v1137
        %v1146 = vld [vmem:[#allocation2] sm:$0xff]
        %v1147 = vld [vmem:[#allocation2 + $0x8] sm:$0xff]
        %v1148 = vld [vmem:[#allocation2 + $0x10] sm:$0xff]
        %v1149 = vld [vmem:[#allocation2 + $0x18] sm:$0xff]
        %v1150 = vld [vmem:[#allocation2 + $0x20] sm:$0xff]
        %s1151 = scalar_lea.vmem [#allocation7], 35
        %v1152 = vld [vmem:[%s1151] ss:$8 sm:$0xf]
        %v1154 = vlaneseq
        %v1155 = vshrl.u32 %v1154, 7
        %v1156 = vsub.s32 0, %v1155
        %v1157 = vrot.slane %v1152, %v1156
        %v1158 = vlaneseq
        %v1159 = vshrl.u32 %v1158, 7
        %v1160 = vsub.s32 1, %v1159
        %v1161 = vrot.slane %v1152, %v1160
        %v1162 = vlaneseq
        %v1163 = vshrl.u32 %v1162, 7
        %v1164 = vsub.s32 2, %v1163
        %v1165 = vrot.slane %v1152, %v1164
        %v1166 = vlaneseq
        %v1167 = vshrl.u32 %v1166, 7
        %v1168 = vsub.s32 3, %v1167
        %v1169 = vrot.slane %v1152, %v1168
        %1170 = vrot.lane.b32.xlu0 %v1157, 66
        %v1171 = vpop.permute.xlu0 %1170
        %1172 = vrot.lane.b32.xlu0 %v1161, 66
        %v1173 = vpop.permute.xlu0 %1172
        %1174 = vrot.lane.b32.xlu0 %v1165, 66
        %v1175 = vpop.permute.xlu0 %1174
        %1176 = vrot.lane.b32.xlu0 %v1169, 66
        %v1177 = vpop.permute.xlu0 %1176
        %vm1178 = vcmask 539648
        %v1179 = vsel %vm1178, %v1171, %v1173
        %v1180 = vsel %vm1178, %v1173, %v1175
        %v1181 = vsel %vm1178, %v1175, %v1177
        %v1187 = vmul.f32 %v1146, %v1171
        %v1188 = vmul.f32 %v1147, %v1179
        %v1189 = vmul.f32 %v1148, %v1180
        %v1190 = vmul.f32 %v1149, %v1181
        %v1191 = vmul.f32 %v1150, %v1177
        %1197 = vrot.lane.b32.xlu0 %v1187, 62
        %v1198 = vpop.permute.xlu0 %1197
        %1199 = vrot.lane.b32.xlu0 %v1188, 62
        %v1200 = vpop.permute.xlu0 %1199
        %1201 = vrot.lane.b32.xlu0 %v1189, 62
        %v1202 = vpop.permute.xlu0 %1201
        %1203 = vrot.lane.b32.xlu0 %v1190, 62
        %v1204 = vpop.permute.xlu0 %1203
        %1205 = vrot.lane.b32.xlu0 %v1191, 62
        %v1206 = vpop.permute.xlu0 %1205
        %vm1207 = vcmask 506880
        %v1208 = vsel %vm1207, %v1198, %v1200
        %v1209 = vsel %vm1207, %v1200, %v1202
        %v1210 = vsel %vm1207, %v1202, %v1204
        %v1211 = vsel %vm1207, %v1204, %v1206
        %1216 = vst [vmem:[#allocation3 + $0x160] sm:$0xff] %v1208
        %1217 = vst [vmem:[#allocation3 + $0x168] sm:$0xff] %v1209
        %1218 = vst [vmem:[#allocation3 + $0x170] sm:$0xff] %v1210
        %1219 = vst [vmem:[#allocation3 + $0x178] sm:$0xff] %v1211
        %v1220 = vld [vmem:[#allocation2] sm:$0xff]
        %v1221 = vld [vmem:[#allocation2 + $0x8] sm:$0xff]
        %v1222 = vld [vmem:[#allocation2 + $0x10] sm:$0xff]
        %v1223 = vld [vmem:[#allocation2 + $0x18] sm:$0xff]
        %v1224 = vld [vmem:[#allocation2 + $0x20] sm:$0xff]
        %s1225 = scalar_lea.vmem [#allocation7], 36
        %v1226 = vld [vmem:[%s1225] ss:$8 sm:$0xf]
        %v1228 = vlaneseq
        %v1229 = vshrl.u32 %v1228, 7
        %v1230 = vsub.s32 0, %v1229
        %v1231 = vrot.slane %v1226, %v1230
        %v1232 = vlaneseq
        %v1233 = vshrl.u32 %v1232, 7
        %v1234 = vsub.s32 1, %v1233
        %v1235 = vrot.slane %v1226, %v1234
        %v1236 = vlaneseq
        %v1237 = vshrl.u32 %v1236, 7
        %v1238 = vsub.s32 2, %v1237
        %v1239 = vrot.slane %v1226, %v1238
        %v1240 = vlaneseq
        %v1241 = vshrl.u32 %v1240, 7
        %v1242 = vsub.s32 3, %v1241
        %v1243 = vrot.slane %v1226, %v1242
        %1244 = vrot.lane.b32.xlu0 %v1231, 72
        %v1245 = vpop.permute.xlu0 %1244
        %1246 = vrot.lane.b32.xlu0 %v1235, 72
        %v1247 = vpop.permute.xlu0 %1246
        %1248 = vrot.lane.b32.xlu0 %v1239, 72
        %v1249 = vpop.permute.xlu0 %1248
        %1250 = vrot.lane.b32.xlu0 %v1243, 72
        %v1251 = vpop.permute.xlu0 %1250
        %vm1252 = vcmask 588800
        %v1253 = vsel %vm1252, %v1245, %v1247
        %v1254 = vsel %vm1252, %v1247, %v1249
        %v1255 = vsel %vm1252, %v1249, %v1251
        %v1261 = vmul.f32 %v1220, %v1245
        %v1262 = vmul.f32 %v1221, %v1253
        %v1263 = vmul.f32 %v1222, %v1254
        %v1264 = vmul.f32 %v1223, %v1255
        %v1265 = vmul.f32 %v1224, %v1251
        %1271 = vrot.lane.b32.xlu0 %v1261, 56
        %v1272 = vpop.permute.xlu0 %1271
        %1273 = vrot.lane.b32.xlu0 %v1262, 56
        %v1274 = vpop.permute.xlu0 %1273
        %1275 = vrot.lane.b32.xlu0 %v1263, 56
        %v1276 = vpop.permute.xlu0 %1275
        %1277 = vrot.lane.b32.xlu0 %v1264, 56
        %v1278 = vpop.permute.xlu0 %1277
        %1279 = vrot.lane.b32.xlu0 %v1265, 56
        %v1280 = vpop.permute.xlu0 %1279
        %vm1281 = vcmask 457728
        %v1282 = vsel %vm1281, %v1272, %v1274
        %v1283 = vsel %vm1281, %v1274, %v1276
        %v1284 = vsel %vm1281, %v1276, %v1278
        %v1285 = vsel %vm1281, %v1278, %v1280
        %1290 = vst [vmem:[#allocation3 + $0x180] sm:$0xff] %v1282
        %1291 = vst [vmem:[#allocation3 + $0x188] sm:$0xff] %v1283
        %1292 = vst [vmem:[#allocation3 + $0x190] sm:$0xff] %v1284
        %1293 = vst [vmem:[#allocation3 + $0x198] sm:$0xff] %v1285
        %v1294 = vld [vmem:[#allocation2] sm:$0xff]
        %v1295 = vld [vmem:[#allocation2 + $0x8] sm:$0xff]
        %v1296 = vld [vmem:[#allocation2 + $0x10] sm:$0xff]
        %v1297 = vld [vmem:[#allocation2 + $0x18] sm:$0xff]
        %v1298 = vld [vmem:[#allocation2 + $0x20] sm:$0xff]
        %1304 = vrot.lane.b32.xlu0 %v1294, 55
        %v1305 = vpop.permute.xlu0 %1304
        %1306 = vrot.lane.b32.xlu0 %v1295, 55
        %v1307 = vpop.permute.xlu0 %1306
        %1308 = vrot.lane.b32.xlu0 %v1296, 55
        %v1309 = vpop.permute.xlu0 %1308
        %1310 = vrot.lane.b32.xlu0 %v1297, 55
        %v1311 = vpop.permute.xlu0 %1310
        %1312 = vrot.lane.b32.xlu0 %v1298, 55
        %v1313 = vpop.permute.xlu0 %1312
        %vm1314 = vcmask 449536
        %v1315 = vsel %vm1314, %v1305, %v1307
        %v1316 = vsel %vm1314, %v1307, %v1309
        %v1317 = vsel %vm1314, %v1309, %v1311
        %v1318 = vsel %vm1314, %v1311, %v1313
        %1323 = vst [vmem:[#allocation3 + $0x1a0] sm:$0xff] %v1315
        %1324 = vst [vmem:[#allocation3 + $0x1a8] sm:$0xff] %v1316
        %1325 = vst [vmem:[#allocation3 + $0x1b0] sm:$0xff] %v1317
        %1326 = vst [vmem:[#allocation3 + $0x1b8] sm:$0xff] %v1318
        %v1327 = vld [vmem:[#allocation2] sm:$0xff]
        %v1328 = vld [vmem:[#allocation2 + $0x8] sm:$0xff]
        %v1329 = vld [vmem:[#allocation2 + $0x10] sm:$0xff]
        %v1330 = vld [vmem:[#allocation2 + $0x18] sm:$0xff]
        %v1331 = vld [vmem:[#allocation2 + $0x20] sm:$0xff]
        %s1332 = scalar_lea.vmem [#allocation7], 38
        %v1333 = vld [vmem:[%s1332] ss:$8 sm:$0xf]
        %v1335 = vlaneseq
        %v1336 = vshrl.u32 %v1335, 7
        %v1337 = vsub.s32 0, %v1336
        %v1338 = vrot.slane %v1333, %v1337
        %v1339 = vlaneseq
        %v1340 = vshrl.u32 %v1339, 7
        %v1341 = vsub.s32 1, %v1340
        %v1342 = vrot.slane %v1333, %v1341
        %v1343 = vlaneseq
        %v1344 = vshrl.u32 %v1343, 7
        %v1345 = vsub.s32 2, %v1344
        %v1346 = vrot.slane %v1333, %v1345
        %v1347 = vlaneseq
        %v1348 = vshrl.u32 %v1347, 7
        %v1349 = vsub.s32 3, %v1348
        %v1350 = vrot.slane %v1333, %v1349
        %1351 = vrot.lane.b32.xlu0 %v1338, 74
        %v1352 = vpop.permute.xlu0 %1351
        %1353 = vrot.lane.b32.xlu0 %v1342, 74
        %v1354 = vpop.permute.xlu0 %1353
        %1355 = vrot.lane.b32.xlu0 %v1346, 74
        %v1356 = vpop.permute.xlu0 %1355
        %1357 = vrot.lane.b32.xlu0 %v1350, 74
        %v1358 = vpop.permute.xlu0 %1357
        %vm1359 = vcmask 605184
        %v1360 = vsel %vm1359, %v1352, %v1354
        %v1361 = vsel %vm1359, %v1354, %v1356
        %v1362 = vsel %vm1359, %v1356, %v1358
        %v1368 = vmul.f32 %v1327, %v1352
        %v1369 = vmul.f32 %v1328, %v1360
        %v1370 = vmul.f32 %v1329, %v1361
        %v1371 = vmul.f32 %v1330, %v1362
        %v1372 = vmul.f32 %v1331, %v1358
        %1378 = vrot.lane.b32.xlu0 %v1368, 54
        %v1379 = vpop.permute.xlu0 %1378
        %1380 = vrot.lane.b32.xlu0 %v1369, 54
        %v1381 = vpop.permute.xlu0 %1380
        %1382 = vrot.lane.b32.xlu0 %v1370, 54
        %v1383 = vpop.permute.xlu0 %1382
        %1384 = vrot.lane.b32.xlu0 %v1371, 54
        %v1385 = vpop.permute.xlu0 %1384
        %1386 = vrot.lane.b32.xlu0 %v1372, 54
        %v1387 = vpop.permute.xlu0 %1386
        %vm1388 = vcmask 441344
        %v1389 = vsel %vm1388, %v1379, %v1381
        %v1390 = vsel %vm1388, %v1381, %v1383
        %v1391 = vsel %vm1388, %v1383, %v1385
        %v1392 = vsel %vm1388, %v1385, %v1387
        %1397 = vst [vmem:[#allocation3 + $0x1c0] sm:$0xff] %v1389
        %1398 = vst [vmem:[#allocation3 + $0x1c8] sm:$0xff] %v1390
        %1399 = vst [vmem:[#allocation3 + $0x1d0] sm:$0xff] %v1391
        %1400 = vst [vmem:[#allocation3 + $0x1d8] sm:$0xff] %v1392
        %v1401 = vld [vmem:[#allocation2] sm:$0xff]
        %v1402 = vld [vmem:[#allocation2 + $0x8] sm:$0xff]
        %v1403 = vld [vmem:[#allocation2 + $0x10] sm:$0xff]
        %v1404 = vld [vmem:[#allocation2 + $0x18] sm:$0xff]
        %v1405 = vld [vmem:[#allocation2 + $0x20] sm:$0xff]
        %s1406 = scalar_lea.vmem [#allocation7], 39
        %v1407 = vld [vmem:[%s1406] ss:$8 sm:$0xf]
        %v1409 = vlaneseq
        %v1410 = vshrl.u32 %v1409, 7
        %v1411 = vsub.s32 0, %v1410
        %v1412 = vrot.slane %v1407, %v1411
        %v1413 = vlaneseq
        %v1414 = vshrl.u32 %v1413, 7
        %v1415 = vsub.s32 1, %v1414
        %v1416 = vrot.slane %v1407, %v1415
        %v1417 = vlaneseq
        %v1418 = vshrl.u32 %v1417, 7
        %v1419 = vsub.s32 2, %v1418
        %v1420 = vrot.slane %v1407, %v1419
        %v1421 = vlaneseq
        %v1422 = vshrl.u32 %v1421, 7
        %v1423 = vsub.s32 3, %v1422
        %v1424 = vrot.slane %v1407, %v1423
        %1425 = vrot.lane.b32.xlu0 %v1412, 80
        %v1426 = vpop.permute.xlu0 %1425
        %1427 = vrot.lane.b32.xlu0 %v1416, 80
        %v1428 = vpop.permute.xlu0 %1427
        %1429 = vrot.lane.b32.xlu0 %v1420, 80
        %v1430 = vpop.permute.xlu0 %1429
        %1431 = vrot.lane.b32.xlu0 %v1424, 80
        %v1432 = vpop.permute.xlu0 %1431
        %vm1433 = vcmask 654336
        %v1434 = vsel %vm1433, %v1426, %v1428
        %v1435 = vsel %vm1433, %v1428, %v1430
        %v1436 = vsel %vm1433, %v1430, %v1432
        %v1442 = vmul.f32 %v1401, %v1426
        %v1443 = vmul.f32 %v1402, %v1434
        %v1444 = vmul.f32 %v1403, %v1435
        %v1445 = vmul.f32 %v1404, %v1436
        %v1446 = vmul.f32 %v1405, %v1432
        %1452 = vrot.lane.b32.xlu0 %v1442, 48
        %v1453 = vpop.permute.xlu0 %1452
        %1454 = vrot.lane.b32.xlu0 %v1443, 48
        %v1455 = vpop.permute.xlu0 %1454
        %1456 = vrot.lane.b32.xlu0 %v1444, 48
        %v1457 = vpop.permute.xlu0 %1456
        %1458 = vrot.lane.b32.xlu0 %v1445, 48
        %v1459 = vpop.permute.xlu0 %1458
        %1460 = vrot.lane.b32.xlu0 %v1446, 48
        %v1461 = vpop.permute.xlu0 %1460
        %vm1462 = vcmask 392192
        %v1463 = vsel %vm1462, %v1453, %v1455
        %v1464 = vsel %vm1462, %v1455, %v1457
        %v1465 = vsel %vm1462, %v1457, %v1459
        %v1466 = vsel %vm1462, %v1459, %v1461
        %1471 = vst [vmem:[#allocation3 + $0x1e0] sm:$0xff] %v1463
        %1472 = vst [vmem:[#allocation3 + $0x1e8] sm:$0xff] %v1464
        %1473 = vst [vmem:[#allocation3 + $0x1f0] sm:$0xff] %v1465
        %1474 = vst [vmem:[#allocation3 + $0x1f8] sm:$0xff] %v1466
        %v1475 = vld [vmem:[#allocation2] sm:$0xff]
        %v1476 = vld [vmem:[#allocation2 + $0x8] sm:$0xff]
        %v1477 = vld [vmem:[#allocation2 + $0x10] sm:$0xff]
        %v1478 = vld [vmem:[#allocation2 + $0x18] sm:$0xff]
        %v1479 = vld [vmem:[#allocation2 + $0x20] sm:$0xff]
        %s1480 = scalar_lea.vmem [#allocation7], 64
        %v1481 = vld [vmem:[%s1480] ss:$8 sm:$0xf]
        %v1483 = vlaneseq
        %v1484 = vshrl.u32 %v1483, 7
        %v1485 = vsub.s32 0, %v1484
        %v1486 = vrot.slane %v1481, %v1485
        %v1487 = vlaneseq
        %v1488 = vshrl.u32 %v1487, 7
        %v1489 = vsub.s32 1, %v1488
        %v1490 = vrot.slane %v1481, %v1489
        %v1491 = vlaneseq
        %v1492 = vshrl.u32 %v1491, 7
        %v1493 = vsub.s32 2, %v1492
        %v1494 = vrot.slane %v1481, %v1493
        %v1495 = vlaneseq
        %v1496 = vshrl.u32 %v1495, 7
        %v1497 = vsub.s32 3, %v1496
        %v1498 = vrot.slane %v1481, %v1497
        %1499 = vrot.lane.b32.xlu0 %v1486, 81
        %v1500 = vpop.permute.xlu0 %1499
        %1501 = vrot.lane.b32.xlu0 %v1490, 81
        %v1502 = vpop.permute.xlu0 %1501
        %1503 = vrot.lane.b32.xlu0 %v1494, 81
        %v1504 = vpop.permute.xlu0 %1503
        %1505 = vrot.lane.b32.xlu0 %v1498, 81
        %v1506 = vpop.permute.xlu0 %1505
        %vm1507 = vcmask 662528
        %v1508 = vsel %vm1507, %v1500, %v1502
        %v1509 = vsel %vm1507, %v1502, %v1504
        %v1510 = vsel %vm1507, %v1504, %v1506
        %v1516 = vmul.f32 %v1475, %v1500
        %v1517 = vmul.f32 %v1476, %v1508
        %v1518 = vmul.f32 %v1477, %v1509
        %v1519 = vmul.f32 %v1478, %v1510
        %v1520 = vmul.f32 %v1479, %v1506
        %1526 = vrot.lane.b32.xlu0 %v1516, 47
        %v1527 = vpop.permute.xlu0 %1526
        %1528 = vrot.lane.b32.xlu0 %v1517, 47
        %v1529 = vpop.permute.xlu0 %1528
        %1530 = vrot.lane.b32.xlu0 %v1518, 47
        %v1531 = vpop.permute.xlu0 %1530
        %1532 = vrot.lane.b32.xlu0 %v1519, 47
        %v1533 = vpop.permute.xlu0 %1532
        %1534 = vrot.lane.b32.xlu0 %v1520, 47
        %v1535 = vpop.permute.xlu0 %1534
        %vm1536 = vcmask 384000
        %v1537 = vsel %vm1536, %v1527, %v1529
        %v1538 = vsel %vm1536, %v1529, %v1531
        %v1539 = vsel %vm1536, %v1531, %v1533
        %v1540 = vsel %vm1536, %v1533, %v1535
        %1545 = vst [vmem:[#allocation3 + $0x200] sm:$0xff] %v1537
        %1546 = vst [vmem:[#allocation3 + $0x208] sm:$0xff] %v1538
        %1547 = vst [vmem:[#allocation3 + $0x210] sm:$0xff] %v1539
        %1548 = vst [vmem:[#allocation3 + $0x218] sm:$0xff] %v1540
        %v1549 = vld [vmem:[#allocation2] sm:$0xff]
        %v1550 = vld [vmem:[#allocation2 + $0x8] sm:$0xff]
        %v1551 = vld [vmem:[#allocation2 + $0x10] sm:$0xff]
        %v1552 = vld [vmem:[#allocation2 + $0x18] sm:$0xff]
        %v1553 = vld [vmem:[#allocation2 + $0x20] sm:$0xff]
        %s1554 = scalar_lea.vmem [#allocation7], 65
        %v1555 = vld [vmem:[%s1554] ss:$8 sm:$0xf]
        %v1557 = vlaneseq
        %v1558 = vshrl.u32 %v1557, 7
        %v1559 = vsub.s32 0, %v1558
        %v1560 = vrot.slane %v1555, %v1559
        %v1561 = vlaneseq
        %v1562 = vshrl.u32 %v1561, 7
        %v1563 = vsub.s32 1, %v1562
        %v1564 = vrot.slane %v1555, %v1563
        %v1565 = vlaneseq
        %v1566 = vshrl.u32 %v1565, 7
        %v1567 = vsub.s32 2, %v1566
        %v1568 = vrot.slane %v1555, %v1567
        %v1569 = vlaneseq
        %v1570 = vshrl.u32 %v1569, 7
        %v1571 = vsub.s32 3, %v1570
        %v1572 = vrot.slane %v1555, %v1571
        %1573 = vrot.lane.b32.xlu0 %v1560, 82
        %v1574 = vpop.permute.xlu0 %1573
        %1575 = vrot.lane.b32.xlu0 %v1564, 82
        %v1576 = vpop.permute.xlu0 %1575
        %1577 = vrot.lane.b32.xlu0 %v1568, 82
        %v1578 = vpop.permute.xlu0 %1577
        %1579 = vrot.lane.b32.xlu0 %v1572, 82
        %v1580 = vpop.permute.xlu0 %1579
        %vm1581 = vcmask 670720
        %v1582 = vsel %vm1581, %v1574, %v1576
        %v1583 = vsel %vm1581, %v1576, %v1578
        %v1584 = vsel %vm1581, %v1578, %v1580
        %v1590 = vmul.f32 %v1549, %v1574
        %v1591 = vmul.f32 %v1550, %v1582
        %v1592 = vmul.f32 %v1551, %v1583
        %v1593 = vmul.f32 %v1552, %v1584
        %v1594 = vmul.f32 %v1553, %v1580
        %1600 = vrot.lane.b32.xlu0 %v1590, 46
        %v1601 = vpop.permute.xlu0 %1600
        %1602 = vrot.lane.b32.xlu0 %v1591, 46
        %v1603 = vpop.permute.xlu0 %1602
        %1604 = vrot.lane.b32.xlu0 %v1592, 46
        %v1605 = vpop.permute.xlu0 %1604
        %1606 = vrot.lane.b32.xlu0 %v1593, 46
        %v1607 = vpop.permute.xlu0 %1606
        %1608 = vrot.lane.b32.xlu0 %v1594, 46
        %v1609 = vpop.permute.xlu0 %1608
        %vm1610 = vcmask 375808
        %v1611 = vsel %vm1610, %v1601, %v1603
        %v1612 = vsel %vm1610, %v1603, %v1605
        %v1613 = vsel %vm1610, %v1605, %v1607
        %v1614 = vsel %vm1610, %v1607, %v1609
        %1619 = vst [vmem:[#allocation3 + $0x220] sm:$0xff] %v1611
        %1620 = vst [vmem:[#allocation3 + $0x228] sm:$0xff] %v1612
        %1621 = vst [vmem:[#allocation3 + $0x230] sm:$0xff] %v1613
        %1622 = vst [vmem:[#allocation3 + $0x238] sm:$0xff] %v1614
        %v1623 = vld [vmem:[#allocation2 + $0x8] sm:$0xff]
        %v1624 = vld [vmem:[#allocation2 + $0x10] sm:$0xff]
        %v1625 = vld [vmem:[#allocation2 + $0x18] sm:$0xff]
        %v1626 = vld [vmem:[#allocation2 + $0x20] sm:$0xff]
        %s1627 = scalar_lea.vmem [#allocation7], 66
        %v1628 = vld [vmem:[%s1627] ss:$8 sm:$0xf]
        %v1630 = vlaneseq
        %v1631 = vshrl.u32 %v1630, 7
        %v1632 = vsub.s32 0, %v1631
        %v1633 = vrot.slane %v1628, %v1632
        %v1634 = vlaneseq
        %v1635 = vshrl.u32 %v1634, 7
        %v1636 = vsub.s32 1, %v1635
        %v1637 = vrot.slane %v1628, %v1636
        %v1638 = vlaneseq
        %v1639 = vshrl.u32 %v1638, 7
        %v1640 = vsub.s32 2, %v1639
        %v1641 = vrot.slane %v1628, %v1640
        %v1642 = vlaneseq
        %v1643 = vshrl.u32 %v1642, 7
        %v1644 = vsub.s32 3, %v1643
        %v1645 = vrot.slane %v1628, %v1644
        %v1650 = vmul.f32 %v1623, %v1633
        %v1651 = vmul.f32 %v1624, %v1637
        %v1652 = vmul.f32 %v1625, %v1641
        %v1653 = vmul.f32 %v1626, %v1645
        %1654 = vst [vmem:[#allocation3 + $0x240] sm:$0xff] %v1650
        %1655 = vst [vmem:[#allocation3 + $0x248] sm:$0xff] %v1651
        %1656 = vst [vmem:[#allocation3 + $0x250] sm:$0xff] %v1652
        %1657 = vst [vmem:[#allocation3 + $0x258] sm:$0xff] %v1653
        %v1658 = vld [vmem:[#allocation2 + $0x8] sm:$0xff]
        %v1659 = vld [vmem:[#allocation2 + $0x10] sm:$0xff]
        %v1660 = vld [vmem:[#allocation2 + $0x18] sm:$0xff]
        %v1661 = vld [vmem:[#allocation2 + $0x20] sm:$0xff]
        %v1662 = vld [vmem:[#allocation2 + $0x28] sm:$0xff]
        %s1663 = scalar_lea.vmem [#allocation7], 67
        %v1664 = vld [vmem:[%s1663] ss:$8 sm:$0xf]
        %v1666 = vlaneseq
        %v1667 = vshrl.u32 %v1666, 7
        %v1668 = vsub.s32 0, %v1667
        %v1669 = vrot.slane %v1664, %v1668
        %v1670 = vlaneseq
        %v1671 = vshrl.u32 %v1670, 7
        %v1672 = vsub.s32 1, %v1671
        %v1673 = vrot.slane %v1664, %v1672
        %v1674 = vlaneseq
        %v1675 = vshrl.u32 %v1674, 7
        %v1676 = vsub.s32 2, %v1675
        %v1677 = vrot.slane %v1664, %v1676
        %v1678 = vlaneseq
        %v1679 = vshrl.u32 %v1678, 7
        %v1680 = vsub.s32 3, %v1679
        %v1681 = vrot.slane %v1664, %v1680
        %1682 = vrot.lane.b32.xlu0 %v1669, 1
        %v1683 = vpop.permute.xlu0 %1682
        %1684 = vrot.lane.b32.xlu0 %v1673, 1
        %v1685 = vpop.permute.xlu0 %1684
        %1686 = vrot.lane.b32.xlu0 %v1677, 1
        %v1687 = vpop.permute.xlu0 %1686
        %1688 = vrot.lane.b32.xlu0 %v1681, 1
        %v1689 = vpop.permute.xlu0 %1688
        %v1690 = vsel %vm440, %v1683, %v1685
        %v1691 = vsel %vm440, %v1685, %v1687
        %v1692 = vsel %vm440, %v1687, %v1689
        %v1698 = vmul.f32 %v1658, %v1683
        %v1699 = vmul.f32 %v1659, %v1690
        %v1700 = vmul.f32 %v1660, %v1691
        %v1701 = vmul.f32 %v1661, %v1692
        %v1702 = vmul.f32 %v1662, %v1689
        %1708 = vrot.lane.b32.xlu0 %v1698, 127
        %v1709 = vpop.permute.xlu0 %1708
        %1710 = vrot.lane.b32.xlu0 %v1699, 127
        %v1711 = vpop.permute.xlu0 %1710
        %1712 = vrot.lane.b32.xlu0 %v1700, 127
        %v1713 = vpop.permute.xlu0 %1712
        %1714 = vrot.lane.b32.xlu0 %v1701, 127
        %v1715 = vpop.permute.xlu0 %1714
        %1716 = vrot.lane.b32.xlu0 %v1702, 127
        %v1717 = vpop.permute.xlu0 %1716
        %v1718 = vsel %vm469, %v1709, %v1711
        %v1719 = vsel %vm469, %v1711, %v1713
        %v1720 = vsel %vm469, %v1713, %v1715
        %v1721 = vsel %vm469, %v1715, %v1717
        %1726 = vst [vmem:[#allocation3 + $0x260] sm:$0xff] %v1718
        %1727 = vst [vmem:[#allocation3 + $0x268] sm:$0xff] %v1719
        %1728 = vst [vmem:[#allocation3 + $0x270] sm:$0xff] %v1720
        %1729 = vst [vmem:[#allocation3 + $0x278] sm:$0xff] %v1721
        %v1730 = vld [vmem:[#allocation2 + $0x8] sm:$0xff]
        %v1731 = vld [vmem:[#allocation2 + $0x10] sm:$0xff]
        %v1732 = vld [vmem:[#allocation2 + $0x18] sm:$0xff]
        %v1733 = vld [vmem:[#allocation2 + $0x20] sm:$0xff]
        %v1734 = vld [vmem:[#allocation2 + $0x28] sm:$0xff]
        %s1735 = scalar_lea.vmem [#allocation7], 68
        %v1736 = vld [vmem:[%s1735] ss:$8 sm:$0xf]
        %v1738 = vlaneseq
        %v1739 = vshrl.u32 %v1738, 7
        %v1740 = vsub.s32 0, %v1739
        %v1741 = vrot.slane %v1736, %v1740
        %v1742 = vlaneseq
        %v1743 = vshrl.u32 %v1742, 7
        %v1744 = vsub.s32 1, %v1743
        %v1745 = vrot.slane %v1736, %v1744
        %v1746 = vlaneseq
        %v1747 = vshrl.u32 %v1746, 7
        %v1748 = vsub.s32 2, %v1747
        %v1749 = vrot.slane %v1736, %v1748
        %v1750 = vlaneseq
        %v1751 = vshrl.u32 %v1750, 7
        %v1752 = vsub.s32 3, %v1751
        %v1753 = vrot.slane %v1736, %v1752
        %1754 = vrot.lane.b32.xlu0 %v1741, 2
        %v1755 = vpop.permute.xlu0 %1754
        %1756 = vrot.lane.b32.xlu0 %v1745, 2
        %v1757 = vpop.permute.xlu0 %1756
        %1758 = vrot.lane.b32.xlu0 %v1749, 2
        %v1759 = vpop.permute.xlu0 %1758
        %1760 = vrot.lane.b32.xlu0 %v1753, 2
        %v1761 = vpop.permute.xlu0 %1760
        %v1762 = vsel %vm514, %v1755, %v1757
        %v1763 = vsel %vm514, %v1757, %v1759
        %v1764 = vsel %vm514, %v1759, %v1761
        %v1770 = vmul.f32 %v1730, %v1755
        %v1771 = vmul.f32 %v1731, %v1762
        %v1772 = vmul.f32 %v1732, %v1763
        %v1773 = vmul.f32 %v1733, %v1764
        %v1774 = vmul.f32 %v1734, %v1761
        %1780 = vrot.lane.b32.xlu0 %v1770, 126
        %v1781 = vpop.permute.xlu0 %1780
        %1782 = vrot.lane.b32.xlu0 %v1771, 126
        %v1783 = vpop.permute.xlu0 %1782
        %1784 = vrot.lane.b32.xlu0 %v1772, 126
        %v1785 = vpop.permute.xlu0 %1784
        %1786 = vrot.lane.b32.xlu0 %v1773, 126
        %v1787 = vpop.permute.xlu0 %1786
        %1788 = vrot.lane.b32.xlu0 %v1774, 126
        %v1789 = vpop.permute.xlu0 %1788
        %v1790 = vsel %vm543, %v1781, %v1783
        %v1791 = vsel %vm543, %v1783, %v1785
        %v1792 = vsel %vm543, %v1785, %v1787
        %v1793 = vsel %vm543, %v1787, %v1789
        %1798 = vst [vmem:[#allocation3 + $0x280] sm:$0xff] %v1790
        %1799 = vst [vmem:[#allocation3 + $0x288] sm:$0xff] %v1791
        %1800 = vst [vmem:[#allocation3 + $0x290] sm:$0xff] %v1792
        %1801 = vst [vmem:[#allocation3 + $0x298] sm:$0xff] %v1793
        %v1802 = vld [vmem:[#allocation2 + $0x8] sm:$0xff]
        %v1803 = vld [vmem:[#allocation2 + $0x10] sm:$0xff]
        %v1804 = vld [vmem:[#allocation2 + $0x18] sm:$0xff]
        %v1805 = vld [vmem:[#allocation2 + $0x20] sm:$0xff]
        %v1806 = vld [vmem:[#allocation2 + $0x28] sm:$0xff]
        %s1807 = scalar_lea.vmem [#allocation7], 69
        %v1808 = vld [vmem:[%s1807] ss:$8 sm:$0xf]
        %v1810 = vlaneseq
        %v1811 = vshrl.u32 %v1810, 7
        %v1812 = vsub.s32 0, %v1811
        %v1813 = vrot.slane %v1808, %v1812
        %v1814 = vlaneseq
        %v1815 = vshrl.u32 %v1814, 7
        %v1816 = vsub.s32 1, %v1815
        %v1817 = vrot.slane %v1808, %v1816
        %v1818 = vlaneseq
        %v1819 = vshrl.u32 %v1818, 7
        %v1820 = vsub.s32 2, %v1819
        %v1821 = vrot.slane %v1808, %v1820
        %v1822 = vlaneseq
        %v1823 = vshrl.u32 %v1822, 7
        %v1824 = vsub.s32 3, %v1823
        %v1825 = vrot.slane %v1808, %v1824
        %1826 = vrot.lane.b32.xlu0 %v1813, 8
        %v1827 = vpop.permute.xlu0 %1826
        %1828 = vrot.lane.b32.xlu0 %v1817, 8
        %v1829 = vpop.permute.xlu0 %1828
        %1830 = vrot.lane.b32.xlu0 %v1821, 8
        %v1831 = vpop.permute.xlu0 %1830
        %1832 = vrot.lane.b32.xlu0 %v1825, 8
        %v1833 = vpop.permute.xlu0 %1832
        %v1834 = vsel %vm588, %v1827, %v1829
        %v1835 = vsel %vm588, %v1829, %v1831
        %v1836 = vsel %vm588, %v1831, %v1833
        %v1842 = vmul.f32 %v1802, %v1827
        %v1843 = vmul.f32 %v1803, %v1834
        %v1844 = vmul.f32 %v1804, %v1835
        %v1845 = vmul.f32 %v1805, %v1836
        %v1846 = vmul.f32 %v1806, %v1833
        %1852 = vrot.lane.b32.xlu0 %v1842, 120
        %v1853 = vpop.permute.xlu0 %1852
        %1854 = vrot.lane.b32.xlu0 %v1843, 120
        %v1855 = vpop.permute.xlu0 %1854
        %1856 = vrot.lane.b32.xlu0 %v1844, 120
        %v1857 = vpop.permute.xlu0 %1856
        %1858 = vrot.lane.b32.xlu0 %v1845, 120
        %v1859 = vpop.permute.xlu0 %1858
        %1860 = vrot.lane.b32.xlu0 %v1846, 120
        %v1861 = vpop.permute.xlu0 %1860
        %v1862 = vsel %vm617, %v1853, %v1855
        %v1863 = vsel %vm617, %v1855, %v1857
        %v1864 = vsel %vm617, %v1857, %v1859
        %v1865 = vsel %vm617, %v1859, %v1861
        %1870 = vst [vmem:[#allocation3 + $0x2a0] sm:$0xff] %v1862
        %1871 = vst [vmem:[#allocation3 + $0x2a8] sm:$0xff] %v1863
        %1872 = vst [vmem:[#allocation3 + $0x2b0] sm:$0xff] %v1864
        %1873 = vst [vmem:[#allocation3 + $0x2b8] sm:$0xff] %v1865
        %v1874 = vld [vmem:[#allocation2 + $0x8] sm:$0xff]
        %v1875 = vld [vmem:[#allocation2 + $0x10] sm:$0xff]
        %v1876 = vld [vmem:[#allocation2 + $0x18] sm:$0xff]
        %v1877 = vld [vmem:[#allocation2 + $0x20] sm:$0xff]
        %v1878 = vld [vmem:[#allocation2 + $0x28] sm:$0xff]
        %s1879 = scalar_lea.vmem [#allocation7], 70
        %v1880 = vld [vmem:[%s1879] ss:$8 sm:$0xf]
        %v1882 = vlaneseq
        %v1883 = vshrl.u32 %v1882, 7
        %v1884 = vsub.s32 0, %v1883
        %v1885 = vrot.slane %v1880, %v1884
        %v1886 = vlaneseq
        %v1887 = vshrl.u32 %v1886, 7
        %v1888 = vsub.s32 1, %v1887
        %v1889 = vrot.slane %v1880, %v1888
        %v1890 = vlaneseq
        %v1891 = vshrl.u32 %v1890, 7
        %v1892 = vsub.s32 2, %v1891
        %v1893 = vrot.slane %v1880, %v1892
        %v1894 = vlaneseq
        %v1895 = vshrl.u32 %v1894, 7
        %v1896 = vsub.s32 3, %v1895
        %v1897 = vrot.slane %v1880, %v1896
        %1898 = vrot.lane.b32.xlu0 %v1885, 9
        %v1899 = vpop.permute.xlu0 %1898
        %1900 = vrot.lane.b32.xlu0 %v1889, 9
        %v1901 = vpop.permute.xlu0 %1900
        %1902 = vrot.lane.b32.xlu0 %v1893, 9
        %v1903 = vpop.permute.xlu0 %1902
        %1904 = vrot.lane.b32.xlu0 %v1897, 9
        %v1905 = vpop.permute.xlu0 %1904
        %v1906 = vsel %vm662, %v1899, %v1901
        %v1907 = vsel %vm662, %v1901, %v1903
        %v1908 = vsel %vm662, %v1903, %v1905
        %v1914 = vmul.f32 %v1874, %v1899
        %v1915 = vmul.f32 %v1875, %v1906
        %v1916 = vmul.f32 %v1876, %v1907
        %v1917 = vmul.f32 %v1877, %v1908
        %v1918 = vmul.f32 %v1878, %v1905
        %1924 = vrot.lane.b32.xlu0 %v1914, 119
        %v1925 = vpop.permute.xlu0 %1924
        %1926 = vrot.lane.b32.xlu0 %v1915, 119
        %v1927 = vpop.permute.xlu0 %1926
        %1928 = vrot.lane.b32.xlu0 %v1916, 119
        %v1929 = vpop.permute.xlu0 %1928
        %1930 = vrot.lane.b32.xlu0 %v1917, 119
        %v1931 = vpop.permute.xlu0 %1930
        %1932 = vrot.lane.b32.xlu0 %v1918, 119
        %v1933 = vpop.permute.xlu0 %1932
        %v1934 = vsel %vm691, %v1925, %v1927
        %v1935 = vsel %vm691, %v1927, %v1929
        %v1936 = vsel %vm691, %v1929, %v1931
        %v1937 = vsel %vm691, %v1931, %v1933
        %1942 = vst [vmem:[#allocation3 + $0x2c0] sm:$0xff] %v1934
        %1943 = vst [vmem:[#allocation3 + $0x2c8] sm:$0xff] %v1935
        %1944 = vst [vmem:[#allocation3 + $0x2d0] sm:$0xff] %v1936
        %1945 = vst [vmem:[#allocation3 + $0x2d8] sm:$0xff] %v1937
        %v1946 = vld [vmem:[#allocation2 + $0x8] sm:$0xff]
        %v1947 = vld [vmem:[#allocation2 + $0x10] sm:$0xff]
        %v1948 = vld [vmem:[#allocation2 + $0x18] sm:$0xff]
        %v1949 = vld [vmem:[#allocation2 + $0x20] sm:$0xff]
        %v1950 = vld [vmem:[#allocation2 + $0x28] sm:$0xff]
        %s1951 = scalar_lea.vmem [#allocation7], 71
        %v1952 = vld [vmem:[%s1951] ss:$8 sm:$0xf]
        %v1954 = vlaneseq
        %v1955 = vshrl.u32 %v1954, 7
        %v1956 = vsub.s32 0, %v1955
        %v1957 = vrot.slane %v1952, %v1956
        %v1958 = vlaneseq
        %v1959 = vshrl.u32 %v1958, 7
        %v1960 = vsub.s32 1, %v1959
        %v1961 = vrot.slane %v1952, %v1960
        %v1962 = vlaneseq
        %v1963 = vshrl.u32 %v1962, 7
        %v1964 = vsub.s32 2, %v1963
        %v1965 = vrot.slane %v1952, %v1964
        %v1966 = vlaneseq
        %v1967 = vshrl.u32 %v1966, 7
        %v1968 = vsub.s32 3, %v1967
        %v1969 = vrot.slane %v1952, %v1968
        %1970 = vrot.lane.b32.xlu0 %v1957, 10
        %v1971 = vpop.permute.xlu0 %1970
        %1972 = vrot.lane.b32.xlu0 %v1961, 10
        %v1973 = vpop.permute.xlu0 %1972
        %1974 = vrot.lane.b32.xlu0 %v1965, 10
        %v1975 = vpop.permute.xlu0 %1974
        %1976 = vrot.lane.b32.xlu0 %v1969, 10
        %v1977 = vpop.permute.xlu0 %1976
        %v1978 = vsel %vm736, %v1971, %v1973
        %v1979 = vsel %vm736, %v1973, %v1975
        %v1980 = vsel %vm736, %v1975, %v1977
        %v1986 = vmul.f32 %v1946, %v1971
        %v1987 = vmul.f32 %v1947, %v1978
        %v1988 = vmul.f32 %v1948, %v1979
        %v1989 = vmul.f32 %v1949, %v1980
        %v1990 = vmul.f32 %v1950, %v1977
        %1996 = vrot.lane.b32.xlu0 %v1986, 118
        %v1997 = vpop.permute.xlu0 %1996
        %1998 = vrot.lane.b32.xlu0 %v1987, 118
        %v1999 = vpop.permute.xlu0 %1998
        %2000 = vrot.lane.b32.xlu0 %v1988, 118
        %v2001 = vpop.permute.xlu0 %2000
        %2002 = vrot.lane.b32.xlu0 %v1989, 118
        %v2003 = vpop.permute.xlu0 %2002
        %2004 = vrot.lane.b32.xlu0 %v1990, 118
        %v2005 = vpop.permute.xlu0 %2004
        %v2006 = vsel %vm765, %v1997, %v1999
        %v2007 = vsel %vm765, %v1999, %v2001
        %v2008 = vsel %vm765, %v2001, %v2003
        %v2009 = vsel %vm765, %v2003, %v2005
        %2014 = vst [vmem:[#allocation3 + $0x2e0] sm:$0xff] %v2006
        %2015 = vst [vmem:[#allocation3 + $0x2e8] sm:$0xff] %v2007
        %2016 = vst [vmem:[#allocation3 + $0x2f0] sm:$0xff] %v2008
        %2017 = vst [vmem:[#allocation3 + $0x2f8] sm:$0xff] %v2009
        %v2018 = vld [vmem:[#allocation2 + $0x8] sm:$0xff]
        %v2019 = vld [vmem:[#allocation2 + $0x10] sm:$0xff]
        %v2020 = vld [vmem:[#allocation2 + $0x18] sm:$0xff]
        %v2021 = vld [vmem:[#allocation2 + $0x20] sm:$0xff]
        %v2022 = vld [vmem:[#allocation2 + $0x28] sm:$0xff]
        %s2023 = scalar_lea.vmem [#allocation7], 96
        %v2024 = vld [vmem:[%s2023] ss:$8 sm:$0xf]
        %v2026 = vlaneseq
        %v2027 = vshrl.u32 %v2026, 7
        %v2028 = vsub.s32 0, %v2027
        %v2029 = vrot.slane %v2024, %v2028
        %v2030 = vlaneseq
        %v2031 = vshrl.u32 %v2030, 7
        %v2032 = vsub.s32 1, %v2031
        %v2033 = vrot.slane %v2024, %v2032
        %v2034 = vlaneseq
        %v2035 = vshrl.u32 %v2034, 7
        %v2036 = vsub.s32 2, %v2035
        %v2037 = vrot.slane %v2024, %v2036
        %v2038 = vlaneseq
        %v2039 = vshrl.u32 %v2038, 7
        %v2040 = vsub.s32 3, %v2039
        %v2041 = vrot.slane %v2024, %v2040
        %2042 = vrot.lane.b32.xlu0 %v2029, 16
        %v2043 = vpop.permute.xlu0 %2042
        %2044 = vrot.lane.b32.xlu0 %v2033, 16
        %v2045 = vpop.permute.xlu0 %2044
        %2046 = vrot.lane.b32.xlu0 %v2037, 16
        %v2047 = vpop.permute.xlu0 %2046
        %2048 = vrot.lane.b32.xlu0 %v2041, 16
        %v2049 = vpop.permute.xlu0 %2048
        %v2050 = vsel %vm810, %v2043, %v2045
        %v2051 = vsel %vm810, %v2045, %v2047
        %v2052 = vsel %vm810, %v2047, %v2049
        %v2058 = vmul.f32 %v2018, %v2043
        %v2059 = vmul.f32 %v2019, %v2050
        %v2060 = vmul.f32 %v2020, %v2051
        %v2061 = vmul.f32 %v2021, %v2052
        %v2062 = vmul.f32 %v2022, %v2049
        %2068 = vrot.lane.b32.xlu0 %v2058, 112
        %v2069 = vpop.permute.xlu0 %2068
        %2070 = vrot.lane.b32.xlu0 %v2059, 112
        %v2071 = vpop.permute.xlu0 %2070
        %2072 = vrot.lane.b32.xlu0 %v2060, 112
        %v2073 = vpop.permute.xlu0 %2072
        %2074 = vrot.lane.b32.xlu0 %v2061, 112
        %v2075 = vpop.permute.xlu0 %2074
        %2076 = vrot.lane.b32.xlu0 %v2062, 112
        %v2077 = vpop.permute.xlu0 %2076
        %v2078 = vsel %vm839, %v2069, %v2071
        %v2079 = vsel %vm839, %v2071, %v2073
        %v2080 = vsel %vm839, %v2073, %v2075
        %v2081 = vsel %vm839, %v2075, %v2077
        %2086 = vst [vmem:[#allocation3 + $0x300] sm:$0xff] %v2078
        %2087 = vst [vmem:[#allocation3 + $0x308] sm:$0xff] %v2079
        %2088 = vst [vmem:[#allocation3 + $0x310] sm:$0xff] %v2080
        %2089 = vst [vmem:[#allocation3 + $0x318] sm:$0xff] %v2081
        %v2090 = vld [vmem:[#allocation2 + $0x8] sm:$0xff]
        %v2091 = vld [vmem:[#allocation2 + $0x10] sm:$0xff]
        %v2092 = vld [vmem:[#allocation2 + $0x18] sm:$0xff]
        %v2093 = vld [vmem:[#allocation2 + $0x20] sm:$0xff]
        %v2094 = vld [vmem:[#allocation2 + $0x28] sm:$0xff]
        %s2095 = scalar_lea.vmem [#allocation7], 97
        %v2096 = vld [vmem:[%s2095] ss:$8 sm:$0xf]
        %v2098 = vlaneseq
        %v2099 = vshrl.u32 %v2098, 7
        %v2100 = vsub.s32 0, %v2099
        %v2101 = vrot.slane %v2096, %v2100
        %v2102 = vlaneseq
        %v2103 = vshrl.u32 %v2102, 7
        %v2104 = vsub.s32 1, %v2103
        %v2105 = vrot.slane %v2096, %v2104
        %v2106 = vlaneseq
        %v2107 = vshrl.u32 %v2106, 7
        %v2108 = vsub.s32 2, %v2107
        %v2109 = vrot.slane %v2096, %v2108
        %v2110 = vlaneseq
        %v2111 = vshrl.u32 %v2110, 7
        %v2112 = vsub.s32 3, %v2111
        %v2113 = vrot.slane %v2096, %v2112
        %2114 = vrot.lane.b32.xlu0 %v2101, 17
        %v2115 = vpop.permute.xlu0 %2114
        %2116 = vrot.lane.b32.xlu0 %v2105, 17
        %v2117 = vpop.permute.xlu0 %2116
        %2118 = vrot.lane.b32.xlu0 %v2109, 17
        %v2119 = vpop.permute.xlu0 %2118
        %2120 = vrot.lane.b32.xlu0 %v2113, 17
        %v2121 = vpop.permute.xlu0 %2120
        %v2122 = vsel %vm884, %v2115, %v2117
        %v2123 = vsel %vm884, %v2117, %v2119
        %v2124 = vsel %vm884, %v2119, %v2121
        %v2130 = vmul.f32 %v2090, %v2115
        %v2131 = vmul.f32 %v2091, %v2122
        %v2132 = vmul.f32 %v2092, %v2123
        %v2133 = vmul.f32 %v2093, %v2124
        %v2134 = vmul.f32 %v2094, %v2121
        %2140 = vrot.lane.b32.xlu0 %v2130, 111
        %v2141 = vpop.permute.xlu0 %2140
        %2142 = vrot.lane.b32.xlu0 %v2131, 111
        %v2143 = vpop.permute.xlu0 %2142
        %2144 = vrot.lane.b32.xlu0 %v2132, 111
        %v2145 = vpop.permute.xlu0 %2144
        %2146 = vrot.lane.b32.xlu0 %v2133, 111
        %v2147 = vpop.permute.xlu0 %2146
        %2148 = vrot.lane.b32.xlu0 %v2134, 111
        %v2149 = vpop.permute.xlu0 %2148
        %v2150 = vsel %vm913, %v2141, %v2143
        %v2151 = vsel %vm913, %v2143, %v2145
        %v2152 = vsel %vm913, %v2145, %v2147
        %v2153 = vsel %vm913, %v2147, %v2149
        %2158 = vst [vmem:[#allocation3 + $0x320] sm:$0xff] %v2150
        %2159 = vst [vmem:[#allocation3 + $0x328] sm:$0xff] %v2151
        %2160 = vst [vmem:[#allocation3 + $0x330] sm:$0xff] %v2152
        %2161 = vst [vmem:[#allocation3 + $0x338] sm:$0xff] %v2153
        %v2162 = vld [vmem:[#allocation2 + $0x8] sm:$0xff]
        %v2163 = vld [vmem:[#allocation2 + $0x10] sm:$0xff]
        %v2164 = vld [vmem:[#allocation2 + $0x18] sm:$0xff]
        %v2165 = vld [vmem:[#allocation2 + $0x20] sm:$0xff]
        %v2166 = vld [vmem:[#allocation2 + $0x28] sm:$0xff]
        %s2167 = scalar_lea.vmem [#allocation7], 98
        %v2168 = vld [vmem:[%s2167] ss:$8 sm:$0xf]
        %v2170 = vlaneseq
        %v2171 = vshrl.u32 %v2170, 7
        %v2172 = vsub.s32 0, %v2171
        %v2173 = vrot.slane %v2168, %v2172
        %v2174 = vlaneseq
        %v2175 = vshrl.u32 %v2174, 7
        %v2176 = vsub.s32 1, %v2175
        %v2177 = vrot.slane %v2168, %v2176
        %v2178 = vlaneseq
        %v2179 = vshrl.u32 %v2178, 7
        %v2180 = vsub.s32 2, %v2179
        %v2181 = vrot.slane %v2168, %v2180
        %v2182 = vlaneseq
        %v2183 = vshrl.u32 %v2182, 7
        %v2184 = vsub.s32 3, %v2183
        %v2185 = vrot.slane %v2168, %v2184
        %2186 = vrot.lane.b32.xlu0 %v2173, 18
        %v2187 = vpop.permute.xlu0 %2186
        %2188 = vrot.lane.b32.xlu0 %v2177, 18
        %v2189 = vpop.permute.xlu0 %2188
        %2190 = vrot.lane.b32.xlu0 %v2181, 18
        %v2191 = vpop.permute.xlu0 %2190
        %2192 = vrot.lane.b32.xlu0 %v2185, 18
        %v2193 = vpop.permute.xlu0 %2192
        %v2194 = vsel %vm342, %v2187, %v2189
        %v2195 = vsel %vm342, %v2189, %v2191
        %v2196 = vsel %vm342, %v2191, %v2193
        %v2202 = vmul.f32 %v2162, %v2187
        %v2203 = vmul.f32 %v2163, %v2194
        %v2204 = vmul.f32 %v2164, %v2195
        %v2205 = vmul.f32 %v2165, %v2196
        %v2206 = vmul.f32 %v2166, %v2193
        %2212 = vrot.lane.b32.xlu0 %v2202, 110
        %v2213 = vpop.permute.xlu0 %2212
        %2214 = vrot.lane.b32.xlu0 %v2203, 110
        %v2215 = vpop.permute.xlu0 %2214
        %2216 = vrot.lane.b32.xlu0 %v2204, 110
        %v2217 = vpop.permute.xlu0 %2216
        %2218 = vrot.lane.b32.xlu0 %v2205, 110
        %v2219 = vpop.permute.xlu0 %2218
        %2220 = vrot.lane.b32.xlu0 %v2206, 110
        %v2221 = vpop.permute.xlu0 %2220
        %v2222 = vsel %vm986, %v2213, %v2215
        %v2223 = vsel %vm986, %v2215, %v2217
        %v2224 = vsel %vm986, %v2217, %v2219
        %v2225 = vsel %vm986, %v2219, %v2221
        %2230 = vst [vmem:[#allocation3 + $0x340] sm:$0xff] %v2222
        %2231 = vst [vmem:[#allocation3 + $0x348] sm:$0xff] %v2223
        %2232 = vst [vmem:[#allocation3 + $0x350] sm:$0xff] %v2224
        %2233 = vst [vmem:[#allocation3 + $0x358] sm:$0xff] %v2225
        %v2234 = vld [vmem:[%s2] sm:$0xff]
        %v2235 = vld [vmem:[%s2 + $0x8] sm:$0xff]
        %v2236 = vld [vmem:[#allocation3] sm:$0xff]
        %v2237 = vld [vmem:[#allocation3 + $0x8] sm:$0xff]
        %v2238 = vld [vmem:[#allocation3 + $0x10] sm:$0xff]
        %v2239 = vld [vmem:[#allocation3 + $0x18] sm:$0xff]
        %v2240 = vld [vmem:[#allocation3 + $0x20] sm:$0xff]
        %v2241 = vld [vmem:[#allocation3 + $0x28] sm:$0xff]
        %v2242 = vld [vmem:[#allocation3 + $0x30] sm:$0xff]
        %v2243 = vld [vmem:[#allocation3 + $0x38] sm:$0xff]
        %v2244 = vld [vmem:[#allocation3 + $0x40] sm:$0xff]
        %v2245 = vld [vmem:[#allocation3 + $0x48] sm:$0xff]
        %v2246 = vld [vmem:[#allocation3 + $0x50] sm:$0xff]
        %v2247 = vld [vmem:[#allocation3 + $0x58] sm:$0xff]
        %v2248 = vld [vmem:[#allocation3 + $0x60] sm:$0xff]
        %v2249 = vld [vmem:[#allocation3 + $0x68] sm:$0xff]
        %v2250 = vld [vmem:[#allocation3 + $0x70] sm:$0xff]
        %v2251 = vld [vmem:[#allocation3 + $0x78] sm:$0xff]
        %v2252 = vld [vmem:[#allocation3 + $0x80] sm:$0xff]
        %v2253 = vld [vmem:[#allocation3 + $0x88] sm:$0xff]
        %v2254 = vld [vmem:[#allocation3 + $0x90] sm:$0xff]
        %v2255 = vld [vmem:[#allocation3 + $0x98] sm:$0xff]
        %v2256 = vld [vmem:[#allocation3 + $0xa0] sm:$0xff]
        %v2257 = vld [vmem:[#allocation3 + $0xa8] sm:$0xff]
        %v2258 = vld [vmem:[#allocation3 + $0xb0] sm:$0xff]
        %v2259 = vld [vmem:[#allocation3 + $0xb8] sm:$0xff]
        %v2260 = vld [vmem:[#allocation3 + $0xc0] sm:$0xff]
        %v2261 = vld [vmem:[#allocation3 + $0xc8] sm:$0xff]
        %v2262 = vld [vmem:[#allocation3 + $0xd0] sm:$0xff]
        %v2263 = vld [vmem:[#allocation3 + $0xd8] sm:$0xff]
        %v2264 = vld [vmem:[#allocation3 + $0xe0] sm:$0xff]
        %v2265 = vld [vmem:[#allocation3 + $0xe8] sm:$0xff]
        %v2266 = vld [vmem:[#allocation3 + $0xf0] sm:$0xff]
        %v2267 = vld [vmem:[#allocation3 + $0xf8] sm:$0xff]
        %v2268 = vld [vmem:[#allocation3 + $0x100] sm:$0xff]
        %v2269 = vld [vmem:[#allocation3 + $0x108] sm:$0xff]
        %v2270 = vld [vmem:[#allocation3 + $0x110] sm:$0xff]
        %v2271 = vld [vmem:[#allocation3 + $0x118] sm:$0xff]
        %v2272 = vld [vmem:[#allocation3 + $0x120] sm:$0xff]
        %v2273 = vld [vmem:[#allocation3 + $0x128] sm:$0xff]
        %v2274 = vld [vmem:[#allocation3 + $0x130] sm:$0xff]
        %v2275 = vld [vmem:[#allocation3 + $0x138] sm:$0xff]
        %v2276 = vld [vmem:[#allocation3 + $0x140] sm:$0xff]
        %v2277 = vld [vmem:[#allocation3 + $0x148] sm:$0xff]
        %v2278 = vld [vmem:[#allocation3 + $0x150] sm:$0xff]
        %v2279 = vld [vmem:[#allocation3 + $0x158] sm:$0xff]
        %v2280 = vld [vmem:[#allocation3 + $0x160] sm:$0xff]
        %v2281 = vld [vmem:[#allocation3 + $0x168] sm:$0xff]
        %v2282 = vld [vmem:[#allocation3 + $0x170] sm:$0xff]
        %v2283 = vld [vmem:[#allocation3 + $0x178] sm:$0xff]
        %v2284 = vld [vmem:[#allocation3 + $0x180] sm:$0xff]
        %v2285 = vld [vmem:[#allocation3 + $0x188] sm:$0xff]
        %v2286 = vld [vmem:[#allocation3 + $0x190] sm:$0xff]
        %v2287 = vld [vmem:[#allocation3 + $0x198] sm:$0xff]
        %v2288 = vld [vmem:[#allocation3 + $0x1a0] sm:$0xff]
        %v2289 = vld [vmem:[#allocation3 + $0x1a8] sm:$0xff]
        %v2290 = vld [vmem:[#allocation3 + $0x1b0] sm:$0xff]
        %v2291 = vld [vmem:[#allocation3 + $0x1b8] sm:$0xff]
        %v2292 = vld [vmem:[#allocation3 + $0x1c0] sm:$0xff]
        %v2293 = vld [vmem:[#allocation3 + $0x1c8] sm:$0xff]
        %v2294 = vld [vmem:[#allocation3 + $0x1d0] sm:$0xff]
        %v2295 = vld [vmem:[#allocation3 + $0x1d8] sm:$0xff]
        %v2296 = vld [vmem:[#allocation3 + $0x1e0] sm:$0xff]
        %v2297 = vld [vmem:[#allocation3 + $0x1e8] sm:$0xff]
        %v2298 = vld [vmem:[#allocation3 + $0x1f0] sm:$0xff]
        %v2299 = vld [vmem:[#allocation3 + $0x1f8] sm:$0xff]
        %v2300 = vld [vmem:[#allocation3 + $0x200] sm:$0xff]
        %v2301 = vld [vmem:[#allocation3 + $0x208] sm:$0xff]
        %v2302 = vld [vmem:[#allocation3 + $0x210] sm:$0xff]
        %v2303 = vld [vmem:[#allocation3 + $0x218] sm:$0xff]
        %v2304 = vld [vmem:[#allocation3 + $0x220] sm:$0xff]
        %v2305 = vld [vmem:[#allocation3 + $0x228] sm:$0xff]
        %v2306 = vld [vmem:[#allocation3 + $0x230] sm:$0xff]
        %v2307 = vld [vmem:[#allocation3 + $0x238] sm:$0xff]
        %v2308 = vld [vmem:[#allocation3 + $0x240] sm:$0xff]
        %v2309 = vld [vmem:[#allocation3 + $0x248] sm:$0xff]
        %v2310 = vld [vmem:[#allocation3 + $0x250] sm:$0xff]
        %v2311 = vld [vmem:[#allocation3 + $0x258] sm:$0xff]
        %v2312 = vld [vmem:[#allocation3 + $0x260] sm:$0xff]
        %v2313 = vld [vmem:[#allocation3 + $0x268] sm:$0xff]
        %v2314 = vld [vmem:[#allocation3 + $0x270] sm:$0xff]
        %v2315 = vld [vmem:[#allocation3 + $0x278] sm:$0xff]
        %v2316 = vld [vmem:[#allocation3 + $0x280] sm:$0xff]
        %v2317 = vld [vmem:[#allocation3 + $0x288] sm:$0xff]
        %v2318 = vld [vmem:[#allocation3 + $0x290] sm:$0xff]
        %v2319 = vld [vmem:[#allocation3 + $0x298] sm:$0xff]
        %v2320 = vld [vmem:[#allocation3 + $0x2a0] sm:$0xff]
        %v2321 = vld [vmem:[#allocation3 + $0x2a8] sm:$0xff]
        %v2322 = vld [vmem:[#allocation3 + $0x2b0] sm:$0xff]
        %v2323 = vld [vmem:[#allocation3 + $0x2b8] sm:$0xff]
        %v2324 = vld [vmem:[#allocation3 + $0x2c0] sm:$0xff]
        %v2325 = vld [vmem:[#allocation3 + $0x2c8] sm:$0xff]
        %v2326 = vld [vmem:[#allocation3 + $0x2d0] sm:$0xff]
        %v2327 = vld [vmem:[#allocation3 + $0x2d8] sm:$0xff]
        %v2328 = vld [vmem:[#allocation3 + $0x2e0] sm:$0xff]
        %v2329 = vld [vmem:[#allocation3 + $0x2e8] sm:$0xff]
        %v2330 = vld [vmem:[#allocation3 + $0x2f0] sm:$0xff]
        %v2331 = vld [vmem:[#allocation3 + $0x2f8] sm:$0xff]
        %v2332 = vld [vmem:[#allocation3 + $0x300] sm:$0xff]
        %v2333 = vld [vmem:[#allocation3 + $0x308] sm:$0xff]
        %v2334 = vld [vmem:[#allocation3 + $0x310] sm:$0xff]
        %v2335 = vld [vmem:[#allocation3 + $0x318] sm:$0xff]
        %v2336 = vld [vmem:[#allocation3 + $0x320] sm:$0xff]
        %v2337 = vld [vmem:[#allocation3 + $0x328] sm:$0xff]
        %v2338 = vld [vmem:[#allocation3 + $0x330] sm:$0xff]
        %v2339 = vld [vmem:[#allocation3 + $0x338] sm:$0xff]
        %v2340 = vld [vmem:[#allocation3 + $0x340] sm:$0xff]
        %v2341 = vld [vmem:[#allocation3 + $0x348] sm:$0xff]
        %v2342 = vld [vmem:[#allocation3 + $0x350] sm:$0xff]
        %v2343 = vld [vmem:[#allocation3 + $0x358] sm:$0xff]
        %v2344 = vld [vmem:[%s3] sm:$0xff]
        %2346 = vset.pattern.permute.xlu0 0
        %2347 = vperm.xlu0 %2346, %v2344
        %v2348 = vpop.permute.xlu0 %2347
        %vm2350 = vcmask 719872
        %v2352 = vsel %vm2350, %v2235, 0
        %2354 = vmatprep.subr.mxu0 %v2237
        %2355 = vmatpush1.msra.mxu0 %v2236
        %2356 = vmatprep.subr.mxu0 %v2241
        %2357 = vmatpush1.msra.mxu0 %v2240
        %2358 = vmatprep.subr.mxu0 %v2245
        %2359 = vmatpush1.msra.mxu0 %v2244
        %2360 = vmatprep.subr.mxu0 %v2249
        %2361 = vmatpush1.msra.mxu0 %v2248
        %2362 = vmatprep.subr.mxu0 %v2253
        %2363 = vmatpush1.msra.mxu0 %v2252
        %2364 = vmatprep.subr.mxu0 %v2257
        %2365 = vmatpush1.msra.mxu0 %v2256
        %2366 = vmatprep.subr.mxu0 %v2261
        %2367 = vmatpush1.msra.mxu0 %v2260
        %2368 = vmatprep.subr.mxu0 %v2265
        %2369 = vmatpush1.msra.mxu0 %v2264
        %2370 = vmatprep.subr.mxu0 %v2269
        %2371 = vmatpush1.msra.mxu0 %v2268
        %2372 = vmatprep.subr.mxu0 %v2273
        %2373 = vmatpush1.msra.mxu0 %v2272
        %2374 = vmatprep.subr.mxu0 %v2277
        %2375 = vmatpush1.msra.mxu0 %v2276
        %2376 = vmatprep.subr.mxu0 %v2281
        %2377 = vmatpush1.msra.mxu0 %v2280
        %2378 = vmatprep.subr.mxu0 %v2285
        %2379 = vmatpush1.msra.mxu0 %v2284
        %2380 = vmatprep.subr.mxu0 %v2289
        %2381 = vmatpush1.msra.mxu0 %v2288
        %2382 = vmatprep.subr.mxu0 %v2293
        %2383 = vmatpush1.msra.mxu0 %v2292
        %2384 = vmatprep.subr.mxu0 %v2297
        %2385 = vmatpush1.msra.mxu0 %v2296
        %2386 = vmatprep.subr.mxu0 %v2301
        %2387 = vmatpush1.msra.mxu0 %v2300
        %2388 = vmatprep.subr.mxu0 %v2305
        %2389 = vmatpush1.msra.mxu0 %v2304
        %2390 = vmatprep.subr.mxu0 %v2309
        %2391 = vmatpush1.msra.mxu0 %v2308
        %2392 = vmatprep.subr.mxu0 %v2313
        %2393 = vmatpush1.msra.mxu0 %v2312
        %2394 = vmatprep.subr.mxu0 %v2317
        %2395 = vmatpush1.msra.mxu0 %v2316
        %2396 = vmatprep.subr.mxu0 %v2321
        %2397 = vmatpush1.msra.mxu0 %v2320
        %2398 = vmatprep.subr.mxu0 %v2325
        %2399 = vmatpush1.msra.mxu0 %v2324
        %2400 = vmatprep.subr.mxu0 %v2329
        %2401 = vmatpush1.msra.mxu0 %v2328
        %2402 = vmatprep.subr.mxu0 %v2333
        %2403 = vmatpush1.msra.mxu0 %v2332
        %2404 = vmatprep.subr.mxu0 %v2337
        %2405 = vmatpush1.msra.mxu0 %v2336
        %2406 = vmatprep.subr.mxu0 %v2341
        %2407 = vmatpush1.msra.mxu0 %v2340
        %2408 = vmatprep.subr.mxu0 0.0
        %2409 = vmatpush1.msra.mxu0 0.0
        %2410 = vmatprep.subr.mxu0 0.0
        %2411 = vmatpush1.msra.mxu0 0.0
        %2412 = vmatprep.subr.mxu0 0.0
        %2413 = vmatpush1.msra.mxu0 0.0
        %2414 = vmatprep.subr.mxu0 0.0
        %2415 = vmatpush1.msra.mxu0 0.0
        %2416 = vmatprep.subr.mxu0 0.0
        %2417 = vmatpush1.msra.mxu0 0.0
        %2418 = vmatprep.mubr.f32.mxu0 %v2352
        %2419 = vmatmul.mubr.f32.gmra.mrb[0].mxu0 %v2234
        %v2420 = vpop.f32.mrb[0].mxu0
        %v2421 = vadd.f32 %v2348, %v2420
        %v2422 = vpop.f32.mrb[0].mxu0
        %v2423 = vadd.f32 %v2348, %v2422
        %2424 = vdwg.mxu0
        %2425 = vmatprep.subr.mxu0 %v2239
        %2426 = vmatpush1.msra.mxu0 %v2238
        %2427 = vmatprep.subr.mxu0 %v2243
        %2428 = vmatpush1.msra.mxu0 %v2242
        %2429 = vmatprep.subr.mxu0 %v2247
        %2430 = vmatpush1.msra.mxu0 %v2246
        %2431 = vmatprep.subr.mxu0 %v2251
        %2432 = vmatpush1.msra.mxu0 %v2250
        %2433 = vmatprep.subr.mxu0 %v2255
        %2434 = vmatpush1.msra.mxu0 %v2254
        %2435 = vmatprep.subr.mxu0 %v2259
        %2436 = vmatpush1.msra.mxu0 %v2258
        %2437 = vmatprep.subr.mxu0 %v2263
        %2438 = vmatpush1.msra.mxu0 %v2262
        %2439 = vmatprep.subr.mxu0 %v2267
        %2440 = vmatpush1.msra.mxu0 %v2266
        %2441 = vmatprep.subr.mxu0 %v2271
        %2442 = vmatpush1.msra.mxu0 %v2270
        %2443 = vmatprep.subr.mxu0 %v2275
        %2444 = vmatpush1.msra.mxu0 %v2274
        %2445 = vmatprep.subr.mxu0 %v2279
        %2446 = vmatpush1.msra.mxu0 %v2278
        %2447 = vmatprep.subr.mxu0 %v2283
        %2448 = vmatpush1.msra.mxu0 %v2282
        %2449 = vmatprep.subr.mxu0 %v2287
        %2450 = vmatpush1.msra.mxu0 %v2286
        %2451 = vmatprep.subr.mxu0 %v2291
        %2452 = vmatpush1.msra.mxu0 %v2290
        %2453 = vmatprep.subr.mxu0 %v2295
        %2454 = vmatpush1.msra.mxu0 %v2294
        %2455 = vmatprep.subr.mxu0 %v2299
        %2456 = vmatpush1.msra.mxu0 %v2298
        %2457 = vmatprep.subr.mxu0 %v2303
        %2458 = vmatpush1.msra.mxu0 %v2302
        %2459 = vmatprep.subr.mxu0 %v2307
        %2460 = vmatpush1.msra.mxu0 %v2306
        %2461 = vmatprep.subr.mxu0 %v2311
        %2462 = vmatpush1.msra.mxu0 %v2310
        %2463 = vmatprep.subr.mxu0 %v2315
        %2464 = vmatpush1.msra.mxu0 %v2314
        %2465 = vmatprep.subr.mxu0 %v2319
        %2466 = vmatpush1.msra.mxu0 %v2318
        %2467 = vmatprep.subr.mxu0 %v2323
        %2468 = vmatpush1.msra.mxu0 %v2322
        %2469 = vmatprep.subr.mxu0 %v2327
        %2470 = vmatpush1.msra.mxu0 %v2326
        %2471 = vmatprep.subr.mxu0 %v2331
        %2472 = vmatpush1.msra.mxu0 %v2330
        %2473 = vmatprep.subr.mxu0 %v2335
        %2474 = vmatpush1.msra.mxu0 %v2334
        %2475 = vmatprep.subr.mxu0 %v2339
        %2476 = vmatpush1.msra.mxu0 %v2338
        %2477 = vmatprep.subr.mxu0 %v2343
        %2478 = vmatpush1.msra.mxu0 %v2342
        %2479 = vmatprep.subr.mxu0 0.0
        %2480 = vmatpush1.msra.mxu0 0.0
        %2481 = vmatprep.subr.mxu0 0.0
        %2482 = vmatpush1.msra.mxu0 0.0
        %2483 = vmatprep.subr.mxu0 0.0
        %2484 = vmatpush1.msra.mxu0 0.0
        %2485 = vmatprep.subr.mxu0 0.0
        %2486 = vmatpush1.msra.mxu0 0.0
        %2487 = vmatprep.subr.mxu0 0.0
        %2488 = vmatpush1.msra.mxu0 0.0
        %2489 = vmatprep.mubr.f32.mxu0 %v2352
        %2490 = vmatmul.mubr.f32.gmra.mrb[0].mxu0 %v2234
        %v2491 = vpop.f32.mrb[0].mxu0
        %v2492 = vadd.f32 %v2348, %v2491
        %v2493 = vpop.f32.mrb[0].mxu0
        %v2494 = vadd.f32 %v2348, %v2493
        %2495 = vdwg.mxu0
        %v2496 = vmax.f32 %v2421, 0.0
        %v2497 = vmax.f32 %v2423, 0.0
        %v2498 = vmax.f32 %v2492, 0.0
        %v2499 = vmax.f32 %v2494, 0.0
        %2504 = vrot.lane.b32.xlu0 %v2496, 73
        %v2505 = vpop.permute.xlu0 %2504
        %2506 = vrot.lane.b32.xlu0 %v2497, 73
        %v2507 = vpop.permute.xlu0 %2506
        %2508 = vrot.lane.b32.xlu0 %v2498, 73
        %v2509 = vpop.permute.xlu0 %2508
        %2510 = vrot.lane.b32.xlu0 %v2499, 73
        %v2511 = vpop.permute.xlu0 %2510
        %v2512 = vsel %vm358, %v2505, %v2507
        %v2513 = vsel %vm358, %v2507, %v2509
        %v2514 = vsel %vm358, %v2509, %v2511
        %vm2520 = vcmask 1048136
        %2521 = vst.msk [vmem:[#allocation2] sm:$0xff] %vm2520, %v2505
        %2522 = vst [vmem:[#allocation2 + $0x8] sm:$0xff] %v2512
        %2523 = vst [vmem:[#allocation2 + $0x10] sm:$0xff] %v2513
        %2524 = vst [vmem:[#allocation2 + $0x18] sm:$0xff] %v2514
        %2525 = vst.msk [vmem:[#allocation2 + $0x20] sm:$0xff] %vm358, %v2511
        %v2526 = vld [vmem:[#allocation2] sm:$0xff]
        %v2527 = vld [vmem:[#allocation2 + $0x8] sm:$0xff]
        %v2528 = vld [vmem:[#allocation2 + $0x10] sm:$0xff]
        %v2529 = vld [vmem:[#allocation2 + $0x18] sm:$0xff]
        %v2530 = vld [vmem:[#allocation7] ss:$8 sm:$0xf]
        %v2532 = vlaneseq
        %v2533 = vshrl.u32 %v2532, 7
        %v2534 = vsub.s32 0, %v2533
        %v2535 = vrot.slane %v2530, %v2534
        %v2536 = vlaneseq
        %v2537 = vshrl.u32 %v2536, 7
        %v2538 = vsub.s32 1, %v2537
        %v2539 = vrot.slane %v2530, %v2538
        %v2540 = vlaneseq
        %v2541 = vshrl.u32 %v2540, 7
        %v2542 = vsub.s32 2, %v2541
        %v2543 = vrot.slane %v2530, %v2542
        %v2544 = vlaneseq
        %v2545 = vshrl.u32 %v2544, 7
        %v2546 = vsub.s32 3, %v2545
        %v2547 = vrot.slane %v2530, %v2546
        %v2552 = vmul.f32 %v2526, %v2535
        %v2553 = vmul.f32 %v2527, %v2539
        %v2554 = vmul.f32 %v2528, %v2543
        %v2555 = vmul.f32 %v2529, %v2547
        %2556 = vst [vmem:[#allocation3] sm:$0xff] %v2552
        %2557 = vst [vmem:[#allocation3 + $0x8] sm:$0xff] %v2553
        %2558 = vst [vmem:[#allocation3 + $0x10] sm:$0xff] %v2554
        %2559 = vst [vmem:[#allocation3 + $0x18] sm:$0xff] %v2555
        %v2560 = vld [vmem:[#allocation2] sm:$0xff]
        %v2561 = vld [vmem:[#allocation2 + $0x8] sm:$0xff]
        %v2562 = vld [vmem:[#allocation2 + $0x10] sm:$0xff]
        %v2563 = vld [vmem:[#allocation2 + $0x18] sm:$0xff]
        %v2564 = vld [vmem:[#allocation2 + $0x20] sm:$0xff]
        %v2565 = vld [vmem:[%s413] ss:$8 sm:$0xf]
        %v2567 = vlaneseq
        %v2568 = vshrl.u32 %v2567, 7
        %v2569 = vsub.s32 0, %v2568
        %v2570 = vrot.slane %v2565, %v2569
        %v2571 = vlaneseq
        %v2572 = vshrl.u32 %v2571, 7
        %v2573 = vsub.s32 1, %v2572
        %v2574 = vrot.slane %v2565, %v2573
        %v2575 = vlaneseq
        %v2576 = vshrl.u32 %v2575, 7
        %v2577 = vsub.s32 2, %v2576
        %v2578 = vrot.slane %v2565, %v2577
        %v2579 = vlaneseq
        %v2580 = vshrl.u32 %v2579, 7
        %v2581 = vsub.s32 3, %v2580
        %v2582 = vrot.slane %v2565, %v2581
        %2583 = vrot.lane.b32.xlu0 %v2570, 1
        %v2584 = vpop.permute.xlu0 %2583
        %2585 = vrot.lane.b32.xlu0 %v2574, 1
        %v2586 = vpop.permute.xlu0 %2585
        %2587 = vrot.lane.b32.xlu0 %v2578, 1
        %v2588 = vpop.permute.xlu0 %2587
        %2589 = vrot.lane.b32.xlu0 %v2582, 1
        %v2590 = vpop.permute.xlu0 %2589
        %v2591 = vsel %vm440, %v2584, %v2586
        %v2592 = vsel %vm440, %v2586, %v2588
        %v2593 = vsel %vm440, %v2588, %v2590
        %v2599 = vmul.f32 %v2560, %v2584
        %v2600 = vmul.f32 %v2561, %v2591
        %v2601 = vmul.f32 %v2562, %v2592
        %v2602 = vmul.f32 %v2563, %v2593
        %v2603 = vmul.f32 %v2564, %v2590
        %2609 = vrot.lane.b32.xlu0 %v2599, 127
        %v2610 = vpop.permute.xlu0 %2609
        %2611 = vrot.lane.b32.xlu0 %v2600, 127
        %v2612 = vpop.permute.xlu0 %2611
        %2613 = vrot.lane.b32.xlu0 %v2601, 127
        %v2614 = vpop.permute.xlu0 %2613
        %2615 = vrot.lane.b32.xlu0 %v2602, 127
        %v2616 = vpop.permute.xlu0 %2615
        %2617 = vrot.lane.b32.xlu0 %v2603, 127
        %v2618 = vpop.permute.xlu0 %2617
        %v2619 = vsel %vm469, %v2610, %v2612
        %v2620 = vsel %vm469, %v2612, %v2614
        %v2621 = vsel %vm469, %v2614, %v2616
        %v2622 = vsel %vm469, %v2616, %v2618
        %2627 = vst [vmem:[#allocation3 + $0x20] sm:$0xff] %v2619
        %2628 = vst [vmem:[#allocation3 + $0x28] sm:$0xff] %v2620
        %2629 = vst [vmem:[#allocation3 + $0x30] sm:$0xff] %v2621
        %2630 = vst [vmem:[#allocation3 + $0x38] sm:$0xff] %v2622
        %v2631 = vld [vmem:[#allocation2] sm:$0xff]
        %v2632 = vld [vmem:[#allocation2 + $0x8] sm:$0xff]
        %v2633 = vld [vmem:[#allocation2 + $0x10] sm:$0xff]
        %v2634 = vld [vmem:[#allocation2 + $0x18] sm:$0xff]
        %v2635 = vld [vmem:[#allocation2 + $0x20] sm:$0xff]
        %v2636 = vld [vmem:[%s487] ss:$8 sm:$0xf]
        %v2638 = vlaneseq
        %v2639 = vshrl.u32 %v2638, 7
        %v2640 = vsub.s32 0, %v2639
        %v2641 = vrot.slane %v2636, %v2640
        %v2642 = vlaneseq
        %v2643 = vshrl.u32 %v2642, 7
        %v2644 = vsub.s32 1, %v2643
        %v2645 = vrot.slane %v2636, %v2644
        %v2646 = vlaneseq
        %v2647 = vshrl.u32 %v2646, 7
        %v2648 = vsub.s32 2, %v2647
        %v2649 = vrot.slane %v2636, %v2648
        %v2650 = vlaneseq
        %v2651 = vshrl.u32 %v2650, 7
        %v2652 = vsub.s32 3, %v2651
        %v2653 = vrot.slane %v2636, %v2652
        %2654 = vrot.lane.b32.xlu0 %v2641, 2
        %v2655 = vpop.permute.xlu0 %2654
        %2656 = vrot.lane.b32.xlu0 %v2645, 2
        %v2657 = vpop.permute.xlu0 %2656
        %2658 = vrot.lane.b32.xlu0 %v2649, 2
        %v2659 = vpop.permute.xlu0 %2658
        %2660 = vrot.lane.b32.xlu0 %v2653, 2
        %v2661 = vpop.permute.xlu0 %2660
        %v2662 = vsel %vm514, %v2655, %v2657
        %v2663 = vsel %vm514, %v2657, %v2659
        %v2664 = vsel %vm514, %v2659, %v2661
        %v2670 = vmul.f32 %v2631, %v2655
        %v2671 = vmul.f32 %v2632, %v2662
        %v2672 = vmul.f32 %v2633, %v2663
        %v2673 = vmul.f32 %v2634, %v2664
        %v2674 = vmul.f32 %v2635, %v2661
        %2680 = vrot.lane.b32.xlu0 %v2670, 126
        %v2681 = vpop.permute.xlu0 %2680
        %2682 = vrot.lane.b32.xlu0 %v2671, 126
        %v2683 = vpop.permute.xlu0 %2682
        %2684 = vrot.lane.b32.xlu0 %v2672, 126
        %v2685 = vpop.permute.xlu0 %2684
        %2686 = vrot.lane.b32.xlu0 %v2673, 126
        %v2687 = vpop.permute.xlu0 %2686
        %2688 = vrot.lane.b32.xlu0 %v2674, 126
        %v2689 = vpop.permute.xlu0 %2688
        %v2690 = vsel %vm543, %v2681, %v2683
        %v2691 = vsel %vm543, %v2683, %v2685
        %v2692 = vsel %vm543, %v2685, %v2687
        %v2693 = vsel %vm543, %v2687, %v2689
        %2698 = vst [vmem:[#allocation3 + $0x40] sm:$0xff] %v2690
        %2699 = vst [vmem:[#allocation3 + $0x48] sm:$0xff] %v2691
        %2700 = vst [vmem:[#allocation3 + $0x50] sm:$0xff] %v2692
        %2701 = vst [vmem:[#allocation3 + $0x58] sm:$0xff] %v2693
        %v2702 = vld [vmem:[#allocation2] sm:$0xff]
        %v2703 = vld [vmem:[#allocation2 + $0x8] sm:$0xff]
        %v2704 = vld [vmem:[#allocation2 + $0x10] sm:$0xff]
        %v2705 = vld [vmem:[#allocation2 + $0x18] sm:$0xff]
        %v2706 = vld [vmem:[#allocation2 + $0x20] sm:$0xff]
        %v2707 = vld [vmem:[%s561] ss:$8 sm:$0xf]
        %v2709 = vlaneseq
        %v2710 = vshrl.u32 %v2709, 7
        %v2711 = vsub.s32 0, %v2710
        %v2712 = vrot.slane %v2707, %v2711
        %v2713 = vlaneseq
        %v2714 = vshrl.u32 %v2713, 7
        %v2715 = vsub.s32 1, %v2714
        %v2716 = vrot.slane %v2707, %v2715
        %v2717 = vlaneseq
        %v2718 = vshrl.u32 %v2717, 7
        %v2719 = vsub.s32 2, %v2718
        %v2720 = vrot.slane %v2707, %v2719
        %v2721 = vlaneseq
        %v2722 = vshrl.u32 %v2721, 7
        %v2723 = vsub.s32 3, %v2722
        %v2724 = vrot.slane %v2707, %v2723
        %2725 = vrot.lane.b32.xlu0 %v2712, 8
        %v2726 = vpop.permute.xlu0 %2725
        %2727 = vrot.lane.b32.xlu0 %v2716, 8
        %v2728 = vpop.permute.xlu0 %2727
        %2729 = vrot.lane.b32.xlu0 %v2720, 8
        %v2730 = vpop.permute.xlu0 %2729
        %2731 = vrot.lane.b32.xlu0 %v2724, 8
        %v2732 = vpop.permute.xlu0 %2731
        %v2733 = vsel %vm588, %v2726, %v2728
        %v2734 = vsel %vm588, %v2728, %v2730
        %v2735 = vsel %vm588, %v2730, %v2732
        %v2741 = vmul.f32 %v2702, %v2726
        %v2742 = vmul.f32 %v2703, %v2733
        %v2743 = vmul.f32 %v2704, %v2734
        %v2744 = vmul.f32 %v2705, %v2735
        %v2745 = vmul.f32 %v2706, %v2732
        %2751 = vrot.lane.b32.xlu0 %v2741, 120
        %v2752 = vpop.permute.xlu0 %2751
        %2753 = vrot.lane.b32.xlu0 %v2742, 120
        %v2754 = vpop.permute.xlu0 %2753
        %2755 = vrot.lane.b32.xlu0 %v2743, 120
        %v2756 = vpop.permute.xlu0 %2755
        %2757 = vrot.lane.b32.xlu0 %v2744, 120
        %v2758 = vpop.permute.xlu0 %2757
        %2759 = vrot.lane.b32.xlu0 %v2745, 120
        %v2760 = vpop.permute.xlu0 %2759
        %v2761 = vsel %vm617, %v2752, %v2754
        %v2762 = vsel %vm617, %v2754, %v2756
        %v2763 = vsel %vm617, %v2756, %v2758
        %v2764 = vsel %vm617, %v2758, %v2760
        %2769 = vst [vmem:[#allocation3 + $0x60] sm:$0xff] %v2761
        %2770 = vst [vmem:[#allocation3 + $0x68] sm:$0xff] %v2762
        %2771 = vst [vmem:[#allocation3 + $0x70] sm:$0xff] %v2763
        %2772 = vst [vmem:[#allocation3 + $0x78] sm:$0xff] %v2764
        %v2773 = vld [vmem:[#allocation2] sm:$0xff]
        %v2774 = vld [vmem:[#allocation2 + $0x8] sm:$0xff]
        %v2775 = vld [vmem:[#allocation2 + $0x10] sm:$0xff]
        %v2776 = vld [vmem:[#allocation2 + $0x18] sm:$0xff]
        %v2777 = vld [vmem:[#allocation2 + $0x20] sm:$0xff]
        %v2778 = vld [vmem:[%s635] ss:$8 sm:$0xf]
        %v2780 = vlaneseq
        %v2781 = vshrl.u32 %v2780, 7
        %v2782 = vsub.s32 0, %v2781
        %v2783 = vrot.slane %v2778, %v2782
        %v2784 = vlaneseq
        %v2785 = vshrl.u32 %v2784, 7
        %v2786 = vsub.s32 1, %v2785
        %v2787 = vrot.slane %v2778, %v2786
        %v2788 = vlaneseq
        %v2789 = vshrl.u32 %v2788, 7
        %v2790 = vsub.s32 2, %v2789
        %v2791 = vrot.slane %v2778, %v2790
        %v2792 = vlaneseq
        %v2793 = vshrl.u32 %v2792, 7
        %v2794 = vsub.s32 3, %v2793
        %v2795 = vrot.slane %v2778, %v2794
        %2796 = vrot.lane.b32.xlu0 %v2783, 9
        %v2797 = vpop.permute.xlu0 %2796
        %2798 = vrot.lane.b32.xlu0 %v2787, 9
        %v2799 = vpop.permute.xlu0 %2798
        %2800 = vrot.lane.b32.xlu0 %v2791, 9
        %v2801 = vpop.permute.xlu0 %2800
        %2802 = vrot.lane.b32.xlu0 %v2795, 9
        %v2803 = vpop.permute.xlu0 %2802
        %v2804 = vsel %vm662, %v2797, %v2799
        %v2805 = vsel %vm662, %v2799, %v2801
        %v2806 = vsel %vm662, %v2801, %v2803
        %v2812 = vmul.f32 %v2773, %v2797
        %v2813 = vmul.f32 %v2774, %v2804
        %v2814 = vmul.f32 %v2775, %v2805
        %v2815 = vmul.f32 %v2776, %v2806
        %v2816 = vmul.f32 %v2777, %v2803
        %2822 = vrot.lane.b32.xlu0 %v2812, 119
        %v2823 = vpop.permute.xlu0 %2822
        %2824 = vrot.lane.b32.xlu0 %v2813, 119
        %v2825 = vpop.permute.xlu0 %2824
        %2826 = vrot.lane.b32.xlu0 %v2814, 119
        %v2827 = vpop.permute.xlu0 %2826
        %2828 = vrot.lane.b32.xlu0 %v2815, 119
        %v2829 = vpop.permute.xlu0 %2828
        %2830 = vrot.lane.b32.xlu0 %v2816, 119
        %v2831 = vpop.permute.xlu0 %2830
        %v2832 = vsel %vm691, %v2823, %v2825
        %v2833 = vsel %vm691, %v2825, %v2827
        %v2834 = vsel %vm691, %v2827, %v2829
        %v2835 = vsel %vm691, %v2829, %v2831
        %2840 = vst [vmem:[#allocation3 + $0x80] sm:$0xff] %v2832
        %2841 = vst [vmem:[#allocation3 + $0x88] sm:$0xff] %v2833
        %2842 = vst [vmem:[#allocation3 + $0x90] sm:$0xff] %v2834
        %2843 = vst [vmem:[#allocation3 + $0x98] sm:$0xff] %v2835
        %v2844 = vld [vmem:[#allocation2] sm:$0xff]
        %v2845 = vld [vmem:[#allocation2 + $0x8] sm:$0xff]
        %v2846 = vld [vmem:[#allocation2 + $0x10] sm:$0xff]
        %v2847 = vld [vmem:[#allocation2 + $0x18] sm:$0xff]
        %v2848 = vld [vmem:[#allocation2 + $0x20] sm:$0xff]
        %v2849 = vld [vmem:[%s709] ss:$8 sm:$0xf]
        %v2851 = vlaneseq
        %v2852 = vshrl.u32 %v2851, 7
        %v2853 = vsub.s32 0, %v2852
        %v2854 = vrot.slane %v2849, %v2853
        %v2855 = vlaneseq
        %v2856 = vshrl.u32 %v2855, 7
        %v2857 = vsub.s32 1, %v2856
        %v2858 = vrot.slane %v2849, %v2857
        %v2859 = vlaneseq
        %v2860 = vshrl.u32 %v2859, 7
        %v2861 = vsub.s32 2, %v2860
        %v2862 = vrot.slane %v2849, %v2861
        %v2863 = vlaneseq
        %v2864 = vshrl.u32 %v2863, 7
        %v2865 = vsub.s32 3, %v2864
        %v2866 = vrot.slane %v2849, %v2865
        %2867 = vrot.lane.b32.xlu0 %v2854, 10
        %v2868 = vpop.permute.xlu0 %2867
        %2869 = vrot.lane.b32.xlu0 %v2858, 10
        %v2870 = vpop.permute.xlu0 %2869
        %2871 = vrot.lane.b32.xlu0 %v2862, 10
        %v2872 = vpop.permute.xlu0 %2871
        %2873 = vrot.lane.b32.xlu0 %v2866, 10
        %v2874 = vpop.permute.xlu0 %2873
        %v2875 = vsel %vm736, %v2868, %v2870
        %v2876 = vsel %vm736, %v2870, %v2872
        %v2877 = vsel %vm736, %v2872, %v2874
        %v2883 = vmul.f32 %v2844, %v2868
        %v2884 = vmul.f32 %v2845, %v2875
        %v2885 = vmul.f32 %v2846, %v2876
        %v2886 = vmul.f32 %v2847, %v2877
        %v2887 = vmul.f32 %v2848, %v2874
        %2893 = vrot.lane.b32.xlu0 %v2883, 118
        %v2894 = vpop.permute.xlu0 %2893
        %2895 = vrot.lane.b32.xlu0 %v2884, 118
        %v2896 = vpop.permute.xlu0 %2895
        %2897 = vrot.lane.b32.xlu0 %v2885, 118
        %v2898 = vpop.permute.xlu0 %2897
        %2899 = vrot.lane.b32.xlu0 %v2886, 118
        %v2900 = vpop.permute.xlu0 %2899
        %2901 = vrot.lane.b32.xlu0 %v2887, 118
        %v2902 = vpop.permute.xlu0 %2901
        %v2903 = vsel %vm765, %v2894, %v2896
        %v2904 = vsel %vm765, %v2896, %v2898
        %v2905 = vsel %vm765, %v2898, %v2900
        %v2906 = vsel %vm765, %v2900, %v2902
        %2911 = vst [vmem:[#allocation3 + $0xa0] sm:$0xff] %v2903
        %2912 = vst [vmem:[#allocation3 + $0xa8] sm:$0xff] %v2904
        %2913 = vst [vmem:[#allocation3 + $0xb0] sm:$0xff] %v2905
        %2914 = vst [vmem:[#allocation3 + $0xb8] sm:$0xff] %v2906
        %v2915 = vld [vmem:[#allocation2] sm:$0xff]
        %v2916 = vld [vmem:[#allocation2 + $0x8] sm:$0xff]
        %v2917 = vld [vmem:[#allocation2 + $0x10] sm:$0xff]
        %v2918 = vld [vmem:[#allocation2 + $0x18] sm:$0xff]
        %v2919 = vld [vmem:[#allocation2 + $0x20] sm:$0xff]
        %v2920 = vld [vmem:[%s783] ss:$8 sm:$0xf]
        %v2922 = vlaneseq
        %v2923 = vshrl.u32 %v2922, 7
        %v2924 = vsub.s32 0, %v2923
        %v2925 = vrot.slane %v2920, %v2924
        %v2926 = vlaneseq
        %v2927 = vshrl.u32 %v2926, 7
        %v2928 = vsub.s32 1, %v2927
        %v2929 = vrot.slane %v2920, %v2928
        %v2930 = vlaneseq
        %v2931 = vshrl.u32 %v2930, 7
        %v2932 = vsub.s32 2, %v2931
        %v2933 = vrot.slane %v2920, %v2932
        %v2934 = vlaneseq
        %v2935 = vshrl.u32 %v2934, 7
        %v2936 = vsub.s32 3, %v2935
        %v2937 = vrot.slane %v2920, %v2936
        %2938 = vrot.lane.b32.xlu0 %v2925, 16
        %v2939 = vpop.permute.xlu0 %2938
        %2940 = vrot.lane.b32.xlu0 %v2929, 16
        %v2941 = vpop.permute.xlu0 %2940
        %2942 = vrot.lane.b32.xlu0 %v2933, 16
        %v2943 = vpop.permute.xlu0 %2942
        %2944 = vrot.lane.b32.xlu0 %v2937, 16
        %v2945 = vpop.permute.xlu0 %2944
        %v2946 = vsel %vm810, %v2939, %v2941
        %v2947 = vsel %vm810, %v2941, %v2943
        %v2948 = vsel %vm810, %v2943, %v2945
        %v2954 = vmul.f32 %v2915, %v2939
        %v2955 = vmul.f32 %v2916, %v2946
        %v2956 = vmul.f32 %v2917, %v2947
        %v2957 = vmul.f32 %v2918, %v2948
        %v2958 = vmul.f32 %v2919, %v2945
        %2964 = vrot.lane.b32.xlu0 %v2954, 112
        %v2965 = vpop.permute.xlu0 %2964
        %2966 = vrot.lane.b32.xlu0 %v2955, 112
        %v2967 = vpop.permute.xlu0 %2966
        %2968 = vrot.lane.b32.xlu0 %v2956, 112
        %v2969 = vpop.permute.xlu0 %2968
        %2970 = vrot.lane.b32.xlu0 %v2957, 112
        %v2971 = vpop.permute.xlu0 %2970
        %2972 = vrot.lane.b32.xlu0 %v2958, 112
        %v2973 = vpop.permute.xlu0 %2972
        %v2974 = vsel %vm839, %v2965, %v2967
        %v2975 = vsel %vm839, %v2967, %v2969
        %v2976 = vsel %vm839, %v2969, %v2971
        %v2977 = vsel %vm839, %v2971, %v2973
        %2982 = vst [vmem:[#allocation3 + $0xc0] sm:$0xff] %v2974
        %2983 = vst [vmem:[#allocation3 + $0xc8] sm:$0xff] %v2975
        %2984 = vst [vmem:[#allocation3 + $0xd0] sm:$0xff] %v2976
        %2985 = vst [vmem:[#allocation3 + $0xd8] sm:$0xff] %v2977
        %v2986 = vld [vmem:[#allocation2] sm:$0xff]
        %v2987 = vld [vmem:[#allocation2 + $0x8] sm:$0xff]
        %v2988 = vld [vmem:[#allocation2 + $0x10] sm:$0xff]
        %v2989 = vld [vmem:[#allocation2 + $0x18] sm:$0xff]
        %v2990 = vld [vmem:[#allocation2 + $0x20] sm:$0xff]
        %v2991 = vld [vmem:[%s857] ss:$8 sm:$0xf]
        %v2993 = vlaneseq
        %v2994 = vshrl.u32 %v2993, 7
        %v2995 = vsub.s32 0, %v2994
        %v2996 = vrot.slane %v2991, %v2995
        %v2997 = vlaneseq
        %v2998 = vshrl.u32 %v2997, 7
        %v2999 = vsub.s32 1, %v2998
        %v3000 = vrot.slane %v2991, %v2999
        %v3001 = vlaneseq
        %v3002 = vshrl.u32 %v3001, 7
        %v3003 = vsub.s32 2, %v3002
        %v3004 = vrot.slane %v2991, %v3003
        %v3005 = vlaneseq
        %v3006 = vshrl.u32 %v3005, 7
        %v3007 = vsub.s32 3, %v3006
        %v3008 = vrot.slane %v2991, %v3007
        %3009 = vrot.lane.b32.xlu0 %v2996, 17
        %v3010 = vpop.permute.xlu0 %3009
        %3011 = vrot.lane.b32.xlu0 %v3000, 17
        %v3012 = vpop.permute.xlu0 %3011
        %3013 = vrot.lane.b32.xlu0 %v3004, 17
        %v3014 = vpop.permute.xlu0 %3013
        %3015 = vrot.lane.b32.xlu0 %v3008, 17
        %v3016 = vpop.permute.xlu0 %3015
        %v3017 = vsel %vm884, %v3010, %v3012
        %v3018 = vsel %vm884, %v3012, %v3014
        %v3019 = vsel %vm884, %v3014, %v3016
        %v3025 = vmul.f32 %v2986, %v3010
        %v3026 = vmul.f32 %v2987, %v3017
        %v3027 = vmul.f32 %v2988, %v3018
        %v3028 = vmul.f32 %v2989, %v3019
        %v3029 = vmul.f32 %v2990, %v3016
        %3035 = vrot.lane.b32.xlu0 %v3025, 111
        %v3036 = vpop.permute.xlu0 %3035
        %3037 = vrot.lane.b32.xlu0 %v3026, 111
        %v3038 = vpop.permute.xlu0 %3037
        %3039 = vrot.lane.b32.xlu0 %v3027, 111
        %v3040 = vpop.permute.xlu0 %3039
        %3041 = vrot.lane.b32.xlu0 %v3028, 111
        %v3042 = vpop.permute.xlu0 %3041
        %3043 = vrot.lane.b32.xlu0 %v3029, 111
        %v3044 = vpop.permute.xlu0 %3043
        %v3045 = vsel %vm913, %v3036, %v3038
        %v3046 = vsel %vm913, %v3038, %v3040
        %v3047 = vsel %vm913, %v3040, %v3042
        %v3048 = vsel %vm913, %v3042, %v3044
        %3053 = vst [vmem:[#allocation3 + $0xe0] sm:$0xff] %v3045
        %3054 = vst [vmem:[#allocation3 + $0xe8] sm:$0xff] %v3046
        %3055 = vst [vmem:[#allocation3 + $0xf0] sm:$0xff] %v3047
        %3056 = vst [vmem:[#allocation3 + $0xf8] sm:$0xff] %v3048
        %v3057 = vld [vmem:[#allocation2] sm:$0xff]
        %v3058 = vld [vmem:[#allocation2 + $0x8] sm:$0xff]
        %v3059 = vld [vmem:[#allocation2 + $0x10] sm:$0xff]
        %v3060 = vld [vmem:[#allocation2 + $0x18] sm:$0xff]
        %v3061 = vld [vmem:[#allocation2 + $0x20] sm:$0xff]
        %v3062 = vld [vmem:[%s931] ss:$8 sm:$0xf]
        %v3064 = vlaneseq
        %v3065 = vshrl.u32 %v3064, 7
        %v3066 = vsub.s32 0, %v3065
        %v3067 = vrot.slane %v3062, %v3066
        %v3068 = vlaneseq
        %v3069 = vshrl.u32 %v3068, 7
        %v3070 = vsub.s32 1, %v3069
        %v3071 = vrot.slane %v3062, %v3070
        %v3072 = vlaneseq
        %v3073 = vshrl.u32 %v3072, 7
        %v3074 = vsub.s32 2, %v3073
        %v3075 = vrot.slane %v3062, %v3074
        %v3076 = vlaneseq
        %v3077 = vshrl.u32 %v3076, 7
        %v3078 = vsub.s32 3, %v3077
        %v3079 = vrot.slane %v3062, %v3078
        %3080 = vrot.lane.b32.xlu0 %v3067, 18
        %v3081 = vpop.permute.xlu0 %3080
        %3082 = vrot.lane.b32.xlu0 %v3071, 18
        %v3083 = vpop.permute.xlu0 %3082
        %3084 = vrot.lane.b32.xlu0 %v3075, 18
        %v3085 = vpop.permute.xlu0 %3084
        %3086 = vrot.lane.b32.xlu0 %v3079, 18
        %v3087 = vpop.permute.xlu0 %3086
        %v3088 = vsel %vm342, %v3081, %v3083
        %v3089 = vsel %vm342, %v3083, %v3085
        %v3090 = vsel %vm342, %v3085, %v3087
        %v3096 = vmul.f32 %v3057, %v3081
        %v3097 = vmul.f32 %v3058, %v3088
        %v3098 = vmul.f32 %v3059, %v3089
        %v3099 = vmul.f32 %v3060, %v3090
        %v3100 = vmul.f32 %v3061, %v3087
        %3106 = vrot.lane.b32.xlu0 %v3096, 110
        %v3107 = vpop.permute.xlu0 %3106
        %3108 = vrot.lane.b32.xlu0 %v3097, 110
        %v3109 = vpop.permute.xlu0 %3108
        %3110 = vrot.lane.b32.xlu0 %v3098, 110
        %v3111 = vpop.permute.xlu0 %3110
        %3112 = vrot.lane.b32.xlu0 %v3099, 110
        %v3113 = vpop.permute.xlu0 %3112
        %3114 = vrot.lane.b32.xlu0 %v3100, 110
        %v3115 = vpop.permute.xlu0 %3114
        %v3116 = vsel %vm986, %v3107, %v3109
        %v3117 = vsel %vm986, %v3109, %v3111
        %v3118 = vsel %vm986, %v3111, %v3113
        %v3119 = vsel %vm986, %v3113, %v3115
        %3124 = vst [vmem:[#allocation3 + $0x100] sm:$0xff] %v3116
        %3125 = vst [vmem:[#allocation3 + $0x108] sm:$0xff] %v3117
        %3126 = vst [vmem:[#allocation3 + $0x110] sm:$0xff] %v3118
        %3127 = vst [vmem:[#allocation3 + $0x118] sm:$0xff] %v3119
        %v3128 = vld [vmem:[#allocation2] sm:$0xff]
        %v3129 = vld [vmem:[#allocation2 + $0x8] sm:$0xff]
        %v3130 = vld [vmem:[#allocation2 + $0x10] sm:$0xff]
        %v3131 = vld [vmem:[#allocation2 + $0x18] sm:$0xff]
        %v3132 = vld [vmem:[#allocation2 + $0x20] sm:$0xff]
        %v3133 = vld [vmem:[%s1004] ss:$8 sm:$0xf]
        %v3135 = vlaneseq
        %v3136 = vshrl.u32 %v3135, 7
        %v3137 = vsub.s32 0, %v3136
        %v3138 = vrot.slane %v3133, %v3137
        %v3139 = vlaneseq
        %v3140 = vshrl.u32 %v3139, 7
        %v3141 = vsub.s32 1, %v3140
        %v3142 = vrot.slane %v3133, %v3141
        %v3143 = vlaneseq
        %v3144 = vshrl.u32 %v3143, 7
        %v3145 = vsub.s32 2, %v3144
        %v3146 = vrot.slane %v3133, %v3145
        %v3147 = vlaneseq
        %v3148 = vshrl.u32 %v3147, 7
        %v3149 = vsub.s32 3, %v3148
        %v3150 = vrot.slane %v3133, %v3149
        %3151 = vrot.lane.b32.xlu0 %v3138, 64
        %v3152 = vpop.permute.xlu0 %3151
        %3153 = vrot.lane.b32.xlu0 %v3142, 64
        %v3154 = vpop.permute.xlu0 %3153
        %3155 = vrot.lane.b32.xlu0 %v3146, 64
        %v3156 = vpop.permute.xlu0 %3155
        %3157 = vrot.lane.b32.xlu0 %v3150, 64
        %v3158 = vpop.permute.xlu0 %3157
        %v3159 = vsel %vm1031, %v3152, %v3154
        %v3160 = vsel %vm1031, %v3154, %v3156
        %v3161 = vsel %vm1031, %v3156, %v3158
        %v3167 = vmul.f32 %v3128, %v3152
        %v3168 = vmul.f32 %v3129, %v3159
        %v3169 = vmul.f32 %v3130, %v3160
        %v3170 = vmul.f32 %v3131, %v3161
        %v3171 = vmul.f32 %v3132, %v3158
        %3177 = vrot.lane.b32.xlu0 %v3167, 64
        %v3178 = vpop.permute.xlu0 %3177
        %3179 = vrot.lane.b32.xlu0 %v3168, 64
        %v3180 = vpop.permute.xlu0 %3179
        %3181 = vrot.lane.b32.xlu0 %v3169, 64
        %v3182 = vpop.permute.xlu0 %3181
        %3183 = vrot.lane.b32.xlu0 %v3170, 64
        %v3184 = vpop.permute.xlu0 %3183
        %3185 = vrot.lane.b32.xlu0 %v3171, 64
        %v3186 = vpop.permute.xlu0 %3185
        %v3187 = vsel %vm1031, %v3178, %v3180
        %v3188 = vsel %vm1031, %v3180, %v3182
        %v3189 = vsel %vm1031, %v3182, %v3184
        %v3190 = vsel %vm1031, %v3184, %v3186
        %3195 = vst [vmem:[#allocation3 + $0x120] sm:$0xff] %v3187
        %3196 = vst [vmem:[#allocation3 + $0x128] sm:$0xff] %v3188
        %3197 = vst [vmem:[#allocation3 + $0x130] sm:$0xff] %v3189
        %3198 = vst [vmem:[#allocation3 + $0x138] sm:$0xff] %v3190
        %v3199 = vld [vmem:[#allocation2] sm:$0xff]
        %v3200 = vld [vmem:[#allocation2 + $0x8] sm:$0xff]
        %v3201 = vld [vmem:[#allocation2 + $0x10] sm:$0xff]
        %v3202 = vld [vmem:[#allocation2 + $0x18] sm:$0xff]
        %v3203 = vld [vmem:[#allocation2 + $0x20] sm:$0xff]
        %v3204 = vld [vmem:[%s1077] ss:$8 sm:$0xf]
        %v3206 = vlaneseq
        %v3207 = vshrl.u32 %v3206, 7
        %v3208 = vsub.s32 0, %v3207
        %v3209 = vrot.slane %v3204, %v3208
        %v3210 = vlaneseq
        %v3211 = vshrl.u32 %v3210, 7
        %v3212 = vsub.s32 1, %v3211
        %v3213 = vrot.slane %v3204, %v3212
        %v3214 = vlaneseq
        %v3215 = vshrl.u32 %v3214, 7
        %v3216 = vsub.s32 2, %v3215
        %v3217 = vrot.slane %v3204, %v3216
        %v3218 = vlaneseq
        %v3219 = vshrl.u32 %v3218, 7
        %v3220 = vsub.s32 3, %v3219
        %v3221 = vrot.slane %v3204, %v3220
        %3222 = vrot.lane.b32.xlu0 %v3209, 65
        %v3223 = vpop.permute.xlu0 %3222
        %3224 = vrot.lane.b32.xlu0 %v3213, 65
        %v3225 = vpop.permute.xlu0 %3224
        %3226 = vrot.lane.b32.xlu0 %v3217, 65
        %v3227 = vpop.permute.xlu0 %3226
        %3228 = vrot.lane.b32.xlu0 %v3221, 65
        %v3229 = vpop.permute.xlu0 %3228
        %v3230 = vsel %vm1104, %v3223, %v3225
        %v3231 = vsel %vm1104, %v3225, %v3227
        %v3232 = vsel %vm1104, %v3227, %v3229
        %v3238 = vmul.f32 %v3199, %v3223
        %v3239 = vmul.f32 %v3200, %v3230
        %v3240 = vmul.f32 %v3201, %v3231
        %v3241 = vmul.f32 %v3202, %v3232
        %v3242 = vmul.f32 %v3203, %v3229
        %3248 = vrot.lane.b32.xlu0 %v3238, 63
        %v3249 = vpop.permute.xlu0 %3248
        %3250 = vrot.lane.b32.xlu0 %v3239, 63
        %v3251 = vpop.permute.xlu0 %3250
        %3252 = vrot.lane.b32.xlu0 %v3240, 63
        %v3253 = vpop.permute.xlu0 %3252
        %3254 = vrot.lane.b32.xlu0 %v3241, 63
        %v3255 = vpop.permute.xlu0 %3254
        %3256 = vrot.lane.b32.xlu0 %v3242, 63
        %v3257 = vpop.permute.xlu0 %3256
        %v3258 = vsel %vm1133, %v3249, %v3251
        %v3259 = vsel %vm1133, %v3251, %v3253
        %v3260 = vsel %vm1133, %v3253, %v3255
        %v3261 = vsel %vm1133, %v3255, %v3257
        %3266 = vst [vmem:[#allocation3 + $0x140] sm:$0xff] %v3258
        %3267 = vst [vmem:[#allocation3 + $0x148] sm:$0xff] %v3259
        %3268 = vst [vmem:[#allocation3 + $0x150] sm:$0xff] %v3260
        %3269 = vst [vmem:[#allocation3 + $0x158] sm:$0xff] %v3261
        %v3270 = vld [vmem:[#allocation2] sm:$0xff]
        %v3271 = vld [vmem:[#allocation2 + $0x8] sm:$0xff]
        %v3272 = vld [vmem:[#allocation2 + $0x10] sm:$0xff]
        %v3273 = vld [vmem:[#allocation2 + $0x18] sm:$0xff]
        %v3274 = vld [vmem:[#allocation2 + $0x20] sm:$0xff]
        %v3275 = vld [vmem:[%s1151] ss:$8 sm:$0xf]
        %v3277 = vlaneseq
        %v3278 = vshrl.u32 %v3277, 7
        %v3279 = vsub.s32 0, %v3278
        %v3280 = vrot.slane %v3275, %v3279
        %v3281 = vlaneseq
        %v3282 = vshrl.u32 %v3281, 7
        %v3283 = vsub.s32 1, %v3282
        %v3284 = vrot.slane %v3275, %v3283
        %v3285 = vlaneseq
        %v3286 = vshrl.u32 %v3285, 7
        %v3287 = vsub.s32 2, %v3286
        %v3288 = vrot.slane %v3275, %v3287
        %v3289 = vlaneseq
        %v3290 = vshrl.u32 %v3289, 7
        %v3291 = vsub.s32 3, %v3290
        %v3292 = vrot.slane %v3275, %v3291
        %3293 = vrot.lane.b32.xlu0 %v3280, 66
        %v3294 = vpop.permute.xlu0 %3293
        %3295 = vrot.lane.b32.xlu0 %v3284, 66
        %v3296 = vpop.permute.xlu0 %3295
        %3297 = vrot.lane.b32.xlu0 %v3288, 66
        %v3298 = vpop.permute.xlu0 %3297
        %3299 = vrot.lane.b32.xlu0 %v3292, 66
        %v3300 = vpop.permute.xlu0 %3299
        %v3301 = vsel %vm1178, %v3294, %v3296
        %v3302 = vsel %vm1178, %v3296, %v3298
        %v3303 = vsel %vm1178, %v3298, %v3300
        %v3309 = vmul.f32 %v3270, %v3294
        %v3310 = vmul.f32 %v3271, %v3301
        %v3311 = vmul.f32 %v3272, %v3302
        %v3312 = vmul.f32 %v3273, %v3303
        %v3313 = vmul.f32 %v3274, %v3300
        %3319 = vrot.lane.b32.xlu0 %v3309, 62
        %v3320 = vpop.permute.xlu0 %3319
        %3321 = vrot.lane.b32.xlu0 %v3310, 62
        %v3322 = vpop.permute.xlu0 %3321
        %3323 = vrot.lane.b32.xlu0 %v3311, 62
        %v3324 = vpop.permute.xlu0 %3323
        %3325 = vrot.lane.b32.xlu0 %v3312, 62
        %v3326 = vpop.permute.xlu0 %3325
        %3327 = vrot.lane.b32.xlu0 %v3313, 62
        %v3328 = vpop.permute.xlu0 %3327
        %v3329 = vsel %vm1207, %v3320, %v3322
        %v3330 = vsel %vm1207, %v3322, %v3324
        %v3331 = vsel %vm1207, %v3324, %v3326
        %v3332 = vsel %vm1207, %v3326, %v3328
        %3337 = vst [vmem:[#allocation3 + $0x160] sm:$0xff] %v3329
        %3338 = vst [vmem:[#allocation3 + $0x168] sm:$0xff] %v3330
        %3339 = vst [vmem:[#allocation3 + $0x170] sm:$0xff] %v3331
        %3340 = vst [vmem:[#allocation3 + $0x178] sm:$0xff] %v3332
        %v3341 = vld [vmem:[#allocation2] sm:$0xff]
        %v3342 = vld [vmem:[#allocation2 + $0x8] sm:$0xff]
        %v3343 = vld [vmem:[#allocation2 + $0x10] sm:$0xff]
        %v3344 = vld [vmem:[#allocation2 + $0x18] sm:$0xff]
        %v3345 = vld [vmem:[#allocation2 + $0x20] sm:$0xff]
        %v3346 = vld [vmem:[%s1225] ss:$8 sm:$0xf]
        %v3348 = vlaneseq
        %v3349 = vshrl.u32 %v3348, 7
        %v3350 = vsub.s32 0, %v3349
        %v3351 = vrot.slane %v3346, %v3350
        %v3352 = vlaneseq
        %v3353 = vshrl.u32 %v3352, 7
        %v3354 = vsub.s32 1, %v3353
        %v3355 = vrot.slane %v3346, %v3354
        %v3356 = vlaneseq
        %v3357 = vshrl.u32 %v3356, 7
        %v3358 = vsub.s32 2, %v3357
        %v3359 = vrot.slane %v3346, %v3358
        %v3360 = vlaneseq
        %v3361 = vshrl.u32 %v3360, 7
        %v3362 = vsub.s32 3, %v3361
        %v3363 = vrot.slane %v3346, %v3362
        %3364 = vrot.lane.b32.xlu0 %v3351, 72
        %v3365 = vpop.permute.xlu0 %3364
        %3366 = vrot.lane.b32.xlu0 %v3355, 72
        %v3367 = vpop.permute.xlu0 %3366
        %3368 = vrot.lane.b32.xlu0 %v3359, 72
        %v3369 = vpop.permute.xlu0 %3368
        %3370 = vrot.lane.b32.xlu0 %v3363, 72
        %v3371 = vpop.permute.xlu0 %3370
        %v3372 = vsel %vm1252, %v3365, %v3367
        %v3373 = vsel %vm1252, %v3367, %v3369
        %v3374 = vsel %vm1252, %v3369, %v3371
        %v3380 = vmul.f32 %v3341, %v3365
        %v3381 = vmul.f32 %v3342, %v3372
        %v3382 = vmul.f32 %v3343, %v3373
        %v3383 = vmul.f32 %v3344, %v3374
        %v3384 = vmul.f32 %v3345, %v3371
        %3390 = vrot.lane.b32.xlu0 %v3380, 56
        %v3391 = vpop.permute.xlu0 %3390
        %3392 = vrot.lane.b32.xlu0 %v3381, 56
        %v3393 = vpop.permute.xlu0 %3392
        %3394 = vrot.lane.b32.xlu0 %v3382, 56
        %v3395 = vpop.permute.xlu0 %3394
        %3396 = vrot.lane.b32.xlu0 %v3383, 56
        %v3397 = vpop.permute.xlu0 %3396
        %3398 = vrot.lane.b32.xlu0 %v3384, 56
        %v3399 = vpop.permute.xlu0 %3398
        %v3400 = vsel %vm1281, %v3391, %v3393
        %v3401 = vsel %vm1281, %v3393, %v3395
        %v3402 = vsel %vm1281, %v3395, %v3397
        %v3403 = vsel %vm1281, %v3397, %v3399
        %3408 = vst [vmem:[#allocation3 + $0x180] sm:$0xff] %v3400
        %3409 = vst [vmem:[#allocation3 + $0x188] sm:$0xff] %v3401
        %3410 = vst [vmem:[#allocation3 + $0x190] sm:$0xff] %v3402
        %3411 = vst [vmem:[#allocation3 + $0x198] sm:$0xff] %v3403
        %v3412 = vld [vmem:[#allocation2] sm:$0xff]
        %v3413 = vld [vmem:[#allocation2 + $0x8] sm:$0xff]
        %v3414 = vld [vmem:[#allocation2 + $0x10] sm:$0xff]
        %v3415 = vld [vmem:[#allocation2 + $0x18] sm:$0xff]
        %v3416 = vld [vmem:[#allocation2 + $0x20] sm:$0xff]
        %3422 = vrot.lane.b32.xlu0 %v3412, 55
        %v3423 = vpop.permute.xlu0 %3422
        %3424 = vrot.lane.b32.xlu0 %v3413, 55
        %v3425 = vpop.permute.xlu0 %3424
        %3426 = vrot.lane.b32.xlu0 %v3414, 55
        %v3427 = vpop.permute.xlu0 %3426
        %3428 = vrot.lane.b32.xlu0 %v3415, 55
        %v3429 = vpop.permute.xlu0 %3428
        %3430 = vrot.lane.b32.xlu0 %v3416, 55
        %v3431 = vpop.permute.xlu0 %3430
        %v3432 = vsel %vm1314, %v3423, %v3425
        %v3433 = vsel %vm1314, %v3425, %v3427
        %v3434 = vsel %vm1314, %v3427, %v3429
        %v3435 = vsel %vm1314, %v3429, %v3431
        %3440 = vst [vmem:[#allocation3 + $0x1a0] sm:$0xff] %v3432
        %3441 = vst [vmem:[#allocation3 + $0x1a8] sm:$0xff] %v3433
        %3442 = vst [vmem:[#allocation3 + $0x1b0] sm:$0xff] %v3434
        %3443 = vst [vmem:[#allocation3 + $0x1b8] sm:$0xff] %v3435
        %v3444 = vld [vmem:[#allocation2] sm:$0xff]
        %v3445 = vld [vmem:[#allocation2 + $0x8] sm:$0xff]
        %v3446 = vld [vmem:[#allocation2 + $0x10] sm:$0xff]
        %v3447 = vld [vmem:[#allocation2 + $0x18] sm:$0xff]
        %v3448 = vld [vmem:[#allocation2 + $0x20] sm:$0xff]
        %v3449 = vld [vmem:[%s1332] ss:$8 sm:$0xf]
        %v3451 = vlaneseq
        %v3452 = vshrl.u32 %v3451, 7
        %v3453 = vsub.s32 0, %v3452
        %v3454 = vrot.slane %v3449, %v3453
        %v3455 = vlaneseq
        %v3456 = vshrl.u32 %v3455, 7
        %v3457 = vsub.s32 1, %v3456
        %v3458 = vrot.slane %v3449, %v3457
        %v3459 = vlaneseq
        %v3460 = vshrl.u32 %v3459, 7
        %v3461 = vsub.s32 2, %v3460
        %v3462 = vrot.slane %v3449, %v3461
        %v3463 = vlaneseq
        %v3464 = vshrl.u32 %v3463, 7
        %v3465 = vsub.s32 3, %v3464
        %v3466 = vrot.slane %v3449, %v3465
        %3467 = vrot.lane.b32.xlu0 %v3454, 74
        %v3468 = vpop.permute.xlu0 %3467
        %3469 = vrot.lane.b32.xlu0 %v3458, 74
        %v3470 = vpop.permute.xlu0 %3469
        %3471 = vrot.lane.b32.xlu0 %v3462, 74
        %v3472 = vpop.permute.xlu0 %3471
        %3473 = vrot.lane.b32.xlu0 %v3466, 74
        %v3474 = vpop.permute.xlu0 %3473
        %v3475 = vsel %vm1359, %v3468, %v3470
        %v3476 = vsel %vm1359, %v3470, %v3472
        %v3477 = vsel %vm1359, %v3472, %v3474
        %v3483 = vmul.f32 %v3444, %v3468
        %v3484 = vmul.f32 %v3445, %v3475
        %v3485 = vmul.f32 %v3446, %v3476
        %v3486 = vmul.f32 %v3447, %v3477
        %v3487 = vmul.f32 %v3448, %v3474
        %3493 = vrot.lane.b32.xlu0 %v3483, 54
        %v3494 = vpop.permute.xlu0 %3493
        %3495 = vrot.lane.b32.xlu0 %v3484, 54
        %v3496 = vpop.permute.xlu0 %3495
        %3497 = vrot.lane.b32.xlu0 %v3485, 54
        %v3498 = vpop.permute.xlu0 %3497
        %3499 = vrot.lane.b32.xlu0 %v3486, 54
        %v3500 = vpop.permute.xlu0 %3499
        %3501 = vrot.lane.b32.xlu0 %v3487, 54
        %v3502 = vpop.permute.xlu0 %3501
        %v3503 = vsel %vm1388, %v3494, %v3496
        %v3504 = vsel %vm1388, %v3496, %v3498
        %v3505 = vsel %vm1388, %v3498, %v3500
        %v3506 = vsel %vm1388, %v3500, %v3502
        %3511 = vst [vmem:[#allocation3 + $0x1c0] sm:$0xff] %v3503
        %3512 = vst [vmem:[#allocation3 + $0x1c8] sm:$0xff] %v3504
        %3513 = vst [vmem:[#allocation3 + $0x1d0] sm:$0xff] %v3505
        %3514 = vst [vmem:[#allocation3 + $0x1d8] sm:$0xff] %v3506
        %v3515 = vld [vmem:[#allocation2] sm:$0xff]
        %v3516 = vld [vmem:[#allocation2 + $0x8] sm:$0xff]
        %v3517 = vld [vmem:[#allocation2 + $0x10] sm:$0xff]
        %v3518 = vld [vmem:[#allocation2 + $0x18] sm:$0xff]
        %v3519 = vld [vmem:[#allocation2 + $0x20] sm:$0xff]
        %v3520 = vld [vmem:[%s1406] ss:$8 sm:$0xf]
        %v3522 = vlaneseq
        %v3523 = vshrl.u32 %v3522, 7
        %v3524 = vsub.s32 0, %v3523
        %v3525 = vrot.slane %v3520, %v3524
        %v3526 = vlaneseq
        %v3527 = vshrl.u32 %v3526, 7
        %v3528 = vsub.s32 1, %v3527
        %v3529 = vrot.slane %v3520, %v3528
        %v3530 = vlaneseq
        %v3531 = vshrl.u32 %v3530, 7
        %v3532 = vsub.s32 2, %v3531
        %v3533 = vrot.slane %v3520, %v3532
        %v3534 = vlaneseq
        %v3535 = vshrl.u32 %v3534, 7
        %v3536 = vsub.s32 3, %v3535
        %v3537 = vrot.slane %v3520, %v3536
        %3538 = vrot.lane.b32.xlu0 %v3525, 80
        %v3539 = vpop.permute.xlu0 %3538
        %3540 = vrot.lane.b32.xlu0 %v3529, 80
        %v3541 = vpop.permute.xlu0 %3540
        %3542 = vrot.lane.b32.xlu0 %v3533, 80
        %v3543 = vpop.permute.xlu0 %3542
        %3544 = vrot.lane.b32.xlu0 %v3537, 80
        %v3545 = vpop.permute.xlu0 %3544
        %v3546 = vsel %vm1433, %v3539, %v3541
        %v3547 = vsel %vm1433, %v3541, %v3543
        %v3548 = vsel %vm1433, %v3543, %v3545
        %v3554 = vmul.f32 %v3515, %v3539
        %v3555 = vmul.f32 %v3516, %v3546
        %v3556 = vmul.f32 %v3517, %v3547
        %v3557 = vmul.f32 %v3518, %v3548
        %v3558 = vmul.f32 %v3519, %v3545
        %3564 = vrot.lane.b32.xlu0 %v3554, 48
        %v3565 = vpop.permute.xlu0 %3564
        %3566 = vrot.lane.b32.xlu0 %v3555, 48
        %v3567 = vpop.permute.xlu0 %3566
        %3568 = vrot.lane.b32.xlu0 %v3556, 48
        %v3569 = vpop.permute.xlu0 %3568
        %3570 = vrot.lane.b32.xlu0 %v3557, 48
        %v3571 = vpop.permute.xlu0 %3570
        %3572 = vrot.lane.b32.xlu0 %v3558, 48
        %v3573 = vpop.permute.xlu0 %3572
        %v3574 = vsel %vm1462, %v3565, %v3567
        %v3575 = vsel %vm1462, %v3567, %v3569
        %v3576 = vsel %vm1462, %v3569, %v3571
        %v3577 = vsel %vm1462, %v3571, %v3573
        %3582 = vst [vmem:[#allocation3 + $0x1e0] sm:$0xff] %v3574
        %3583 = vst [vmem:[#allocation3 + $0x1e8] sm:$0xff] %v3575
        %3584 = vst [vmem:[#allocation3 + $0x1f0] sm:$0xff] %v3576
        %3585 = vst [vmem:[#allocation3 + $0x1f8] sm:$0xff] %v3577
        %v3586 = vld [vmem:[#allocation2] sm:$0xff]
        %v3587 = vld [vmem:[#allocation2 + $0x8] sm:$0xff]
        %v3588 = vld [vmem:[#allocation2 + $0x10] sm:$0xff]
        %v3589 = vld [vmem:[#allocation2 + $0x18] sm:$0xff]
        %v3590 = vld [vmem:[#allocation2 + $0x20] sm:$0xff]
        %v3591 = vld [vmem:[%s1480] ss:$8 sm:$0xf]
        %v3593 = vlaneseq
        %v3594 = vshrl.u32 %v3593, 7
        %v3595 = vsub.s32 0, %v3594
        %v3596 = vrot.slane %v3591, %v3595
        %v3597 = vlaneseq
        %v3598 = vshrl.u32 %v3597, 7
        %v3599 = vsub.s32 1, %v3598
        %v3600 = vrot.slane %v3591, %v3599
        %v3601 = vlaneseq
        %v3602 = vshrl.u32 %v3601, 7
        %v3603 = vsub.s32 2, %v3602
        %v3604 = vrot.slane %v3591, %v3603
        %v3605 = vlaneseq
        %v3606 = vshrl.u32 %v3605, 7
        %v3607 = vsub.s32 3, %v3606
        %v3608 = vrot.slane %v3591, %v3607
        %3609 = vrot.lane.b32.xlu0 %v3596, 81
        %v3610 = vpop.permute.xlu0 %3609
        %3611 = vrot.lane.b32.xlu0 %v3600, 81
        %v3612 = vpop.permute.xlu0 %3611
        %3613 = vrot.lane.b32.xlu0 %v3604, 81
        %v3614 = vpop.permute.xlu0 %3613
        %3615 = vrot.lane.b32.xlu0 %v3608, 81
        %v3616 = vpop.permute.xlu0 %3615
        %v3617 = vsel %vm1507, %v3610, %v3612
        %v3618 = vsel %vm1507, %v3612, %v3614
        %v3619 = vsel %vm1507, %v3614, %v3616
        %v3625 = vmul.f32 %v3586, %v3610
        %v3626 = vmul.f32 %v3587, %v3617
        %v3627 = vmul.f32 %v3588, %v3618
        %v3628 = vmul.f32 %v3589, %v3619
        %v3629 = vmul.f32 %v3590, %v3616
        %3635 = vrot.lane.b32.xlu0 %v3625, 47
        %v3636 = vpop.permute.xlu0 %3635
        %3637 = vrot.lane.b32.xlu0 %v3626, 47
        %v3638 = vpop.permute.xlu0 %3637
        %3639 = vrot.lane.b32.xlu0 %v3627, 47
        %v3640 = vpop.permute.xlu0 %3639
        %3641 = vrot.lane.b32.xlu0 %v3628, 47
        %v3642 = vpop.permute.xlu0 %3641
        %3643 = vrot.lane.b32.xlu0 %v3629, 47
        %v3644 = vpop.permute.xlu0 %3643
        %v3645 = vsel %vm1536, %v3636, %v3638
        %v3646 = vsel %vm1536, %v3638, %v3640
        %v3647 = vsel %vm1536, %v3640, %v3642
        %v3648 = vsel %vm1536, %v3642, %v3644
        %3653 = vst [vmem:[#allocation3 + $0x200] sm:$0xff] %v3645
        %3654 = vst [vmem:[#allocation3 + $0x208] sm:$0xff] %v3646
        %3655 = vst [vmem:[#allocation3 + $0x210] sm:$0xff] %v3647
        %3656 = vst [vmem:[#allocation3 + $0x218] sm:$0xff] %v3648
        %v3657 = vld [vmem:[#allocation2] sm:$0xff]
        %v3658 = vld [vmem:[#allocation2 + $0x8] sm:$0xff]
        %v3659 = vld [vmem:[#allocation2 + $0x10] sm:$0xff]
        %v3660 = vld [vmem:[#allocation2 + $0x18] sm:$0xff]
        %v3661 = vld [vmem:[#allocation2 + $0x20] sm:$0xff]
        %v3662 = vld [vmem:[%s1554] ss:$8 sm:$0xf]
        %v3664 = vlaneseq
        %v3665 = vshrl.u32 %v3664, 7
        %v3666 = vsub.s32 0, %v3665
        %v3667 = vrot.slane %v3662, %v3666
        %v3668 = vlaneseq
        %v3669 = vshrl.u32 %v3668, 7
        %v3670 = vsub.s32 1, %v3669
        %v3671 = vrot.slane %v3662, %v3670
        %v3672 = vlaneseq
        %v3673 = vshrl.u32 %v3672, 7
        %v3674 = vsub.s32 2, %v3673
        %v3675 = vrot.slane %v3662, %v3674
        %v3676 = vlaneseq
        %v3677 = vshrl.u32 %v3676, 7
        %v3678 = vsub.s32 3, %v3677
        %v3679 = vrot.slane %v3662, %v3678
        %3680 = vrot.lane.b32.xlu0 %v3667, 82
        %v3681 = vpop.permute.xlu0 %3680
        %3682 = vrot.lane.b32.xlu0 %v3671, 82
        %v3683 = vpop.permute.xlu0 %3682
        %3684 = vrot.lane.b32.xlu0 %v3675, 82
        %v3685 = vpop.permute.xlu0 %3684
        %3686 = vrot.lane.b32.xlu0 %v3679, 82
        %v3687 = vpop.permute.xlu0 %3686
        %v3688 = vsel %vm1581, %v3681, %v3683
        %v3689 = vsel %vm1581, %v3683, %v3685
        %v3690 = vsel %vm1581, %v3685, %v3687
        %v3696 = vmul.f32 %v3657, %v3681
        %v3697 = vmul.f32 %v3658, %v3688
        %v3698 = vmul.f32 %v3659, %v3689
        %v3699 = vmul.f32 %v3660, %v3690
        %v3700 = vmul.f32 %v3661, %v3687
        %3706 = vrot.lane.b32.xlu0 %v3696, 46
        %v3707 = vpop.permute.xlu0 %3706
        %3708 = vrot.lane.b32.xlu0 %v3697, 46
        %v3709 = vpop.permute.xlu0 %3708
        %3710 = vrot.lane.b32.xlu0 %v3698, 46
        %v3711 = vpop.permute.xlu0 %3710
        %3712 = vrot.lane.b32.xlu0 %v3699, 46
        %v3713 = vpop.permute.xlu0 %3712
        %3714 = vrot.lane.b32.xlu0 %v3700, 46
        %v3715 = vpop.permute.xlu0 %3714
        %v3716 = vsel %vm1610, %v3707, %v3709
        %v3717 = vsel %vm1610, %v3709, %v3711
        %v3718 = vsel %vm1610, %v3711, %v3713
        %v3719 = vsel %vm1610, %v3713, %v3715
        %3724 = vst [vmem:[#allocation3 + $0x220] sm:$0xff] %v3716
        %3725 = vst [vmem:[#allocation3 + $0x228] sm:$0xff] %v3717
        %3726 = vst [vmem:[#allocation3 + $0x230] sm:$0xff] %v3718
        %3727 = vst [vmem:[#allocation3 + $0x238] sm:$0xff] %v3719
        %v3728 = vld [vmem:[#allocation2 + $0x8] sm:$0xff]
        %v3729 = vld [vmem:[#allocation2 + $0x10] sm:$0xff]
        %v3730 = vld [vmem:[#allocation2 + $0x18] sm:$0xff]
        %v3731 = vld [vmem:[#allocation2 + $0x20] sm:$0xff]
        %v3732 = vld [vmem:[%s1627] ss:$8 sm:$0xf]
        %v3734 = vlaneseq
        %v3735 = vshrl.u32 %v3734, 7
        %v3736 = vsub.s32 0, %v3735
        %v3737 = vrot.slane %v3732, %v3736
        %v3738 = vlaneseq
        %v3739 = vshrl.u32 %v3738, 7
        %v3740 = vsub.s32 1, %v3739
        %v3741 = vrot.slane %v3732, %v3740
        %v3742 = vlaneseq
        %v3743 = vshrl.u32 %v3742, 7
        %v3744 = vsub.s32 2, %v3743
        %v3745 = vrot.slane %v3732, %v3744
        %v3746 = vlaneseq
        %v3747 = vshrl.u32 %v3746, 7
        %v3748 = vsub.s32 3, %v3747
        %v3749 = vrot.slane %v3732, %v3748
        %v3754 = vmul.f32 %v3728, %v3737
        %v3755 = vmul.f32 %v3729, %v3741
        %v3756 = vmul.f32 %v3730, %v3745
        %v3757 = vmul.f32 %v3731, %v3749
        %3758 = vst [vmem:[#allocation3 + $0x240] sm:$0xff] %v3754
        %3759 = vst [vmem:[#allocation3 + $0x248] sm:$0xff] %v3755
        %3760 = vst [vmem:[#allocation3 + $0x250] sm:$0xff] %v3756
        %3761 = vst [vmem:[#allocation3 + $0x258] sm:$0xff] %v3757
        %v3762 = vld [vmem:[#allocation2 + $0x8] sm:$0xff]
        %v3763 = vld [vmem:[#allocation2 + $0x10] sm:$0xff]
        %v3764 = vld [vmem:[#allocation2 + $0x18] sm:$0xff]
        %v3765 = vld [vmem:[#allocation2 + $0x20] sm:$0xff]
        %v3766 = vld [vmem:[#allocation2 + $0x28] sm:$0xff]
        %v3767 = vld [vmem:[%s1663] ss:$8 sm:$0xf]
        %v3769 = vlaneseq
        %v3770 = vshrl.u32 %v3769, 7
        %v3771 = vsub.s32 0, %v3770
        %v3772 = vrot.slane %v3767, %v3771
        %v3773 = vlaneseq
        %v3774 = vshrl.u32 %v3773, 7
        %v3775 = vsub.s32 1, %v3774
        %v3776 = vrot.slane %v3767, %v3775
        %v3777 = vlaneseq
        %v3778 = vshrl.u32 %v3777, 7
        %v3779 = vsub.s32 2, %v3778
        %v3780 = vrot.slane %v3767, %v3779
        %v3781 = vlaneseq
        %v3782 = vshrl.u32 %v3781, 7
        %v3783 = vsub.s32 3, %v3782
        %v3784 = vrot.slane %v3767, %v3783
        %3785 = vrot.lane.b32.xlu0 %v3772, 1
        %v3786 = vpop.permute.xlu0 %3785
        %3787 = vrot.lane.b32.xlu0 %v3776, 1
        %v3788 = vpop.permute.xlu0 %3787
        %3789 = vrot.lane.b32.xlu0 %v3780, 1
        %v3790 = vpop.permute.xlu0 %3789
        %3791 = vrot.lane.b32.xlu0 %v3784, 1
        %v3792 = vpop.permute.xlu0 %3791
        %v3793 = vsel %vm440, %v3786, %v3788
        %v3794 = vsel %vm440, %v3788, %v3790
        %v3795 = vsel %vm440, %v3790, %v3792
        %v3801 = vmul.f32 %v3762, %v3786
        %v3802 = vmul.f32 %v3763, %v3793
        %v3803 = vmul.f32 %v3764, %v3794
        %v3804 = vmul.f32 %v3765, %v3795
        %v3805 = vmul.f32 %v3766, %v3792
        %3811 = vrot.lane.b32.xlu0 %v3801, 127
        %v3812 = vpop.permute.xlu0 %3811
        %3813 = vrot.lane.b32.xlu0 %v3802, 127
        %v3814 = vpop.permute.xlu0 %3813
        %3815 = vrot.lane.b32.xlu0 %v3803, 127
        %v3816 = vpop.permute.xlu0 %3815
        %3817 = vrot.lane.b32.xlu0 %v3804, 127
        %v3818 = vpop.permute.xlu0 %3817
        %3819 = vrot.lane.b32.xlu0 %v3805, 127
        %v3820 = vpop.permute.xlu0 %3819
        %v3821 = vsel %vm469, %v3812, %v3814
        %v3822 = vsel %vm469, %v3814, %v3816
        %v3823 = vsel %vm469, %v3816, %v3818
        %v3824 = vsel %vm469, %v3818, %v3820
        %3829 = vst [vmem:[#allocation3 + $0x260] sm:$0xff] %v3821
        %3830 = vst [vmem:[#allocation3 + $0x268] sm:$0xff] %v3822
        %3831 = vst [vmem:[#allocation3 + $0x270] sm:$0xff] %v3823
        %3832 = vst [vmem:[#allocation3 + $0x278] sm:$0xff] %v3824
        %v3833 = vld [vmem:[#allocation2 + $0x8] sm:$0xff]
        %v3834 = vld [vmem:[#allocation2 + $0x10] sm:$0xff]
        %v3835 = vld [vmem:[#allocation2 + $0x18] sm:$0xff]
        %v3836 = vld [vmem:[#allocation2 + $0x20] sm:$0xff]
        %v3837 = vld [vmem:[#allocation2 + $0x28] sm:$0xff]
        %v3838 = vld [vmem:[%s1735] ss:$8 sm:$0xf]
        %v3840 = vlaneseq
        %v3841 = vshrl.u32 %v3840, 7
        %v3842 = vsub.s32 0, %v3841
        %v3843 = vrot.slane %v3838, %v3842
        %v3844 = vlaneseq
        %v3845 = vshrl.u32 %v3844, 7
        %v3846 = vsub.s32 1, %v3845
        %v3847 = vrot.slane %v3838, %v3846
        %v3848 = vlaneseq
        %v3849 = vshrl.u32 %v3848, 7
        %v3850 = vsub.s32 2, %v3849
        %v3851 = vrot.slane %v3838, %v3850
        %v3852 = vlaneseq
        %v3853 = vshrl.u32 %v3852, 7
        %v3854 = vsub.s32 3, %v3853
        %v3855 = vrot.slane %v3838, %v3854
        %3856 = vrot.lane.b32.xlu0 %v3843, 2
        %v3857 = vpop.permute.xlu0 %3856
        %3858 = vrot.lane.b32.xlu0 %v3847, 2
        %v3859 = vpop.permute.xlu0 %3858
        %3860 = vrot.lane.b32.xlu0 %v3851, 2
        %v3861 = vpop.permute.xlu0 %3860
        %3862 = vrot.lane.b32.xlu0 %v3855, 2
        %v3863 = vpop.permute.xlu0 %3862
        %v3864 = vsel %vm514, %v3857, %v3859
        %v3865 = vsel %vm514, %v3859, %v3861
        %v3866 = vsel %vm514, %v3861, %v3863
        %v3872 = vmul.f32 %v3833, %v3857
        %v3873 = vmul.f32 %v3834, %v3864
        %v3874 = vmul.f32 %v3835, %v3865
        %v3875 = vmul.f32 %v3836, %v3866
        %v3876 = vmul.f32 %v3837, %v3863
        %3882 = vrot.lane.b32.xlu0 %v3872, 126
        %v3883 = vpop.permute.xlu0 %3882
        %3884 = vrot.lane.b32.xlu0 %v3873, 126
        %v3885 = vpop.permute.xlu0 %3884
        %3886 = vrot.lane.b32.xlu0 %v3874, 126
        %v3887 = vpop.permute.xlu0 %3886
        %3888 = vrot.lane.b32.xlu0 %v3875, 126
        %v3889 = vpop.permute.xlu0 %3888
        %3890 = vrot.lane.b32.xlu0 %v3876, 126
        %v3891 = vpop.permute.xlu0 %3890
        %v3892 = vsel %vm543, %v3883, %v3885
        %v3893 = vsel %vm543, %v3885, %v3887
        %v3894 = vsel %vm543, %v3887, %v3889
        %v3895 = vsel %vm543, %v3889, %v3891
        %3900 = vst [vmem:[#allocation3 + $0x280] sm:$0xff] %v3892
        %3901 = vst [vmem:[#allocation3 + $0x288] sm:$0xff] %v3893
        %3902 = vst [vmem:[#allocation3 + $0x290] sm:$0xff] %v3894
        %3903 = vst [vmem:[#allocation3 + $0x298] sm:$0xff] %v3895
        %v3904 = vld [vmem:[#allocation2 + $0x8] sm:$0xff]
        %v3905 = vld [vmem:[#allocation2 + $0x10] sm:$0xff]
        %v3906 = vld [vmem:[#allocation2 + $0x18] sm:$0xff]
        %v3907 = vld [vmem:[#allocation2 + $0x20] sm:$0xff]
        %v3908 = vld [vmem:[#allocation2 + $0x28] sm:$0xff]
        %v3909 = vld [vmem:[%s1807] ss:$8 sm:$0xf]
        %v3911 = vlaneseq
        %v3912 = vshrl.u32 %v3911, 7
        %v3913 = vsub.s32 0, %v3912
        %v3914 = vrot.slane %v3909, %v3913
        %v3915 = vlaneseq
        %v3916 = vshrl.u32 %v3915, 7
        %v3917 = vsub.s32 1, %v3916
        %v3918 = vrot.slane %v3909, %v3917
        %v3919 = vlaneseq
        %v3920 = vshrl.u32 %v3919, 7
        %v3921 = vsub.s32 2, %v3920
        %v3922 = vrot.slane %v3909, %v3921
        %v3923 = vlaneseq
        %v3924 = vshrl.u32 %v3923, 7
        %v3925 = vsub.s32 3, %v3924
        %v3926 = vrot.slane %v3909, %v3925
        %3927 = vrot.lane.b32.xlu0 %v3914, 8
        %v3928 = vpop.permute.xlu0 %3927
        %3929 = vrot.lane.b32.xlu0 %v3918, 8
        %v3930 = vpop.permute.xlu0 %3929
        %3931 = vrot.lane.b32.xlu0 %v3922, 8
        %v3932 = vpop.permute.xlu0 %3931
        %3933 = vrot.lane.b32.xlu0 %v3926, 8
        %v3934 = vpop.permute.xlu0 %3933
        %v3935 = vsel %vm588, %v3928, %v3930
        %v3936 = vsel %vm588, %v3930, %v3932
        %v3937 = vsel %vm588, %v3932, %v3934
        %v3943 = vmul.f32 %v3904, %v3928
        %v3944 = vmul.f32 %v3905, %v3935
        %v3945 = vmul.f32 %v3906, %v3936
        %v3946 = vmul.f32 %v3907, %v3937
        %v3947 = vmul.f32 %v3908, %v3934
        %3953 = vrot.lane.b32.xlu0 %v3943, 120
        %v3954 = vpop.permute.xlu0 %3953
        %3955 = vrot.lane.b32.xlu0 %v3944, 120
        %v3956 = vpop.permute.xlu0 %3955
        %3957 = vrot.lane.b32.xlu0 %v3945, 120
        %v3958 = vpop.permute.xlu0 %3957
        %3959 = vrot.lane.b32.xlu0 %v3946, 120
        %v3960 = vpop.permute.xlu0 %3959
        %3961 = vrot.lane.b32.xlu0 %v3947, 120
        %v3962 = vpop.permute.xlu0 %3961
        %v3963 = vsel %vm617, %v3954, %v3956
        %v3964 = vsel %vm617, %v3956, %v3958
        %v3965 = vsel %vm617, %v3958, %v3960
        %v3966 = vsel %vm617, %v3960, %v3962
        %3971 = vst [vmem:[#allocation3 + $0x2a0] sm:$0xff] %v3963
        %3972 = vst [vmem:[#allocation3 + $0x2a8] sm:$0xff] %v3964
        %3973 = vst [vmem:[#allocation3 + $0x2b0] sm:$0xff] %v3965
        %3974 = vst [vmem:[#allocation3 + $0x2b8] sm:$0xff] %v3966
        %v3975 = vld [vmem:[#allocation2 + $0x8] sm:$0xff]
        %v3976 = vld [vmem:[#allocation2 + $0x10] sm:$0xff]
        %v3977 = vld [vmem:[#allocation2 + $0x18] sm:$0xff]
        %v3978 = vld [vmem:[#allocation2 + $0x20] sm:$0xff]
        %v3979 = vld [vmem:[#allocation2 + $0x28] sm:$0xff]
        %v3980 = vld [vmem:[%s1879] ss:$8 sm:$0xf]
        %v3982 = vlaneseq
        %v3983 = vshrl.u32 %v3982, 7
        %v3984 = vsub.s32 0, %v3983
        %v3985 = vrot.slane %v3980, %v3984
        %v3986 = vlaneseq
        %v3987 = vshrl.u32 %v3986, 7
        %v3988 = vsub.s32 1, %v3987
        %v3989 = vrot.slane %v3980, %v3988
        %v3990 = vlaneseq
        %v3991 = vshrl.u32 %v3990, 7
        %v3992 = vsub.s32 2, %v3991
        %v3993 = vrot.slane %v3980, %v3992
        %v3994 = vlaneseq
        %v3995 = vshrl.u32 %v3994, 7
        %v3996 = vsub.s32 3, %v3995
        %v3997 = vrot.slane %v3980, %v3996
        %3998 = vrot.lane.b32.xlu0 %v3985, 9
        %v3999 = vpop.permute.xlu0 %3998
        %4000 = vrot.lane.b32.xlu0 %v3989, 9
        %v4001 = vpop.permute.xlu0 %4000
        %4002 = vrot.lane.b32.xlu0 %v3993, 9
        %v4003 = vpop.permute.xlu0 %4002
        %4004 = vrot.lane.b32.xlu0 %v3997, 9
        %v4005 = vpop.permute.xlu0 %4004
        %v4006 = vsel %vm662, %v3999, %v4001
        %v4007 = vsel %vm662, %v4001, %v4003
        %v4008 = vsel %vm662, %v4003, %v4005
        %v4014 = vmul.f32 %v3975, %v3999
        %v4015 = vmul.f32 %v3976, %v4006
        %v4016 = vmul.f32 %v3977, %v4007
        %v4017 = vmul.f32 %v3978, %v4008
        %v4018 = vmul.f32 %v3979, %v4005
        %4024 = vrot.lane.b32.xlu0 %v4014, 119
        %v4025 = vpop.permute.xlu0 %4024
        %4026 = vrot.lane.b32.xlu0 %v4015, 119
        %v4027 = vpop.permute.xlu0 %4026
        %4028 = vrot.lane.b32.xlu0 %v4016, 119
        %v4029 = vpop.permute.xlu0 %4028
        %4030 = vrot.lane.b32.xlu0 %v4017, 119
        %v4031 = vpop.permute.xlu0 %4030
        %4032 = vrot.lane.b32.xlu0 %v4018, 119
        %v4033 = vpop.permute.xlu0 %4032
        %v4034 = vsel %vm691, %v4025, %v4027
        %v4035 = vsel %vm691, %v4027, %v4029
        %v4036 = vsel %vm691, %v4029, %v4031
        %v4037 = vsel %vm691, %v4031, %v4033
        %4042 = vst [vmem:[#allocation3 + $0x2c0] sm:$0xff] %v4034
        %4043 = vst [vmem:[#allocation3 + $0x2c8] sm:$0xff] %v4035
        %4044 = vst [vmem:[#allocation3 + $0x2d0] sm:$0xff] %v4036
        %4045 = vst [vmem:[#allocation3 + $0x2d8] sm:$0xff] %v4037
        %v4046 = vld [vmem:[#allocation2 + $0x8] sm:$0xff]
        %v4047 = vld [vmem:[#allocation2 + $0x10] sm:$0xff]
        %v4048 = vld [vmem:[#allocation2 + $0x18] sm:$0xff]
        %v4049 = vld [vmem:[#allocation2 + $0x20] sm:$0xff]
        %v4050 = vld [vmem:[#allocation2 + $0x28] sm:$0xff]
        %v4051 = vld [vmem:[%s1951] ss:$8 sm:$0xf]
        %v4053 = vlaneseq
        %v4054 = vshrl.u32 %v4053, 7
        %v4055 = vsub.s32 0, %v4054
        %v4056 = vrot.slane %v4051, %v4055
        %v4057 = vlaneseq
        %v4058 = vshrl.u32 %v4057, 7
        %v4059 = vsub.s32 1, %v4058
        %v4060 = vrot.slane %v4051, %v4059
        %v4061 = vlaneseq
        %v4062 = vshrl.u32 %v4061, 7
        %v4063 = vsub.s32 2, %v4062
        %v4064 = vrot.slane %v4051, %v4063
        %v4065 = vlaneseq
        %v4066 = vshrl.u32 %v4065, 7
        %v4067 = vsub.s32 3, %v4066
        %v4068 = vrot.slane %v4051, %v4067
        %4069 = vrot.lane.b32.xlu0 %v4056, 10
        %v4070 = vpop.permute.xlu0 %4069
        %4071 = vrot.lane.b32.xlu0 %v4060, 10
        %v4072 = vpop.permute.xlu0 %4071
        %4073 = vrot.lane.b32.xlu0 %v4064, 10
        %v4074 = vpop.permute.xlu0 %4073
        %4075 = vrot.lane.b32.xlu0 %v4068, 10
        %v4076 = vpop.permute.xlu0 %4075
        %v4077 = vsel %vm736, %v4070, %v4072
        %v4078 = vsel %vm736, %v4072, %v4074
        %v4079 = vsel %vm736, %v4074, %v4076
        %v4085 = vmul.f32 %v4046, %v4070
        %v4086 = vmul.f32 %v4047, %v4077
        %v4087 = vmul.f32 %v4048, %v4078
        %v4088 = vmul.f32 %v4049, %v4079
        %v4089 = vmul.f32 %v4050, %v4076
        %4095 = vrot.lane.b32.xlu0 %v4085, 118
        %v4096 = vpop.permute.xlu0 %4095
        %4097 = vrot.lane.b32.xlu0 %v4086, 118
        %v4098 = vpop.permute.xlu0 %4097
        %4099 = vrot.lane.b32.xlu0 %v4087, 118
        %v4100 = vpop.permute.xlu0 %4099
        %4101 = vrot.lane.b32.xlu0 %v4088, 118
        %v4102 = vpop.permute.xlu0 %4101
        %4103 = vrot.lane.b32.xlu0 %v4089, 118
        %v4104 = vpop.permute.xlu0 %4103
        %v4105 = vsel %vm765, %v4096, %v4098
        %v4106 = vsel %vm765, %v4098, %v4100
        %v4107 = vsel %vm765, %v4100, %v4102
        %v4108 = vsel %vm765, %v4102, %v4104
        %4113 = vst [vmem:[#allocation3 + $0x2e0] sm:$0xff] %v4105
        %4114 = vst [vmem:[#allocation3 + $0x2e8] sm:$0xff] %v4106
        %4115 = vst [vmem:[#allocation3 + $0x2f0] sm:$0xff] %v4107
        %4116 = vst [vmem:[#allocation3 + $0x2f8] sm:$0xff] %v4108
        %v4117 = vld [vmem:[#allocation2 + $0x8] sm:$0xff]
        %v4118 = vld [vmem:[#allocation2 + $0x10] sm:$0xff]
        %v4119 = vld [vmem:[#allocation2 + $0x18] sm:$0xff]
        %v4120 = vld [vmem:[#allocation2 + $0x20] sm:$0xff]
        %v4121 = vld [vmem:[#allocation2 + $0x28] sm:$0xff]
        %v4122 = vld [vmem:[%s2023] ss:$8 sm:$0xf]
        %v4124 = vlaneseq
        %v4125 = vshrl.u32 %v4124, 7
        %v4126 = vsub.s32 0, %v4125
        %v4127 = vrot.slane %v4122, %v4126
        %v4128 = vlaneseq
        %v4129 = vshrl.u32 %v4128, 7
        %v4130 = vsub.s32 1, %v4129
        %v4131 = vrot.slane %v4122, %v4130
        %v4132 = vlaneseq
        %v4133 = vshrl.u32 %v4132, 7
        %v4134 = vsub.s32 2, %v4133
        %v4135 = vrot.slane %v4122, %v4134
        %v4136 = vlaneseq
        %v4137 = vshrl.u32 %v4136, 7
        %v4138 = vsub.s32 3, %v4137
        %v4139 = vrot.slane %v4122, %v4138
        %4140 = vrot.lane.b32.xlu0 %v4127, 16
        %v4141 = vpop.permute.xlu0 %4140
        %4142 = vrot.lane.b32.xlu0 %v4131, 16
        %v4143 = vpop.permute.xlu0 %4142
        %4144 = vrot.lane.b32.xlu0 %v4135, 16
        %v4145 = vpop.permute.xlu0 %4144
        %4146 = vrot.lane.b32.xlu0 %v4139, 16
        %v4147 = vpop.permute.xlu0 %4146
        %v4148 = vsel %vm810, %v4141, %v4143
        %v4149 = vsel %vm810, %v4143, %v4145
        %v4150 = vsel %vm810, %v4145, %v4147
        %v4156 = vmul.f32 %v4117, %v4141
        %v4157 = vmul.f32 %v4118, %v4148
        %v4158 = vmul.f32 %v4119, %v4149
        %v4159 = vmul.f32 %v4120, %v4150
        %v4160 = vmul.f32 %v4121, %v4147
        %4166 = vrot.lane.b32.xlu0 %v4156, 112
        %v4167 = vpop.permute.xlu0 %4166
        %4168 = vrot.lane.b32.xlu0 %v4157, 112
        %v4169 = vpop.permute.xlu0 %4168
        %4170 = vrot.lane.b32.xlu0 %v4158, 112
        %v4171 = vpop.permute.xlu0 %4170
        %4172 = vrot.lane.b32.xlu0 %v4159, 112
        %v4173 = vpop.permute.xlu0 %4172
        %4174 = vrot.lane.b32.xlu0 %v4160, 112
        %v4175 = vpop.permute.xlu0 %4174
        %v4176 = vsel %vm839, %v4167, %v4169
        %v4177 = vsel %vm839, %v4169, %v4171
        %v4178 = vsel %vm839, %v4171, %v4173
        %v4179 = vsel %vm839, %v4173, %v4175
        %4184 = vst [vmem:[#allocation3 + $0x300] sm:$0xff] %v4176
        %4185 = vst [vmem:[#allocation3 + $0x308] sm:$0xff] %v4177
        %4186 = vst [vmem:[#allocation3 + $0x310] sm:$0xff] %v4178
        %4187 = vst [vmem:[#allocation3 + $0x318] sm:$0xff] %v4179
        %v4188 = vld [vmem:[#allocation2 + $0x8] sm:$0xff]
        %v4189 = vld [vmem:[#allocation2 + $0x10] sm:$0xff]
        %v4190 = vld [vmem:[#allocation2 + $0x18] sm:$0xff]
        %v4191 = vld [vmem:[#allocation2 + $0x20] sm:$0xff]
        %v4192 = vld [vmem:[#allocation2 + $0x28] sm:$0xff]
        %v4193 = vld [vmem:[%s2095] ss:$8 sm:$0xf]
        %v4195 = vlaneseq
        %v4196 = vshrl.u32 %v4195, 7
        %v4197 = vsub.s32 0, %v4196
        %v4198 = vrot.slane %v4193, %v4197
        %v4199 = vlaneseq
        %v4200 = vshrl.u32 %v4199, 7
        %v4201 = vsub.s32 1, %v4200
        %v4202 = vrot.slane %v4193, %v4201
        %v4203 = vlaneseq
        %v4204 = vshrl.u32 %v4203, 7
        %v4205 = vsub.s32 2, %v4204
        %v4206 = vrot.slane %v4193, %v4205
        %v4207 = vlaneseq
        %v4208 = vshrl.u32 %v4207, 7
        %v4209 = vsub.s32 3, %v4208
        %v4210 = vrot.slane %v4193, %v4209
        %4211 = vrot.lane.b32.xlu0 %v4198, 17
        %v4212 = vpop.permute.xlu0 %4211
        %4213 = vrot.lane.b32.xlu0 %v4202, 17
        %v4214 = vpop.permute.xlu0 %4213
        %4215 = vrot.lane.b32.xlu0 %v4206, 17
        %v4216 = vpop.permute.xlu0 %4215
        %4217 = vrot.lane.b32.xlu0 %v4210, 17
        %v4218 = vpop.permute.xlu0 %4217
        %v4219 = vsel %vm884, %v4212, %v4214
        %v4220 = vsel %vm884, %v4214, %v4216
        %v4221 = vsel %vm884, %v4216, %v4218
        %v4227 = vmul.f32 %v4188, %v4212
        %v4228 = vmul.f32 %v4189, %v4219
        %v4229 = vmul.f32 %v4190, %v4220
        %v4230 = vmul.f32 %v4191, %v4221
        %v4231 = vmul.f32 %v4192, %v4218
        %4237 = vrot.lane.b32.xlu0 %v4227, 111
        %v4238 = vpop.permute.xlu0 %4237
        %4239 = vrot.lane.b32.xlu0 %v4228, 111
        %v4240 = vpop.permute.xlu0 %4239
        %4241 = vrot.lane.b32.xlu0 %v4229, 111
        %v4242 = vpop.permute.xlu0 %4241
        %4243 = vrot.lane.b32.xlu0 %v4230, 111
        %v4244 = vpop.permute.xlu0 %4243
        %4245 = vrot.lane.b32.xlu0 %v4231, 111
        %v4246 = vpop.permute.xlu0 %4245
        %v4247 = vsel %vm913, %v4238, %v4240
        %v4248 = vsel %vm913, %v4240, %v4242
        %v4249 = vsel %vm913, %v4242, %v4244
        %v4250 = vsel %vm913, %v4244, %v4246
        %4255 = vst [vmem:[#allocation3 + $0x320] sm:$0xff] %v4247
        %4256 = vst [vmem:[#allocation3 + $0x328] sm:$0xff] %v4248
        %4257 = vst [vmem:[#allocation3 + $0x330] sm:$0xff] %v4249
        %4258 = vst [vmem:[#allocation3 + $0x338] sm:$0xff] %v4250
        %v4259 = vld [vmem:[#allocation2 + $0x8] sm:$0xff]
        %v4260 = vld [vmem:[#allocation2 + $0x10] sm:$0xff]
        %v4261 = vld [vmem:[#allocation2 + $0x18] sm:$0xff]
        %v4262 = vld [vmem:[#allocation2 + $0x20] sm:$0xff]
        %v4263 = vld [vmem:[#allocation2 + $0x28] sm:$0xff]
        %v4264 = vld [vmem:[%s2167] ss:$8 sm:$0xf]
        %v4266 = vlaneseq
        %v4267 = vshrl.u32 %v4266, 7
        %v4268 = vsub.s32 0, %v4267
        %v4269 = vrot.slane %v4264, %v4268
        %v4270 = vlaneseq
        %v4271 = vshrl.u32 %v4270, 7
        %v4272 = vsub.s32 1, %v4271
        %v4273 = vrot.slane %v4264, %v4272
        %v4274 = vlaneseq
        %v4275 = vshrl.u32 %v4274, 7
        %v4276 = vsub.s32 2, %v4275
        %v4277 = vrot.slane %v4264, %v4276
        %v4278 = vlaneseq
        %v4279 = vshrl.u32 %v4278, 7
        %v4280 = vsub.s32 3, %v4279
        %v4281 = vrot.slane %v4264, %v4280
        %4282 = vrot.lane.b32.xlu0 %v4269, 18
        %v4283 = vpop.permute.xlu0 %4282
        %4284 = vrot.lane.b32.xlu0 %v4273, 18
        %v4285 = vpop.permute.xlu0 %4284
        %4286 = vrot.lane.b32.xlu0 %v4277, 18
        %v4287 = vpop.permute.xlu0 %4286
        %4288 = vrot.lane.b32.xlu0 %v4281, 18
        %v4289 = vpop.permute.xlu0 %4288
        %v4290 = vsel %vm342, %v4283, %v4285
        %v4291 = vsel %vm342, %v4285, %v4287
        %v4292 = vsel %vm342, %v4287, %v4289
        %v4298 = vmul.f32 %v4259, %v4283
        %v4299 = vmul.f32 %v4260, %v4290
        %v4300 = vmul.f32 %v4261, %v4291
        %v4301 = vmul.f32 %v4262, %v4292
        %v4302 = vmul.f32 %v4263, %v4289
        %4308 = vrot.lane.b32.xlu0 %v4298, 110
        %v4309 = vpop.permute.xlu0 %4308
        %4310 = vrot.lane.b32.xlu0 %v4299, 110
        %v4311 = vpop.permute.xlu0 %4310
        %4312 = vrot.lane.b32.xlu0 %v4300, 110
        %v4313 = vpop.permute.xlu0 %4312
        %4314 = vrot.lane.b32.xlu0 %v4301, 110
        %v4315 = vpop.permute.xlu0 %4314
        %4316 = vrot.lane.b32.xlu0 %v4302, 110
        %v4317 = vpop.permute.xlu0 %4316
        %v4318 = vsel %vm986, %v4309, %v4311
        %v4319 = vsel %vm986, %v4311, %v4313
        %v4320 = vsel %vm986, %v4313, %v4315
        %v4321 = vsel %vm986, %v4315, %v4317
        %4326 = vst [vmem:[#allocation3 + $0x340] sm:$0xff] %v4318
        %4327 = vst [vmem:[#allocation3 + $0x348] sm:$0xff] %v4319
        %4328 = vst [vmem:[#allocation3 + $0x350] sm:$0xff] %v4320
        %4329 = vst [vmem:[#allocation3 + $0x358] sm:$0xff] %v4321
        %v4330 = vld [vmem:[%s4] sm:$0xff]
        %v4331 = vld [vmem:[%s4 + $0x8] sm:$0xff]
        %v4332 = vld [vmem:[#allocation3] sm:$0xff]
        %v4333 = vld [vmem:[#allocation3 + $0x8] sm:$0xff]
        %v4334 = vld [vmem:[#allocation3 + $0x10] sm:$0xff]
        %v4335 = vld [vmem:[#allocation3 + $0x18] sm:$0xff]
        %v4336 = vld [vmem:[#allocation3 + $0x20] sm:$0xff]
        %v4337 = vld [vmem:[#allocation3 + $0x28] sm:$0xff]
        %v4338 = vld [vmem:[#allocation3 + $0x30] sm:$0xff]
        %v4339 = vld [vmem:[#allocation3 + $0x38] sm:$0xff]
        %v4340 = vld [vmem:[#allocation3 + $0x40] sm:$0xff]
        %v4341 = vld [vmem:[#allocation3 + $0x48] sm:$0xff]
        %v4342 = vld [vmem:[#allocation3 + $0x50] sm:$0xff]
        %v4343 = vld [vmem:[#allocation3 + $0x58] sm:$0xff]
        %v4344 = vld [vmem:[#allocation3 + $0x60] sm:$0xff]
        %v4345 = vld [vmem:[#allocation3 + $0x68] sm:$0xff]
        %v4346 = vld [vmem:[#allocation3 + $0x70] sm:$0xff]
        %v4347 = vld [vmem:[#allocation3 + $0x78] sm:$0xff]
        %v4348 = vld [vmem:[#allocation3 + $0x80] sm:$0xff]
        %v4349 = vld [vmem:[#allocation3 + $0x88] sm:$0xff]
        %v4350 = vld [vmem:[#allocation3 + $0x90] sm:$0xff]
        %v4351 = vld [vmem:[#allocation3 + $0x98] sm:$0xff]
        %v4352 = vld [vmem:[#allocation3 + $0xa0] sm:$0xff]
        %v4353 = vld [vmem:[#allocation3 + $0xa8] sm:$0xff]
        %v4354 = vld [vmem:[#allocation3 + $0xb0] sm:$0xff]
        %v4355 = vld [vmem:[#allocation3 + $0xb8] sm:$0xff]
        %v4356 = vld [vmem:[#allocation3 + $0xc0] sm:$0xff]
        %v4357 = vld [vmem:[#allocation3 + $0xc8] sm:$0xff]
        %v4358 = vld [vmem:[#allocation3 + $0xd0] sm:$0xff]
        %v4359 = vld [vmem:[#allocation3 + $0xd8] sm:$0xff]
        %v4360 = vld [vmem:[#allocation3 + $0xe0] sm:$0xff]
        %v4361 = vld [vmem:[#allocation3 + $0xe8] sm:$0xff]
        %v4362 = vld [vmem:[#allocation3 + $0xf0] sm:$0xff]
        %v4363 = vld [vmem:[#allocation3 + $0xf8] sm:$0xff]
        %v4364 = vld [vmem:[#allocation3 + $0x100] sm:$0xff]
        %v4365 = vld [vmem:[#allocation3 + $0x108] sm:$0xff]
        %v4366 = vld [vmem:[#allocation3 + $0x110] sm:$0xff]
        %v4367 = vld [vmem:[#allocation3 + $0x118] sm:$0xff]
        %v4368 = vld [vmem:[#allocation3 + $0x120] sm:$0xff]
        %v4369 = vld [vmem:[#allocation3 + $0x128] sm:$0xff]
        %v4370 = vld [vmem:[#allocation3 + $0x130] sm:$0xff]
        %v4371 = vld [vmem:[#allocation3 + $0x138] sm:$0xff]
        %v4372 = vld [vmem:[#allocation3 + $0x140] sm:$0xff]
        %v4373 = vld [vmem:[#allocation3 + $0x148] sm:$0xff]
        %v4374 = vld [vmem:[#allocation3 + $0x150] sm:$0xff]
        %v4375 = vld [vmem:[#allocation3 + $0x158] sm:$0xff]
        %v4376 = vld [vmem:[#allocation3 + $0x160] sm:$0xff]
        %v4377 = vld [vmem:[#allocation3 + $0x168] sm:$0xff]
        %v4378 = vld [vmem:[#allocation3 + $0x170] sm:$0xff]
        %v4379 = vld [vmem:[#allocation3 + $0x178] sm:$0xff]
        %v4380 = vld [vmem:[#allocation3 + $0x180] sm:$0xff]
        %v4381 = vld [vmem:[#allocation3 + $0x188] sm:$0xff]
        %v4382 = vld [vmem:[#allocation3 + $0x190] sm:$0xff]
        %v4383 = vld [vmem:[#allocation3 + $0x198] sm:$0xff]
        %v4384 = vld [vmem:[#allocation3 + $0x1a0] sm:$0xff]
        %v4385 = vld [vmem:[#allocation3 + $0x1a8] sm:$0xff]
        %v4386 = vld [vmem:[#allocation3 + $0x1b0] sm:$0xff]
        %v4387 = vld [vmem:[#allocation3 + $0x1b8] sm:$0xff]
        %v4388 = vld [vmem:[#allocation3 + $0x1c0] sm:$0xff]
        %v4389 = vld [vmem:[#allocation3 + $0x1c8] sm:$0xff]
        %v4390 = vld [vmem:[#allocation3 + $0x1d0] sm:$0xff]
        %v4391 = vld [vmem:[#allocation3 + $0x1d8] sm:$0xff]
        %v4392 = vld [vmem:[#allocation3 + $0x1e0] sm:$0xff]
        %v4393 = vld [vmem:[#allocation3 + $0x1e8] sm:$0xff]
        %v4394 = vld [vmem:[#allocation3 + $0x1f0] sm:$0xff]
        %v4395 = vld [vmem:[#allocation3 + $0x1f8] sm:$0xff]
        %v4396 = vld [vmem:[#allocation3 + $0x200] sm:$0xff]
        %v4397 = vld [vmem:[#allocation3 + $0x208] sm:$0xff]
        %v4398 = vld [vmem:[#allocation3 + $0x210] sm:$0xff]
        %v4399 = vld [vmem:[#allocation3 + $0x218] sm:$0xff]
        %v4400 = vld [vmem:[#allocation3 + $0x220] sm:$0xff]
        %v4401 = vld [vmem:[#allocation3 + $0x228] sm:$0xff]
        %v4402 = vld [vmem:[#allocation3 + $0x230] sm:$0xff]
        %v4403 = vld [vmem:[#allocation3 + $0x238] sm:$0xff]
        %v4404 = vld [vmem:[#allocation3 + $0x240] sm:$0xff]
        %v4405 = vld [vmem:[#allocation3 + $0x248] sm:$0xff]
        %v4406 = vld [vmem:[#allocation3 + $0x250] sm:$0xff]
        %v4407 = vld [vmem:[#allocation3 + $0x258] sm:$0xff]
        %v4408 = vld [vmem:[#allocation3 + $0x260] sm:$0xff]
        %v4409 = vld [vmem:[#allocation3 + $0x268] sm:$0xff]
        %v4410 = vld [vmem:[#allocation3 + $0x270] sm:$0xff]
        %v4411 = vld [vmem:[#allocation3 + $0x278] sm:$0xff]
        %v4412 = vld [vmem:[#allocation3 + $0x280] sm:$0xff]
        %v4413 = vld [vmem:[#allocation3 + $0x288] sm:$0xff]
        %v4414 = vld [vmem:[#allocation3 + $0x290] sm:$0xff]
        %v4415 = vld [vmem:[#allocation3 + $0x298] sm:$0xff]
        %v4416 = vld [vmem:[#allocation3 + $0x2a0] sm:$0xff]
        %v4417 = vld [vmem:[#allocation3 + $0x2a8] sm:$0xff]
        %v4418 = vld [vmem:[#allocation3 + $0x2b0] sm:$0xff]
        %v4419 = vld [vmem:[#allocation3 + $0x2b8] sm:$0xff]
        %v4420 = vld [vmem:[#allocation3 + $0x2c0] sm:$0xff]
        %v4421 = vld [vmem:[#allocation3 + $0x2c8] sm:$0xff]
        %v4422 = vld [vmem:[#allocation3 + $0x2d0] sm:$0xff]
        %v4423 = vld [vmem:[#allocation3 + $0x2d8] sm:$0xff]
        %v4424 = vld [vmem:[#allocation3 + $0x2e0] sm:$0xff]
        %v4425 = vld [vmem:[#allocation3 + $0x2e8] sm:$0xff]
        %v4426 = vld [vmem:[#allocation3 + $0x2f0] sm:$0xff]
        %v4427 = vld [vmem:[#allocation3 + $0x2f8] sm:$0xff]
        %v4428 = vld [vmem:[#allocation3 + $0x300] sm:$0xff]
        %v4429 = vld [vmem:[#allocation3 + $0x308] sm:$0xff]
        %v4430 = vld [vmem:[#allocation3 + $0x310] sm:$0xff]
        %v4431 = vld [vmem:[#allocation3 + $0x318] sm:$0xff]
        %v4432 = vld [vmem:[#allocation3 + $0x320] sm:$0xff]
        %v4433 = vld [vmem:[#allocation3 + $0x328] sm:$0xff]
        %v4434 = vld [vmem:[#allocation3 + $0x330] sm:$0xff]
        %v4435 = vld [vmem:[#allocation3 + $0x338] sm:$0xff]
        %v4436 = vld [vmem:[#allocation3 + $0x340] sm:$0xff]
        %v4437 = vld [vmem:[#allocation3 + $0x348] sm:$0xff]
        %v4438 = vld [vmem:[#allocation3 + $0x350] sm:$0xff]
        %v4439 = vld [vmem:[#allocation3 + $0x358] sm:$0xff]
        %v4440 = vld [vmem:[%s5] sm:$0xff]
        %4442 = vset.pattern.permute.xlu0 0
        %4443 = vperm.xlu0 %4442, %v4440
        %v4444 = vpop.permute.xlu0 %4443
        %v4447 = vsel %vm2350, %v4331, 0
        %4449 = vmatprep.subr.mxu0 %v4333
        %4450 = vmatpush1.msra.mxu0 %v4332
        %4451 = vmatprep.subr.mxu0 %v4337
        %4452 = vmatpush1.msra.mxu0 %v4336
        %4453 = vmatprep.subr.mxu0 %v4341
        %4454 = vmatpush1.msra.mxu0 %v4340
        %4455 = vmatprep.subr.mxu0 %v4345
        %4456 = vmatpush1.msra.mxu0 %v4344
        %4457 = vmatprep.subr.mxu0 %v4349
        %4458 = vmatpush1.msra.mxu0 %v4348
        %4459 = vmatprep.subr.mxu0 %v4353
        %4460 = vmatpush1.msra.mxu0 %v4352
        %4461 = vmatprep.subr.mxu0 %v4357
        %4462 = vmatpush1.msra.mxu0 %v4356
        %4463 = vmatprep.subr.mxu0 %v4361
        %4464 = vmatpush1.msra.mxu0 %v4360
        %4465 = vmatprep.subr.mxu0 %v4365
        %4466 = vmatpush1.msra.mxu0 %v4364
        %4467 = vmatprep.subr.mxu0 %v4369
        %4468 = vmatpush1.msra.mxu0 %v4368
        %4469 = vmatprep.subr.mxu0 %v4373
        %4470 = vmatpush1.msra.mxu0 %v4372
        %4471 = vmatprep.subr.mxu0 %v4377
        %4472 = vmatpush1.msra.mxu0 %v4376
        %4473 = vmatprep.subr.mxu0 %v4381
        %4474 = vmatpush1.msra.mxu0 %v4380
        %4475 = vmatprep.subr.mxu0 %v4385
        %4476 = vmatpush1.msra.mxu0 %v4384
        %4477 = vmatprep.subr.mxu0 %v4389
        %4478 = vmatpush1.msra.mxu0 %v4388
        %4479 = vmatprep.subr.mxu0 %v4393
        %4480 = vmatpush1.msra.mxu0 %v4392
        %4481 = vmatprep.subr.mxu0 %v4397
        %4482 = vmatpush1.msra.mxu0 %v4396
        %4483 = vmatprep.subr.mxu0 %v4401
        %4484 = vmatpush1.msra.mxu0 %v4400
        %4485 = vmatprep.subr.mxu0 %v4405
        %4486 = vmatpush1.msra.mxu0 %v4404
        %4487 = vmatprep.subr.mxu0 %v4409
        %4488 = vmatpush1.msra.mxu0 %v4408
        %4489 = vmatprep.subr.mxu0 %v4413
        %4490 = vmatpush1.msra.mxu0 %v4412
        %4491 = vmatprep.subr.mxu0 %v4417
        %4492 = vmatpush1.msra.mxu0 %v4416
        %4493 = vmatprep.subr.mxu0 %v4421
        %4494 = vmatpush1.msra.mxu0 %v4420
        %4495 = vmatprep.subr.mxu0 %v4425
        %4496 = vmatpush1.msra.mxu0 %v4424
        %4497 = vmatprep.subr.mxu0 %v4429
        %4498 = vmatpush1.msra.mxu0 %v4428
        %4499 = vmatprep.subr.mxu0 %v4433
        %4500 = vmatpush1.msra.mxu0 %v4432
        %4501 = vmatprep.subr.mxu0 %v4437
        %4502 = vmatpush1.msra.mxu0 %v4436
        %4503 = vmatprep.subr.mxu0 0.0
        %4504 = vmatpush1.msra.mxu0 0.0
        %4505 = vmatprep.subr.mxu0 0.0
        %4506 = vmatpush1.msra.mxu0 0.0
        %4507 = vmatprep.subr.mxu0 0.0
        %4508 = vmatpush1.msra.mxu0 0.0
        %4509 = vmatprep.subr.mxu0 0.0
        %4510 = vmatpush1.msra.mxu0 0.0
        %4511 = vmatprep.subr.mxu0 0.0
        %4512 = vmatpush1.msra.mxu0 0.0
        %4513 = vmatprep.mubr.f32.mxu0 %v4447
        %4514 = vmatmul.mubr.f32.gmra.mrb[0].mxu0 %v4330
        %v4515 = vpop.f32.mrb[0].mxu0
        %v4516 = vadd.f32 %v4444, %v4515
        %v4517 = vpop.f32.mrb[0].mxu0
        %v4518 = vadd.f32 %v4444, %v4517
        %4519 = vdwg.mxu0
        %4520 = vmatprep.subr.mxu0 %v4335
        %4521 = vmatpush1.msra.mxu0 %v4334
        %4522 = vmatprep.subr.mxu0 %v4339
        %4523 = vmatpush1.msra.mxu0 %v4338
        %4524 = vmatprep.subr.mxu0 %v4343
        %4525 = vmatpush1.msra.mxu0 %v4342
        %4526 = vmatprep.subr.mxu0 %v4347
        %4527 = vmatpush1.msra.mxu0 %v4346
        %4528 = vmatprep.subr.mxu0 %v4351
        %4529 = vmatpush1.msra.mxu0 %v4350
        %4530 = vmatprep.subr.mxu0 %v4355
        %4531 = vmatpush1.msra.mxu0 %v4354
        %4532 = vmatprep.subr.mxu0 %v4359
        %4533 = vmatpush1.msra.mxu0 %v4358
        %4534 = vmatprep.subr.mxu0 %v4363
        %4535 = vmatpush1.msra.mxu0 %v4362
        %4536 = vmatprep.subr.mxu0 %v4367
        %4537 = vmatpush1.msra.mxu0 %v4366
        %4538 = vmatprep.subr.mxu0 %v4371
        %4539 = vmatpush1.msra.mxu0 %v4370
        %4540 = vmatprep.subr.mxu0 %v4375
        %4541 = vmatpush1.msra.mxu0 %v4374
        %4542 = vmatprep.subr.mxu0 %v4379
        %4543 = vmatpush1.msra.mxu0 %v4378
        %4544 = vmatprep.subr.mxu0 %v4383
        %4545 = vmatpush1.msra.mxu0 %v4382
        %4546 = vmatprep.subr.mxu0 %v4387
        %4547 = vmatpush1.msra.mxu0 %v4386
        %4548 = vmatprep.subr.mxu0 %v4391
        %4549 = vmatpush1.msra.mxu0 %v4390
        %4550 = vmatprep.subr.mxu0 %v4395
        %4551 = vmatpush1.msra.mxu0 %v4394
        %4552 = vmatprep.subr.mxu0 %v4399
        %4553 = vmatpush1.msra.mxu0 %v4398
        %4554 = vmatprep.subr.mxu0 %v4403
        %4555 = vmatpush1.msra.mxu0 %v4402
        %4556 = vmatprep.subr.mxu0 %v4407
        %4557 = vmatpush1.msra.mxu0 %v4406
        %4558 = vmatprep.subr.mxu0 %v4411
        %4559 = vmatpush1.msra.mxu0 %v4410
        %4560 = vmatprep.subr.mxu0 %v4415
        %4561 = vmatpush1.msra.mxu0 %v4414
        %4562 = vmatprep.subr.mxu0 %v4419
        %4563 = vmatpush1.msra.mxu0 %v4418
        %4564 = vmatprep.subr.mxu0 %v4423
        %4565 = vmatpush1.msra.mxu0 %v4422
        %4566 = vmatprep.subr.mxu0 %v4427
        %4567 = vmatpush1.msra.mxu0 %v4426
        %4568 = vmatprep.subr.mxu0 %v4431
        %4569 = vmatpush1.msra.mxu0 %v4430
        %4570 = vmatprep.subr.mxu0 %v4435
        %4571 = vmatpush1.msra.mxu0 %v4434
        %4572 = vmatprep.subr.mxu0 %v4439
        %4573 = vmatpush1.msra.mxu0 %v4438
        %4574 = vmatprep.subr.mxu0 0.0
        %4575 = vmatpush1.msra.mxu0 0.0
        %4576 = vmatprep.subr.mxu0 0.0
        %4577 = vmatpush1.msra.mxu0 0.0
        %4578 = vmatprep.subr.mxu0 0.0
        %4579 = vmatpush1.msra.mxu0 0.0
        %4580 = vmatprep.subr.mxu0 0.0
        %4581 = vmatpush1.msra.mxu0 0.0
        %4582 = vmatprep.subr.mxu0 0.0
        %4583 = vmatpush1.msra.mxu0 0.0
        %4584 = vmatprep.mubr.f32.mxu0 %v4447
        %4585 = vmatmul.mubr.f32.gmra.mrb[0].mxu0 %v4330
        %v4586 = vpop.f32.mrb[0].mxu0
        %v4587 = vadd.f32 %v4444, %v4586
        %v4588 = vpop.f32.mrb[0].mxu0
        %v4589 = vadd.f32 %v4444, %v4588
        %4590 = vdwg.mxu0
        %v4591 = vmax.f32 %v4516, 0.0
        %v4592 = vmax.f32 %v4518, 0.0
        %v4593 = vmax.f32 %v4587, 0.0
        %v4594 = vmax.f32 %v4589, 0.0
        %4599 = vrot.lane.b32.xlu0 %v4591, 73
        %v4600 = vpop.permute.xlu0 %4599
        %4601 = vrot.lane.b32.xlu0 %v4592, 73
        %v4602 = vpop.permute.xlu0 %4601
        %4603 = vrot.lane.b32.xlu0 %v4593, 73
        %v4604 = vpop.permute.xlu0 %4603
        %4605 = vrot.lane.b32.xlu0 %v4594, 73
        %v4606 = vpop.permute.xlu0 %4605
        %v4607 = vsel %vm358, %v4600, %v4602
        %v4608 = vsel %vm358, %v4602, %v4604
        %v4609 = vsel %vm358, %v4604, %v4606
        %4615 = vst.msk [vmem:[#allocation2] sm:$0xff] %vm2520, %v4600
        %4616 = vst [vmem:[#allocation2 + $0x8] sm:$0xff] %v4607
        %4617 = vst [vmem:[#allocation2 + $0x10] sm:$0xff] %v4608
        %4618 = vst [vmem:[#allocation2 + $0x18] sm:$0xff] %v4609
        %4619 = vst.msk [vmem:[#allocation2 + $0x20] sm:$0xff] %vm358, %v4606
        %v4620 = vld [vmem:[#allocation2] sm:$0xff]
        %v4621 = vld [vmem:[#allocation2 + $0x8] sm:$0xff]
        %v4622 = vld [vmem:[#allocation2 + $0x10] sm:$0xff]
        %v4623 = vld [vmem:[#allocation2 + $0x18] sm:$0xff]
        %v4624 = vld [vmem:[#allocation7] ss:$8 sm:$0xf]
        %v4626 = vlaneseq
        %v4627 = vshrl.u32 %v4626, 7
        %v4628 = vsub.s32 0, %v4627
        %v4629 = vrot.slane %v4624, %v4628
        %v4630 = vlaneseq
        %v4631 = vshrl.u32 %v4630, 7
        %v4632 = vsub.s32 1, %v4631
        %v4633 = vrot.slane %v4624, %v4632
        %v4634 = vlaneseq
        %v4635 = vshrl.u32 %v4634, 7
        %v4636 = vsub.s32 2, %v4635
        %v4637 = vrot.slane %v4624, %v4636
        %v4638 = vlaneseq
        %v4639 = vshrl.u32 %v4638, 7
        %v4640 = vsub.s32 3, %v4639
        %v4641 = vrot.slane %v4624, %v4640
        %v4646 = vmul.f32 %v4620, %v4629
        %v4647 = vmul.f32 %v4621, %v4633
        %v4648 = vmul.f32 %v4622, %v4637
        %v4649 = vmul.f32 %v4623, %v4641
        %4650 = vst [vmem:[#allocation3] sm:$0xff] %v4646
        %4651 = vst [vmem:[#allocation3 + $0x8] sm:$0xff] %v4647
        %4652 = vst [vmem:[#allocation3 + $0x10] sm:$0xff] %v4648
        %4653 = vst [vmem:[#allocation3 + $0x18] sm:$0xff] %v4649
        %v4654 = vld [vmem:[#allocation2] sm:$0xff]
        %v4655 = vld [vmem:[#allocation2 + $0x8] sm:$0xff]
        %v4656 = vld [vmem:[#allocation2 + $0x10] sm:$0xff]
        %v4657 = vld [vmem:[#allocation2 + $0x18] sm:$0xff]
        %v4658 = vld [vmem:[#allocation2 + $0x20] sm:$0xff]
        %v4659 = vld [vmem:[%s413] ss:$8 sm:$0xf]
        %v4661 = vlaneseq
        %v4662 = vshrl.u32 %v4661, 7
        %v4663 = vsub.s32 0, %v4662
        %v4664 = vrot.slane %v4659, %v4663
        %v4665 = vlaneseq
        %v4666 = vshrl.u32 %v4665, 7
        %v4667 = vsub.s32 1, %v4666
        %v4668 = vrot.slane %v4659, %v4667
        %v4669 = vlaneseq
        %v4670 = vshrl.u32 %v4669, 7
        %v4671 = vsub.s32 2, %v4670
        %v4672 = vrot.slane %v4659, %v4671
        %v4673 = vlaneseq
        %v4674 = vshrl.u32 %v4673, 7
        %v4675 = vsub.s32 3, %v4674
        %v4676 = vrot.slane %v4659, %v4675
        %4677 = vrot.lane.b32.xlu0 %v4664, 1
        %v4678 = vpop.permute.xlu0 %4677
        %4679 = vrot.lane.b32.xlu0 %v4668, 1
        %v4680 = vpop.permute.xlu0 %4679
        %4681 = vrot.lane.b32.xlu0 %v4672, 1
        %v4682 = vpop.permute.xlu0 %4681
        %4683 = vrot.lane.b32.xlu0 %v4676, 1
        %v4684 = vpop.permute.xlu0 %4683
        %v4685 = vsel %vm440, %v4678, %v4680
        %v4686 = vsel %vm440, %v4680, %v4682
        %v4687 = vsel %vm440, %v4682, %v4684
        %v4693 = vmul.f32 %v4654, %v4678
        %v4694 = vmul.f32 %v4655, %v4685
        %v4695 = vmul.f32 %v4656, %v4686
        %v4696 = vmul.f32 %v4657, %v4687
        %v4697 = vmul.f32 %v4658, %v4684
        %4703 = vrot.lane.b32.xlu0 %v4693, 127
        %v4704 = vpop.permute.xlu0 %4703
        %4705 = vrot.lane.b32.xlu0 %v4694, 127
        %v4706 = vpop.permute.xlu0 %4705
        %4707 = vrot.lane.b32.xlu0 %v4695, 127
        %v4708 = vpop.permute.xlu0 %4707
        %4709 = vrot.lane.b32.xlu0 %v4696, 127
        %v4710 = vpop.permute.xlu0 %4709
        %4711 = vrot.lane.b32.xlu0 %v4697, 127
        %v4712 = vpop.permute.xlu0 %4711
        %v4713 = vsel %vm469, %v4704, %v4706
        %v4714 = vsel %vm469, %v4706, %v4708
        %v4715 = vsel %vm469, %v4708, %v4710
        %v4716 = vsel %vm469, %v4710, %v4712
        %4721 = vst [vmem:[#allocation3 + $0x20] sm:$0xff] %v4713
        %4722 = vst [vmem:[#allocation3 + $0x28] sm:$0xff] %v4714
        %4723 = vst [vmem:[#allocation3 + $0x30] sm:$0xff] %v4715
        %4724 = vst [vmem:[#allocation3 + $0x38] sm:$0xff] %v4716
        %v4725 = vld [vmem:[#allocation2] sm:$0xff]
        %v4726 = vld [vmem:[#allocation2 + $0x8] sm:$0xff]
        %v4727 = vld [vmem:[#allocation2 + $0x10] sm:$0xff]
        %v4728 = vld [vmem:[#allocation2 + $0x18] sm:$0xff]
        %v4729 = vld [vmem:[#allocation2 + $0x20] sm:$0xff]
        %v4730 = vld [vmem:[%s487] ss:$8 sm:$0xf]
        %v4732 = vlaneseq
        %v4733 = vshrl.u32 %v4732, 7
        %v4734 = vsub.s32 0, %v4733
        %v4735 = vrot.slane %v4730, %v4734
        %v4736 = vlaneseq
        %v4737 = vshrl.u32 %v4736, 7
        %v4738 = vsub.s32 1, %v4737
        %v4739 = vrot.slane %v4730, %v4738
        %v4740 = vlaneseq
        %v4741 = vshrl.u32 %v4740, 7
        %v4742 = vsub.s32 2, %v4741
        %v4743 = vrot.slane %v4730, %v4742
        %v4744 = vlaneseq
        %v4745 = vshrl.u32 %v4744, 7
        %v4746 = vsub.s32 3, %v4745
        %v4747 = vrot.slane %v4730, %v4746
        %4748 = vrot.lane.b32.xlu0 %v4735, 2
        %v4749 = vpop.permute.xlu0 %4748
        %4750 = vrot.lane.b32.xlu0 %v4739, 2
        %v4751 = vpop.permute.xlu0 %4750
        %4752 = vrot.lane.b32.xlu0 %v4743, 2
        %v4753 = vpop.permute.xlu0 %4752
        %4754 = vrot.lane.b32.xlu0 %v4747, 2
        %v4755 = vpop.permute.xlu0 %4754
        %v4756 = vsel %vm514, %v4749, %v4751
        %v4757 = vsel %vm514, %v4751, %v4753
        %v4758 = vsel %vm514, %v4753, %v4755
        %v4764 = vmul.f32 %v4725, %v4749
        %v4765 = vmul.f32 %v4726, %v4756
        %v4766 = vmul.f32 %v4727, %v4757
        %v4767 = vmul.f32 %v4728, %v4758
        %v4768 = vmul.f32 %v4729, %v4755
        %4774 = vrot.lane.b32.xlu0 %v4764, 126
        %v4775 = vpop.permute.xlu0 %4774
        %4776 = vrot.lane.b32.xlu0 %v4765, 126
        %v4777 = vpop.permute.xlu0 %4776
        %4778 = vrot.lane.b32.xlu0 %v4766, 126
        %v4779 = vpop.permute.xlu0 %4778
        %4780 = vrot.lane.b32.xlu0 %v4767, 126
        %v4781 = vpop.permute.xlu0 %4780
        %4782 = vrot.lane.b32.xlu0 %v4768, 126
        %v4783 = vpop.permute.xlu0 %4782
        %v4784 = vsel %vm543, %v4775, %v4777
        %v4785 = vsel %vm543, %v4777, %v4779
        %v4786 = vsel %vm543, %v4779, %v4781
        %v4787 = vsel %vm543, %v4781, %v4783
        %4792 = vst [vmem:[#allocation3 + $0x40] sm:$0xff] %v4784
        %4793 = vst [vmem:[#allocation3 + $0x48] sm:$0xff] %v4785
        %4794 = vst [vmem:[#allocation3 + $0x50] sm:$0xff] %v4786
        %4795 = vst [vmem:[#allocation3 + $0x58] sm:$0xff] %v4787
        %v4796 = vld [vmem:[#allocation2] sm:$0xff]
        %v4797 = vld [vmem:[#allocation2 + $0x8] sm:$0xff]
        %v4798 = vld [vmem:[#allocation2 + $0x10] sm:$0xff]
        %v4799 = vld [vmem:[#allocation2 + $0x18] sm:$0xff]
        %v4800 = vld [vmem:[#allocation2 + $0x20] sm:$0xff]
        %v4801 = vld [vmem:[%s561] ss:$8 sm:$0xf]
        %v4803 = vlaneseq
        %v4804 = vshrl.u32 %v4803, 7
        %v4805 = vsub.s32 0, %v4804
        %v4806 = vrot.slane %v4801, %v4805
        %v4807 = vlaneseq
        %v4808 = vshrl.u32 %v4807, 7
        %v4809 = vsub.s32 1, %v4808
        %v4810 = vrot.slane %v4801, %v4809
        %v4811 = vlaneseq
        %v4812 = vshrl.u32 %v4811, 7
        %v4813 = vsub.s32 2, %v4812
        %v4814 = vrot.slane %v4801, %v4813
        %v4815 = vlaneseq
        %v4816 = vshrl.u32 %v4815, 7
        %v4817 = vsub.s32 3, %v4816
        %v4818 = vrot.slane %v4801, %v4817
        %4819 = vrot.lane.b32.xlu0 %v4806, 8
        %v4820 = vpop.permute.xlu0 %4819
        %4821 = vrot.lane.b32.xlu0 %v4810, 8
        %v4822 = vpop.permute.xlu0 %4821
        %4823 = vrot.lane.b32.xlu0 %v4814, 8
        %v4824 = vpop.permute.xlu0 %4823
        %4825 = vrot.lane.b32.xlu0 %v4818, 8
        %v4826 = vpop.permute.xlu0 %4825
        %v4827 = vsel %vm588, %v4820, %v4822
        %v4828 = vsel %vm588, %v4822, %v4824
        %v4829 = vsel %vm588, %v4824, %v4826
        %v4835 = vmul.f32 %v4796, %v4820
        %v4836 = vmul.f32 %v4797, %v4827
        %v4837 = vmul.f32 %v4798, %v4828
        %v4838 = vmul.f32 %v4799, %v4829
        %v4839 = vmul.f32 %v4800, %v4826
        %4845 = vrot.lane.b32.xlu0 %v4835, 120
        %v4846 = vpop.permute.xlu0 %4845
        %4847 = vrot.lane.b32.xlu0 %v4836, 120
        %v4848 = vpop.permute.xlu0 %4847
        %4849 = vrot.lane.b32.xlu0 %v4837, 120
        %v4850 = vpop.permute.xlu0 %4849
        %4851 = vrot.lane.b32.xlu0 %v4838, 120
        %v4852 = vpop.permute.xlu0 %4851
        %4853 = vrot.lane.b32.xlu0 %v4839, 120
        %v4854 = vpop.permute.xlu0 %4853
        %v4855 = vsel %vm617, %v4846, %v4848
        %v4856 = vsel %vm617, %v4848, %v4850
        %v4857 = vsel %vm617, %v4850, %v4852
        %v4858 = vsel %vm617, %v4852, %v4854
        %4863 = vst [vmem:[#allocation3 + $0x60] sm:$0xff] %v4855
        %4864 = vst [vmem:[#allocation3 + $0x68] sm:$0xff] %v4856
        %4865 = vst [vmem:[#allocation3 + $0x70] sm:$0xff] %v4857
        %4866 = vst [vmem:[#allocation3 + $0x78] sm:$0xff] %v4858
        %v4867 = vld [vmem:[#allocation2] sm:$0xff]
        %v4868 = vld [vmem:[#allocation2 + $0x8] sm:$0xff]
        %v4869 = vld [vmem:[#allocation2 + $0x10] sm:$0xff]
        %v4870 = vld [vmem:[#allocation2 + $0x18] sm:$0xff]
        %v4871 = vld [vmem:[#allocation2 + $0x20] sm:$0xff]
        %v4872 = vld [vmem:[%s635] ss:$8 sm:$0xf]
        %v4874 = vlaneseq
        %v4875 = vshrl.u32 %v4874, 7
        %v4876 = vsub.s32 0, %v4875
        %v4877 = vrot.slane %v4872, %v4876
        %v4878 = vlaneseq
        %v4879 = vshrl.u32 %v4878, 7
        %v4880 = vsub.s32 1, %v4879
        %v4881 = vrot.slane %v4872, %v4880
        %v4882 = vlaneseq
        %v4883 = vshrl.u32 %v4882, 7
        %v4884 = vsub.s32 2, %v4883
        %v4885 = vrot.slane %v4872, %v4884
        %v4886 = vlaneseq
        %v4887 = vshrl.u32 %v4886, 7
        %v4888 = vsub.s32 3, %v4887
        %v4889 = vrot.slane %v4872, %v4888
        %4890 = vrot.lane.b32.xlu0 %v4877, 9
        %v4891 = vpop.permute.xlu0 %4890
        %4892 = vrot.lane.b32.xlu0 %v4881, 9
        %v4893 = vpop.permute.xlu0 %4892
        %4894 = vrot.lane.b32.xlu0 %v4885, 9
        %v4895 = vpop.permute.xlu0 %4894
        %4896 = vrot.lane.b32.xlu0 %v4889, 9
        %v4897 = vpop.permute.xlu0 %4896
        %v4898 = vsel %vm662, %v4891, %v4893
        %v4899 = vsel %vm662, %v4893, %v4895
        %v4900 = vsel %vm662, %v4895, %v4897
        %v4906 = vmul.f32 %v4867, %v4891
        %v4907 = vmul.f32 %v4868, %v4898
        %v4908 = vmul.f32 %v4869, %v4899
        %v4909 = vmul.f32 %v4870, %v4900
        %v4910 = vmul.f32 %v4871, %v4897
        %4916 = vrot.lane.b32.xlu0 %v4906, 119
        %v4917 = vpop.permute.xlu0 %4916
        %4918 = vrot.lane.b32.xlu0 %v4907, 119
        %v4919 = vpop.permute.xlu0 %4918
        %4920 = vrot.lane.b32.xlu0 %v4908, 119
        %v4921 = vpop.permute.xlu0 %4920
        %4922 = vrot.lane.b32.xlu0 %v4909, 119
        %v4923 = vpop.permute.xlu0 %4922
        %4924 = vrot.lane.b32.xlu0 %v4910, 119
        %v4925 = vpop.permute.xlu0 %4924
        %v4926 = vsel %vm691, %v4917, %v4919
        %v4927 = vsel %vm691, %v4919, %v4921
        %v4928 = vsel %vm691, %v4921, %v4923
        %v4929 = vsel %vm691, %v4923, %v4925
        %4934 = vst [vmem:[#allocation3 + $0x80] sm:$0xff] %v4926
        %4935 = vst [vmem:[#allocation3 + $0x88] sm:$0xff] %v4927
        %4936 = vst [vmem:[#allocation3 + $0x90] sm:$0xff] %v4928
        %4937 = vst [vmem:[#allocation3 + $0x98] sm:$0xff] %v4929
        %v4938 = vld [vmem:[#allocation2] sm:$0xff]
        %v4939 = vld [vmem:[#allocation2 + $0x8] sm:$0xff]
        %v4940 = vld [vmem:[#allocation2 + $0x10] sm:$0xff]
        %v4941 = vld [vmem:[#allocation2 + $0x18] sm:$0xff]
        %v4942 = vld [vmem:[#allocation2 + $0x20] sm:$0xff]
        %v4943 = vld [vmem:[%s709] ss:$8 sm:$0xf]
        %v4945 = vlaneseq
        %v4946 = vshrl.u32 %v4945, 7
        %v4947 = vsub.s32 0, %v4946
        %v4948 = vrot.slane %v4943, %v4947
        %v4949 = vlaneseq
        %v4950 = vshrl.u32 %v4949, 7
        %v4951 = vsub.s32 1, %v4950
        %v4952 = vrot.slane %v4943, %v4951
        %v4953 = vlaneseq
        %v4954 = vshrl.u32 %v4953, 7
        %v4955 = vsub.s32 2, %v4954
        %v4956 = vrot.slane %v4943, %v4955
        %v4957 = vlaneseq
        %v4958 = vshrl.u32 %v4957, 7
        %v4959 = vsub.s32 3, %v4958
        %v4960 = vrot.slane %v4943, %v4959
        %4961 = vrot.lane.b32.xlu0 %v4948, 10
        %v4962 = vpop.permute.xlu0 %4961
        %4963 = vrot.lane.b32.xlu0 %v4952, 10
        %v4964 = vpop.permute.xlu0 %4963
        %4965 = vrot.lane.b32.xlu0 %v4956, 10
        %v4966 = vpop.permute.xlu0 %4965
        %4967 = vrot.lane.b32.xlu0 %v4960, 10
        %v4968 = vpop.permute.xlu0 %4967
        %v4969 = vsel %vm736, %v4962, %v4964
        %v4970 = vsel %vm736, %v4964, %v4966
        %v4971 = vsel %vm736, %v4966, %v4968
        %v4977 = vmul.f32 %v4938, %v4962
        %v4978 = vmul.f32 %v4939, %v4969
        %v4979 = vmul.f32 %v4940, %v4970
        %v4980 = vmul.f32 %v4941, %v4971
        %v4981 = vmul.f32 %v4942, %v4968
        %4987 = vrot.lane.b32.xlu0 %v4977, 118
        %v4988 = vpop.permute.xlu0 %4987
        %4989 = vrot.lane.b32.xlu0 %v4978, 118
        %v4990 = vpop.permute.xlu0 %4989
        %4991 = vrot.lane.b32.xlu0 %v4979, 118
        %v4992 = vpop.permute.xlu0 %4991
        %4993 = vrot.lane.b32.xlu0 %v4980, 118
        %v4994 = vpop.permute.xlu0 %4993
        %4995 = vrot.lane.b32.xlu0 %v4981, 118
        %v4996 = vpop.permute.xlu0 %4995
        %v4997 = vsel %vm765, %v4988, %v4990
        %v4998 = vsel %vm765, %v4990, %v4992
        %v4999 = vsel %vm765, %v4992, %v4994
        %v5000 = vsel %vm765, %v4994, %v4996
        %5005 = vst [vmem:[#allocation3 + $0xa0] sm:$0xff] %v4997
        %5006 = vst [vmem:[#allocation3 + $0xa8] sm:$0xff] %v4998
        %5007 = vst [vmem:[#allocation3 + $0xb0] sm:$0xff] %v4999
        %5008 = vst [vmem:[#allocation3 + $0xb8] sm:$0xff] %v5000
        %v5009 = vld [vmem:[#allocation2] sm:$0xff]
        %v5010 = vld [vmem:[#allocation2 + $0x8] sm:$0xff]
        %v5011 = vld [vmem:[#allocation2 + $0x10] sm:$0xff]
        %v5012 = vld [vmem:[#allocation2 + $0x18] sm:$0xff]
        %v5013 = vld [vmem:[#allocation2 + $0x20] sm:$0xff]
        %v5014 = vld [vmem:[%s783] ss:$8 sm:$0xf]
        %v5016 = vlaneseq
        %v5017 = vshrl.u32 %v5016, 7
        %v5018 = vsub.s32 0, %v5017
        %v5019 = vrot.slane %v5014, %v5018
        %v5020 = vlaneseq
        %v5021 = vshrl.u32 %v5020, 7
        %v5022 = vsub.s32 1, %v5021
        %v5023 = vrot.slane %v5014, %v5022
        %v5024 = vlaneseq
        %v5025 = vshrl.u32 %v5024, 7
        %v5026 = vsub.s32 2, %v5025
        %v5027 = vrot.slane %v5014, %v5026
        %v5028 = vlaneseq
        %v5029 = vshrl.u32 %v5028, 7
        %v5030 = vsub.s32 3, %v5029
        %v5031 = vrot.slane %v5014, %v5030
        %5032 = vrot.lane.b32.xlu0 %v5019, 16
        %v5033 = vpop.permute.xlu0 %5032
        %5034 = vrot.lane.b32.xlu0 %v5023, 16
        %v5035 = vpop.permute.xlu0 %5034
        %5036 = vrot.lane.b32.xlu0 %v5027, 16
        %v5037 = vpop.permute.xlu0 %5036
        %5038 = vrot.lane.b32.xlu0 %v5031, 16
        %v5039 = vpop.permute.xlu0 %5038
        %v5040 = vsel %vm810, %v5033, %v5035
        %v5041 = vsel %vm810, %v5035, %v5037
        %v5042 = vsel %vm810, %v5037, %v5039
        %v5048 = vmul.f32 %v5009, %v5033
        %v5049 = vmul.f32 %v5010, %v5040
        %v5050 = vmul.f32 %v5011, %v5041
        %v5051 = vmul.f32 %v5012, %v5042
        %v5052 = vmul.f32 %v5013, %v5039
        %5058 = vrot.lane.b32.xlu0 %v5048, 112
        %v5059 = vpop.permute.xlu0 %5058
        %5060 = vrot.lane.b32.xlu0 %v5049, 112
        %v5061 = vpop.permute.xlu0 %5060
        %5062 = vrot.lane.b32.xlu0 %v5050, 112
        %v5063 = vpop.permute.xlu0 %5062
        %5064 = vrot.lane.b32.xlu0 %v5051, 112
        %v5065 = vpop.permute.xlu0 %5064
        %5066 = vrot.lane.b32.xlu0 %v5052, 112
        %v5067 = vpop.permute.xlu0 %5066
        %v5068 = vsel %vm839, %v5059, %v5061
        %v5069 = vsel %vm839, %v5061, %v5063
        %v5070 = vsel %vm839, %v5063, %v5065
        %v5071 = vsel %vm839, %v5065, %v5067
        %5076 = vst [vmem:[#allocation3 + $0xc0] sm:$0xff] %v5068
        %5077 = vst [vmem:[#allocation3 + $0xc8] sm:$0xff] %v5069
        %5078 = vst [vmem:[#allocation3 + $0xd0] sm:$0xff] %v5070
        %5079 = vst [vmem:[#allocation3 + $0xd8] sm:$0xff] %v5071
        %v5080 = vld [vmem:[#allocation2] sm:$0xff]
        %v5081 = vld [vmem:[#allocation2 + $0x8] sm:$0xff]
        %v5082 = vld [vmem:[#allocation2 + $0x10] sm:$0xff]
        %v5083 = vld [vmem:[#allocation2 + $0x18] sm:$0xff]
        %v5084 = vld [vmem:[#allocation2 + $0x20] sm:$0xff]
        %v5085 = vld [vmem:[%s857] ss:$8 sm:$0xf]
        %v5087 = vlaneseq
        %v5088 = vshrl.u32 %v5087, 7
        %v5089 = vsub.s32 0, %v5088
        %v5090 = vrot.slane %v5085, %v5089
        %v5091 = vlaneseq
        %v5092 = vshrl.u32 %v5091, 7
        %v5093 = vsub.s32 1, %v5092
        %v5094 = vrot.slane %v5085, %v5093
        %v5095 = vlaneseq
        %v5096 = vshrl.u32 %v5095, 7
        %v5097 = vsub.s32 2, %v5096
        %v5098 = vrot.slane %v5085, %v5097
        %v5099 = vlaneseq
        %v5100 = vshrl.u32 %v5099, 7
        %v5101 = vsub.s32 3, %v5100
        %v5102 = vrot.slane %v5085, %v5101
        %5103 = vrot.lane.b32.xlu0 %v5090, 17
        %v5104 = vpop.permute.xlu0 %5103
        %5105 = vrot.lane.b32.xlu0 %v5094, 17
        %v5106 = vpop.permute.xlu0 %5105
        %5107 = vrot.lane.b32.xlu0 %v5098, 17
        %v5108 = vpop.permute.xlu0 %5107
        %5109 = vrot.lane.b32.xlu0 %v5102, 17
        %v5110 = vpop.permute.xlu0 %5109
        %v5111 = vsel %vm884, %v5104, %v5106
        %v5112 = vsel %vm884, %v5106, %v5108
        %v5113 = vsel %vm884, %v5108, %v5110
        %v5119 = vmul.f32 %v5080, %v5104
        %v5120 = vmul.f32 %v5081, %v5111
        %v5121 = vmul.f32 %v5082, %v5112
        %v5122 = vmul.f32 %v5083, %v5113
        %v5123 = vmul.f32 %v5084, %v5110
        %5129 = vrot.lane.b32.xlu0 %v5119, 111
        %v5130 = vpop.permute.xlu0 %5129
        %5131 = vrot.lane.b32.xlu0 %v5120, 111
        %v5132 = vpop.permute.xlu0 %5131
        %5133 = vrot.lane.b32.xlu0 %v5121, 111
        %v5134 = vpop.permute.xlu0 %5133
        %5135 = vrot.lane.b32.xlu0 %v5122, 111
        %v5136 = vpop.permute.xlu0 %5135
        %5137 = vrot.lane.b32.xlu0 %v5123, 111
        %v5138 = vpop.permute.xlu0 %5137
        %v5139 = vsel %vm913, %v5130, %v5132
        %v5140 = vsel %vm913, %v5132, %v5134
        %v5141 = vsel %vm913, %v5134, %v5136
        %v5142 = vsel %vm913, %v5136, %v5138
        %5147 = vst [vmem:[#allocation3 + $0xe0] sm:$0xff] %v5139
        %5148 = vst [vmem:[#allocation3 + $0xe8] sm:$0xff] %v5140
        %5149 = vst [vmem:[#allocation3 + $0xf0] sm:$0xff] %v5141
        %5150 = vst [vmem:[#allocation3 + $0xf8] sm:$0xff] %v5142
        %v5151 = vld [vmem:[#allocation2] sm:$0xff]
        %v5152 = vld [vmem:[#allocation2 + $0x8] sm:$0xff]
        %v5153 = vld [vmem:[#allocation2 + $0x10] sm:$0xff]
        %v5154 = vld [vmem:[#allocation2 + $0x18] sm:$0xff]
        %v5155 = vld [vmem:[#allocation2 + $0x20] sm:$0xff]
        %v5156 = vld [vmem:[%s931] ss:$8 sm:$0xf]
        %v5158 = vlaneseq
        %v5159 = vshrl.u32 %v5158, 7
        %v5160 = vsub.s32 0, %v5159
        %v5161 = vrot.slane %v5156, %v5160
        %v5162 = vlaneseq
        %v5163 = vshrl.u32 %v5162, 7
        %v5164 = vsub.s32 1, %v5163
        %v5165 = vrot.slane %v5156, %v5164
        %v5166 = vlaneseq
        %v5167 = vshrl.u32 %v5166, 7
        %v5168 = vsub.s32 2, %v5167
        %v5169 = vrot.slane %v5156, %v5168
        %v5170 = vlaneseq
        %v5171 = vshrl.u32 %v5170, 7
        %v5172 = vsub.s32 3, %v5171
        %v5173 = vrot.slane %v5156, %v5172
        %5174 = vrot.lane.b32.xlu0 %v5161, 18
        %v5175 = vpop.permute.xlu0 %5174
        %5176 = vrot.lane.b32.xlu0 %v5165, 18
        %v5177 = vpop.permute.xlu0 %5176
        %5178 = vrot.lane.b32.xlu0 %v5169, 18
        %v5179 = vpop.permute.xlu0 %5178
        %5180 = vrot.lane.b32.xlu0 %v5173, 18
        %v5181 = vpop.permute.xlu0 %5180
        %v5182 = vsel %vm342, %v5175, %v5177
        %v5183 = vsel %vm342, %v5177, %v5179
        %v5184 = vsel %vm342, %v5179, %v5181
        %v5190 = vmul.f32 %v5151, %v5175
        %v5191 = vmul.f32 %v5152, %v5182
        %v5192 = vmul.f32 %v5153, %v5183
        %v5193 = vmul.f32 %v5154, %v5184
        %v5194 = vmul.f32 %v5155, %v5181
        %5200 = vrot.lane.b32.xlu0 %v5190, 110
        %v5201 = vpop.permute.xlu0 %5200
        %5202 = vrot.lane.b32.xlu0 %v5191, 110
        %v5203 = vpop.permute.xlu0 %5202
        %5204 = vrot.lane.b32.xlu0 %v5192, 110
        %v5205 = vpop.permute.xlu0 %5204
        %5206 = vrot.lane.b32.xlu0 %v5193, 110
        %v5207 = vpop.permute.xlu0 %5206
        %5208 = vrot.lane.b32.xlu0 %v5194, 110
        %v5209 = vpop.permute.xlu0 %5208
        %v5210 = vsel %vm986, %v5201, %v5203
        %v5211 = vsel %vm986, %v5203, %v5205
        %v5212 = vsel %vm986, %v5205, %v5207
        %v5213 = vsel %vm986, %v5207, %v5209
        %5218 = vst [vmem:[#allocation3 + $0x100] sm:$0xff] %v5210
        %5219 = vst [vmem:[#allocation3 + $0x108] sm:$0xff] %v5211
        %5220 = vst [vmem:[#allocation3 + $0x110] sm:$0xff] %v5212
        %5221 = vst [vmem:[#allocation3 + $0x118] sm:$0xff] %v5213
        %v5222 = vld [vmem:[#allocation2] sm:$0xff]
        %v5223 = vld [vmem:[#allocation2 + $0x8] sm:$0xff]
        %v5224 = vld [vmem:[#allocation2 + $0x10] sm:$0xff]
        %v5225 = vld [vmem:[#allocation2 + $0x18] sm:$0xff]
        %v5226 = vld [vmem:[#allocation2 + $0x20] sm:$0xff]
        %v5227 = vld [vmem:[%s1004] ss:$8 sm:$0xf]
        %v5229 = vlaneseq
        %v5230 = vshrl.u32 %v5229, 7
        %v5231 = vsub.s32 0, %v5230
        %v5232 = vrot.slane %v5227, %v5231
        %v5233 = vlaneseq
        %v5234 = vshrl.u32 %v5233, 7
        %v5235 = vsub.s32 1, %v5234
        %v5236 = vrot.slane %v5227, %v5235
        %v5237 = vlaneseq
        %v5238 = vshrl.u32 %v5237, 7
        %v5239 = vsub.s32 2, %v5238
        %v5240 = vrot.slane %v5227, %v5239
        %v5241 = vlaneseq
        %v5242 = vshrl.u32 %v5241, 7
        %v5243 = vsub.s32 3, %v5242
        %v5244 = vrot.slane %v5227, %v5243
        %5245 = vrot.lane.b32.xlu0 %v5232, 64
        %v5246 = vpop.permute.xlu0 %5245
        %5247 = vrot.lane.b32.xlu0 %v5236, 64
        %v5248 = vpop.permute.xlu0 %5247
        %5249 = vrot.lane.b32.xlu0 %v5240, 64
        %v5250 = vpop.permute.xlu0 %5249
        %5251 = vrot.lane.b32.xlu0 %v5244, 64
        %v5252 = vpop.permute.xlu0 %5251
        %v5253 = vsel %vm1031, %v5246, %v5248
        %v5254 = vsel %vm1031, %v5248, %v5250
        %v5255 = vsel %vm1031, %v5250, %v5252
        %v5261 = vmul.f32 %v5222, %v5246
        %v5262 = vmul.f32 %v5223, %v5253
        %v5263 = vmul.f32 %v5224, %v5254
        %v5264 = vmul.f32 %v5225, %v5255
        %v5265 = vmul.f32 %v5226, %v5252
        %5271 = vrot.lane.b32.xlu0 %v5261, 64
        %v5272 = vpop.permute.xlu0 %5271
        %5273 = vrot.lane.b32.xlu0 %v5262, 64
        %v5274 = vpop.permute.xlu0 %5273
        %5275 = vrot.lane.b32.xlu0 %v5263, 64
        %v5276 = vpop.permute.xlu0 %5275
        %5277 = vrot.lane.b32.xlu0 %v5264, 64
        %v5278 = vpop.permute.xlu0 %5277
        %5279 = vrot.lane.b32.xlu0 %v5265, 64
        %v5280 = vpop.permute.xlu0 %5279
        %v5281 = vsel %vm1031, %v5272, %v5274
        %v5282 = vsel %vm1031, %v5274, %v5276
        %v5283 = vsel %vm1031, %v5276, %v5278
        %v5284 = vsel %vm1031, %v5278, %v5280
        %5289 = vst [vmem:[#allocation3 + $0x120] sm:$0xff] %v5281
        %5290 = vst [vmem:[#allocation3 + $0x128] sm:$0xff] %v5282
        %5291 = vst [vmem:[#allocation3 + $0x130] sm:$0xff] %v5283
        %5292 = vst [vmem:[#allocation3 + $0x138] sm:$0xff] %v5284
        %v5293 = vld [vmem:[#allocation2] sm:$0xff]
        %v5294 = vld [vmem:[#allocation2 + $0x8] sm:$0xff]
        %v5295 = vld [vmem:[#allocation2 + $0x10] sm:$0xff]
        %v5296 = vld [vmem:[#allocation2 + $0x18] sm:$0xff]
        %v5297 = vld [vmem:[#allocation2 + $0x20] sm:$0xff]
        %v5298 = vld [vmem:[%s1077] ss:$8 sm:$0xf]
        %v5300 = vlaneseq
        %v5301 = vshrl.u32 %v5300, 7
        %v5302 = vsub.s32 0, %v5301
        %v5303 = vrot.slane %v5298, %v5302
        %v5304 = vlaneseq
        %v5305 = vshrl.u32 %v5304, 7
        %v5306 = vsub.s32 1, %v5305
        %v5307 = vrot.slane %v5298, %v5306
        %v5308 = vlaneseq
        %v5309 = vshrl.u32 %v5308, 7
        %v5310 = vsub.s32 2, %v5309
        %v5311 = vrot.slane %v5298, %v5310
        %v5312 = vlaneseq
        %v5313 = vshrl.u32 %v5312, 7
        %v5314 = vsub.s32 3, %v5313
        %v5315 = vrot.slane %v5298, %v5314
        %5316 = vrot.lane.b32.xlu0 %v5303, 65
        %v5317 = vpop.permute.xlu0 %5316
        %5318 = vrot.lane.b32.xlu0 %v5307, 65
        %v5319 = vpop.permute.xlu0 %5318
        %5320 = vrot.lane.b32.xlu0 %v5311, 65
        %v5321 = vpop.permute.xlu0 %5320
        %5322 = vrot.lane.b32.xlu0 %v5315, 65
        %v5323 = vpop.permute.xlu0 %5322
        %v5324 = vsel %vm1104, %v5317, %v5319
        %v5325 = vsel %vm1104, %v5319, %v5321
        %v5326 = vsel %vm1104, %v5321, %v5323
        %v5332 = vmul.f32 %v5293, %v5317
        %v5333 = vmul.f32 %v5294, %v5324
        %v5334 = vmul.f32 %v5295, %v5325
        %v5335 = vmul.f32 %v5296, %v5326
        %v5336 = vmul.f32 %v5297, %v5323
        %5342 = vrot.lane.b32.xlu0 %v5332, 63
        %v5343 = vpop.permute.xlu0 %5342
        %5344 = vrot.lane.b32.xlu0 %v5333, 63
        %v5345 = vpop.permute.xlu0 %5344
        %5346 = vrot.lane.b32.xlu0 %v5334, 63
        %v5347 = vpop.permute.xlu0 %5346
        %5348 = vrot.lane.b32.xlu0 %v5335, 63
        %v5349 = vpop.permute.xlu0 %5348
        %5350 = vrot.lane.b32.xlu0 %v5336, 63
        %v5351 = vpop.permute.xlu0 %5350
        %v5352 = vsel %vm1133, %v5343, %v5345
        %v5353 = vsel %vm1133, %v5345, %v5347
        %v5354 = vsel %vm1133, %v5347, %v5349
        %v5355 = vsel %vm1133, %v5349, %v5351
        %5360 = vst [vmem:[#allocation3 + $0x140] sm:$0xff] %v5352
        %5361 = vst [vmem:[#allocation3 + $0x148] sm:$0xff] %v5353
        %5362 = vst [vmem:[#allocation3 + $0x150] sm:$0xff] %v5354
        %5363 = vst [vmem:[#allocation3 + $0x158] sm:$0xff] %v5355
        %v5364 = vld [vmem:[#allocation2] sm:$0xff]
        %v5365 = vld [vmem:[#allocation2 + $0x8] sm:$0xff]
        %v5366 = vld [vmem:[#allocation2 + $0x10] sm:$0xff]
        %v5367 = vld [vmem:[#allocation2 + $0x18] sm:$0xff]
        %v5368 = vld [vmem:[#allocation2 + $0x20] sm:$0xff]
        %v5369 = vld [vmem:[%s1151] ss:$8 sm:$0xf]
        %v5371 = vlaneseq
        %v5372 = vshrl.u32 %v5371, 7
        %v5373 = vsub.s32 0, %v5372
        %v5374 = vrot.slane %v5369, %v5373
        %v5375 = vlaneseq
        %v5376 = vshrl.u32 %v5375, 7
        %v5377 = vsub.s32 1, %v5376
        %v5378 = vrot.slane %v5369, %v5377
        %v5379 = vlaneseq
        %v5380 = vshrl.u32 %v5379, 7
        %v5381 = vsub.s32 2, %v5380
        %v5382 = vrot.slane %v5369, %v5381
        %v5383 = vlaneseq
        %v5384 = vshrl.u32 %v5383, 7
        %v5385 = vsub.s32 3, %v5384
        %v5386 = vrot.slane %v5369, %v5385
        %5387 = vrot.lane.b32.xlu0 %v5374, 66
        %v5388 = vpop.permute.xlu0 %5387
        %5389 = vrot.lane.b32.xlu0 %v5378, 66
        %v5390 = vpop.permute.xlu0 %5389
        %5391 = vrot.lane.b32.xlu0 %v5382, 66
        %v5392 = vpop.permute.xlu0 %5391
        %5393 = vrot.lane.b32.xlu0 %v5386, 66
        %v5394 = vpop.permute.xlu0 %5393
        %v5395 = vsel %vm1178, %v5388, %v5390
        %v5396 = vsel %vm1178, %v5390, %v5392
        %v5397 = vsel %vm1178, %v5392, %v5394
        %v5403 = vmul.f32 %v5364, %v5388
        %v5404 = vmul.f32 %v5365, %v5395
        %v5405 = vmul.f32 %v5366, %v5396
        %v5406 = vmul.f32 %v5367, %v5397
        %v5407 = vmul.f32 %v5368, %v5394
        %5413 = vrot.lane.b32.xlu0 %v5403, 62
        %v5414 = vpop.permute.xlu0 %5413
        %5415 = vrot.lane.b32.xlu0 %v5404, 62
        %v5416 = vpop.permute.xlu0 %5415
        %5417 = vrot.lane.b32.xlu0 %v5405, 62
        %v5418 = vpop.permute.xlu0 %5417
        %5419 = vrot.lane.b32.xlu0 %v5406, 62
        %v5420 = vpop.permute.xlu0 %5419
        %5421 = vrot.lane.b32.xlu0 %v5407, 62
        %v5422 = vpop.permute.xlu0 %5421
        %v5423 = vsel %vm1207, %v5414, %v5416
        %v5424 = vsel %vm1207, %v5416, %v5418
        %v5425 = vsel %vm1207, %v5418, %v5420
        %v5426 = vsel %vm1207, %v5420, %v5422
        %5431 = vst [vmem:[#allocation3 + $0x160] sm:$0xff] %v5423
        %5432 = vst [vmem:[#allocation3 + $0x168] sm:$0xff] %v5424
        %5433 = vst [vmem:[#allocation3 + $0x170] sm:$0xff] %v5425
        %5434 = vst [vmem:[#allocation3 + $0x178] sm:$0xff] %v5426
        %v5435 = vld [vmem:[#allocation2] sm:$0xff]
        %v5436 = vld [vmem:[#allocation2 + $0x8] sm:$0xff]
        %v5437 = vld [vmem:[#allocation2 + $0x10] sm:$0xff]
        %v5438 = vld [vmem:[#allocation2 + $0x18] sm:$0xff]
        %v5439 = vld [vmem:[#allocation2 + $0x20] sm:$0xff]
        %v5440 = vld [vmem:[%s1225] ss:$8 sm:$0xf]
        %v5442 = vlaneseq
        %v5443 = vshrl.u32 %v5442, 7
        %v5444 = vsub.s32 0, %v5443
        %v5445 = vrot.slane %v5440, %v5444
        %v5446 = vlaneseq
        %v5447 = vshrl.u32 %v5446, 7
        %v5448 = vsub.s32 1, %v5447
        %v5449 = vrot.slane %v5440, %v5448
        %v5450 = vlaneseq
        %v5451 = vshrl.u32 %v5450, 7
        %v5452 = vsub.s32 2, %v5451
        %v5453 = vrot.slane %v5440, %v5452
        %v5454 = vlaneseq
        %v5455 = vshrl.u32 %v5454, 7
        %v5456 = vsub.s32 3, %v5455
        %v5457 = vrot.slane %v5440, %v5456
        %5458 = vrot.lane.b32.xlu0 %v5445, 72
        %v5459 = vpop.permute.xlu0 %5458
        %5460 = vrot.lane.b32.xlu0 %v5449, 72
        %v5461 = vpop.permute.xlu0 %5460
        %5462 = vrot.lane.b32.xlu0 %v5453, 72
        %v5463 = vpop.permute.xlu0 %5462
        %5464 = vrot.lane.b32.xlu0 %v5457, 72
        %v5465 = vpop.permute.xlu0 %5464
        %v5466 = vsel %vm1252, %v5459, %v5461
        %v5467 = vsel %vm1252, %v5461, %v5463
        %v5468 = vsel %vm1252, %v5463, %v5465
        %v5474 = vmul.f32 %v5435, %v5459
        %v5475 = vmul.f32 %v5436, %v5466
        %v5476 = vmul.f32 %v5437, %v5467
        %v5477 = vmul.f32 %v5438, %v5468
        %v5478 = vmul.f32 %v5439, %v5465
        %5484 = vrot.lane.b32.xlu0 %v5474, 56
        %v5485 = vpop.permute.xlu0 %5484
        %5486 = vrot.lane.b32.xlu0 %v5475, 56
        %v5487 = vpop.permute.xlu0 %5486
        %5488 = vrot.lane.b32.xlu0 %v5476, 56
        %v5489 = vpop.permute.xlu0 %5488
        %5490 = vrot.lane.b32.xlu0 %v5477, 56
        %v5491 = vpop.permute.xlu0 %5490
        %5492 = vrot.lane.b32.xlu0 %v5478, 56
        %v5493 = vpop.permute.xlu0 %5492
        %v5494 = vsel %vm1281, %v5485, %v5487
        %v5495 = vsel %vm1281, %v5487, %v5489
        %v5496 = vsel %vm1281, %v5489, %v5491
        %v5497 = vsel %vm1281, %v5491, %v5493
        %5502 = vst [vmem:[#allocation3 + $0x180] sm:$0xff] %v5494
        %5503 = vst [vmem:[#allocation3 + $0x188] sm:$0xff] %v5495
        %5504 = vst [vmem:[#allocation3 + $0x190] sm:$0xff] %v5496
        %5505 = vst [vmem:[#allocation3 + $0x198] sm:$0xff] %v5497
        %v5506 = vld [vmem:[#allocation2] sm:$0xff]
        %v5507 = vld [vmem:[#allocation2 + $0x8] sm:$0xff]
        %v5508 = vld [vmem:[#allocation2 + $0x10] sm:$0xff]
        %v5509 = vld [vmem:[#allocation2 + $0x18] sm:$0xff]
        %v5510 = vld [vmem:[#allocation2 + $0x20] sm:$0xff]
        %5516 = vrot.lane.b32.xlu0 %v5506, 55
        %v5517 = vpop.permute.xlu0 %5516
        %5518 = vrot.lane.b32.xlu0 %v5507, 55
        %v5519 = vpop.permute.xlu0 %5518
        %5520 = vrot.lane.b32.xlu0 %v5508, 55
        %v5521 = vpop.permute.xlu0 %5520
        %5522 = vrot.lane.b32.xlu0 %v5509, 55
        %v5523 = vpop.permute.xlu0 %5522
        %5524 = vrot.lane.b32.xlu0 %v5510, 55
        %v5525 = vpop.permute.xlu0 %5524
        %v5526 = vsel %vm1314, %v5517, %v5519
        %v5527 = vsel %vm1314, %v5519, %v5521
        %v5528 = vsel %vm1314, %v5521, %v5523
        %v5529 = vsel %vm1314, %v5523, %v5525
        %5534 = vst [vmem:[#allocation3 + $0x1a0] sm:$0xff] %v5526
        %5535 = vst [vmem:[#allocation3 + $0x1a8] sm:$0xff] %v5527
        %5536 = vst [vmem:[#allocation3 + $0x1b0] sm:$0xff] %v5528
        %5537 = vst [vmem:[#allocation3 + $0x1b8] sm:$0xff] %v5529
        %v5538 = vld [vmem:[#allocation2] sm:$0xff]
        %v5539 = vld [vmem:[#allocation2 + $0x8] sm:$0xff]
        %v5540 = vld [vmem:[#allocation2 + $0x10] sm:$0xff]
        %v5541 = vld [vmem:[#allocation2 + $0x18] sm:$0xff]
        %v5542 = vld [vmem:[#allocation2 + $0x20] sm:$0xff]
        %v5543 = vld [vmem:[%s1332] ss:$8 sm:$0xf]
        %v5545 = vlaneseq
        %v5546 = vshrl.u32 %v5545, 7
        %v5547 = vsub.s32 0, %v5546
        %v5548 = vrot.slane %v5543, %v5547
        %v5549 = vlaneseq
        %v5550 = vshrl.u32 %v5549, 7
        %v5551 = vsub.s32 1, %v5550
        %v5552 = vrot.slane %v5543, %v5551
        %v5553 = vlaneseq
        %v5554 = vshrl.u32 %v5553, 7
        %v5555 = vsub.s32 2, %v5554
        %v5556 = vrot.slane %v5543, %v5555
        %v5557 = vlaneseq
        %v5558 = vshrl.u32 %v5557, 7
        %v5559 = vsub.s32 3, %v5558
        %v5560 = vrot.slane %v5543, %v5559
        %5561 = vrot.lane.b32.xlu0 %v5548, 74
        %v5562 = vpop.permute.xlu0 %5561
        %5563 = vrot.lane.b32.xlu0 %v5552, 74
        %v5564 = vpop.permute.xlu0 %5563
        %5565 = vrot.lane.b32.xlu0 %v5556, 74
        %v5566 = vpop.permute.xlu0 %5565
        %5567 = vrot.lane.b32.xlu0 %v5560, 74
        %v5568 = vpop.permute.xlu0 %5567
        %v5569 = vsel %vm1359, %v5562, %v5564
        %v5570 = vsel %vm1359, %v5564, %v5566
        %v5571 = vsel %vm1359, %v5566, %v5568
        %v5577 = vmul.f32 %v5538, %v5562
        %v5578 = vmul.f32 %v5539, %v5569
        %v5579 = vmul.f32 %v5540, %v5570
        %v5580 = vmul.f32 %v5541, %v5571
        %v5581 = vmul.f32 %v5542, %v5568
        %5587 = vrot.lane.b32.xlu0 %v5577, 54
        %v5588 = vpop.permute.xlu0 %5587
        %5589 = vrot.lane.b32.xlu0 %v5578, 54
        %v5590 = vpop.permute.xlu0 %5589
        %5591 = vrot.lane.b32.xlu0 %v5579, 54
        %v5592 = vpop.permute.xlu0 %5591
        %5593 = vrot.lane.b32.xlu0 %v5580, 54
        %v5594 = vpop.permute.xlu0 %5593
        %5595 = vrot.lane.b32.xlu0 %v5581, 54
        %v5596 = vpop.permute.xlu0 %5595
        %v5597 = vsel %vm1388, %v5588, %v5590
        %v5598 = vsel %vm1388, %v5590, %v5592
        %v5599 = vsel %vm1388, %v5592, %v5594
        %v5600 = vsel %vm1388, %v5594, %v5596
        %5605 = vst [vmem:[#allocation3 + $0x1c0] sm:$0xff] %v5597
        %5606 = vst [vmem:[#allocation3 + $0x1c8] sm:$0xff] %v5598
        %5607 = vst [vmem:[#allocation3 + $0x1d0] sm:$0xff] %v5599
        %5608 = vst [vmem:[#allocation3 + $0x1d8] sm:$0xff] %v5600
        %v5609 = vld [vmem:[#allocation2] sm:$0xff]
        %v5610 = vld [vmem:[#allocation2 + $0x8] sm:$0xff]
        %v5611 = vld [vmem:[#allocation2 + $0x10] sm:$0xff]
        %v5612 = vld [vmem:[#allocation2 + $0x18] sm:$0xff]
        %v5613 = vld [vmem:[#allocation2 + $0x20] sm:$0xff]
        %v5614 = vld [vmem:[%s1406] ss:$8 sm:$0xf]
        %v5616 = vlaneseq
        %v5617 = vshrl.u32 %v5616, 7
        %v5618 = vsub.s32 0, %v5617
        %v5619 = vrot.slane %v5614, %v5618
        %v5620 = vlaneseq
        %v5621 = vshrl.u32 %v5620, 7
        %v5622 = vsub.s32 1, %v5621
        %v5623 = vrot.slane %v5614, %v5622
        %v5624 = vlaneseq
        %v5625 = vshrl.u32 %v5624, 7
        %v5626 = vsub.s32 2, %v5625
        %v5627 = vrot.slane %v5614, %v5626
        %v5628 = vlaneseq
        %v5629 = vshrl.u32 %v5628, 7
        %v5630 = vsub.s32 3, %v5629
        %v5631 = vrot.slane %v5614, %v5630
        %5632 = vrot.lane.b32.xlu0 %v5619, 80
        %v5633 = vpop.permute.xlu0 %5632
        %5634 = vrot.lane.b32.xlu0 %v5623, 80
        %v5635 = vpop.permute.xlu0 %5634
        %5636 = vrot.lane.b32.xlu0 %v5627, 80
        %v5637 = vpop.permute.xlu0 %5636
        %5638 = vrot.lane.b32.xlu0 %v5631, 80
        %v5639 = vpop.permute.xlu0 %5638
        %v5640 = vsel %vm1433, %v5633, %v5635
        %v5641 = vsel %vm1433, %v5635, %v5637
        %v5642 = vsel %vm1433, %v5637, %v5639
        %v5648 = vmul.f32 %v5609, %v5633
        %v5649 = vmul.f32 %v5610, %v5640
        %v5650 = vmul.f32 %v5611, %v5641
        %v5651 = vmul.f32 %v5612, %v5642
        %v5652 = vmul.f32 %v5613, %v5639
        %5658 = vrot.lane.b32.xlu0 %v5648, 48
        %v5659 = vpop.permute.xlu0 %5658
        %5660 = vrot.lane.b32.xlu0 %v5649, 48
        %v5661 = vpop.permute.xlu0 %5660
        %5662 = vrot.lane.b32.xlu0 %v5650, 48
        %v5663 = vpop.permute.xlu0 %5662
        %5664 = vrot.lane.b32.xlu0 %v5651, 48
        %v5665 = vpop.permute.xlu0 %5664
        %5666 = vrot.lane.b32.xlu0 %v5652, 48
        %v5667 = vpop.permute.xlu0 %5666
        %v5668 = vsel %vm1462, %v5659, %v5661
        %v5669 = vsel %vm1462, %v5661, %v5663
        %v5670 = vsel %vm1462, %v5663, %v5665
        %v5671 = vsel %vm1462, %v5665, %v5667
        %5676 = vst [vmem:[#allocation3 + $0x1e0] sm:$0xff] %v5668
        %5677 = vst [vmem:[#allocation3 + $0x1e8] sm:$0xff] %v5669
        %5678 = vst [vmem:[#allocation3 + $0x1f0] sm:$0xff] %v5670
        %5679 = vst [vmem:[#allocation3 + $0x1f8] sm:$0xff] %v5671
        %v5680 = vld [vmem:[#allocation2] sm:$0xff]
        %v5681 = vld [vmem:[#allocation2 + $0x8] sm:$0xff]
        %v5682 = vld [vmem:[#allocation2 + $0x10] sm:$0xff]
        %v5683 = vld [vmem:[#allocation2 + $0x18] sm:$0xff]
        %v5684 = vld [vmem:[#allocation2 + $0x20] sm:$0xff]
        %v5685 = vld [vmem:[%s1480] ss:$8 sm:$0xf]
        %v5687 = vlaneseq
        %v5688 = vshrl.u32 %v5687, 7
        %v5689 = vsub.s32 0, %v5688
        %v5690 = vrot.slane %v5685, %v5689
        %v5691 = vlaneseq
        %v5692 = vshrl.u32 %v5691, 7
        %v5693 = vsub.s32 1, %v5692
        %v5694 = vrot.slane %v5685, %v5693
        %v5695 = vlaneseq
        %v5696 = vshrl.u32 %v5695, 7
        %v5697 = vsub.s32 2, %v5696
        %v5698 = vrot.slane %v5685, %v5697
        %v5699 = vlaneseq
        %v5700 = vshrl.u32 %v5699, 7
        %v5701 = vsub.s32 3, %v5700
        %v5702 = vrot.slane %v5685, %v5701
        %5703 = vrot.lane.b32.xlu0 %v5690, 81
        %v5704 = vpop.permute.xlu0 %5703
        %5705 = vrot.lane.b32.xlu0 %v5694, 81
        %v5706 = vpop.permute.xlu0 %5705
        %5707 = vrot.lane.b32.xlu0 %v5698, 81
        %v5708 = vpop.permute.xlu0 %5707
        %5709 = vrot.lane.b32.xlu0 %v5702, 81
        %v5710 = vpop.permute.xlu0 %5709
        %v5711 = vsel %vm1507, %v5704, %v5706
        %v5712 = vsel %vm1507, %v5706, %v5708
        %v5713 = vsel %vm1507, %v5708, %v5710
        %v5719 = vmul.f32 %v5680, %v5704
        %v5720 = vmul.f32 %v5681, %v5711
        %v5721 = vmul.f32 %v5682, %v5712
        %v5722 = vmul.f32 %v5683, %v5713
        %v5723 = vmul.f32 %v5684, %v5710
        %5729 = vrot.lane.b32.xlu0 %v5719, 47
        %v5730 = vpop.permute.xlu0 %5729
        %5731 = vrot.lane.b32.xlu0 %v5720, 47
        %v5732 = vpop.permute.xlu0 %5731
        %5733 = vrot.lane.b32.xlu0 %v5721, 47
        %v5734 = vpop.permute.xlu0 %5733
        %5735 = vrot.lane.b32.xlu0 %v5722, 47
        %v5736 = vpop.permute.xlu0 %5735
        %5737 = vrot.lane.b32.xlu0 %v5723, 47
        %v5738 = vpop.permute.xlu0 %5737
        %v5739 = vsel %vm1536, %v5730, %v5732
        %v5740 = vsel %vm1536, %v5732, %v5734
        %v5741 = vsel %vm1536, %v5734, %v5736
        %v5742 = vsel %vm1536, %v5736, %v5738
        %5747 = vst [vmem:[#allocation3 + $0x200] sm:$0xff] %v5739
        %5748 = vst [vmem:[#allocation3 + $0x208] sm:$0xff] %v5740
        %5749 = vst [vmem:[#allocation3 + $0x210] sm:$0xff] %v5741
        %5750 = vst [vmem:[#allocation3 + $0x218] sm:$0xff] %v5742
        %v5751 = vld [vmem:[#allocation2] sm:$0xff]
        %v5752 = vld [vmem:[#allocation2 + $0x8] sm:$0xff]
        %v5753 = vld [vmem:[#allocation2 + $0x10] sm:$0xff]
        %v5754 = vld [vmem:[#allocation2 + $0x18] sm:$0xff]
        %v5755 = vld [vmem:[#allocation2 + $0x20] sm:$0xff]
        %v5756 = vld [vmem:[%s1554] ss:$8 sm:$0xf]
        %v5758 = vlaneseq
        %v5759 = vshrl.u32 %v5758, 7
        %v5760 = vsub.s32 0, %v5759
        %v5761 = vrot.slane %v5756, %v5760
        %v5762 = vlaneseq
        %v5763 = vshrl.u32 %v5762, 7
        %v5764 = vsub.s32 1, %v5763
        %v5765 = vrot.slane %v5756, %v5764
        %v5766 = vlaneseq
        %v5767 = vshrl.u32 %v5766, 7
        %v5768 = vsub.s32 2, %v5767
        %v5769 = vrot.slane %v5756, %v5768
        %v5770 = vlaneseq
        %v5771 = vshrl.u32 %v5770, 7
        %v5772 = vsub.s32 3, %v5771
        %v5773 = vrot.slane %v5756, %v5772
        %5774 = vrot.lane.b32.xlu0 %v5761, 82
        %v5775 = vpop.permute.xlu0 %5774
        %5776 = vrot.lane.b32.xlu0 %v5765, 82
        %v5777 = vpop.permute.xlu0 %5776
        %5778 = vrot.lane.b32.xlu0 %v5769, 82
        %v5779 = vpop.permute.xlu0 %5778
        %5780 = vrot.lane.b32.xlu0 %v5773, 82
        %v5781 = vpop.permute.xlu0 %5780
        %v5782 = vsel %vm1581, %v5775, %v5777
        %v5783 = vsel %vm1581, %v5777, %v5779
        %v5784 = vsel %vm1581, %v5779, %v5781
        %v5790 = vmul.f32 %v5751, %v5775
        %v5791 = vmul.f32 %v5752, %v5782
        %v5792 = vmul.f32 %v5753, %v5783
        %v5793 = vmul.f32 %v5754, %v5784
        %v5794 = vmul.f32 %v5755, %v5781
        %5800 = vrot.lane.b32.xlu0 %v5790, 46
        %v5801 = vpop.permute.xlu0 %5800
        %5802 = vrot.lane.b32.xlu0 %v5791, 46
        %v5803 = vpop.permute.xlu0 %5802
        %5804 = vrot.lane.b32.xlu0 %v5792, 46
        %v5805 = vpop.permute.xlu0 %5804
        %5806 = vrot.lane.b32.xlu0 %v5793, 46
        %v5807 = vpop.permute.xlu0 %5806
        %5808 = vrot.lane.b32.xlu0 %v5794, 46
        %v5809 = vpop.permute.xlu0 %5808
        %v5810 = vsel %vm1610, %v5801, %v5803
        %v5811 = vsel %vm1610, %v5803, %v5805
        %v5812 = vsel %vm1610, %v5805, %v5807
        %v5813 = vsel %vm1610, %v5807, %v5809
        %5818 = vst [vmem:[#allocation3 + $0x220] sm:$0xff] %v5810
        %5819 = vst [vmem:[#allocation3 + $0x228] sm:$0xff] %v5811
        %5820 = vst [vmem:[#allocation3 + $0x230] sm:$0xff] %v5812
        %5821 = vst [vmem:[#allocation3 + $0x238] sm:$0xff] %v5813
        %v5822 = vld [vmem:[#allocation2 + $0x8] sm:$0xff]
        %v5823 = vld [vmem:[#allocation2 + $0x10] sm:$0xff]
        %v5824 = vld [vmem:[#allocation2 + $0x18] sm:$0xff]
        %v5825 = vld [vmem:[#allocation2 + $0x20] sm:$0xff]
        %v5826 = vld [vmem:[%s1627] ss:$8 sm:$0xf]
        %v5828 = vlaneseq
        %v5829 = vshrl.u32 %v5828, 7
        %v5830 = vsub.s32 0, %v5829
        %v5831 = vrot.slane %v5826, %v5830
        %v5832 = vlaneseq
        %v5833 = vshrl.u32 %v5832, 7
        %v5834 = vsub.s32 1, %v5833
        %v5835 = vrot.slane %v5826, %v5834
        %v5836 = vlaneseq
        %v5837 = vshrl.u32 %v5836, 7
        %v5838 = vsub.s32 2, %v5837
        %v5839 = vrot.slane %v5826, %v5838
        %v5840 = vlaneseq
        %v5841 = vshrl.u32 %v5840, 7
        %v5842 = vsub.s32 3, %v5841
        %v5843 = vrot.slane %v5826, %v5842
        %v5848 = vmul.f32 %v5822, %v5831
        %v5849 = vmul.f32 %v5823, %v5835
        %v5850 = vmul.f32 %v5824, %v5839
        %v5851 = vmul.f32 %v5825, %v5843
        %5852 = vst [vmem:[#allocation3 + $0x240] sm:$0xff] %v5848
        %5853 = vst [vmem:[#allocation3 + $0x248] sm:$0xff] %v5849
        %5854 = vst [vmem:[#allocation3 + $0x250] sm:$0xff] %v5850
        %5855 = vst [vmem:[#allocation3 + $0x258] sm:$0xff] %v5851
        %v5856 = vld [vmem:[#allocation2 + $0x8] sm:$0xff]
        %v5857 = vld [vmem:[#allocation2 + $0x10] sm:$0xff]
        %v5858 = vld [vmem:[#allocation2 + $0x18] sm:$0xff]
        %v5859 = vld [vmem:[#allocation2 + $0x20] sm:$0xff]
        %v5860 = vld [vmem:[#allocation2 + $0x28] sm:$0xff]
        %v5861 = vld [vmem:[%s1663] ss:$8 sm:$0xf]
        %v5863 = vlaneseq
        %v5864 = vshrl.u32 %v5863, 7
        %v5865 = vsub.s32 0, %v5864
        %v5866 = vrot.slane %v5861, %v5865
        %v5867 = vlaneseq
        %v5868 = vshrl.u32 %v5867, 7
        %v5869 = vsub.s32 1, %v5868
        %v5870 = vrot.slane %v5861, %v5869
        %v5871 = vlaneseq
        %v5872 = vshrl.u32 %v5871, 7
        %v5873 = vsub.s32 2, %v5872
        %v5874 = vrot.slane %v5861, %v5873
        %v5875 = vlaneseq
        %v5876 = vshrl.u32 %v5875, 7
        %v5877 = vsub.s32 3, %v5876
        %v5878 = vrot.slane %v5861, %v5877
        %5879 = vrot.lane.b32.xlu0 %v5866, 1
        %v5880 = vpop.permute.xlu0 %5879
        %5881 = vrot.lane.b32.xlu0 %v5870, 1
        %v5882 = vpop.permute.xlu0 %5881
        %5883 = vrot.lane.b32.xlu0 %v5874, 1
        %v5884 = vpop.permute.xlu0 %5883
        %5885 = vrot.lane.b32.xlu0 %v5878, 1
        %v5886 = vpop.permute.xlu0 %5885
        %v5887 = vsel %vm440, %v5880, %v5882
        %v5888 = vsel %vm440, %v5882, %v5884
        %v5889 = vsel %vm440, %v5884, %v5886
        %v5895 = vmul.f32 %v5856, %v5880
        %v5896 = vmul.f32 %v5857, %v5887
        %v5897 = vmul.f32 %v5858, %v5888
        %v5898 = vmul.f32 %v5859, %v5889
        %v5899 = vmul.f32 %v5860, %v5886
        %5905 = vrot.lane.b32.xlu0 %v5895, 127
        %v5906 = vpop.permute.xlu0 %5905
        %5907 = vrot.lane.b32.xlu0 %v5896, 127
        %v5908 = vpop.permute.xlu0 %5907
        %5909 = vrot.lane.b32.xlu0 %v5897, 127
        %v5910 = vpop.permute.xlu0 %5909
        %5911 = vrot.lane.b32.xlu0 %v5898, 127
        %v5912 = vpop.permute.xlu0 %5911
        %5913 = vrot.lane.b32.xlu0 %v5899, 127
        %v5914 = vpop.permute.xlu0 %5913
        %v5915 = vsel %vm469, %v5906, %v5908
        %v5916 = vsel %vm469, %v5908, %v5910
        %v5917 = vsel %vm469, %v5910, %v5912
        %v5918 = vsel %vm469, %v5912, %v5914
        %5923 = vst [vmem:[#allocation3 + $0x260] sm:$0xff] %v5915
        %5924 = vst [vmem:[#allocation3 + $0x268] sm:$0xff] %v5916
        %5925 = vst [vmem:[#allocation3 + $0x270] sm:$0xff] %v5917
        %5926 = vst [vmem:[#allocation3 + $0x278] sm:$0xff] %v5918
        %v5927 = vld [vmem:[#allocation2 + $0x8] sm:$0xff]
        %v5928 = vld [vmem:[#allocation2 + $0x10] sm:$0xff]
        %v5929 = vld [vmem:[#allocation2 + $0x18] sm:$0xff]
        %v5930 = vld [vmem:[#allocation2 + $0x20] sm:$0xff]
        %v5931 = vld [vmem:[#allocation2 + $0x28] sm:$0xff]
        %v5932 = vld [vmem:[%s1735] ss:$8 sm:$0xf]
        %v5934 = vlaneseq
        %v5935 = vshrl.u32 %v5934, 7
        %v5936 = vsub.s32 0, %v5935
        %v5937 = vrot.slane %v5932, %v5936
        %v5938 = vlaneseq
        %v5939 = vshrl.u32 %v5938, 7
        %v5940 = vsub.s32 1, %v5939
        %v5941 = vrot.slane %v5932, %v5940
        %v5942 = vlaneseq
        %v5943 = vshrl.u32 %v5942, 7
        %v5944 = vsub.s32 2, %v5943
        %v5945 = vrot.slane %v5932, %v5944
        %v5946 = vlaneseq
        %v5947 = vshrl.u32 %v5946, 7
        %v5948 = vsub.s32 3, %v5947
        %v5949 = vrot.slane %v5932, %v5948
        %5950 = vrot.lane.b32.xlu0 %v5937, 2
        %v5951 = vpop.permute.xlu0 %5950
        %5952 = vrot.lane.b32.xlu0 %v5941, 2
        %v5953 = vpop.permute.xlu0 %5952
        %5954 = vrot.lane.b32.xlu0 %v5945, 2
        %v5955 = vpop.permute.xlu0 %5954
        %5956 = vrot.lane.b32.xlu0 %v5949, 2
        %v5957 = vpop.permute.xlu0 %5956
        %v5958 = vsel %vm514, %v5951, %v5953
        %v5959 = vsel %vm514, %v5953, %v5955
        %v5960 = vsel %vm514, %v5955, %v5957
        %v5966 = vmul.f32 %v5927, %v5951
        %v5967 = vmul.f32 %v5928, %v5958
        %v5968 = vmul.f32 %v5929, %v5959
        %v5969 = vmul.f32 %v5930, %v5960
        %v5970 = vmul.f32 %v5931, %v5957
        %5976 = vrot.lane.b32.xlu0 %v5966, 126
        %v5977 = vpop.permute.xlu0 %5976
        %5978 = vrot.lane.b32.xlu0 %v5967, 126
        %v5979 = vpop.permute.xlu0 %5978
        %5980 = vrot.lane.b32.xlu0 %v5968, 126
        %v5981 = vpop.permute.xlu0 %5980
        %5982 = vrot.lane.b32.xlu0 %v5969, 126
        %v5983 = vpop.permute.xlu0 %5982
        %5984 = vrot.lane.b32.xlu0 %v5970, 126
        %v5985 = vpop.permute.xlu0 %5984
        %v5986 = vsel %vm543, %v5977, %v5979
        %v5987 = vsel %vm543, %v5979, %v5981
        %v5988 = vsel %vm543, %v5981, %v5983
        %v5989 = vsel %vm543, %v5983, %v5985
        %5994 = vst [vmem:[#allocation3 + $0x280] sm:$0xff] %v5986
        %5995 = vst [vmem:[#allocation3 + $0x288] sm:$0xff] %v5987
        %5996 = vst [vmem:[#allocation3 + $0x290] sm:$0xff] %v5988
        %5997 = vst [vmem:[#allocation3 + $0x298] sm:$0xff] %v5989
        %v5998 = vld [vmem:[#allocation2 + $0x8] sm:$0xff]
        %v5999 = vld [vmem:[#allocation2 + $0x10] sm:$0xff]
        %v6000 = vld [vmem:[#allocation2 + $0x18] sm:$0xff]
        %v6001 = vld [vmem:[#allocation2 + $0x20] sm:$0xff]
        %v6002 = vld [vmem:[#allocation2 + $0x28] sm:$0xff]
        %v6003 = vld [vmem:[%s1807] ss:$8 sm:$0xf]
        %v6005 = vlaneseq
        %v6006 = vshrl.u32 %v6005, 7
        %v6007 = vsub.s32 0, %v6006
        %v6008 = vrot.slane %v6003, %v6007
        %v6009 = vlaneseq
        %v6010 = vshrl.u32 %v6009, 7
        %v6011 = vsub.s32 1, %v6010
        %v6012 = vrot.slane %v6003, %v6011
        %v6013 = vlaneseq
        %v6014 = vshrl.u32 %v6013, 7
        %v6015 = vsub.s32 2, %v6014
        %v6016 = vrot.slane %v6003, %v6015
        %v6017 = vlaneseq
        %v6018 = vshrl.u32 %v6017, 7
        %v6019 = vsub.s32 3, %v6018
        %v6020 = vrot.slane %v6003, %v6019
        %6021 = vrot.lane.b32.xlu0 %v6008, 8
        %v6022 = vpop.permute.xlu0 %6021
        %6023 = vrot.lane.b32.xlu0 %v6012, 8
        %v6024 = vpop.permute.xlu0 %6023
        %6025 = vrot.lane.b32.xlu0 %v6016, 8
        %v6026 = vpop.permute.xlu0 %6025
        %6027 = vrot.lane.b32.xlu0 %v6020, 8
        %v6028 = vpop.permute.xlu0 %6027
        %v6029 = vsel %vm588, %v6022, %v6024
        %v6030 = vsel %vm588, %v6024, %v6026
        %v6031 = vsel %vm588, %v6026, %v6028
        %v6037 = vmul.f32 %v5998, %v6022
        %v6038 = vmul.f32 %v5999, %v6029
        %v6039 = vmul.f32 %v6000, %v6030
        %v6040 = vmul.f32 %v6001, %v6031
        %v6041 = vmul.f32 %v6002, %v6028
        %6047 = vrot.lane.b32.xlu0 %v6037, 120
        %v6048 = vpop.permute.xlu0 %6047
        %6049 = vrot.lane.b32.xlu0 %v6038, 120
        %v6050 = vpop.permute.xlu0 %6049
        %6051 = vrot.lane.b32.xlu0 %v6039, 120
        %v6052 = vpop.permute.xlu0 %6051
        %6053 = vrot.lane.b32.xlu0 %v6040, 120
        %v6054 = vpop.permute.xlu0 %6053
        %6055 = vrot.lane.b32.xlu0 %v6041, 120
        %v6056 = vpop.permute.xlu0 %6055
        %v6057 = vsel %vm617, %v6048, %v6050
        %v6058 = vsel %vm617, %v6050, %v6052
        %v6059 = vsel %vm617, %v6052, %v6054
        %v6060 = vsel %vm617, %v6054, %v6056
        %6065 = vst [vmem:[#allocation3 + $0x2a0] sm:$0xff] %v6057
        %6066 = vst [vmem:[#allocation3 + $0x2a8] sm:$0xff] %v6058
        %6067 = vst [vmem:[#allocation3 + $0x2b0] sm:$0xff] %v6059
        %6068 = vst [vmem:[#allocation3 + $0x2b8] sm:$0xff] %v6060
        %v6069 = vld [vmem:[#allocation2 + $0x8] sm:$0xff]
        %v6070 = vld [vmem:[#allocation2 + $0x10] sm:$0xff]
        %v6071 = vld [vmem:[#allocation2 + $0x18] sm:$0xff]
        %v6072 = vld [vmem:[#allocation2 + $0x20] sm:$0xff]
        %v6073 = vld [vmem:[#allocation2 + $0x28] sm:$0xff]
        %v6074 = vld [vmem:[%s1879] ss:$8 sm:$0xf]
        %v6076 = vlaneseq
        %v6077 = vshrl.u32 %v6076, 7
        %v6078 = vsub.s32 0, %v6077
        %v6079 = vrot.slane %v6074, %v6078
        %v6080 = vlaneseq
        %v6081 = vshrl.u32 %v6080, 7
        %v6082 = vsub.s32 1, %v6081
        %v6083 = vrot.slane %v6074, %v6082
        %v6084 = vlaneseq
        %v6085 = vshrl.u32 %v6084, 7
        %v6086 = vsub.s32 2, %v6085
        %v6087 = vrot.slane %v6074, %v6086
        %v6088 = vlaneseq
        %v6089 = vshrl.u32 %v6088, 7
        %v6090 = vsub.s32 3, %v6089
        %v6091 = vrot.slane %v6074, %v6090
        %6092 = vrot.lane.b32.xlu0 %v6079, 9
        %v6093 = vpop.permute.xlu0 %6092
        %6094 = vrot.lane.b32.xlu0 %v6083, 9
        %v6095 = vpop.permute.xlu0 %6094
        %6096 = vrot.lane.b32.xlu0 %v6087, 9
        %v6097 = vpop.permute.xlu0 %6096
        %6098 = vrot.lane.b32.xlu0 %v6091, 9
        %v6099 = vpop.permute.xlu0 %6098
        %v6100 = vsel %vm662, %v6093, %v6095
        %v6101 = vsel %vm662, %v6095, %v6097
        %v6102 = vsel %vm662, %v6097, %v6099
        %v6108 = vmul.f32 %v6069, %v6093
        %v6109 = vmul.f32 %v6070, %v6100
        %v6110 = vmul.f32 %v6071, %v6101
        %v6111 = vmul.f32 %v6072, %v6102
        %v6112 = vmul.f32 %v6073, %v6099
        %6118 = vrot.lane.b32.xlu0 %v6108, 119
        %v6119 = vpop.permute.xlu0 %6118
        %6120 = vrot.lane.b32.xlu0 %v6109, 119
        %v6121 = vpop.permute.xlu0 %6120
        %6122 = vrot.lane.b32.xlu0 %v6110, 119
        %v6123 = vpop.permute.xlu0 %6122
        %6124 = vrot.lane.b32.xlu0 %v6111, 119
        %v6125 = vpop.permute.xlu0 %6124
        %6126 = vrot.lane.b32.xlu0 %v6112, 119
        %v6127 = vpop.permute.xlu0 %6126
        %v6128 = vsel %vm691, %v6119, %v6121
        %v6129 = vsel %vm691, %v6121, %v6123
        %v6130 = vsel %vm691, %v6123, %v6125
        %v6131 = vsel %vm691, %v6125, %v6127
        %6136 = vst [vmem:[#allocation3 + $0x2c0] sm:$0xff] %v6128
        %6137 = vst [vmem:[#allocation3 + $0x2c8] sm:$0xff] %v6129
        %6138 = vst [vmem:[#allocation3 + $0x2d0] sm:$0xff] %v6130
        %6139 = vst [vmem:[#allocation3 + $0x2d8] sm:$0xff] %v6131
        %v6140 = vld [vmem:[#allocation2 + $0x8] sm:$0xff]
        %v6141 = vld [vmem:[#allocation2 + $0x10] sm:$0xff]
        %v6142 = vld [vmem:[#allocation2 + $0x18] sm:$0xff]
        %v6143 = vld [vmem:[#allocation2 + $0x20] sm:$0xff]
        %v6144 = vld [vmem:[#allocation2 + $0x28] sm:$0xff]
        %v6145 = vld [vmem:[%s1951] ss:$8 sm:$0xf]
        %v6147 = vlaneseq
        %v6148 = vshrl.u32 %v6147, 7
        %v6149 = vsub.s32 0, %v6148
        %v6150 = vrot.slane %v6145, %v6149
        %v6151 = vlaneseq
        %v6152 = vshrl.u32 %v6151, 7
        %v6153 = vsub.s32 1, %v6152
        %v6154 = vrot.slane %v6145, %v6153
        %v6155 = vlaneseq
        %v6156 = vshrl.u32 %v6155, 7
        %v6157 = vsub.s32 2, %v6156
        %v6158 = vrot.slane %v6145, %v6157
        %v6159 = vlaneseq
        %v6160 = vshrl.u32 %v6159, 7
        %v6161 = vsub.s32 3, %v6160
        %v6162 = vrot.slane %v6145, %v6161
        %6163 = vrot.lane.b32.xlu0 %v6150, 10
        %v6164 = vpop.permute.xlu0 %6163
        %6165 = vrot.lane.b32.xlu0 %v6154, 10
        %v6166 = vpop.permute.xlu0 %6165
        %6167 = vrot.lane.b32.xlu0 %v6158, 10
        %v6168 = vpop.permute.xlu0 %6167
        %6169 = vrot.lane.b32.xlu0 %v6162, 10
        %v6170 = vpop.permute.xlu0 %6169
        %v6171 = vsel %vm736, %v6164, %v6166
        %v6172 = vsel %vm736, %v6166, %v6168
        %v6173 = vsel %vm736, %v6168, %v6170
        %v6179 = vmul.f32 %v6140, %v6164
        %v6180 = vmul.f32 %v6141, %v6171
        %v6181 = vmul.f32 %v6142, %v6172
        %v6182 = vmul.f32 %v6143, %v6173
        %v6183 = vmul.f32 %v6144, %v6170
        %6189 = vrot.lane.b32.xlu0 %v6179, 118
        %v6190 = vpop.permute.xlu0 %6189
        %6191 = vrot.lane.b32.xlu0 %v6180, 118
        %v6192 = vpop.permute.xlu0 %6191
        %6193 = vrot.lane.b32.xlu0 %v6181, 118
        %v6194 = vpop.permute.xlu0 %6193
        %6195 = vrot.lane.b32.xlu0 %v6182, 118
        %v6196 = vpop.permute.xlu0 %6195
        %6197 = vrot.lane.b32.xlu0 %v6183, 118
        %v6198 = vpop.permute.xlu0 %6197
        %v6199 = vsel %vm765, %v6190, %v6192
        %v6200 = vsel %vm765, %v6192, %v6194
        %v6201 = vsel %vm765, %v6194, %v6196
        %v6202 = vsel %vm765, %v6196, %v6198
        %6207 = vst [vmem:[#allocation3 + $0x2e0] sm:$0xff] %v6199
        %6208 = vst [vmem:[#allocation3 + $0x2e8] sm:$0xff] %v6200
        %6209 = vst [vmem:[#allocation3 + $0x2f0] sm:$0xff] %v6201
        %6210 = vst [vmem:[#allocation3 + $0x2f8] sm:$0xff] %v6202
        %v6211 = vld [vmem:[#allocation2 + $0x8] sm:$0xff]
        %v6212 = vld [vmem:[#allocation2 + $0x10] sm:$0xff]
        %v6213 = vld [vmem:[#allocation2 + $0x18] sm:$0xff]
        %v6214 = vld [vmem:[#allocation2 + $0x20] sm:$0xff]
        %v6215 = vld [vmem:[#allocation2 + $0x28] sm:$0xff]
        %v6216 = vld [vmem:[%s2023] ss:$8 sm:$0xf]
        %v6218 = vlaneseq
        %v6219 = vshrl.u32 %v6218, 7
        %v6220 = vsub.s32 0, %v6219
        %v6221 = vrot.slane %v6216, %v6220
        %v6222 = vlaneseq
        %v6223 = vshrl.u32 %v6222, 7
        %v6224 = vsub.s32 1, %v6223
        %v6225 = vrot.slane %v6216, %v6224
        %v6226 = vlaneseq
        %v6227 = vshrl.u32 %v6226, 7
        %v6228 = vsub.s32 2, %v6227
        %v6229 = vrot.slane %v6216, %v6228
        %v6230 = vlaneseq
        %v6231 = vshrl.u32 %v6230, 7
        %v6232 = vsub.s32 3, %v6231
        %v6233 = vrot.slane %v6216, %v6232
        %6234 = vrot.lane.b32.xlu0 %v6221, 16
        %v6235 = vpop.permute.xlu0 %6234
        %6236 = vrot.lane.b32.xlu0 %v6225, 16
        %v6237 = vpop.permute.xlu0 %6236
        %6238 = vrot.lane.b32.xlu0 %v6229, 16
        %v6239 = vpop.permute.xlu0 %6238
        %6240 = vrot.lane.b32.xlu0 %v6233, 16
        %v6241 = vpop.permute.xlu0 %6240
        %v6242 = vsel %vm810, %v6235, %v6237
        %v6243 = vsel %vm810, %v6237, %v6239
        %v6244 = vsel %vm810, %v6239, %v6241
        %v6250 = vmul.f32 %v6211, %v6235
        %v6251 = vmul.f32 %v6212, %v6242
        %v6252 = vmul.f32 %v6213, %v6243
        %v6253 = vmul.f32 %v6214, %v6244
        %v6254 = vmul.f32 %v6215, %v6241
        %6260 = vrot.lane.b32.xlu0 %v6250, 112
        %v6261 = vpop.permute.xlu0 %6260
        %6262 = vrot.lane.b32.xlu0 %v6251, 112
        %v6263 = vpop.permute.xlu0 %6262
        %6264 = vrot.lane.b32.xlu0 %v6252, 112
        %v6265 = vpop.permute.xlu0 %6264
        %6266 = vrot.lane.b32.xlu0 %v6253, 112
        %v6267 = vpop.permute.xlu0 %6266
        %6268 = vrot.lane.b32.xlu0 %v6254, 112
        %v6269 = vpop.permute.xlu0 %6268
        %v6270 = vsel %vm839, %v6261, %v6263
        %v6271 = vsel %vm839, %v6263, %v6265
        %v6272 = vsel %vm839, %v6265, %v6267
        %v6273 = vsel %vm839, %v6267, %v6269
        %6278 = vst [vmem:[#allocation3 + $0x300] sm:$0xff] %v6270
        %6279 = vst [vmem:[#allocation3 + $0x308] sm:$0xff] %v6271
        %6280 = vst [vmem:[#allocation3 + $0x310] sm:$0xff] %v6272
        %6281 = vst [vmem:[#allocation3 + $0x318] sm:$0xff] %v6273
        %v6282 = vld [vmem:[#allocation2 + $0x8] sm:$0xff]
        %v6283 = vld [vmem:[#allocation2 + $0x10] sm:$0xff]
        %v6284 = vld [vmem:[#allocation2 + $0x18] sm:$0xff]
        %v6285 = vld [vmem:[#allocation2 + $0x20] sm:$0xff]
        %v6286 = vld [vmem:[#allocation2 + $0x28] sm:$0xff]
        %v6287 = vld [vmem:[%s2095] ss:$8 sm:$0xf]
        %v6289 = vlaneseq
        %v6290 = vshrl.u32 %v6289, 7
        %v6291 = vsub.s32 0, %v6290
        %v6292 = vrot.slane %v6287, %v6291
        %v6293 = vlaneseq
        %v6294 = vshrl.u32 %v6293, 7
        %v6295 = vsub.s32 1, %v6294
        %v6296 = vrot.slane %v6287, %v6295
        %v6297 = vlaneseq
        %v6298 = vshrl.u32 %v6297, 7
        %v6299 = vsub.s32 2, %v6298
        %v6300 = vrot.slane %v6287, %v6299
        %v6301 = vlaneseq
        %v6302 = vshrl.u32 %v6301, 7
        %v6303 = vsub.s32 3, %v6302
        %v6304 = vrot.slane %v6287, %v6303
        %6305 = vrot.lane.b32.xlu0 %v6292, 17
        %v6306 = vpop.permute.xlu0 %6305
        %6307 = vrot.lane.b32.xlu0 %v6296, 17
        %v6308 = vpop.permute.xlu0 %6307
        %6309 = vrot.lane.b32.xlu0 %v6300, 17
        %v6310 = vpop.permute.xlu0 %6309
        %6311 = vrot.lane.b32.xlu0 %v6304, 17
        %v6312 = vpop.permute.xlu0 %6311
        %v6313 = vsel %vm884, %v6306, %v6308
        %v6314 = vsel %vm884, %v6308, %v6310
        %v6315 = vsel %vm884, %v6310, %v6312
        %v6321 = vmul.f32 %v6282, %v6306
        %v6322 = vmul.f32 %v6283, %v6313
        %v6323 = vmul.f32 %v6284, %v6314
        %v6324 = vmul.f32 %v6285, %v6315
        %v6325 = vmul.f32 %v6286, %v6312
        %6331 = vrot.lane.b32.xlu0 %v6321, 111
        %v6332 = vpop.permute.xlu0 %6331
        %6333 = vrot.lane.b32.xlu0 %v6322, 111
        %v6334 = vpop.permute.xlu0 %6333
        %6335 = vrot.lane.b32.xlu0 %v6323, 111
        %v6336 = vpop.permute.xlu0 %6335
        %6337 = vrot.lane.b32.xlu0 %v6324, 111
        %v6338 = vpop.permute.xlu0 %6337
        %6339 = vrot.lane.b32.xlu0 %v6325, 111
        %v6340 = vpop.permute.xlu0 %6339
        %v6341 = vsel %vm913, %v6332, %v6334
        %v6342 = vsel %vm913, %v6334, %v6336
        %v6343 = vsel %vm913, %v6336, %v6338
        %v6344 = vsel %vm913, %v6338, %v6340
        %6349 = vst [vmem:[#allocation3 + $0x320] sm:$0xff] %v6341
        %6350 = vst [vmem:[#allocation3 + $0x328] sm:$0xff] %v6342
        %6351 = vst [vmem:[#allocation3 + $0x330] sm:$0xff] %v6343
        %6352 = vst [vmem:[#allocation3 + $0x338] sm:$0xff] %v6344
        %v6353 = vld [vmem:[#allocation2 + $0x8] sm:$0xff]
        %v6354 = vld [vmem:[#allocation2 + $0x10] sm:$0xff]
        %v6355 = vld [vmem:[#allocation2 + $0x18] sm:$0xff]
        %v6356 = vld [vmem:[#allocation2 + $0x20] sm:$0xff]
        %v6357 = vld [vmem:[#allocation2 + $0x28] sm:$0xff]
        %v6358 = vld [vmem:[%s2167] ss:$8 sm:$0xf]
        %v6360 = vlaneseq
        %v6361 = vshrl.u32 %v6360, 7
        %v6362 = vsub.s32 0, %v6361
        %v6363 = vrot.slane %v6358, %v6362
        %v6364 = vlaneseq
        %v6365 = vshrl.u32 %v6364, 7
        %v6366 = vsub.s32 1, %v6365
        %v6367 = vrot.slane %v6358, %v6366
        %v6368 = vlaneseq
        %v6369 = vshrl.u32 %v6368, 7
        %v6370 = vsub.s32 2, %v6369
        %v6371 = vrot.slane %v6358, %v6370
        %v6372 = vlaneseq
        %v6373 = vshrl.u32 %v6372, 7
        %v6374 = vsub.s32 3, %v6373
        %v6375 = vrot.slane %v6358, %v6374
        %6376 = vrot.lane.b32.xlu0 %v6363, 18
        %v6377 = vpop.permute.xlu0 %6376
        %6378 = vrot.lane.b32.xlu0 %v6367, 18
        %v6379 = vpop.permute.xlu0 %6378
        %6380 = vrot.lane.b32.xlu0 %v6371, 18
        %v6381 = vpop.permute.xlu0 %6380
        %6382 = vrot.lane.b32.xlu0 %v6375, 18
        %v6383 = vpop.permute.xlu0 %6382
        %v6384 = vsel %vm342, %v6377, %v6379
        %v6385 = vsel %vm342, %v6379, %v6381
        %v6386 = vsel %vm342, %v6381, %v6383
        %v6392 = vmul.f32 %v6353, %v6377
        %v6393 = vmul.f32 %v6354, %v6384
        %v6394 = vmul.f32 %v6355, %v6385
        %v6395 = vmul.f32 %v6356, %v6386
        %v6396 = vmul.f32 %v6357, %v6383
        %6402 = vrot.lane.b32.xlu0 %v6392, 110
        %v6403 = vpop.permute.xlu0 %6402
        %6404 = vrot.lane.b32.xlu0 %v6393, 110
        %v6405 = vpop.permute.xlu0 %6404
        %6406 = vrot.lane.b32.xlu0 %v6394, 110
        %v6407 = vpop.permute.xlu0 %6406
        %6408 = vrot.lane.b32.xlu0 %v6395, 110
        %v6409 = vpop.permute.xlu0 %6408
        %6410 = vrot.lane.b32.xlu0 %v6396, 110
        %v6411 = vpop.permute.xlu0 %6410
        %v6412 = vsel %vm986, %v6403, %v6405
        %v6413 = vsel %vm986, %v6405, %v6407
        %v6414 = vsel %vm986, %v6407, %v6409
        %v6415 = vsel %vm986, %v6409, %v6411
        %6420 = vst [vmem:[#allocation3 + $0x340] sm:$0xff] %v6412
        %6421 = vst [vmem:[#allocation3 + $0x348] sm:$0xff] %v6413
        %6422 = vst [vmem:[#allocation3 + $0x350] sm:$0xff] %v6414
        %6423 = vst [vmem:[#allocation3 + $0x358] sm:$0xff] %v6415
        %v6424 = vld [vmem:[%s6] sm:$0xff]
        %v6425 = vld [vmem:[%s6 + $0x8] sm:$0xff]
        %v6426 = vld [vmem:[#allocation3] sm:$0xff]
        %v6427 = vld [vmem:[#allocation3 + $0x8] sm:$0xff]
        %v6428 = vld [vmem:[#allocation3 + $0x10] sm:$0xff]
        %v6429 = vld [vmem:[#allocation3 + $0x18] sm:$0xff]
        %v6430 = vld [vmem:[#allocation3 + $0x20] sm:$0xff]
        %v6431 = vld [vmem:[#allocation3 + $0x28] sm:$0xff]
        %v6432 = vld [vmem:[#allocation3 + $0x30] sm:$0xff]
        %v6433 = vld [vmem:[#allocation3 + $0x38] sm:$0xff]
        %v6434 = vld [vmem:[#allocation3 + $0x40] sm:$0xff]
        %v6435 = vld [vmem:[#allocation3 + $0x48] sm:$0xff]
        %v6436 = vld [vmem:[#allocation3 + $0x50] sm:$0xff]
        %v6437 = vld [vmem:[#allocation3 + $0x58] sm:$0xff]
        %v6438 = vld [vmem:[#allocation3 + $0x60] sm:$0xff]
        %v6439 = vld [vmem:[#allocation3 + $0x68] sm:$0xff]
        %v6440 = vld [vmem:[#allocation3 + $0x70] sm:$0xff]
        %v6441 = vld [vmem:[#allocation3 + $0x78] sm:$0xff]
        %v6442 = vld [vmem:[#allocation3 + $0x80] sm:$0xff]
        %v6443 = vld [vmem:[#allocation3 + $0x88] sm:$0xff]
        %v6444 = vld [vmem:[#allocation3 + $0x90] sm:$0xff]
        %v6445 = vld [vmem:[#allocation3 + $0x98] sm:$0xff]
        %v6446 = vld [vmem:[#allocation3 + $0xa0] sm:$0xff]
        %v6447 = vld [vmem:[#allocation3 + $0xa8] sm:$0xff]
        %v6448 = vld [vmem:[#allocation3 + $0xb0] sm:$0xff]
        %v6449 = vld [vmem:[#allocation3 + $0xb8] sm:$0xff]
        %v6450 = vld [vmem:[#allocation3 + $0xc0] sm:$0xff]
        %v6451 = vld [vmem:[#allocation3 + $0xc8] sm:$0xff]
        %v6452 = vld [vmem:[#allocation3 + $0xd0] sm:$0xff]
        %v6453 = vld [vmem:[#allocation3 + $0xd8] sm:$0xff]
        %v6454 = vld [vmem:[#allocation3 + $0xe0] sm:$0xff]
        %v6455 = vld [vmem:[#allocation3 + $0xe8] sm:$0xff]
        %v6456 = vld [vmem:[#allocation3 + $0xf0] sm:$0xff]
        %v6457 = vld [vmem:[#allocation3 + $0xf8] sm:$0xff]
        %v6458 = vld [vmem:[#allocation3 + $0x100] sm:$0xff]
        %v6459 = vld [vmem:[#allocation3 + $0x108] sm:$0xff]
        %v6460 = vld [vmem:[#allocation3 + $0x110] sm:$0xff]
        %v6461 = vld [vmem:[#allocation3 + $0x118] sm:$0xff]
        %v6462 = vld [vmem:[#allocation3 + $0x120] sm:$0xff]
        %v6463 = vld [vmem:[#allocation3 + $0x128] sm:$0xff]
        %v6464 = vld [vmem:[#allocation3 + $0x130] sm:$0xff]
        %v6465 = vld [vmem:[#allocation3 + $0x138] sm:$0xff]
        %v6466 = vld [vmem:[#allocation3 + $0x140] sm:$0xff]
        %v6467 = vld [vmem:[#allocation3 + $0x148] sm:$0xff]
        %v6468 = vld [vmem:[#allocation3 + $0x150] sm:$0xff]
        %v6469 = vld [vmem:[#allocation3 + $0x158] sm:$0xff]
        %v6470 = vld [vmem:[#allocation3 + $0x160] sm:$0xff]
        %v6471 = vld [vmem:[#allocation3 + $0x168] sm:$0xff]
        %v6472 = vld [vmem:[#allocation3 + $0x170] sm:$0xff]
        %v6473 = vld [vmem:[#allocation3 + $0x178] sm:$0xff]
        %v6474 = vld [vmem:[#allocation3 + $0x180] sm:$0xff]
        %v6475 = vld [vmem:[#allocation3 + $0x188] sm:$0xff]
        %v6476 = vld [vmem:[#allocation3 + $0x190] sm:$0xff]
        %v6477 = vld [vmem:[#allocation3 + $0x198] sm:$0xff]
        %v6478 = vld [vmem:[#allocation3 + $0x1a0] sm:$0xff]
        %v6479 = vld [vmem:[#allocation3 + $0x1a8] sm:$0xff]
        %v6480 = vld [vmem:[#allocation3 + $0x1b0] sm:$0xff]
        %v6481 = vld [vmem:[#allocation3 + $0x1b8] sm:$0xff]
        %v6482 = vld [vmem:[#allocation3 + $0x1c0] sm:$0xff]
        %v6483 = vld [vmem:[#allocation3 + $0x1c8] sm:$0xff]
        %v6484 = vld [vmem:[#allocation3 + $0x1d0] sm:$0xff]
        %v6485 = vld [vmem:[#allocation3 + $0x1d8] sm:$0xff]
        %v6486 = vld [vmem:[#allocation3 + $0x1e0] sm:$0xff]
        %v6487 = vld [vmem:[#allocation3 + $0x1e8] sm:$0xff]
        %v6488 = vld [vmem:[#allocation3 + $0x1f0] sm:$0xff]
        %v6489 = vld [vmem:[#allocation3 + $0x1f8] sm:$0xff]
        %v6490 = vld [vmem:[#allocation3 + $0x200] sm:$0xff]
        %v6491 = vld [vmem:[#allocation3 + $0x208] sm:$0xff]
        %v6492 = vld [vmem:[#allocation3 + $0x210] sm:$0xff]
        %v6493 = vld [vmem:[#allocation3 + $0x218] sm:$0xff]
        %v6494 = vld [vmem:[#allocation3 + $0x220] sm:$0xff]
        %v6495 = vld [vmem:[#allocation3 + $0x228] sm:$0xff]
        %v6496 = vld [vmem:[#allocation3 + $0x230] sm:$0xff]
        %v6497 = vld [vmem:[#allocation3 + $0x238] sm:$0xff]
        %v6498 = vld [vmem:[#allocation3 + $0x240] sm:$0xff]
        %v6499 = vld [vmem:[#allocation3 + $0x248] sm:$0xff]
        %v6500 = vld [vmem:[#allocation3 + $0x250] sm:$0xff]
        %v6501 = vld [vmem:[#allocation3 + $0x258] sm:$0xff]
        %v6502 = vld [vmem:[#allocation3 + $0x260] sm:$0xff]
        %v6503 = vld [vmem:[#allocation3 + $0x268] sm:$0xff]
        %v6504 = vld [vmem:[#allocation3 + $0x270] sm:$0xff]
        %v6505 = vld [vmem:[#allocation3 + $0x278] sm:$0xff]
        %v6506 = vld [vmem:[#allocation3 + $0x280] sm:$0xff]
        %v6507 = vld [vmem:[#allocation3 + $0x288] sm:$0xff]
        %v6508 = vld [vmem:[#allocation3 + $0x290] sm:$0xff]
        %v6509 = vld [vmem:[#allocation3 + $0x298] sm:$0xff]
        %v6510 = vld [vmem:[#allocation3 + $0x2a0] sm:$0xff]
        %v6511 = vld [vmem:[#allocation3 + $0x2a8] sm:$0xff]
        %v6512 = vld [vmem:[#allocation3 + $0x2b0] sm:$0xff]
        %v6513 = vld [vmem:[#allocation3 + $0x2b8] sm:$0xff]
        %v6514 = vld [vmem:[#allocation3 + $0x2c0] sm:$0xff]
        %v6515 = vld [vmem:[#allocation3 + $0x2c8] sm:$0xff]
        %v6516 = vld [vmem:[#allocation3 + $0x2d0] sm:$0xff]
        %v6517 = vld [vmem:[#allocation3 + $0x2d8] sm:$0xff]
        %v6518 = vld [vmem:[#allocation3 + $0x2e0] sm:$0xff]
        %v6519 = vld [vmem:[#allocation3 + $0x2e8] sm:$0xff]
        %v6520 = vld [vmem:[#allocation3 + $0x2f0] sm:$0xff]
        %v6521 = vld [vmem:[#allocation3 + $0x2f8] sm:$0xff]
        %v6522 = vld [vmem:[#allocation3 + $0x300] sm:$0xff]
        %v6523 = vld [vmem:[#allocation3 + $0x308] sm:$0xff]
        %v6524 = vld [vmem:[#allocation3 + $0x310] sm:$0xff]
        %v6525 = vld [vmem:[#allocation3 + $0x318] sm:$0xff]
        %v6526 = vld [vmem:[#allocation3 + $0x320] sm:$0xff]
        %v6527 = vld [vmem:[#allocation3 + $0x328] sm:$0xff]
        %v6528 = vld [vmem:[#allocation3 + $0x330] sm:$0xff]
        %v6529 = vld [vmem:[#allocation3 + $0x338] sm:$0xff]
        %v6530 = vld [vmem:[#allocation3 + $0x340] sm:$0xff]
        %v6531 = vld [vmem:[#allocation3 + $0x348] sm:$0xff]
        %v6532 = vld [vmem:[#allocation3 + $0x350] sm:$0xff]
        %v6533 = vld [vmem:[#allocation3 + $0x358] sm:$0xff]
        %v6534 = vld [vmem:[%s7] sm:$0xff]
        %6536 = vset.pattern.permute.xlu0 0
        %6537 = vperm.xlu0 %6536, %v6534
        %v6538 = vpop.permute.xlu0 %6537
        %v6541 = vsel %vm2350, %v6425, 0
        %6543 = vmatprep.subr.mxu0 %v6427
        %6544 = vmatpush1.msra.mxu0 %v6426
        %6545 = vmatprep.subr.mxu0 %v6431
        %6546 = vmatpush1.msra.mxu0 %v6430
        %6547 = vmatprep.subr.mxu0 %v6435
        %6548 = vmatpush1.msra.mxu0 %v6434
        %6549 = vmatprep.subr.mxu0 %v6439
        %6550 = vmatpush1.msra.mxu0 %v6438
        %6551 = vmatprep.subr.mxu0 %v6443
        %6552 = vmatpush1.msra.mxu0 %v6442
        %6553 = vmatprep.subr.mxu0 %v6447
        %6554 = vmatpush1.msra.mxu0 %v6446
        %6555 = vmatprep.subr.mxu0 %v6451
        %6556 = vmatpush1.msra.mxu0 %v6450
        %6557 = vmatprep.subr.mxu0 %v6455
        %6558 = vmatpush1.msra.mxu0 %v6454
        %6559 = vmatprep.subr.mxu0 %v6459
        %6560 = vmatpush1.msra.mxu0 %v6458
        %6561 = vmatprep.subr.mxu0 %v6463
        %6562 = vmatpush1.msra.mxu0 %v6462
        %6563 = vmatprep.subr.mxu0 %v6467
        %6564 = vmatpush1.msra.mxu0 %v6466
        %6565 = vmatprep.subr.mxu0 %v6471
        %6566 = vmatpush1.msra.mxu0 %v6470
        %6567 = vmatprep.subr.mxu0 %v6475
        %6568 = vmatpush1.msra.mxu0 %v6474
        %6569 = vmatprep.subr.mxu0 %v6479
        %6570 = vmatpush1.msra.mxu0 %v6478
        %6571 = vmatprep.subr.mxu0 %v6483
        %6572 = vmatpush1.msra.mxu0 %v6482
        %6573 = vmatprep.subr.mxu0 %v6487
        %6574 = vmatpush1.msra.mxu0 %v6486
        %6575 = vmatprep.subr.mxu0 %v6491
        %6576 = vmatpush1.msra.mxu0 %v6490
        %6577 = vmatprep.subr.mxu0 %v6495
        %6578 = vmatpush1.msra.mxu0 %v6494
        %6579 = vmatprep.subr.mxu0 %v6499
        %6580 = vmatpush1.msra.mxu0 %v6498
        %6581 = vmatprep.subr.mxu0 %v6503
        %6582 = vmatpush1.msra.mxu0 %v6502
        %6583 = vmatprep.subr.mxu0 %v6507
        %6584 = vmatpush1.msra.mxu0 %v6506
        %6585 = vmatprep.subr.mxu0 %v6511
        %6586 = vmatpush1.msra.mxu0 %v6510
        %6587 = vmatprep.subr.mxu0 %v6515
        %6588 = vmatpush1.msra.mxu0 %v6514
        %6589 = vmatprep.subr.mxu0 %v6519
        %6590 = vmatpush1.msra.mxu0 %v6518
        %6591 = vmatprep.subr.mxu0 %v6523
        %6592 = vmatpush1.msra.mxu0 %v6522
        %6593 = vmatprep.subr.mxu0 %v6527
        %6594 = vmatpush1.msra.mxu0 %v6526
        %6595 = vmatprep.subr.mxu0 %v6531
        %6596 = vmatpush1.msra.mxu0 %v6530
        %6597 = vmatprep.subr.mxu0 0.0
        %6598 = vmatpush1.msra.mxu0 0.0
        %6599 = vmatprep.subr.mxu0 0.0
        %6600 = vmatpush1.msra.mxu0 0.0
        %6601 = vmatprep.subr.mxu0 0.0
        %6602 = vmatpush1.msra.mxu0 0.0
        %6603 = vmatprep.subr.mxu0 0.0
        %6604 = vmatpush1.msra.mxu0 0.0
        %6605 = vmatprep.subr.mxu0 0.0
        %6606 = vmatpush1.msra.mxu0 0.0
        %6607 = vmatprep.mubr.f32.mxu0 %v6541
        %6608 = vmatmul.mubr.f32.gmra.mrb[0].mxu0 %v6424
        %v6609 = vpop.f32.mrb[0].mxu0
        %v6610 = vadd.f32 %v6538, %v6609
        %v6611 = vpop.f32.mrb[0].mxu0
        %v6612 = vadd.f32 %v6538, %v6611
        %6613 = vdwg.mxu0
        %6614 = vmatprep.subr.mxu0 %v6429
        %6615 = vmatpush1.msra.mxu0 %v6428
        %6616 = vmatprep.subr.mxu0 %v6433
        %6617 = vmatpush1.msra.mxu0 %v6432
        %6618 = vmatprep.subr.mxu0 %v6437
        %6619 = vmatpush1.msra.mxu0 %v6436
        %6620 = vmatprep.subr.mxu0 %v6441
        %6621 = vmatpush1.msra.mxu0 %v6440
        %6622 = vmatprep.subr.mxu0 %v6445
        %6623 = vmatpush1.msra.mxu0 %v6444
        %6624 = vmatprep.subr.mxu0 %v6449
        %6625 = vmatpush1.msra.mxu0 %v6448
        %6626 = vmatprep.subr.mxu0 %v6453
        %6627 = vmatpush1.msra.mxu0 %v6452
        %6628 = vmatprep.subr.mxu0 %v6457
        %6629 = vmatpush1.msra.mxu0 %v6456
        %6630 = vmatprep.subr.mxu0 %v6461
        %6631 = vmatpush1.msra.mxu0 %v6460
        %6632 = vmatprep.subr.mxu0 %v6465
        %6633 = vmatpush1.msra.mxu0 %v6464
        %6634 = vmatprep.subr.mxu0 %v6469
        %6635 = vmatpush1.msra.mxu0 %v6468
        %6636 = vmatprep.subr.mxu0 %v6473
        %6637 = vmatpush1.msra.mxu0 %v6472
        %6638 = vmatprep.subr.mxu0 %v6477
        %6639 = vmatpush1.msra.mxu0 %v6476
        %6640 = vmatprep.subr.mxu0 %v6481
        %6641 = vmatpush1.msra.mxu0 %v6480
        %6642 = vmatprep.subr.mxu0 %v6485
        %6643 = vmatpush1.msra.mxu0 %v6484
        %6644 = vmatprep.subr.mxu0 %v6489
        %6645 = vmatpush1.msra.mxu0 %v6488
        %6646 = vmatprep.subr.mxu0 %v6493
        %6647 = vmatpush1.msra.mxu0 %v6492
        %6648 = vmatprep.subr.mxu0 %v6497
        %6649 = vmatpush1.msra.mxu0 %v6496
        %6650 = vmatprep.subr.mxu0 %v6501
        %6651 = vmatpush1.msra.mxu0 %v6500
        %6652 = vmatprep.subr.mxu0 %v6505
        %6653 = vmatpush1.msra.mxu0 %v6504
        %6654 = vmatprep.subr.mxu0 %v6509
        %6655 = vmatpush1.msra.mxu0 %v6508
        %6656 = vmatprep.subr.mxu0 %v6513
        %6657 = vmatpush1.msra.mxu0 %v6512
        %6658 = vmatprep.subr.mxu0 %v6517
        %6659 = vmatpush1.msra.mxu0 %v6516
        %6660 = vmatprep.subr.mxu0 %v6521
        %6661 = vmatpush1.msra.mxu0 %v6520
        %6662 = vmatprep.subr.mxu0 %v6525
        %6663 = vmatpush1.msra.mxu0 %v6524
        %6664 = vmatprep.subr.mxu0 %v6529
        %6665 = vmatpush1.msra.mxu0 %v6528
        %6666 = vmatprep.subr.mxu0 %v6533
        %6667 = vmatpush1.msra.mxu0 %v6532
        %6668 = vmatprep.subr.mxu0 0.0
        %6669 = vmatpush1.msra.mxu0 0.0
        %6670 = vmatprep.subr.mxu0 0.0
        %6671 = vmatpush1.msra.mxu0 0.0
        %6672 = vmatprep.subr.mxu0 0.0
        %6673 = vmatpush1.msra.mxu0 0.0
        %6674 = vmatprep.subr.mxu0 0.0
        %6675 = vmatpush1.msra.mxu0 0.0
        %6676 = vmatprep.subr.mxu0 0.0
        %6677 = vmatpush1.msra.mxu0 0.0
        %6678 = vmatprep.mubr.f32.mxu0 %v6541
        %6679 = vmatmul.mubr.f32.gmra.mrb[0].mxu0 %v6424
        %v6680 = vpop.f32.mrb[0].mxu0
        %v6681 = vadd.f32 %v6538, %v6680
        %v6682 = vpop.f32.mrb[0].mxu0
        %v6683 = vadd.f32 %v6538, %v6682
        %6684 = vdwg.mxu0
        %6685 = vst [vmem:[%s336] sm:$0xff] %v6610
        %6686 = vst [vmem:[%s336 + $0x8] sm:$0xff] %v6612
        %6687 = vst [vmem:[%s336 + $0x10] sm:$0xff] %v6681
        %6688 = vst [vmem:[%s336 + $0x18] sm:$0xff] %v6683
        %s6689 = sand.u32 %s207, 1
        %s6690 = scalar_lea.sflag [#allocation6], %s6689
        %s6691 = sand.u32 %s207, 1
        %s6692 = smul.addr %s6691, 32
        %s6693 = scalar_lea.vmem [#allocation9], %s6692
        // Predicated region
        $region61: #{tpu_custom_call.1} parent=51 // pred_check
          %p6694 = pneg %p217
        $region62: #{tpu_custom_call.1} parent=51 // pred_check_branch
          %6696 = sbr.rel (%p6694) target = $region64
        $region63: #{tpu_custom_call.1} parent=51 // pred_region
          %s6698 = ssub.s32 512, 512
          %6699 = vsyncadd %s6690, %s6698
          %s6700 = smul.addr %s26, 4
          %s6701 = smul.addr %s6700, 128
          %s6702 = scalar_lea.hbm %s8, %s6701
          %s6704 = sshll.u32 %s6693, 4
          %s6705 = int_to_ptr.vmem [resolvable:$true] %s6704
          %6707 = dma.vmem_to_hbm [thread:$0]  %s6705, 512, %s6702, %s6690
        $region64: #{tpu_custom_call.1} parent=51 // pred_fallthru
          _
      $region52: #{tpu_custom_call.1} parent=5 // pred_fallthru
        _
      %p6708 = scmp.le.s32.totalorder 2, %s21
      // Predicated region
      $region65: #{tpu_custom_call.1} parent=5 // pred_check
        %p6709 = pneg %p6708
      $region66: #{tpu_custom_call.1} parent=5 // pred_check_branch
        %6711 = sbr.rel (%p6709) target = $region68
      $region67: #{tpu_custom_call.1} parent=5 // pred_region
        %s6712 = ssub.s32 %s21, 2
        // Predicated region
        $region69: #{tpu_custom_call.1} parent=67 // pred_check
          %p6713 = pneg %p223
        $region70: #{tpu_custom_call.1} parent=67 // pred_check_branch
          %6715 = sbr.rel (%p6713) target = $region72
        $region71: #{tpu_custom_call.1} parent=67 // pred_region
          %s6716 = sand.u32 %s208, 1
          %s6717 = scalar_lea.sflag [#allocation6], %s6716
          %s6718 = sand.u32 %s208, 1
          %s6719 = smul.addr %s6718, 32
          %s6720 = scalar_lea.vmem [#allocation9], %s6719
          %6721 = dma.done %s6717, 512
        $region72: #{tpu_custom_call.1} parent=67 // pred_fallthru
          _
      $region68: #{tpu_custom_call.1} parent=5 // pred_fallthru
        _
    $region6: #{tpu_custom_call.1} parent=1 // loop_footer
      %s25 = sadd.s32 1, %s21
    $region7: #{tpu_custom_call.1} parent=1 // loop_footer_branch
      %20 = sbr.rel target = $region3
    $region8: #{tpu_custom_call.1} parent=1 // loop_exit
      _
    %6722 = vsyncpa [#allocation5], 1
    %s6723 = scalar_lea.sflag [#allocation5], 1
    %6724 = vsyncpa %s6723, 1
    %6725 = vsyncpa [#allocation8], 1
    %6726 = vsyncpa [#allocation6], 1
    %s6727 = scalar_lea.sflag [#allocation6], 1
    %6728 = vsyncpa %s6727, 1

</llo_original>
